<compile_context>
chip_gen: v6e
topology: v6e:2x2x1
jax: 0.10.0
libtpu: 0.0.40
codegen_flags: <defaults>
</compile_context>

<pallas_src>
import functools

import jax
import jax.numpy as jnp
from jax import lax
from jax.experimental import pallas as pl
from jax.experimental.pallas import tpu as pltpu


EXPANSION = 4
BN_EPS = 1e-5

_VMEM_LIMIT_CACHE = None


def _round_up(x, m):
    return ((x + m - 1) // m) * m


def _vmem_limit_bytes():
    """Per-generation scoped-VMEM budget.

    v5e/v6e have 128 MiB of VMEM per TensorCore -> use ~112 MiB; v7x has only
    64 MiB -> ~48 MiB, leaving headroom for Mosaic-internal scratch.
    """
    global _VMEM_LIMIT_CACHE
    if _VMEM_LIMIT_CACHE is None:
        try:
            cap = int(pltpu.get_tpu_info().vmem_capacity_bytes)
        except Exception:
            cap = 64 * 1024 * 1024
        _VMEM_LIMIT_CACHE = max(32 * 1024 * 1024,
                                min(cap - 16 * 1024 * 1024, 112 * 1024 * 1024))
    return _VMEM_LIMIT_CACHE


# ----------------------------------------------------------------------------
# Kernel A: 1x1 conv (channel matmul) + folded BN + ReLU  (bf16 output)
# ----------------------------------------------------------------------------
def _conv1x1_bn_relu_kernel(x_ref, w_ref, s_ref, b_ref, o_ref):
    y = jnp.dot(x_ref[...], w_ref[...], preferred_element_type=jnp.float32)
    y = y * s_ref[...] + b_ref[...]
    o_ref[...] = jnp.maximum(y, 0.0).astype(o_ref.dtype)


def conv1x1_bn_relu(x2d, w, scale, bias, *, tm=1024, out_dtype=jnp.bfloat16):
    M, cin = x2d.shape
    cout = w.shape[1]
    tm = min(tm, _round_up(M, 8))
    Mp = _round_up(M, tm)

    xb = x2d.astype(jnp.bfloat16)
    if Mp != M:
        xb = jnp.pad(xb, ((0, Mp - M), (0, 0)))

    out = pl.pallas_call(
        _conv1x1_bn_relu_kernel,
        out_shape=jax.ShapeDtypeStruct((Mp, cout), out_dtype),
        grid_spec=pltpu.PrefetchScalarGridSpec(
            num_scalar_prefetch=0,
            grid=(Mp // tm,),
            in_specs=[
                pl.BlockSpec((tm, cin), lambda i: (i, 0)),
                pl.BlockSpec((cin, cout), lambda i: (0, 0)),   # resident
                pl.BlockSpec((1, cout), lambda i: (0, 0)),
                pl.BlockSpec((1, cout), lambda i: (0, 0)),
            ],
            out_specs=pl.BlockSpec((tm, cout), lambda i: (i, 0)),
        ),
        compiler_params=pltpu.CompilerParams(
            dimension_semantics=("parallel",),
            vmem_limit_bytes=_vmem_limit_bytes(),
        ),
    )(xb, w.astype(jnp.bfloat16), scale, bias)
    return out[:M] if Mp != M else out


# ----------------------------------------------------------------------------
# Kernel B (fused): dilated 3x3 conv + BN2 + ReLU + conv3 (1x1) + BN3
#                   + shortcut (projection or identity) + add + ReLU.
#
# The padded image of one batch element is flattened to rows of width Wp and
# kept resident in VMEM across the inner grid axis; each of the 9 taps is a
# (tz, Cin) x (Cin, Cout) matmul at static row offset ky*d*Wp + kx*d (Wp is a
# multiple of 16 so the ky part is sublane-aligned).  The epilogue applies
# conv3 + BN3, adds the shortcut tile (streamed in the same Wp-padded row
# layout), and writes the final (tz, 4*planes) tile — no HBM round-trip of
# the conv2 output, no separate kernel C.
# ----------------------------------------------------------------------------
def _make_fused_kernel(*, tz, d, wp, planes, concat_k, identity):
    offs = tuple(ky * d * wp + kx * d for ky in range(3) for kx in range(3))

    def kernel(x1_ref, xsc_ref, w2_ref, s2_ref, b2_ref,
               w3_ref, s3_ref, b3_ref, *rest):
        if identity:
            (o_ref,) = rest
        else:
            wsc_ref, ssc_ref, bsc_ref, o_ref = rest

        j = pl.program_id(1)
        base = pl.multiple_of(j * tz, tz)

        acc = jnp.zeros((tz, planes), jnp.float32)
        if concat_k:
            # K-concatenated taps: 3 matmuls with K = 3*planes (fills the
            # 256-deep MXU when planes <= 128; 3 accumulator passes not 9).
            for ky in range(3):
                parts = [
                    x1_ref[pl.ds(base + ky * d * wp + kx * d, tz), :]
                    .astype(jnp.bfloat16)
                    for kx in range(3)
                ]
                xk = jnp.concatenate(parts, axis=1)            # (tz, 3*planes)
                acc = acc + jnp.dot(xk, w2_ref[ky],
                                    preferred_element_type=jnp.float32)
        else:
            for t, off in enumerate(offs):                     # static unroll
                xt = x1_ref[pl.ds(base + off, tz), :].astype(jnp.bfloat16)
                acc = acc + jnp.dot(xt, w2_ref[t],
                                    preferred_element_type=jnp.float32)

        # BN2 + ReLU (f32 epilogue), then conv3 on the MXU in bf16.
        h = jnp.maximum(acc * s2_ref[...] + b2_ref[...], 0.0)
        h = h.astype(jnp.bfloat16)

        y = jnp.dot(h, w3_ref[...], preferred_element_type=jnp.float32)
        y = y * s3_ref[...] + b3_ref[...]

        if identity:
            sc = xsc_ref[...].astype(jnp.float32)
        else:
            sc = jnp.dot(xsc_ref[...], wsc_ref[...],
                         preferred_element_type=jnp.float32)
            sc = sc * ssc_ref[...] + bsc_ref[...]

        o_ref[...] = jnp.maximum(y + sc, 0.0).astype(o_ref.dtype)

    return kernel


def fused_conv2_conv3_shortcut(out1_nhwc, x_nhwc, w2_hwio, s2, b2,
                               w3, s3, b3, wsc=None, ssc=None, bsc=None, *,
                               hole, tz=512, out_dtype=jnp.float32):
    N, H, W, planes = out1_nhwc.shape
    cin_sc = x_nhwc.shape[-1]
    cout = w3.shape[1]
    d = hole

    # Pad W up to a multiple of 16 so every ky*d*Wp row offset is
    # sublane-aligned; only the small kx*d components stay unaligned.
    wp = _round_up(W + 2 * d, 16)
    hp = H + 2 * d
    lz_need = H * wp
    tz = _round_up(min(tz, _round_up(lz_need, 16)), 16)
    lz = _round_up(lz_need, tz)
    lin = lz + 2 * d * wp + 2 * d      # covers the largest tap read

    # Padded conv2 input, flattened per batch element (resident in VMEM across
    # the inner grid axis).  Zero padding is applied to the *post*-conv1
    # activations, so pad pixels are true zeros (relu(bn(conv1(0))) would not
    # be).  Kept f32: the per-tap dynamic sublane slices act on an unpacked
    # dtype; taps are cast to bf16 right before the MXU.
    x1p = jnp.pad(out1_nhwc.astype(jnp.float32),
                  ((0, 0), (d, d), (d, wp - W - d), (0, 0)))
    x1f = x1p.reshape(N, hp * wp, planes)
    x1f = jnp.pad(x1f, ((0, 0), (0, lin - hp * wp), (0, 0)))

    # Shortcut input in the same Wp-row layout as the kernel's output rows.
    xs = jnp.pad(x_nhwc.astype(jnp.bfloat16),
                 ((0, 0), (0, 0), (0, wp - W), (0, 0)))
    xs = xs.reshape(N, H * wp, cin_sc)
    if lz > H * wp:
        xs = jnp.pad(xs, ((0, 0), (0, lz - H * wp), (0, 0)))

    concat_k = (planes % 128 == 0)
    if concat_k:
        # (3, 3*planes, planes): per ky, the 3 kx taps concatenated along K.
        w2k = w2_hwio.reshape(3, 3 * planes, planes).astype(jnp.bfloat16)
        w2_spec = pl.BlockSpec((3, 3 * planes, planes), lambda n, j: (0, 0, 0))
    else:
        w2k = w2_hwio.reshape(9, planes, planes).astype(jnp.bfloat16)
        w2_spec = pl.BlockSpec((9, planes, planes), lambda n, j: (0, 0, 0))

    identity = wsc is None
    kernel = _make_fused_kernel(tz=tz, d=d, wp=wp, planes=planes,
                                concat_k=concat_k, identity=identity)

    def bcast(c):
        return pl.BlockSpec((1, c), lambda n, j: (0, 0))

    in_specs = [
        # full padded image of batch element n: resident across the j axis
        pl.BlockSpec((None, lin, planes), lambda n, j: (n, 0, 0)),
        # shortcut tile, streamed per output tile
        pl.BlockSpec((None, tz, cin_sc), lambda n, j: (n, j, 0)),
        w2_spec,                                              # resident
        bcast(planes), bcast(planes),
        pl.BlockSpec((planes, cout), lambda n, j: (0, 0)),    # resident
        bcast(cout), bcast(cout),
    ]
    args = [x1f, xs, w2k, s2, b2, w3.astype(jnp.bfloat16), s3, b3]
    if not identity:
        in_specs += [pl.BlockSpec((cin_sc, cout), lambda n, j: (0, 0)),
                     bcast(cout), bcast(cout)]
        args += [wsc.astype(jnp.bfloat16), ssc, bsc]

    z = pl.pallas_call(
        kernel,
        out_shape=jax.ShapeDtypeStruct((N, lz, cout), out_dtype),
        grid_spec=pltpu.PrefetchScalarGridSpec(
            num_scalar_prefetch=0,
            grid=(N, lz // tz),
            in_specs=in_specs,
            out_specs=pl.BlockSpec((None, tz, cout), lambda n, j: (n, j, 0)),
        ),
        compiler_params=pltpu.CompilerParams(
            # Inner axis writes disjoint output tiles -> parallel, so v7x's
            # two TensorCores can split the spatial tiles even when N is odd.
            dimension_semantics=("parallel", "parallel"),
            vmem_limit_bytes=_vmem_limit_bytes(),
        ),
    )(*args)

    # Row r = y*wp + x holds the output at (n, y, x); drop pad columns/rows
    # (folds into the final NCHW transpose in XLA).
    out = z[:, :H * wp, :].reshape(N, H, wp, cout)[:, :, :W, :]
    return out


# ----------------------------------------------------------------------------
# Parameter init (deterministic, synthetic) + BN folding
# ----------------------------------------------------------------------------
def _fold_bn(gamma, beta, mean, var, eps=BN_EPS):
    scale = gamma / jnp.sqrt(var + eps)
    bias = beta - mean * scale
    return (scale.reshape(1, -1).astype(jnp.float32),
            bias.reshape(1, -1).astype(jnp.float32))


def init_params(key, in_planes, planes):
    out_planes = EXPANSION * planes
    ks = jax.random.split(key, 8)

    def w(k, shape):
        return jax.random.normal(k, shape, jnp.float32) * 0.1

    def bn(k, c):
        k1, k2, k3, k4 = jax.random.split(k, 4)
        gamma = jax.random.uniform(k1, (c,), jnp.float32, 0.8, 1.2)
        beta = jax.random.normal(k2, (c,), jnp.float32) * 0.1
        mean = jax.random.normal(k3, (c,), jnp.float32) * 0.1
        var = jax.random.uniform(k4, (c,), jnp.float32, 0.5, 1.5)
        return _fold_bn(gamma, beta, mean, var)

    p = {}
    p["w1"] = w(ks[0], (in_planes, planes))              # 1x1 conv as (Cin, Cout)
    p["s1"], p["b1"] = bn(ks[1], planes)
    p["w2"] = w(ks[2], (3, 3, planes, planes))           # HWIO
    p["s2"], p["b2"] = bn(ks[3], planes)
    p["w3"] = w(ks[4], (planes, out_planes))
    p["s3"], p["b3"] = bn(ks[5], out_planes)
    if in_planes != out_planes:                          # projection shortcut
        p["wsc"] = w(ks[6], (in_planes, out_planes))
        p["ssc"], p["bsc"] = bn(ks[7], out_planes)
    return p


# ----------------------------------------------------------------------------
# Bottleneck forward (Pallas) and plain-JAX reference
# ----------------------------------------------------------------------------
def bottleneck_forward(x_nchw, params, *, hole=1, tm=1024, tz=512):
    N, cin, H, W = x_nchw.shape
    planes = params["w1"].shape[1]

    x_nhwc = jnp.transpose(x_nchw, (0, 2, 3, 1))
    x2d = x_nhwc.reshape(N * H * W, cin)

    # conv1 + bn1 + relu  (bf16 intermediate: half the HBM write)
    out1 = conv1x1_bn_relu(x2d, params["w1"], params["s1"], params["b1"], tm=tm)
    out1 = out1.reshape(N, H, W, planes)

    # conv2 (dilated 3x3) + bn2 + relu + conv3 + bn3 + shortcut + add + relu,
    # all fused in one kernel: the conv2 output never touches HBM.
    out_nhwc = fused_conv2_conv3_shortcut(
        out1, x_nhwc, params["w2"], params["s2"], params["b2"],
        params["w3"], params["s3"], params["b3"],
        params.get("wsc"), params.get("ssc"), params.get("bsc"),
        hole=hole, tz=tz)
    return jnp.transpose(out_nhwc, (0, 3, 1, 2))         # back to NCHW


def bottleneck_reference(x_nchw, params, *, hole=1):
    x = jnp.transpose(x_nchw, (0, 2, 3, 1))              # NHWC
    dn = ("NHWC", "HWIO", "NHWC")
    hp = lax.Precision.HIGHEST

    def conv1x1(a, w):
        return lax.conv_general_dilated(
            a, w.reshape(1, 1, *w.shape), (1, 1), "VALID",
            dimension_numbers=dn, precision=hp)

    h = jnp.maximum(conv1x1(x, params["w1"]) * params["s1"] + params["b1"], 0.0)
    h = lax.conv_general_dilated(
        h, params["w2"], (1, 1), ((hole, hole), (hole, hole)),
        rhs_dilation=(hole, hole), dimension_numbers=dn, precision=hp)
    h = jnp.maximum(h * params["s2"] + params["b2"], 0.0)
    h = conv1x1(h, params["w3"]) * params["s3"] + params["b3"]
    if "wsc" in params:
        sc = conv1x1(x, params["wsc"]) * params["ssc"] + params["bsc"]
    else:
        sc = x
    out = jnp.maximum(h + sc, 0.0)
    return jnp.transpose(out, (0, 3, 1, 2))


if __name__ == "__main__":
    key = jax.random.PRNGKey(0)

    configs = [
        # (N, in_planes, H, W, planes, hole)
        (2, 16, 16, 16, 8, 2),   # projection shortcut, dilation 2
        (2, 32, 16, 16, 8, 1),   # identity shortcut (in_planes == 4*planes)
    ]
    for idx, (N, in_planes, H, W, planes, hole) in enumerate(configs):
        k_x, k_p = jax.random.split(jax.random.fold_in(key, idx))
        x = jax.random.normal(k_x, (N, in_planes, H, W), jnp.float32)
        params = init_params(k_p, in_planes, planes)

        fwd = jax.jit(functools.partial(bottleneck_forward, hole=hole))
        out = jax.block_until_ready(fwd(x, params))
        assert out.shape == (N, EXPANSION * planes, H, W), out.shape

        ref = bottleneck_reference(x, params, hole=hole)
        max_err = float(jnp.max(jnp.abs(out - ref)))
        assert jnp.allclose(out, ref, atol=3e-2, rtol=3e-2), max_err

    print("KERNEL_OK")
</pallas_src>

<mosaic_0001>
module attributes {stable_mosaic.version = 11 : i64} {
  func.func @_conv1x1_bn_relu_kernel(%arg0: i32, %arg1: memref<512x16xbf16, #tpu.memory_space<vmem>>, %arg2: memref<16x8xbf16, #tpu.memory_space<vmem>>, %arg3: memref<1x8xf32, #tpu.memory_space<vmem>>, %arg4: memref<1x8xf32, #tpu.memory_space<vmem>>, %arg5: memref<512x8xbf16, #tpu.memory_space<vmem>>) attributes {dimension_semantics = [#tpu.dimension_semantics<parallel>], iteration_bounds = array<i64: 1>, scalar_prefetch = 0 : i64, scratch_operands = 0 : i64, tpu.core_type = #tpu.core_type<tc>, window_params = [{transform_indices = @transform_0, window_bounds = array<i64: 512, 16>}, {pipeline_mode = #tpu.pipeline_mode<synchronous>, transform_indices = @transform_1, window_bounds = array<i64: 16, 8>}, {pipeline_mode = #tpu.pipeline_mode<synchronous>, transform_indices = @transform_2, window_bounds = array<i64: 1, 8>}, {pipeline_mode = #tpu.pipeline_mode<synchronous>, transform_indices = @transform_3, window_bounds = array<i64: 1, 8>}, {transform_indices = @transform_4, window_bounds = array<i64: 512, 8>}]} {
    %c0 = arith.constant 0 : index
    %c0_0 = arith.constant 0 : index
    %0 = vector.load %arg1[%c0, %c0_0] : memref<512x16xbf16, #tpu.memory_space<vmem>>, vector<512x16xbf16>
    %c0_1 = arith.constant 0 : index
    %c0_2 = arith.constant 0 : index
    %1 = vector.load %arg2[%c0_1, %c0_2] : memref<16x8xbf16, #tpu.memory_space<vmem>>, vector<16x8xbf16>
    %cst = arith.constant dense<0.000000e+00> : vector<512x8xf32>
    %2 = tpu.matmul %0, %1, %cst {dimension_numbers = #tpu.dot_dimension_numbers<[1], [0], [0], [1], [0, 0, 1, 1], [], []>} : vector<512x16xbf16>, vector<16x8xbf16>, vector<512x8xf32> -> vector<512x8xf32>
    %c0_3 = arith.constant 0 : index
    %c0_4 = arith.constant 0 : index
    %3 = vector.load %arg3[%c0_3, %c0_4] : memref<1x8xf32, #tpu.memory_space<vmem>>, vector<1x8xf32>
    %4 = vector.broadcast %3 : vector<1x8xf32> to vector<512x8xf32>
    %5 = arith.mulf %2, %4 : vector<512x8xf32>
    %c0_5 = arith.constant 0 : index
    %c0_6 = arith.constant 0 : index
    %6 = vector.load %arg4[%c0_5, %c0_6] : memref<1x8xf32, #tpu.memory_space<vmem>>, vector<1x8xf32>
    %7 = vector.broadcast %6 : vector<1x8xf32> to vector<512x8xf32>
    %8 = arith.addf %5, %7 : vector<512x8xf32>
    %cst_7 = arith.constant 0.000000e+00 : f32
    %9 = vector.broadcast %cst_7 : f32 to vector<512x8xf32>
    %10 = arith.maximumf %8, %9 : vector<512x8xf32>
    %11 = arith.truncf %10 : vector<512x8xf32> to vector<512x8xbf16>
    %c0_8 = arith.constant 0 : index
    %c0_9 = arith.constant 0 : index
    %12 = vector.load %arg5[%c0_8, %c0_9] : memref<512x8xbf16, #tpu.memory_space<vmem>>, vector<512x8xbf16>
    tpu.vector_store %arg5[%c0_8, %c0_9], %11 {strides = array<i32>} : memref<512x8xbf16, #tpu.memory_space<vmem>>, vector<512x8xbf16>,
    return
  }
  func.func @transform_0(%arg0: i32) -> (i32, i32) {
    %c0_i32 = arith.constant 0 : i32
    %c0_i32_0 = arith.constant 0 : i32
    return %arg0, %c0_i32 : i32, i32
  }
  func.func @transform_1(%arg0: i32) -> (i32, i32) {
    %c0_i32 = arith.constant 0 : i32
    %c0_i32_0 = arith.constant 0 : i32
    %c0_i32_1 = arith.constant 0 : i32
    return %c0_i32, %c0_i32_0 : i32, i32
  }
  func.func @transform_2(%arg0: i32) -> (i32, i32) {
    %c0_i32 = arith.constant 0 : i32
    %c0_i32_0 = arith.constant 0 : i32
    %c0_i32_1 = arith.constant 0 : i32
    return %c0_i32, %c0_i32_0 : i32, i32
  }
  func.func @transform_3(%arg0: i32) -> (i32, i32) {
    %c0_i32 = arith.constant 0 : i32
    %c0_i32_0 = arith.constant 0 : i32
    %c0_i32_1 = arith.constant 0 : i32
    return %c0_i32, %c0_i32_0 : i32, i32
  }
  func.func @transform_4(%arg0: i32) -> (i32, i32) {
    %c0_i32 = arith.constant 0 : i32
    %c0_i32_0 = arith.constant 0 : i32
    return %arg0, %c0_i32 : i32, i32
  }
}

module attributes {stable_mosaic.version = 11 : i64} {
  func.func @kernel(%arg0: i32, %arg1: i32, %arg2: memref<1x644x8xf32, #tpu.memory_space<vmem>>, %arg3: memref<1x512x16xbf16, #tpu.memory_space<vmem>>, %arg4: memref<9x8x8xbf16, #tpu.memory_space<vmem>>, %arg5: memref<1x8xf32, #tpu.memory_space<vmem>>, %arg6: memref<1x8xf32, #tpu.memory_space<vmem>>, %arg7: memref<8x32xbf16, #tpu.memory_space<vmem>>, %arg8: memref<1x32xf32, #tpu.memory_space<vmem>>, %arg9: memref<1x32xf32, #tpu.memory_space<vmem>>, %arg10: memref<16x32xbf16, #tpu.memory_space<vmem>>, %arg11: memref<1x32xf32, #tpu.memory_space<vmem>>, %arg12: memref<1x32xf32, #tpu.memory_space<vmem>>, %arg13: memref<1x512x32xf32, #tpu.memory_space<vmem>>) attributes {dimension_semantics = [#tpu.dimension_semantics<parallel>, #tpu.dimension_semantics<parallel>], iteration_bounds = array<i64: 2, 1>, scalar_prefetch = 0 : i64, scratch_operands = 0 : i64, tpu.core_type = #tpu.core_type<tc>, window_params = [{transform_indices = @transform_0, window_bounds = array<i64: 1, 644, 8>}, {transform_indices = @transform_1, window_bounds = array<i64: 1, 512, 16>}, {pipeline_mode = #tpu.pipeline_mode<synchronous>, transform_indices = @transform_2, window_bounds = array<i64: 9, 8, 8>}, {pipeline_mode = #tpu.pipeline_mode<synchronous>, transform_indices = @transform_3, window_bounds = array<i64: 1, 8>}, {pipeline_mode = #tpu.pipeline_mode<synchronous>, transform_indices = @transform_4, window_bounds = array<i64: 1, 8>}, {pipeline_mode = #tpu.pipeline_mode<synchronous>, transform_indices = @transform_5, window_bounds = array<i64: 8, 32>}, {pipeline_mode = #tpu.pipeline_mode<synchronous>, transform_indices = @transform_6, window_bounds = array<i64: 1, 32>}, {pipeline_mode = #tpu.pipeline_mode<synchronous>, transform_indices = @transform_7, window_bounds = array<i64: 1, 32>}, {pipeline_mode = #tpu.pipeline_mode<synchronous>, transform_indices = @transform_8, window_bounds = array<i64: 16, 32>}, {pipeline_mode = #tpu.pipeline_mode<synchronous>, transform_indices = @transform_9, window_bounds = array<i64: 1, 32>}, {pipeline_mode = #tpu.pipeline_mode<synchronous>, transform_indices = @transform_10, window_bounds = array<i64: 1, 32>}, {transform_indices = @transform_11, window_bounds = array<i64: 1, 512, 32>}]} {
    %c512_i32 = arith.constant 512 : i32
    %0 = arith.muli %arg1, %c512_i32 : i32
    %1 = tpu.assume_multiple %0, 512 : i32
    %cst = arith.constant 0.000000e+00 : f32
    %2 = vector.broadcast %cst : f32 to vector<512x8xf32>
    %c0_i32 = arith.constant 0 : i32
    %3 = arith.addi %1, %c0_i32 : i32
    %c0 = arith.constant 0 : index
    %4 = arith.index_cast %3 : i32 to index
    %c0_0 = arith.constant 0 : index
    %5 = vector.load %arg2[%c0, %4, %c0_0] : memref<1x644x8xf32, #tpu.memory_space<vmem>>, vector<1x512x8xf32>
    %6 = vector.shape_cast %5 : vector<1x512x8xf32> to vector<512x8xf32>
    %7 = arith.truncf %6 : vector<512x8xf32> to vector<512x8xbf16>
    %c0_1 = arith.constant 0 : index
    %c0_2 = arith.constant 0 : index
    %c0_3 = arith.constant 0 : index
    %8 = vector.load %arg4[%c0_1, %c0_2, %c0_3] : memref<9x8x8xbf16, #tpu.memory_space<vmem>>, vector<1x8x8xbf16>
    %9 = vector.shape_cast %8 : vector<1x8x8xbf16> to vector<8x8xbf16>
    %cst_4 = arith.constant dense<0.000000e+00> : vector<512x8xf32>
    %10 = tpu.matmul %7, %9, %cst_4 {dimension_numbers = #tpu.dot_dimension_numbers<[1], [0], [0], [1], [0, 0, 1, 1], [], []>} : vector<512x8xbf16>, vector<8x8xbf16>, vector<512x8xf32> -> vector<512x8xf32>
    %11 = arith.addf %2, %10 : vector<512x8xf32>
    %c2_i32 = arith.constant 2 : i32
    %12 = arith.addi %1, %c2_i32 : i32
    %c0_5 = arith.constant 0 : index
    %13 = arith.index_cast %12 : i32 to index
    %c0_6 = arith.constant 0 : index
    %14 = vector.load %arg2[%c0_5, %13, %c0_6] : memref<1x644x8xf32, #tpu.memory_space<vmem>>, vector<1x512x8xf32>
    %15 = vector.shape_cast %14 : vector<1x512x8xf32> to vector<512x8xf32>
    %16 = arith.truncf %15 : vector<512x8xf32> to vector<512x8xbf16>
    %c1 = arith.constant 1 : index
    %c0_7 = arith.constant 0 : index
    %c0_8 = arith.constant 0 : index
    %17 = vector.load %arg4[%c1, %c0_7, %c0_8] : memref<9x8x8xbf16, #tpu.memory_space<vmem>>, vector<1x8x8xbf16>
    %18 = vector.shape_cast %17 : vector<1x8x8xbf16> to vector<8x8xbf16>
    %cst_9 = arith.constant dense<0.000000e+00> : vector<512x8xf32>
    %19 = tpu.matmul %16, %18, %cst_9 {dimension_numbers = #tpu.dot_dimension_numbers<[1], [0], [0], [1], [0, 0, 1, 1], [], []>} : vector<512x8xbf16>, vector<8x8xbf16>, vector<512x8xf32> -> vector<512x8xf32>
    %20 = arith.addf %11, %19 : vector<512x8xf32>
    %c4_i32 = arith.constant 4 : i32
    %21 = arith.addi %1, %c4_i32 : i32
    %c0_10 = arith.constant 0 : index
    %22 = arith.index_cast %21 : i32 to index
    %c0_11 = arith.constant 0 : index
    %23 = vector.load %arg2[%c0_10, %22, %c0_11] : memref<1x644x8xf32, #tpu.memory_space<vmem>>, vector<1x512x8xf32>
    %24 = vector.shape_cast %23 : vector<1x512x8xf32> to vector<512x8xf32>
    %25 = arith.truncf %24 : vector<512x8xf32> to vector<512x8xbf16>
    %c2 = arith.constant 2 : index
    %c0_12 = arith.constant 0 : index
    %c0_13 = arith.constant 0 : index
    %26 = vector.load %arg4[%c2, %c0_12, %c0_13] : memref<9x8x8xbf16, #tpu.memory_space<vmem>>, vector<1x8x8xbf16>
    %27 = vector.shape_cast %26 : vector<1x8x8xbf16> to vector<8x8xbf16>
    %cst_14 = arith.constant dense<0.000000e+00> : vector<512x8xf32>
    %28 = tpu.matmul %25, %27, %cst_14 {dimension_numbers = #tpu.dot_dimension_numbers<[1], [0], [0], [1], [0, 0, 1, 1], [], []>} : vector<512x8xbf16>, vector<8x8xbf16>, vector<512x8xf32> -> vector<512x8xf32>
    %29 = arith.addf %20, %28 : vector<512x8xf32>
    %c64_i32 = arith.constant 64 : i32
    %30 = arith.addi %1, %c64_i32 : i32
    %c0_15 = arith.constant 0 : index
    %31 = arith.index_cast %30 : i32 to index
    %c0_16 = arith.constant 0 : index
    %32 = vector.load %arg2[%c0_15, %31, %c0_16] : memref<1x644x8xf32, #tpu.memory_space<vmem>>, vector<1x512x8xf32>
    %33 = vector.shape_cast %32 : vector<1x512x8xf32> to vector<512x8xf32>
    %34 = arith.truncf %33 : vector<512x8xf32> to vector<512x8xbf16>
    %c3 = arith.constant 3 : index
    %c0_17 = arith.constant 0 : index
    %c0_18 = arith.constant 0 : index
    %35 = vector.load %arg4[%c3, %c0_17, %c0_18] : memref<9x8x8xbf16, #tpu.memory_space<vmem>>, vector<1x8x8xbf16>
    %36 = vector.shape_cast %35 : vector<1x8x8xbf16> to vector<8x8xbf16>
    %cst_19 = arith.constant dense<0.000000e+00> : vector<512x8xf32>
    %37 = tpu.matmul %34, %36, %cst_19 {dimension_numbers = #tpu.dot_dimension_numbers<[1], [0], [0], [1], [0, 0, 1, 1], [], []>} : vector<512x8xbf16>, vector<8x8xbf16>, vector<512x8xf32> -> vector<512x8xf32>
    %38 = arith.addf %29, %37 : vector<512x8xf32>
    %c66_i32 = arith.constant 66 : i32
    %39 = arith.addi %1, %c66_i32 : i32
    %c0_20 = arith.constant 0 : index
    %40 = arith.index_cast %39 : i32 to index
    %c0_21 = arith.constant 0 : index
    %41 = vector.load %arg2[%c0_20, %40, %c0_21] : memref<1x644x8xf32, #tpu.memory_space<vmem>>, vector<1x512x8xf32>
    %42 = vector.shape_cast %41 : vector<1x512x8xf32> to vector<512x8xf32>
    %43 = arith.truncf %42 : vector<512x8xf32> to vector<512x8xbf16>
    %c4 = arith.constant 4 : index
    %c0_22 = arith.constant 0 : index
    %c0_23 = arith.constant 0 : index
    %44 = vector.load %arg4[%c4, %c0_22, %c0_23] : memref<9x8x8xbf16, #tpu.memory_space<vmem>>, vector<1x8x8xbf16>
    %45 = vector.shape_cast %44 : vector<1x8x8xbf16> to vector<8x8xbf16>
    %cst_24 = arith.constant dense<0.000000e+00> : vector<512x8xf32>
    %46 = tpu.matmul %43, %45, %cst_24 {dimension_numbers = #tpu.dot_dimension_numbers<[1], [0], [0], [1], [0, 0, 1, 1], [], []>} : vector<512x8xbf16>, vector<8x8xbf16>, vector<512x8xf32> -> vector<512x8xf32>
    %47 = arith.addf %38, %46 : vector<512x8xf32>
    %c68_i32 = arith.constant 68 : i32
    %48 = arith.addi %1, %c68_i32 : i32
    %c0_25 = arith.constant 0 : index
    %49 = arith.index_cast %48 : i32 to index
    %c0_26 = arith.constant 0 : index
    %50 = vector.load %arg2[%c0_25, %49, %c0_26] : memref<1x644x8xf32, #tpu.memory_space<vmem>>, vector<1x512x8xf32>
    %51 = vector.shape_cast %50 : vector<1x512x8xf32> to vector<512x8xf32>
    %52 = arith.truncf %51 : vector<512x8xf32> to vector<512x8xbf16>
    %c5 = arith.constant 5 : index
    %c0_27 = arith.constant 0 : index
    %c0_28 = arith.constant 0 : index
    %53 = vector.load %arg4[%c5, %c0_27, %c0_28] : memref<9x8x8xbf16, #tpu.memory_space<vmem>>, vector<1x8x8xbf16>
    %54 = vector.shape_cast %53 : vector<1x8x8xbf16> to vector<8x8xbf16>
    %cst_29 = arith.constant dense<0.000000e+00> : vector<512x8xf32>
    %55 = tpu.matmul %52, %54, %cst_29 {dimension_numbers = #tpu.dot_dimension_numbers<[1], [0], [0], [1], [0, 0, 1, 1], [], []>} : vector<512x8xbf16>, vector<8x8xbf16>, vector<512x8xf32> -> vector<512x8xf32>
    %56 = arith.addf %47, %55 : vector<512x8xf32>
    %c128_i32 = arith.constant 128 : i32
    %57 = arith.addi %1, %c128_i32 : i32
    %c0_30 = arith.constant 0 : index
    %58 = arith.index_cast %57 : i32 to index
    %c0_31 = arith.constant 0 : index
    %59 = vector.load %arg2[%c0_30, %58, %c0_31] : memref<1x644x8xf32, #tpu.memory_space<vmem>>, vector<1x512x8xf32>
    %60 = vector.shape_cast %59 : vector<1x512x8xf32> to vector<512x8xf32>
    %61 = arith.truncf %60 : vector<512x8xf32> to vector<512x8xbf16>
    %c6 = arith.constant 6 : index
    %c0_32 = arith.constant 0 : index
    %c0_33 = arith.constant 0 : index
    %62 = vector.load %arg4[%c6, %c0_32, %c0_33] : memref<9x8x8xbf16, #tpu.memory_space<vmem>>, vector<1x8x8xbf16>
    %63 = vector.shape_cast %62 : vector<1x8x8xbf16> to vector<8x8xbf16>
    %cst_34 = arith.constant dense<0.000000e+00> : vector<512x8xf32>
    %64 = tpu.matmul %61, %63, %cst_34 {dimension_numbers = #tpu.dot_dimension_numbers<[1], [0], [0], [1], [0, 0, 1, 1], [], []>} : vector<512x8xbf16>, vector<8x8xbf16>, vector<512x8xf32> -> vector<512x8xf32>
    %65 = arith.addf %56, %64 : vector<512x8xf32>
    %c130_i32 = arith.constant 130 : i32
    %66 = arith.addi %1, %c130_i32 : i32
    %c0_35 = arith.constant 0 : index
    %67 = arith.index_cast %66 : i32 to index
    %c0_36 = arith.constant 0 : index
    %68 = vector.load %arg2[%c0_35, %67, %c0_36] : memref<1x644x8xf32, #tpu.memory_space<vmem>>, vector<1x512x8xf32>
    %69 = vector.shape_cast %68 : vector<1x512x8xf32> to vector<512x8xf32>
    %70 = arith.truncf %69 : vector<512x8xf32> to vector<512x8xbf16>
    %c7 = arith.constant 7 : index
    %c0_37 = arith.constant 0 : index
    %c0_38 = arith.constant 0 : index
    %71 = vector.load %arg4[%c7, %c0_37, %c0_38] : memref<9x8x8xbf16, #tpu.memory_space<vmem>>, vector<1x8x8xbf16>
    %72 = vector.shape_cast %71 : vector<1x8x8xbf16> to vector<8x8xbf16>
    %cst_39 = arith.constant dense<0.000000e+00> : vector<512x8xf32>
    %73 = tpu.matmul %70, %72, %cst_39 {dimension_numbers = #tpu.dot_dimension_numbers<[1], [0], [0], [1], [0, 0, 1, 1], [], []>} : vector<512x8xbf16>, vector<8x8xbf16>, vector<512x8xf32> -> vector<512x8xf32>
    %74 = arith.addf %65, %73 : vector<512x8xf32>
    %c132_i32 = arith.constant 132 : i32
    %75 = arith.addi %1, %c132_i32 : i32
    %c0_40 = arith.constant 0 : index
    %76 = arith.index_cast %75 : i32 to index
    %c0_41 = arith.constant 0 : index
    %77 = vector.load %arg2[%c0_40, %76, %c0_41] : memref<1x644x8xf32, #tpu.memory_space<vmem>>, vector<1x512x8xf32>
    %78 = vector.shape_cast %77 : vector<1x512x8xf32> to vector<512x8xf32>
    %79 = arith.truncf %78 : vector<512x8xf32> to vector<512x8xbf16>
    %c8 = arith.constant 8 : index
    %c0_42 = arith.constant 0 : index
    %c0_43 = arith.constant 0 : index
    %80 = vector.load %arg4[%c8, %c0_42, %c0_43] : memref<9x8x8xbf16, #tpu.memory_space<vmem>>, vector<1x8x8xbf16>
    %81 = vector.shape_cast %80 : vector<1x8x8xbf16> to vector<8x8xbf16>
    %cst_44 = arith.constant dense<0.000000e+00> : vector<512x8xf32>
    %82 = tpu.matmul %79, %81, %cst_44 {dimension_numbers = #tpu.dot_dimension_numbers<[1], [0], [0], [1], [0, 0, 1, 1], [], []>} : vector<512x8xbf16>, vector<8x8xbf16>, vector<512x8xf32> -> vector<512x8xf32>
    %83 = arith.addf %74, %82 : vector<512x8xf32>
    %c0_45 = arith.constant 0 : index
    %c0_46 = arith.constant 0 : index
    %84 = vector.load %arg5[%c0_45, %c0_46] : memref<1x8xf32, #tpu.memory_space<vmem>>, vector<1x8xf32>
    %85 = vector.broadcast %84 : vector<1x8xf32> to vector<512x8xf32>
    %86 = arith.mulf %83, %85 : vector<512x8xf32>
    %c0_47 = arith.constant 0 : index
    %c0_48 = arith.constant 0 : index
    %87 = vector.load %arg6[%c0_47, %c0_48] : memref<1x8xf32, #tpu.memory_space<vmem>>, vector<1x8xf32>
    %88 = vector.broadcast %87 : vector<1x8xf32> to vector<512x8xf32>
    %89 = arith.addf %86, %88 : vector<512x8xf32>
    %cst_49 = arith.constant 0.000000e+00 : f32
    %90 = vector.broadcast %cst_49 : f32 to vector<512x8xf32>
    %91 = arith.maximumf %89, %90 : vector<512x8xf32>
    %92 = arith.truncf %91 : vector<512x8xf32> to vector<512x8xbf16>
    %c0_50 = arith.constant 0 : index
    %c0_51 = arith.constant 0 : index
    %93 = vector.load %arg7[%c0_50, %c0_51] : memref<8x32xbf16, #tpu.memory_space<vmem>>, vector<8x32xbf16>
    %cst_52 = arith.constant dense<0.000000e+00> : vector<512x32xf32>
    %94 = tpu.matmul %92, %93, %cst_52 {dimension_numbers = #tpu.dot_dimension_numbers<[1], [0], [0], [1], [0, 0, 1, 1], [], []>} : vector<512x8xbf16>, vector<8x32xbf16>, vector<512x32xf32> -> vector<512x32xf32>
    %c0_53 = arith.constant 0 : index
    %c0_54 = arith.constant 0 : index
    %95 = vector.load %arg8[%c0_53, %c0_54] : memref<1x32xf32, #tpu.memory_space<vmem>>, vector<1x32xf32>
    %96 = vector.broadcast %95 : vector<1x32xf32> to vector<512x32xf32>
    %97 = arith.mulf %94, %96 : vector<512x32xf32>
    %c0_55 = arith.constant 0 : index
    %c0_56 = arith.constant 0 : index
    %98 = vector.load %arg9[%c0_55, %c0_56] : memref<1x32xf32, #tpu.memory_space<vmem>>, vector<1x32xf32>
    %99 = vector.broadcast %98 : vector<1x32xf32> to vector<512x32xf32>
    %100 = arith.addf %97, %99 : vector<512x32xf32>
    %c0_57 = arith.constant 0 : index
    %c0_58 = arith.constant 0 : index
    %c0_59 = arith.constant 0 : index
    %101 = vector.load %arg3[%c0_57, %c0_58, %c0_59] : memref<1x512x16xbf16, #tpu.memory_space<vmem>>, vector<1x512x16xbf16>
    %102 = vector.shape_cast %101 : vector<1x512x16xbf16> to vector<512x16xbf16>
    %c0_60 = arith.constant 0 : index
    %c0_61 = arith.constant 0 : index
    %103 = vector.load %arg10[%c0_60, %c0_61] : memref<16x32xbf16, #tpu.memory_space<vmem>>, vector<16x32xbf16>
    %cst_62 = arith.constant dense<0.000000e+00> : vector<512x32xf32>
    %104 = tpu.matmul %102, %103, %cst_62 {dimension_numbers = #tpu.dot_dimension_numbers<[1], [0], [0], [1], [0, 0, 1, 1], [], []>} : vector<512x16xbf16>, vector<16x32xbf16>, vector<512x32xf32> -> vector<512x32xf32>
    %c0_63 = arith.constant 0 : index
    %c0_64 = arith.constant 0 : index
    %105 = vector.load %arg11[%c0_63, %c0_64] : memref<1x32xf32, #tpu.memory_space<vmem>>, vector<1x32xf32>
    %106 = vector.broadcast %105 : vector<1x32xf32> to vector<512x32xf32>
    %107 = arith.mulf %104, %106 : vector<512x32xf32>
    %c0_65 = arith.constant 0 : index
    %c0_66 = arith.constant 0 : index
    %108 = vector.load %arg12[%c0_65, %c0_66] : memref<1x32xf32, #tpu.memory_space<vmem>>, vector<1x32xf32>
    %109 = vector.broadcast %108 : vector<1x32xf32> to vector<512x32xf32>
    %110 = arith.addf %107, %109 : vector<512x32xf32>
    %111 = arith.addf %100, %110 : vector<512x32xf32>
    %cst_67 = arith.constant 0.000000e+00 : f32
    %112 = vector.broadcast %cst_67 : f32 to vector<512x32xf32>
    %113 = arith.maximumf %111, %112 : vector<512x32xf32>
    %c0_68 = arith.constant 0 : index
    %c0_69 = arith.constant 0 : index
    %c0_70 = arith.constant 0 : index
    %114 = vector.load %arg13[%c0_68, %c0_69, %c0_70] : memref<1x512x32xf32, #tpu.memory_space<vmem>>, vector<1x512x32xf32>
    %115 = vector.shape_cast %114 : vector<1x512x32xf32> to vector<512x32xf32>
    %116 = vector.shape_cast %113 : vector<512x32xf32> to vector<1x512x32xf32>
    tpu.vector_store %arg13[%c0_68, %c0_69, %c0_70], %116 {strides = array<i32>} : memref<1x512x32xf32, #tpu.memory_space<vmem>>, vector<1x512x32xf32>,
    return
  }
  func.func @transform_0(%arg0: i32, %arg1: i32) -> (i32, i32, i32) {
    %c0_i32 = arith.constant 0 : i32
    %c0_i32_0 = arith.constant 0 : i32
    %c0_i32_1 = arith.constant 0 : i32
    return %arg0, %c0_i32, %c0_i32_0 : i32, i32, i32
  }
  func.func @transform_1(%arg0: i32, %arg1: i32) -> (i32, i32, i32) {
    %c0_i32 = arith.constant 0 : i32
    %c0_i32_0 = arith.constant 0 : i32
    return %arg0, %arg1, %c0_i32 : i32, i32, i32
  }
  func.func @transform_2(%arg0: i32, %arg1: i32) -> (i32, i32, i32) {
    %c0_i32 = arith.constant 0 : i32
    %c0_i32_0 = arith.constant 0 : i32
    %c0_i32_1 = arith.constant 0 : i32
    %c0_i32_2 = arith.constant 0 : i32
    return %c0_i32, %c0_i32_0, %c0_i32_1 : i32, i32, i32
  }
  func.func @transform_3(%arg0: i32, %arg1: i32) -> (i32, i32) {
    %c0_i32 = arith.constant 0 : i32
    %c0_i32_0 = arith.constant 0 : i32
    %c0_i32_1 = arith.constant 0 : i32
    return %c0_i32, %c0_i32_0 : i32, i32
  }
  func.func @transform_4(%arg0: i32, %arg1: i32) -> (i32, i32) {
    %c0_i32 = arith.constant 0 : i32
    %c0_i32_0 = arith.constant 0 : i32
    %c0_i32_1 = arith.constant 0 : i32
    return %c0_i32, %c0_i32_0 : i32, i32
  }
  func.func @transform_5(%arg0: i32, %arg1: i32) -> (i32, i32) {
    %c0_i32 = arith.constant 0 : i32
    %c0_i32_0 = arith.constant 0 : i32
    %c0_i32_1 = arith.constant 0 : i32
    return %c0_i32, %c0_i32_0 : i32, i32
  }
  func.func @transform_6(%arg0: i32, %arg1: i32) -> (i32, i32) {
    %c0_i32 = arith.constant 0 : i32
    %c0_i32_0 = arith.constant 0 : i32
    %c0_i32_1 = arith.constant 0 : i32
    return %c0_i32, %c0_i32_0 : i32, i32
  }
  func.func @transform_7(%arg0: i32, %arg1: i32) -> (i32, i32) {
    %c0_i32 = arith.constant 0 : i32
    %c0_i32_0 = arith.constant 0 : i32
    %c0_i32_1 = arith.constant 0 : i32
    return %c0_i32, %c0_i32_0 : i32, i32
  }
  func.func @transform_8(%arg0: i32, %arg1: i32) -> (i32, i32) {
    %c0_i32 = arith.constant 0 : i32
    %c0_i32_0 = arith.constant 0 : i32
    %c0_i32_1 = arith.constant 0 : i32
    return %c0_i32, %c0_i32_0 : i32, i32
  }
  func.func @transform_9(%arg0: i32, %arg1: i32) -> (i32, i32) {
    %c0_i32 = arith.constant 0 : i32
    %c0_i32_0 = arith.constant 0 : i32
    %c0_i32_1 = arith.constant 0 : i32
    return %c0_i32, %c0_i32_0 : i32, i32
  }
  func.func @transform_10(%arg0: i32, %arg1: i32) -> (i32, i32) {
    %c0_i32 = arith.constant 0 : i32
    %c0_i32_0 = arith.constant 0 : i32
    %c0_i32_1 = arith.constant 0 : i32
    return %c0_i32, %c0_i32_0 : i32, i32
  }
  func.func @transform_11(%arg0: i32, %arg1: i32) -> (i32, i32, i32) {
    %c0_i32 = arith.constant 0 : i32
    %c0_i32_0 = arith.constant 0 : i32
    return %arg0, %arg1, %c0_i32 : i32, i32, i32
  }
}

</mosaic_0001>

<llo_original>
// kernel: bottleneck_forward.2
$region0: #{bottleneck_forward.2}
  #allocation0 [shape = 'u32[]', space=smem, size = 0x4, offset = 0x4, fixed_abs, tag = 'smem constant byte address 0x4 - core index']
  #allocation1 [shape = 'u32[144,128]{1,0:T(1,128)}', space=vmem, size = 0x12000, scoped, tag = 'internal scratch']
  %s0 = inlined_call_operand.vmem [shape: bf16[512,16], index: 0, kind: input, shape index: {}]
  %s1 = inlined_call_operand.vmem [shape: bf16[16,8], index: 1, kind: input, shape index: {}]
  %s2 = inlined_call_operand.vmem [shape: f32[1,8], index: 2, kind: input, shape index: {}]
  %s3 = inlined_call_operand.vmem [shape: f32[1,8], index: 3, kind: input, shape index: {}]
  %s4 = inlined_call_operand.vmem [shape: bf16[512,8], index: 4, kind: output, shape index: {}]
  %s5 = sld [smem:[#allocation0]]
  $region26: #{bottleneck_forward.2} parent=0
    _
  %s7 = ssub.s32 1, %s5
  %s8 = scalar_select 0, %s7, %s5
  // Predicated region
  $region2: #{bottleneck_forward.2} parent=0 // pred_check
    _
  $region3: #{bottleneck_forward.2} parent=0 // pred_check_branch
    %10 = sbr.rel (0) target = $region5
  $region4: #{bottleneck_forward.2} parent=0 // pred_region
    _
  $region5: #{bottleneck_forward.2} parent=0 // pred_fallthru
    _
  // Predicated region
  $region6: #{bottleneck_forward.2} parent=0 // pred_check
    _
  $region7: #{bottleneck_forward.2} parent=0 // pred_check_branch
    %12 = sbr.rel (0) target = $region9
  $region8: #{bottleneck_forward.2} parent=0 // pred_region
    _
  $region9: #{bottleneck_forward.2} parent=0 // pred_fallthru
    _
  // Predicated region
  $region10: #{bottleneck_forward.2} parent=0 // pred_check
    _
  $region11: #{bottleneck_forward.2} parent=0 // pred_check_branch
    %14 = sbr.rel (0) target = $region13
  $region12: #{bottleneck_forward.2} parent=0 // pred_region
    _
  $region13: #{bottleneck_forward.2} parent=0 // pred_fallthru
    _
  // Predicated region
  $region14: #{bottleneck_forward.2} parent=0 // pred_check
    _
  $region15: #{bottleneck_forward.2} parent=0 // pred_check_branch
    %16 = sbr.rel (0) target = $region17
  $region16: #{bottleneck_forward.2} parent=0 // pred_region
    _
  $region17: #{bottleneck_forward.2} parent=0 // pred_fallthru
    _
  %v18 = vld [vmem:[%s0] sm:$0xf]
  %v19 = vld [vmem:[%s0 + $0x4] sm:$0xf]
  %v20 = vld [vmem:[%s0 + $0x8] sm:$0xf]
  %v21 = vld [vmem:[%s0 + $0xc] sm:$0xf]
  %v22 = vld [vmem:[%s0 + $0x10] sm:$0xf]
  %v23 = vld [vmem:[%s0 + $0x14] sm:$0xf]
  %v24 = vld [vmem:[%s0 + $0x18] sm:$0xf]
  %v25 = vld [vmem:[%s0 + $0x1c] sm:$0xf]
  %v26 = vld [vmem:[%s0 + $0x20] sm:$0xf]
  %v27 = vld [vmem:[%s0 + $0x24] sm:$0xf]
  %v28 = vld [vmem:[%s0 + $0x28] sm:$0xf]
  %v29 = vld [vmem:[%s0 + $0x2c] sm:$0xf]
  %v30 = vld [vmem:[%s0 + $0x30] sm:$0xf]
  %v31 = vld [vmem:[%s0 + $0x34] sm:$0xf]
  %v32 = vld [vmem:[%s0 + $0x38] sm:$0xf]
  %v33 = vld [vmem:[%s0 + $0x3c] sm:$0xf]
  %v34 = vld [vmem:[%s0 + $0x40] sm:$0xf]
  %v35 = vld [vmem:[%s0 + $0x44] sm:$0xf]
  %v36 = vld [vmem:[%s0 + $0x48] sm:$0xf]
  %v37 = vld [vmem:[%s0 + $0x4c] sm:$0xf]
  %v38 = vld [vmem:[%s0 + $0x50] sm:$0xf]
  %v39 = vld [vmem:[%s0 + $0x54] sm:$0xf]
  %v40 = vld [vmem:[%s0 + $0x58] sm:$0xf]
  %v41 = vld [vmem:[%s0 + $0x5c] sm:$0xf]
  %v42 = vld [vmem:[%s0 + $0x60] sm:$0xf]
  %v43 = vld [vmem:[%s0 + $0x64] sm:$0xf]
  %v44 = vld [vmem:[%s0 + $0x68] sm:$0xf]
  %v45 = vld [vmem:[%s0 + $0x6c] sm:$0xf]
  %v46 = vld [vmem:[%s0 + $0x70] sm:$0xf]
  %v47 = vld [vmem:[%s0 + $0x74] sm:$0xf]
  %v48 = vld [vmem:[%s0 + $0x78] sm:$0xf]
  %v49 = vld [vmem:[%s0 + $0x7c] sm:$0xf]
  %v50 = vld [vmem:[%s0 + $0x80] sm:$0xf]
  %v51 = vld [vmem:[%s0 + $0x84] sm:$0xf]
  %v52 = vld [vmem:[%s0 + $0x88] sm:$0xf]
  %v53 = vld [vmem:[%s0 + $0x8c] sm:$0xf]
  %v54 = vld [vmem:[%s0 + $0x90] sm:$0xf]
  %v55 = vld [vmem:[%s0 + $0x94] sm:$0xf]
  %v56 = vld [vmem:[%s0 + $0x98] sm:$0xf]
  %v57 = vld [vmem:[%s0 + $0x9c] sm:$0xf]
  %v58 = vld [vmem:[%s0 + $0xa0] sm:$0xf]
  %v59 = vld [vmem:[%s0 + $0xa4] sm:$0xf]
  %v60 = vld [vmem:[%s0 + $0xa8] sm:$0xf]
  %v61 = vld [vmem:[%s0 + $0xac] sm:$0xf]
  %v62 = vld [vmem:[%s0 + $0xb0] sm:$0xf]
  %v63 = vld [vmem:[%s0 + $0xb4] sm:$0xf]
  %v64 = vld [vmem:[%s0 + $0xb8] sm:$0xf]
  %v65 = vld [vmem:[%s0 + $0xbc] sm:$0xf]
  %v66 = vld [vmem:[%s0 + $0xc0] sm:$0xf]
  %v67 = vld [vmem:[%s0 + $0xc4] sm:$0xf]
  %v68 = vld [vmem:[%s0 + $0xc8] sm:$0xf]
  %v69 = vld [vmem:[%s0 + $0xcc] sm:$0xf]
  %v70 = vld [vmem:[%s0 + $0xd0] sm:$0xf]
  %v71 = vld [vmem:[%s0 + $0xd4] sm:$0xf]
  %v72 = vld [vmem:[%s0 + $0xd8] sm:$0xf]
  %v73 = vld [vmem:[%s0 + $0xdc] sm:$0xf]
  %v74 = vld [vmem:[%s0 + $0xe0] sm:$0xf]
  %v75 = vld [vmem:[%s0 + $0xe4] sm:$0xf]
  %v76 = vld [vmem:[%s0 + $0xe8] sm:$0xf]
  %v77 = vld [vmem:[%s0 + $0xec] sm:$0xf]
  %v78 = vld [vmem:[%s0 + $0xf0] sm:$0xf]
  %v79 = vld [vmem:[%s0 + $0xf4] sm:$0xf]
  %v80 = vld [vmem:[%s0 + $0xf8] sm:$0xf]
  %v81 = vld [vmem:[%s0 + $0xfc] sm:$0xf]
  %v82 = vld [vmem:[%s1] sm:$0xf]
  %v83 = vld [vmem:[%s1 + $0x4] sm:$0xf]
  %v148 = vunpack.c.l.b16 %v18
  %v149 = vunpack.c.l.b16 %v19
  %v150 = vunpack.c.l.b16 %v20
  %v151 = vunpack.c.l.b16 %v21
  %v152 = vunpack.c.l.b16 %v22
  %v153 = vunpack.c.l.b16 %v23
  %v154 = vunpack.c.l.b16 %v24
  %v155 = vunpack.c.l.b16 %v25
  %v156 = vunpack.c.l.b16 %v26
  %v157 = vunpack.c.l.b16 %v27
  %v158 = vunpack.c.l.b16 %v28
  %v159 = vunpack.c.l.b16 %v29
  %v160 = vunpack.c.l.b16 %v30
  %v161 = vunpack.c.l.b16 %v31
  %v162 = vunpack.c.l.b16 %v32
  %v163 = vunpack.c.l.b16 %v33
  %v164 = vunpack.c.l.b16 %v34
  %v165 = vunpack.c.l.b16 %v35
  %v166 = vunpack.c.l.b16 %v36
  %v167 = vunpack.c.l.b16 %v37
  %v168 = vunpack.c.l.b16 %v38
  %v169 = vunpack.c.l.b16 %v39
  %v170 = vunpack.c.l.b16 %v40
  %v171 = vunpack.c.l.b16 %v41
  %v172 = vunpack.c.l.b16 %v42
  %v173 = vunpack.c.l.b16 %v43
  %v174 = vunpack.c.l.b16 %v44
  %v175 = vunpack.c.l.b16 %v45
  %v176 = vunpack.c.l.b16 %v46
  %v177 = vunpack.c.l.b16 %v47
  %v178 = vunpack.c.l.b16 %v48
  %v179 = vunpack.c.l.b16 %v49
  %v180 = vunpack.c.l.b16 %v50
  %v181 = vunpack.c.l.b16 %v51
  %v182 = vunpack.c.l.b16 %v52
  %v183 = vunpack.c.l.b16 %v53
  %v184 = vunpack.c.l.b16 %v54
  %v185 = vunpack.c.l.b16 %v55
  %v186 = vunpack.c.l.b16 %v56
  %v187 = vunpack.c.l.b16 %v57
  %v188 = vunpack.c.l.b16 %v58
  %v189 = vunpack.c.l.b16 %v59
  %v190 = vunpack.c.l.b16 %v60
  %v191 = vunpack.c.l.b16 %v61
  %v192 = vunpack.c.l.b16 %v62
  %v193 = vunpack.c.l.b16 %v63
  %v194 = vunpack.c.l.b16 %v64
  %v195 = vunpack.c.l.b16 %v65
  %v196 = vunpack.c.l.b16 %v66
  %v197 = vunpack.c.l.b16 %v67
  %v198 = vunpack.c.l.b16 %v68
  %v199 = vunpack.c.l.b16 %v69
  %v200 = vunpack.c.l.b16 %v70
  %v201 = vunpack.c.l.b16 %v71
  %v202 = vunpack.c.l.b16 %v72
  %v203 = vunpack.c.l.b16 %v73
  %v204 = vunpack.c.l.b16 %v74
  %v205 = vunpack.c.l.b16 %v75
  %v206 = vunpack.c.l.b16 %v76
  %v207 = vunpack.c.l.b16 %v77
  %v208 = vunpack.c.l.b16 %v78
  %v209 = vunpack.c.l.b16 %v79
  %v210 = vunpack.c.l.b16 %v80
  %v211 = vunpack.c.l.b16 %v81
  %v212 = vpack.c.b16 %v149, %v148
  %v213 = vpack.c.b16 %v151, %v150
  %v214 = vpack.c.b16 %v153, %v152
  %v215 = vpack.c.b16 %v155, %v154
  %v216 = vpack.c.b16 %v157, %v156
  %v217 = vpack.c.b16 %v159, %v158
  %v218 = vpack.c.b16 %v161, %v160
  %v219 = vpack.c.b16 %v163, %v162
  %v220 = vpack.c.b16 %v165, %v164
  %v221 = vpack.c.b16 %v167, %v166
  %v222 = vpack.c.b16 %v169, %v168
  %v223 = vpack.c.b16 %v171, %v170
  %v224 = vpack.c.b16 %v173, %v172
  %v225 = vpack.c.b16 %v175, %v174
  %v226 = vpack.c.b16 %v177, %v176
  %v227 = vpack.c.b16 %v179, %v178
  %v228 = vpack.c.b16 %v181, %v180
  %v229 = vpack.c.b16 %v183, %v182
  %v230 = vpack.c.b16 %v185, %v184
  %v231 = vpack.c.b16 %v187, %v186
  %v232 = vpack.c.b16 %v189, %v188
  %v233 = vpack.c.b16 %v191, %v190
  %v234 = vpack.c.b16 %v193, %v192
  %v235 = vpack.c.b16 %v195, %v194
  %v236 = vpack.c.b16 %v197, %v196
  %v237 = vpack.c.b16 %v199, %v198
  %v238 = vpack.c.b16 %v201, %v200
  %v239 = vpack.c.b16 %v203, %v202
  %v240 = vpack.c.b16 %v205, %v204
  %v241 = vpack.c.b16 %v207, %v206
  %v242 = vpack.c.b16 %v209, %v208
  %v243 = vpack.c.b16 %v211, %v210
  %v246 = vunpack.c.l.b16 %v82
  %v247 = vunpack.c.l.b16 %v83
  %v248 = vpack.c.b16 %v247, %v246
  %vm250 = vcmask 130048
  %v252 = vsel %vm250, %v212, 0
  %v255 = vsel %vm250, %v213, 0
  %v258 = vsel %vm250, %v214, 0
  %v261 = vsel %vm250, %v215, 0
  %v264 = vsel %vm250, %v216, 0
  %v267 = vsel %vm250, %v217, 0
  %v270 = vsel %vm250, %v218, 0
  %v273 = vsel %vm250, %v219, 0
  %v276 = vsel %vm250, %v220, 0
  %v279 = vsel %vm250, %v221, 0
  %v282 = vsel %vm250, %v222, 0
  %v285 = vsel %vm250, %v223, 0
  %v288 = vsel %vm250, %v224, 0
  %v291 = vsel %vm250, %v225, 0
  %v294 = vsel %vm250, %v226, 0
  %v297 = vsel %vm250, %v227, 0
  %v300 = vsel %vm250, %v228, 0
  %v303 = vsel %vm250, %v229, 0
  %v306 = vsel %vm250, %v230, 0
  %v309 = vsel %vm250, %v231, 0
  %v312 = vsel %vm250, %v232, 0
  %v315 = vsel %vm250, %v233, 0
  %v318 = vsel %vm250, %v234, 0
  %v321 = vsel %vm250, %v235, 0
  %v324 = vsel %vm250, %v236, 0
  %v327 = vsel %vm250, %v237, 0
  %v330 = vsel %vm250, %v238, 0
  %v333 = vsel %vm250, %v239, 0
  %v336 = vsel %vm250, %v240, 0
  %v339 = vsel %vm250, %v241, 0
  %v342 = vsel %vm250, %v242, 0
  %v345 = vsel %vm250, %v243, 0
  %347 = vmatprep.subr.bf16.mxu0 0
  %348 = vmatpush1.bf16.msra.mxu0 0
  %349 = vmatprep.subr.bf16.mxu0 0
  %350 = vmatpush1.bf16.msra.mxu0 0
  %351 = vmatprep.subr.bf16.mxu0 0
  %352 = vmatpush1.bf16.msra.mxu0 0
  %353 = vmatprep.subr.bf16.mxu0 0
  %354 = vmatpush1.bf16.msra.mxu0 0
  %355 = vmatprep.subr.bf16.mxu0 0
  %356 = vmatpush1.bf16.msra.mxu0 0
  %357 = vmatprep.subr.bf16.mxu0 0
  %358 = vmatpush1.bf16.msra.mxu0 0
  %359 = vmatprep.subr.bf16.mxu0 0
  %360 = vmatpush1.bf16.msra.mxu0 0
  %361 = vmatprep.subr.bf16.mxu0 0
  %362 = vmatpush1.bf16.msra.mxu0 %v248
  %363 = vmatprep.subr.bf16.mxu0 0
  %364 = vmatpush2.bf16.msra.mxu0 0
  %365 = vmatprep.subr.bf16.mxu0 0
  %366 = vmatpush2.bf16.msra.mxu0 0
  %367 = vmatprep.subr.bf16.mxu0 0
  %368 = vmatpush2.bf16.msra.mxu0 0
  %369 = vmatprep.subr.bf16.mxu0 0
  %370 = vmatpush2.bf16.msra.mxu0 0
  %371 = vmatprep.subr.bf16.mxu0 0
  %372 = vmatpush2.bf16.msra.mxu0 0
  %373 = vmatprep.subr.bf16.mxu0 0
  %374 = vmatpush2.bf16.msra.mxu0 0
  %375 = vmatprep.subr.bf16.mxu0 0
  %376 = vmatpush2.bf16.msra.mxu0 0
  %377 = vmatprep.subr.bf16.mxu0 0
  %378 = vmatpush2.bf16.msra.mxu0 0
  %379 = vmatprep.mubr.bf16.mxu0 0
  %380 = vmatmul.mubr.bf16.gmra.mxu0 %v252
  %v381 = vpop.f32.mrf.mxu0
  %v382 = vadd.f32 0.0, %v381
  %v383 = vpop.f32.mrf.mxu0
  %v384 = vpop.f32.mrf.mxu0
  %v385 = vadd.f32 0.0, %v384
  %v386 = vpop.f32.mrf.mxu0
  %387 = vmatprep.mubr.bf16.mxu0 0
  %388 = vmatmul.mubr.bf16.gmra.mxu0 %v255
  %v389 = vpop.f32.mrf.mxu0
  %v390 = vadd.f32 0.0, %v389
  %v391 = vpop.f32.mrf.mxu0
  %v392 = vpop.f32.mrf.mxu0
  %v393 = vadd.f32 0.0, %v392
  %v394 = vpop.f32.mrf.mxu0
  %395 = vmatprep.mubr.bf16.mxu0 0
  %396 = vmatmul.mubr.bf16.gmra.mxu0 %v258
  %v397 = vpop.f32.mrf.mxu0
  %v398 = vadd.f32 0.0, %v397
  %v399 = vpop.f32.mrf.mxu0
  %v400 = vpop.f32.mrf.mxu0
  %v401 = vadd.f32 0.0, %v400
  %v402 = vpop.f32.mrf.mxu0
  %403 = vmatprep.mubr.bf16.mxu0 0
  %404 = vmatmul.mubr.bf16.gmra.mxu0 %v261
  %v405 = vpop.f32.mrf.mxu0
  %v406 = vadd.f32 0.0, %v405
  %v407 = vpop.f32.mrf.mxu0
  %v408 = vpop.f32.mrf.mxu0
  %v409 = vadd.f32 0.0, %v408
  %v410 = vpop.f32.mrf.mxu0
  %411 = vmatprep.mubr.bf16.mxu0 0
  %412 = vmatmul.mubr.bf16.gmra.mxu0 %v264
  %v413 = vpop.f32.mrf.mxu0
  %v414 = vadd.f32 0.0, %v413
  %v415 = vpop.f32.mrf.mxu0
  %v416 = vpop.f32.mrf.mxu0
  %v417 = vadd.f32 0.0, %v416
  %v418 = vpop.f32.mrf.mxu0
  %419 = vmatprep.mubr.bf16.mxu0 0
  %420 = vmatmul.mubr.bf16.gmra.mxu0 %v267
  %v421 = vpop.f32.mrf.mxu0
  %v422 = vadd.f32 0.0, %v421
  %v423 = vpop.f32.mrf.mxu0
  %v424 = vpop.f32.mrf.mxu0
  %v425 = vadd.f32 0.0, %v424
  %v426 = vpop.f32.mrf.mxu0
  %427 = vmatprep.mubr.bf16.mxu0 0
  %428 = vmatmul.mubr.bf16.gmra.mxu0 %v270
  %v429 = vpop.f32.mrf.mxu0
  %v430 = vadd.f32 0.0, %v429
  %v431 = vpop.f32.mrf.mxu0
  %v432 = vpop.f32.mrf.mxu0
  %v433 = vadd.f32 0.0, %v432
  %v434 = vpop.f32.mrf.mxu0
  %435 = vmatprep.mubr.bf16.mxu0 0
  %436 = vmatmul.mubr.bf16.gmra.mxu0 %v273
  %v437 = vpop.f32.mrf.mxu0
  %v438 = vadd.f32 0.0, %v437
  %v439 = vpop.f32.mrf.mxu0
  %v440 = vpop.f32.mrf.mxu0
  %v441 = vadd.f32 0.0, %v440
  %v442 = vpop.f32.mrf.mxu0
  %443 = vmatprep.mubr.bf16.mxu0 0
  %444 = vmatmul.mubr.bf16.gmra.mxu0 %v276
  %v445 = vpop.f32.mrf.mxu0
  %v446 = vadd.f32 0.0, %v445
  %v447 = vpop.f32.mrf.mxu0
  %v448 = vpop.f32.mrf.mxu0
  %v449 = vadd.f32 0.0, %v448
  %v450 = vpop.f32.mrf.mxu0
  %451 = vmatprep.mubr.bf16.mxu0 0
  %452 = vmatmul.mubr.bf16.gmra.mxu0 %v279
  %v453 = vpop.f32.mrf.mxu0
  %v454 = vadd.f32 0.0, %v453
  %v455 = vpop.f32.mrf.mxu0
  %v456 = vpop.f32.mrf.mxu0
  %v457 = vadd.f32 0.0, %v456
  %v458 = vpop.f32.mrf.mxu0
  %459 = vmatprep.mubr.bf16.mxu0 0
  %460 = vmatmul.mubr.bf16.gmra.mxu0 %v282
  %v461 = vpop.f32.mrf.mxu0
  %v462 = vadd.f32 0.0, %v461
  %v463 = vpop.f32.mrf.mxu0
  %v464 = vpop.f32.mrf.mxu0
  %v465 = vadd.f32 0.0, %v464
  %v466 = vpop.f32.mrf.mxu0
  %467 = vmatprep.mubr.bf16.mxu0 0
  %468 = vmatmul.mubr.bf16.gmra.mxu0 %v285
  %v469 = vpop.f32.mrf.mxu0
  %v470 = vadd.f32 0.0, %v469
  %v471 = vpop.f32.mrf.mxu0
  %v472 = vpop.f32.mrf.mxu0
  %v473 = vadd.f32 0.0, %v472
  %v474 = vpop.f32.mrf.mxu0
  %475 = vmatprep.mubr.bf16.mxu0 0
  %476 = vmatmul.mubr.bf16.gmra.mxu0 %v288
  %v477 = vpop.f32.mrf.mxu0
  %v478 = vadd.f32 0.0, %v477
  %v479 = vpop.f32.mrf.mxu0
  %v480 = vpop.f32.mrf.mxu0
  %v481 = vadd.f32 0.0, %v480
  %v482 = vpop.f32.mrf.mxu0
  %483 = vmatprep.mubr.bf16.mxu0 0
  %484 = vmatmul.mubr.bf16.gmra.mxu0 %v291
  %v485 = vpop.f32.mrf.mxu0
  %v486 = vadd.f32 0.0, %v485
  %v487 = vpop.f32.mrf.mxu0
  %v488 = vpop.f32.mrf.mxu0
  %v489 = vadd.f32 0.0, %v488
  %v490 = vpop.f32.mrf.mxu0
  %491 = vmatprep.mubr.bf16.mxu0 0
  %492 = vmatmul.mubr.bf16.gmra.mxu0 %v294
  %v493 = vpop.f32.mrf.mxu0
  %v494 = vadd.f32 0.0, %v493
  %v495 = vpop.f32.mrf.mxu0
  %v496 = vpop.f32.mrf.mxu0
  %v497 = vadd.f32 0.0, %v496
  %v498 = vpop.f32.mrf.mxu0
  %499 = vmatprep.mubr.bf16.mxu0 0
  %500 = vmatmul.mubr.bf16.gmra.mxu0 %v297
  %v501 = vpop.f32.mrf.mxu0
  %v502 = vadd.f32 0.0, %v501
  %v503 = vpop.f32.mrf.mxu0
  %v504 = vpop.f32.mrf.mxu0
  %v505 = vadd.f32 0.0, %v504
  %v506 = vpop.f32.mrf.mxu0
  %507 = vmatprep.mubr.bf16.mxu0 0
  %508 = vmatmul.mubr.bf16.gmra.mxu0 %v300
  %v509 = vpop.f32.mrf.mxu0
  %v510 = vadd.f32 0.0, %v509
  %v511 = vpop.f32.mrf.mxu0
  %v512 = vpop.f32.mrf.mxu0
  %v513 = vadd.f32 0.0, %v512
  %v514 = vpop.f32.mrf.mxu0
  %515 = vmatprep.mubr.bf16.mxu0 0
  %516 = vmatmul.mubr.bf16.gmra.mxu0 %v303
  %v517 = vpop.f32.mrf.mxu0
  %v518 = vadd.f32 0.0, %v517
  %v519 = vpop.f32.mrf.mxu0
  %v520 = vpop.f32.mrf.mxu0
  %v521 = vadd.f32 0.0, %v520
  %v522 = vpop.f32.mrf.mxu0
  %523 = vmatprep.mubr.bf16.mxu0 0
  %524 = vmatmul.mubr.bf16.gmra.mxu0 %v306
  %v525 = vpop.f32.mrf.mxu0
  %v526 = vadd.f32 0.0, %v525
  %v527 = vpop.f32.mrf.mxu0
  %v528 = vpop.f32.mrf.mxu0
  %v529 = vadd.f32 0.0, %v528
  %v530 = vpop.f32.mrf.mxu0
  %531 = vmatprep.mubr.bf16.mxu0 0
  %532 = vmatmul.mubr.bf16.gmra.mxu0 %v309
  %v533 = vpop.f32.mrf.mxu0
  %v534 = vadd.f32 0.0, %v533
  %v535 = vpop.f32.mrf.mxu0
  %v536 = vpop.f32.mrf.mxu0
  %v537 = vadd.f32 0.0, %v536
  %v538 = vpop.f32.mrf.mxu0
  %539 = vmatprep.mubr.bf16.mxu0 0
  %540 = vmatmul.mubr.bf16.gmra.mxu0 %v312
  %v541 = vpop.f32.mrf.mxu0
  %v542 = vadd.f32 0.0, %v541
  %v543 = vpop.f32.mrf.mxu0
  %v544 = vpop.f32.mrf.mxu0
  %v545 = vadd.f32 0.0, %v544
  %v546 = vpop.f32.mrf.mxu0
  %547 = vmatprep.mubr.bf16.mxu0 0
  %548 = vmatmul.mubr.bf16.gmra.mxu0 %v315
  %v549 = vpop.f32.mrf.mxu0
  %v550 = vadd.f32 0.0, %v549
  %v551 = vpop.f32.mrf.mxu0
  %v552 = vpop.f32.mrf.mxu0
  %v553 = vadd.f32 0.0, %v552
  %v554 = vpop.f32.mrf.mxu0
  %555 = vmatprep.mubr.bf16.mxu0 0
  %556 = vmatmul.mubr.bf16.gmra.mxu0 %v318
  %v557 = vpop.f32.mrf.mxu0
  %v558 = vadd.f32 0.0, %v557
  %v559 = vpop.f32.mrf.mxu0
  %v560 = vpop.f32.mrf.mxu0
  %v561 = vadd.f32 0.0, %v560
  %v562 = vpop.f32.mrf.mxu0
  %563 = vmatprep.mubr.bf16.mxu0 0
  %564 = vmatmul.mubr.bf16.gmra.mxu0 %v321
  %v565 = vpop.f32.mrf.mxu0
  %v566 = vadd.f32 0.0, %v565
  %v567 = vpop.f32.mrf.mxu0
  %v568 = vpop.f32.mrf.mxu0
  %v569 = vadd.f32 0.0, %v568
  %v570 = vpop.f32.mrf.mxu0
  %571 = vmatprep.mubr.bf16.mxu0 0
  %572 = vmatmul.mubr.bf16.gmra.mxu0 %v324
  %v573 = vpop.f32.mrf.mxu0
  %v574 = vadd.f32 0.0, %v573
  %v575 = vpop.f32.mrf.mxu0
  %v576 = vpop.f32.mrf.mxu0
  %v577 = vadd.f32 0.0, %v576
  %v578 = vpop.f32.mrf.mxu0
  %579 = vmatprep.mubr.bf16.mxu0 0
  %580 = vmatmul.mubr.bf16.gmra.mxu0 %v327
  %v581 = vpop.f32.mrf.mxu0
  %v582 = vadd.f32 0.0, %v581
  %v583 = vpop.f32.mrf.mxu0
  %v584 = vpop.f32.mrf.mxu0
  %v585 = vadd.f32 0.0, %v584
  %v586 = vpop.f32.mrf.mxu0
  %587 = vmatprep.mubr.bf16.mxu0 0
  %588 = vmatmul.mubr.bf16.gmra.mxu0 %v330
  %v589 = vpop.f32.mrf.mxu0
  %v590 = vadd.f32 0.0, %v589
  %v591 = vpop.f32.mrf.mxu0
  %v592 = vpop.f32.mrf.mxu0
  %v593 = vadd.f32 0.0, %v592
  %v594 = vpop.f32.mrf.mxu0
  %595 = vmatprep.mubr.bf16.mxu0 0
  %596 = vmatmul.mubr.bf16.gmra.mxu0 %v333
  %v597 = vpop.f32.mrf.mxu0
  %v598 = vadd.f32 0.0, %v597
  %v599 = vpop.f32.mrf.mxu0
  %v600 = vpop.f32.mrf.mxu0
  %v601 = vadd.f32 0.0, %v600
  %v602 = vpop.f32.mrf.mxu0
  %603 = vmatprep.mubr.bf16.mxu0 0
  %604 = vmatmul.mubr.bf16.gmra.mxu0 %v336
  %v605 = vpop.f32.mrf.mxu0
  %v606 = vadd.f32 0.0, %v605
  %v607 = vpop.f32.mrf.mxu0
  %v608 = vpop.f32.mrf.mxu0
  %v609 = vadd.f32 0.0, %v608
  %v610 = vpop.f32.mrf.mxu0
  %611 = vmatprep.mubr.bf16.mxu0 0
  %612 = vmatmul.mubr.bf16.gmra.mxu0 %v339
  %v613 = vpop.f32.mrf.mxu0
  %v614 = vadd.f32 0.0, %v613
  %v615 = vpop.f32.mrf.mxu0
  %v616 = vpop.f32.mrf.mxu0
  %v617 = vadd.f32 0.0, %v616
  %v618 = vpop.f32.mrf.mxu0
  %619 = vmatprep.mubr.bf16.mxu0 0
  %620 = vmatmul.mubr.bf16.gmra.mxu0 %v342
  %v621 = vpop.f32.mrf.mxu0
  %v622 = vadd.f32 0.0, %v621
  %v623 = vpop.f32.mrf.mxu0
  %v624 = vpop.f32.mrf.mxu0
  %v625 = vadd.f32 0.0, %v624
  %v626 = vpop.f32.mrf.mxu0
  %627 = vmatprep.mubr.bf16.mxu0 0
  %628 = vmatmul.mubr.bf16.gmra.mxu0 %v345
  %v629 = vpop.f32.mrf.mxu0
  %v630 = vadd.f32 0.0, %v629
  %v631 = vpop.f32.mrf.mxu0
  %v632 = vpop.f32.mrf.mxu0
  %v633 = vadd.f32 0.0, %v632
  %v634 = vpop.f32.mrf.mxu0
  %635 = vdwg.mxu0
  %v636 = vld [vmem:[%s2] sm:$0x1]
  %v638 = vlaneseq
  %v639 = vshrl.u32 %v638, 7
  %v640 = vsub.s32 0, %v639
  %v641 = vrot.slane %v636, %v640
  %v643 = vmul.f32 %v382, %v641
  %v644 = vmul.f32 %v385, %v641
  %v645 = vmul.f32 %v390, %v641
  %v646 = vmul.f32 %v393, %v641
  %v647 = vmul.f32 %v398, %v641
  %v648 = vmul.f32 %v401, %v641
  %v649 = vmul.f32 %v406, %v641
  %v650 = vmul.f32 %v409, %v641
  %v651 = vmul.f32 %v414, %v641
  %v652 = vmul.f32 %v417, %v641
  %v653 = vmul.f32 %v422, %v641
  %v654 = vmul.f32 %v425, %v641
  %v655 = vmul.f32 %v430, %v641
  %v656 = vmul.f32 %v433, %v641
  %v657 = vmul.f32 %v438, %v641
  %v658 = vmul.f32 %v441, %v641
  %v659 = vmul.f32 %v446, %v641
  %v660 = vmul.f32 %v449, %v641
  %v661 = vmul.f32 %v454, %v641
  %v662 = vmul.f32 %v457, %v641
  %v663 = vmul.f32 %v462, %v641
  %v664 = vmul.f32 %v465, %v641
  %v665 = vmul.f32 %v470, %v641
  %v666 = vmul.f32 %v473, %v641
  %v667 = vmul.f32 %v478, %v641
  %v668 = vmul.f32 %v481, %v641
  %v669 = vmul.f32 %v486, %v641
  %v670 = vmul.f32 %v489, %v641
  %v671 = vmul.f32 %v494, %v641
  %v672 = vmul.f32 %v497, %v641
  %v673 = vmul.f32 %v502, %v641
  %v674 = vmul.f32 %v505, %v641
  %v675 = vmul.f32 %v510, %v641
  %v676 = vmul.f32 %v513, %v641
  %v677 = vmul.f32 %v518, %v641
  %v678 = vmul.f32 %v521, %v641
  %v679 = vmul.f32 %v526, %v641
  %v680 = vmul.f32 %v529, %v641
  %v681 = vmul.f32 %v534, %v641
  %v682 = vmul.f32 %v537, %v641
  %v683 = vmul.f32 %v542, %v641
  %v684 = vmul.f32 %v545, %v641
  %v685 = vmul.f32 %v550, %v641
  %v686 = vmul.f32 %v553, %v641
  %v687 = vmul.f32 %v558, %v641
  %v688 = vmul.f32 %v561, %v641
  %v689 = vmul.f32 %v566, %v641
  %v690 = vmul.f32 %v569, %v641
  %v691 = vmul.f32 %v574, %v641
  %v692 = vmul.f32 %v577, %v641
  %v693 = vmul.f32 %v582, %v641
  %v694 = vmul.f32 %v585, %v641
  %v695 = vmul.f32 %v590, %v641
  %v696 = vmul.f32 %v593, %v641
  %v697 = vmul.f32 %v598, %v641
  %v698 = vmul.f32 %v601, %v641
  %v699 = vmul.f32 %v606, %v641
  %v700 = vmul.f32 %v609, %v641
  %v701 = vmul.f32 %v614, %v641
  %v702 = vmul.f32 %v617, %v641
  %v703 = vmul.f32 %v622, %v641
  %v704 = vmul.f32 %v625, %v641
  %v705 = vmul.f32 %v630, %v641
  %v706 = vmul.f32 %v633, %v641
  %v707 = vld [vmem:[%s3] sm:$0x1]
  %v709 = vlaneseq
  %v710 = vshrl.u32 %v709, 7
  %v711 = vsub.s32 0, %v710
  %v712 = vrot.slane %v707, %v711
  %v714 = vadd.f32 %v643, %v712
  %v715 = vadd.f32 %v644, %v712
  %v716 = vadd.f32 %v645, %v712
  %v717 = vadd.f32 %v646, %v712
  %v718 = vadd.f32 %v647, %v712
  %v719 = vadd.f32 %v648, %v712
  %v720 = vadd.f32 %v649, %v712
  %v721 = vadd.f32 %v650, %v712
  %v722 = vadd.f32 %v651, %v712
  %v723 = vadd.f32 %v652, %v712
  %v724 = vadd.f32 %v653, %v712
  %v725 = vadd.f32 %v654, %v712
  %v726 = vadd.f32 %v655, %v712
  %v727 = vadd.f32 %v656, %v712
  %v728 = vadd.f32 %v657, %v712
  %v729 = vadd.f32 %v658, %v712
  %v730 = vadd.f32 %v659, %v712
  %v731 = vadd.f32 %v660, %v712
  %v732 = vadd.f32 %v661, %v712
  %v733 = vadd.f32 %v662, %v712
  %v734 = vadd.f32 %v663, %v712
  %v735 = vadd.f32 %v664, %v712
  %v736 = vadd.f32 %v665, %v712
  %v737 = vadd.f32 %v666, %v712
  %v738 = vadd.f32 %v667, %v712
  %v739 = vadd.f32 %v668, %v712
  %v740 = vadd.f32 %v669, %v712
  %v741 = vadd.f32 %v670, %v712
  %v742 = vadd.f32 %v671, %v712
  %v743 = vadd.f32 %v672, %v712
  %v744 = vadd.f32 %v673, %v712
  %v745 = vadd.f32 %v674, %v712
  %v746 = vadd.f32 %v675, %v712
  %v747 = vadd.f32 %v676, %v712
  %v748 = vadd.f32 %v677, %v712
  %v749 = vadd.f32 %v678, %v712
  %v750 = vadd.f32 %v679, %v712
  %v751 = vadd.f32 %v680, %v712
  %v752 = vadd.f32 %v681, %v712
  %v753 = vadd.f32 %v682, %v712
  %v754 = vadd.f32 %v683, %v712
  %v755 = vadd.f32 %v684, %v712
  %v756 = vadd.f32 %v685, %v712
  %v757 = vadd.f32 %v686, %v712
  %v758 = vadd.f32 %v687, %v712
  %v759 = vadd.f32 %v688, %v712
  %v760 = vadd.f32 %v689, %v712
  %v761 = vadd.f32 %v690, %v712
  %v762 = vadd.f32 %v691, %v712
  %v763 = vadd.f32 %v692, %v712
  %v764 = vadd.f32 %v693, %v712
  %v765 = vadd.f32 %v694, %v712
  %v766 = vadd.f32 %v695, %v712
  %v767 = vadd.f32 %v696, %v712
  %v768 = vadd.f32 %v697, %v712
  %v769 = vadd.f32 %v698, %v712
  %v770 = vadd.f32 %v699, %v712
  %v771 = vadd.f32 %v700, %v712
  %v772 = vadd.f32 %v701, %v712
  %v773 = vadd.f32 %v702, %v712
  %v774 = vadd.f32 %v703, %v712
  %v775 = vadd.f32 %v704, %v712
  %v776 = vadd.f32 %v705, %v712
  %v777 = vadd.f32 %v706, %v712
  %v778 = vmax.f32 %v714, 0.0
  %v779 = vmax.f32 %v715, 0.0
  %v780 = vmax.f32 %v716, 0.0
  %v781 = vmax.f32 %v717, 0.0
  %v782 = vmax.f32 %v718, 0.0
  %v783 = vmax.f32 %v719, 0.0
  %v784 = vmax.f32 %v720, 0.0
  %v785 = vmax.f32 %v721, 0.0
  %v786 = vmax.f32 %v722, 0.0
  %v787 = vmax.f32 %v723, 0.0
  %v788 = vmax.f32 %v724, 0.0
  %v789 = vmax.f32 %v725, 0.0
  %v790 = vmax.f32 %v726, 0.0
  %v791 = vmax.f32 %v727, 0.0
  %v792 = vmax.f32 %v728, 0.0
  %v793 = vmax.f32 %v729, 0.0
  %v794 = vmax.f32 %v730, 0.0
  %v795 = vmax.f32 %v731, 0.0
  %v796 = vmax.f32 %v732, 0.0
  %v797 = vmax.f32 %v733, 0.0
  %v798 = vmax.f32 %v734, 0.0
  %v799 = vmax.f32 %v735, 0.0
  %v800 = vmax.f32 %v736, 0.0
  %v801 = vmax.f32 %v737, 0.0
  %v802 = vmax.f32 %v738, 0.0
  %v803 = vmax.f32 %v739, 0.0
  %v804 = vmax.f32 %v740, 0.0
  %v805 = vmax.f32 %v741, 0.0
  %v806 = vmax.f32 %v742, 0.0
  %v807 = vmax.f32 %v743, 0.0
  %v808 = vmax.f32 %v744, 0.0
  %v809 = vmax.f32 %v745, 0.0
  %v810 = vmax.f32 %v746, 0.0
  %v811 = vmax.f32 %v747, 0.0
  %v812 = vmax.f32 %v748, 0.0
  %v813 = vmax.f32 %v749, 0.0
  %v814 = vmax.f32 %v750, 0.0
  %v815 = vmax.f32 %v751, 0.0
  %v816 = vmax.f32 %v752, 0.0
  %v817 = vmax.f32 %v753, 0.0
  %v818 = vmax.f32 %v754, 0.0
  %v819 = vmax.f32 %v755, 0.0
  %v820 = vmax.f32 %v756, 0.0
  %v821 = vmax.f32 %v757, 0.0
  %v822 = vmax.f32 %v758, 0.0
  %v823 = vmax.f32 %v759, 0.0
  %v824 = vmax.f32 %v760, 0.0
  %v825 = vmax.f32 %v761, 0.0
  %v826 = vmax.f32 %v762, 0.0
  %v827 = vmax.f32 %v763, 0.0
  %v828 = vmax.f32 %v764, 0.0
  %v829 = vmax.f32 %v765, 0.0
  %v830 = vmax.f32 %v766, 0.0
  %v831 = vmax.f32 %v767, 0.0
  %v832 = vmax.f32 %v768, 0.0
  %v833 = vmax.f32 %v769, 0.0
  %v834 = vmax.f32 %v770, 0.0
  %v835 = vmax.f32 %v771, 0.0
  %v836 = vmax.f32 %v772, 0.0
  %v837 = vmax.f32 %v773, 0.0
  %v838 = vmax.f32 %v774, 0.0
  %v839 = vmax.f32 %v775, 0.0
  %v840 = vmax.f32 %v776, 0.0
  %v841 = vmax.f32 %v777, 0.0
  %v842 = vpack.c.bf16 %v779, %v778
  %v843 = vpack.c.bf16 %v781, %v780
  %v844 = vpack.c.bf16 %v783, %v782
  %v845 = vpack.c.bf16 %v785, %v784
  %v846 = vpack.c.bf16 %v787, %v786
  %v847 = vpack.c.bf16 %v789, %v788
  %v848 = vpack.c.bf16 %v791, %v790
  %v849 = vpack.c.bf16 %v793, %v792
  %v850 = vpack.c.bf16 %v795, %v794
  %v851 = vpack.c.bf16 %v797, %v796
  %v852 = vpack.c.bf16 %v799, %v798
  %v853 = vpack.c.bf16 %v801, %v800
  %v854 = vpack.c.bf16 %v803, %v802
  %v855 = vpack.c.bf16 %v805, %v804
  %v856 = vpack.c.bf16 %v807, %v806
  %v857 = vpack.c.bf16 %v809, %v808
  %v858 = vpack.c.bf16 %v811, %v810
  %v859 = vpack.c.bf16 %v813, %v812
  %v860 = vpack.c.bf16 %v815, %v814
  %v861 = vpack.c.bf16 %v817, %v816
  %v862 = vpack.c.bf16 %v819, %v818
  %v863 = vpack.c.bf16 %v821, %v820
  %v864 = vpack.c.bf16 %v823, %v822
  %v865 = vpack.c.bf16 %v825, %v824
  %v866 = vpack.c.bf16 %v827, %v826
  %v867 = vpack.c.bf16 %v829, %v828
  %v868 = vpack.c.bf16 %v831, %v830
  %v869 = vpack.c.bf16 %v833, %v832
  %v870 = vpack.c.bf16 %v835, %v834
  %v871 = vpack.c.bf16 %v837, %v836
  %v872 = vpack.c.bf16 %v839, %v838
  %v873 = vpack.c.bf16 %v841, %v840
  %v906 = vunpack.c.l.b16 %v842
  %v907 = vunpack.c.h.b16 %v842
  %v908 = vunpack.c.l.b16 %v843
  %v909 = vunpack.c.h.b16 %v843
  %v910 = vunpack.c.l.b16 %v844
  %v911 = vunpack.c.h.b16 %v844
  %v912 = vunpack.c.l.b16 %v845
  %v913 = vunpack.c.h.b16 %v845
  %v914 = vunpack.c.l.b16 %v846
  %v915 = vunpack.c.h.b16 %v846
  %v916 = vunpack.c.l.b16 %v847
  %v917 = vunpack.c.h.b16 %v847
  %v918 = vunpack.c.l.b16 %v848
  %v919 = vunpack.c.h.b16 %v848
  %v920 = vunpack.c.l.b16 %v849
  %v921 = vunpack.c.h.b16 %v849
  %v922 = vunpack.c.l.b16 %v850
  %v923 = vunpack.c.h.b16 %v850
  %v924 = vunpack.c.l.b16 %v851
  %v925 = vunpack.c.h.b16 %v851
  %v926 = vunpack.c.l.b16 %v852
  %v927 = vunpack.c.h.b16 %v852
  %v928 = vunpack.c.l.b16 %v853
  %v929 = vunpack.c.h.b16 %v853
  %v930 = vunpack.c.l.b16 %v854
  %v931 = vunpack.c.h.b16 %v854
  %v932 = vunpack.c.l.b16 %v855
  %v933 = vunpack.c.h.b16 %v855
  %v934 = vunpack.c.l.b16 %v856
  %v935 = vunpack.c.h.b16 %v856
  %v936 = vunpack.c.l.b16 %v857
  %v937 = vunpack.c.h.b16 %v857
  %v938 = vunpack.c.l.b16 %v858
  %v939 = vunpack.c.h.b16 %v858
  %v940 = vunpack.c.l.b16 %v859
  %v941 = vunpack.c.h.b16 %v859
  %v942 = vunpack.c.l.b16 %v860
  %v943 = vunpack.c.h.b16 %v860
  %v944 = vunpack.c.l.b16 %v861
  %v945 = vunpack.c.h.b16 %v861
  %v946 = vunpack.c.l.b16 %v862
  %v947 = vunpack.c.h.b16 %v862
  %v948 = vunpack.c.l.b16 %v863
  %v949 = vunpack.c.h.b16 %v863
  %v950 = vunpack.c.l.b16 %v864
  %v951 = vunpack.c.h.b16 %v864
  %v952 = vunpack.c.l.b16 %v865
  %v953 = vunpack.c.h.b16 %v865
  %v954 = vunpack.c.l.b16 %v866
  %v955 = vunpack.c.h.b16 %v866
  %v956 = vunpack.c.l.b16 %v867
  %v957 = vunpack.c.h.b16 %v867
  %v958 = vunpack.c.l.b16 %v868
  %v959 = vunpack.c.h.b16 %v868
  %v960 = vunpack.c.l.b16 %v869
  %v961 = vunpack.c.h.b16 %v869
  %v962 = vunpack.c.l.b16 %v870
  %v963 = vunpack.c.h.b16 %v870
  %v964 = vunpack.c.l.b16 %v871
  %v965 = vunpack.c.h.b16 %v871
  %v966 = vunpack.c.l.b16 %v872
  %v967 = vunpack.c.h.b16 %v872
  %v968 = vunpack.c.l.b16 %v873
  %v969 = vunpack.c.h.b16 %v873
  %v970 = vpack.c.b16 %v906, %v906
  %v971 = vpack.c.b16 %v907, %v907
  %v972 = vpack.c.b16 %v908, %v908
  %v973 = vpack.c.b16 %v909, %v909
  %v974 = vpack.c.b16 %v910, %v910
  %v975 = vpack.c.b16 %v911, %v911
  %v976 = vpack.c.b16 %v912, %v912
  %v977 = vpack.c.b16 %v913, %v913
  %v978 = vpack.c.b16 %v914, %v914
  %v979 = vpack.c.b16 %v915, %v915
  %v980 = vpack.c.b16 %v916, %v916
  %v981 = vpack.c.b16 %v917, %v917
  %v982 = vpack.c.b16 %v918, %v918
  %v983 = vpack.c.b16 %v919, %v919
  %v984 = vpack.c.b16 %v920, %v920
  %v985 = vpack.c.b16 %v921, %v921
  %v986 = vpack.c.b16 %v922, %v922
  %v987 = vpack.c.b16 %v923, %v923
  %v988 = vpack.c.b16 %v924, %v924
  %v989 = vpack.c.b16 %v925, %v925
  %v990 = vpack.c.b16 %v926, %v926
  %v991 = vpack.c.b16 %v927, %v927
  %v992 = vpack.c.b16 %v928, %v928
  %v993 = vpack.c.b16 %v929, %v929
  %v994 = vpack.c.b16 %v930, %v930
  %v995 = vpack.c.b16 %v931, %v931
  %v996 = vpack.c.b16 %v932, %v932
  %v997 = vpack.c.b16 %v933, %v933
  %v998 = vpack.c.b16 %v934, %v934
  %v999 = vpack.c.b16 %v935, %v935
  %v1000 = vpack.c.b16 %v936, %v936
  %v1001 = vpack.c.b16 %v937, %v937
  %v1002 = vpack.c.b16 %v938, %v938
  %v1003 = vpack.c.b16 %v939, %v939
  %v1004 = vpack.c.b16 %v940, %v940
  %v1005 = vpack.c.b16 %v941, %v941
  %v1006 = vpack.c.b16 %v942, %v942
  %v1007 = vpack.c.b16 %v943, %v943
  %v1008 = vpack.c.b16 %v944, %v944
  %v1009 = vpack.c.b16 %v945, %v945
  %v1010 = vpack.c.b16 %v946, %v946
  %v1011 = vpack.c.b16 %v947, %v947
  %v1012 = vpack.c.b16 %v948, %v948
  %v1013 = vpack.c.b16 %v949, %v949
  %v1014 = vpack.c.b16 %v950, %v950
  %v1015 = vpack.c.b16 %v951, %v951
  %v1016 = vpack.c.b16 %v952, %v952
  %v1017 = vpack.c.b16 %v953, %v953
  %v1018 = vpack.c.b16 %v954, %v954
  %v1019 = vpack.c.b16 %v955, %v955
  %v1020 = vpack.c.b16 %v956, %v956
  %v1021 = vpack.c.b16 %v957, %v957
  %v1022 = vpack.c.b16 %v958, %v958
  %v1023 = vpack.c.b16 %v959, %v959
  %v1024 = vpack.c.b16 %v960, %v960
  %v1025 = vpack.c.b16 %v961, %v961
  %v1026 = vpack.c.b16 %v962, %v962
  %v1027 = vpack.c.b16 %v963, %v963
  %v1028 = vpack.c.b16 %v964, %v964
  %v1029 = vpack.c.b16 %v965, %v965
  %v1030 = vpack.c.b16 %v966, %v966
  %v1031 = vpack.c.b16 %v967, %v967
  %v1032 = vpack.c.b16 %v968, %v968
  %v1033 = vpack.c.b16 %v969, %v969
  %vm1098 = vcmask 60416
  %1099 = vst.msk [vmem:[%s4] sm:$0xf] %vm1098, %v970
  %1100 = vst.msk [vmem:[%s4 + $0x4] sm:$0xf] %vm1098, %v971
  %1101 = vst.msk [vmem:[%s4 + $0x8] sm:$0xf] %vm1098, %v972
  %1102 = vst.msk [vmem:[%s4 + $0xc] sm:$0xf] %vm1098, %v973
  %1103 = vst.msk [vmem:[%s4 + $0x10] sm:$0xf] %vm1098, %v974
  %1104 = vst.msk [vmem:[%s4 + $0x14] sm:$0xf] %vm1098, %v975
  %1105 = vst.msk [vmem:[%s4 + $0x18] sm:$0xf] %vm1098, %v976
  %1106 = vst.msk [vmem:[%s4 + $0x1c] sm:$0xf] %vm1098, %v977
  %1107 = vst.msk [vmem:[%s4 + $0x20] sm:$0xf] %vm1098, %v978
  %1108 = vst.msk [vmem:[%s4 + $0x24] sm:$0xf] %vm1098, %v979
  %1109 = vst.msk [vmem:[%s4 + $0x28] sm:$0xf] %vm1098, %v980
  %1110 = vst.msk [vmem:[%s4 + $0x2c] sm:$0xf] %vm1098, %v981
  %1111 = vst.msk [vmem:[%s4 + $0x30] sm:$0xf] %vm1098, %v982
  %1112 = vst.msk [vmem:[%s4 + $0x34] sm:$0xf] %vm1098, %v983
  %1113 = vst.msk [vmem:[%s4 + $0x38] sm:$0xf] %vm1098, %v984
  %1114 = vst.msk [vmem:[%s4 + $0x3c] sm:$0xf] %vm1098, %v985
  %1115 = vst.msk [vmem:[%s4 + $0x40] sm:$0xf] %vm1098, %v986
  %1116 = vst.msk [vmem:[%s4 + $0x44] sm:$0xf] %vm1098, %v987
  %1117 = vst.msk [vmem:[%s4 + $0x48] sm:$0xf] %vm1098, %v988
  %1118 = vst.msk [vmem:[%s4 + $0x4c] sm:$0xf] %vm1098, %v989
  %1119 = vst.msk [vmem:[%s4 + $0x50] sm:$0xf] %vm1098, %v990
  %1120 = vst.msk [vmem:[%s4 + $0x54] sm:$0xf] %vm1098, %v991
  %1121 = vst.msk [vmem:[%s4 + $0x58] sm:$0xf] %vm1098, %v992
  %1122 = vst.msk [vmem:[%s4 + $0x5c] sm:$0xf] %vm1098, %v993
  %1123 = vst.msk [vmem:[%s4 + $0x60] sm:$0xf] %vm1098, %v994
  %1124 = vst.msk [vmem:[%s4 + $0x64] sm:$0xf] %vm1098, %v995
  %1125 = vst.msk [vmem:[%s4 + $0x68] sm:$0xf] %vm1098, %v996
  %1126 = vst.msk [vmem:[%s4 + $0x6c] sm:$0xf] %vm1098, %v997
  %1127 = vst.msk [vmem:[%s4 + $0x70] sm:$0xf] %vm1098, %v998
  %1128 = vst.msk [vmem:[%s4 + $0x74] sm:$0xf] %vm1098, %v999
  %1129 = vst.msk [vmem:[%s4 + $0x78] sm:$0xf] %vm1098, %v1000
  %1130 = vst.msk [vmem:[%s4 + $0x7c] sm:$0xf] %vm1098, %v1001
  %1131 = vst.msk [vmem:[%s4 + $0x80] sm:$0xf] %vm1098, %v1002
  %1132 = vst.msk [vmem:[%s4 + $0x84] sm:$0xf] %vm1098, %v1003
  %1133 = vst.msk [vmem:[%s4 + $0x88] sm:$0xf] %vm1098, %v1004
  %1134 = vst.msk [vmem:[%s4 + $0x8c] sm:$0xf] %vm1098, %v1005
  %1135 = vst.msk [vmem:[%s4 + $0x90] sm:$0xf] %vm1098, %v1006
  %1136 = vst.msk [vmem:[%s4 + $0x94] sm:$0xf] %vm1098, %v1007
  %1137 = vst.msk [vmem:[%s4 + $0x98] sm:$0xf] %vm1098, %v1008
  %1138 = vst.msk [vmem:[%s4 + $0x9c] sm:$0xf] %vm1098, %v1009
  %1139 = vst.msk [vmem:[%s4 + $0xa0] sm:$0xf] %vm1098, %v1010
  %1140 = vst.msk [vmem:[%s4 + $0xa4] sm:$0xf] %vm1098, %v1011
  %1141 = vst.msk [vmem:[%s4 + $0xa8] sm:$0xf] %vm1098, %v1012
  %1142 = vst.msk [vmem:[%s4 + $0xac] sm:$0xf] %vm1098, %v1013
  %1143 = vst.msk [vmem:[%s4 + $0xb0] sm:$0xf] %vm1098, %v1014
  %1144 = vst.msk [vmem:[%s4 + $0xb4] sm:$0xf] %vm1098, %v1015
  %1145 = vst.msk [vmem:[%s4 + $0xb8] sm:$0xf] %vm1098, %v1016
  %1146 = vst.msk [vmem:[%s4 + $0xbc] sm:$0xf] %vm1098, %v1017
  %1147 = vst.msk [vmem:[%s4 + $0xc0] sm:$0xf] %vm1098, %v1018
  %1148 = vst.msk [vmem:[%s4 + $0xc4] sm:$0xf] %vm1098, %v1019
  %1149 = vst.msk [vmem:[%s4 + $0xc8] sm:$0xf] %vm1098, %v1020
  %1150 = vst.msk [vmem:[%s4 + $0xcc] sm:$0xf] %vm1098, %v1021
  %1151 = vst.msk [vmem:[%s4 + $0xd0] sm:$0xf] %vm1098, %v1022
  %1152 = vst.msk [vmem:[%s4 + $0xd4] sm:$0xf] %vm1098, %v1023
  %1153 = vst.msk [vmem:[%s4 + $0xd8] sm:$0xf] %vm1098, %v1024
  %1154 = vst.msk [vmem:[%s4 + $0xdc] sm:$0xf] %vm1098, %v1025
  %1155 = vst.msk [vmem:[%s4 + $0xe0] sm:$0xf] %vm1098, %v1026
  %1156 = vst.msk [vmem:[%s4 + $0xe4] sm:$0xf] %vm1098, %v1027
  %1157 = vst.msk [vmem:[%s4 + $0xe8] sm:$0xf] %vm1098, %v1028
  %1158 = vst.msk [vmem:[%s4 + $0xec] sm:$0xf] %vm1098, %v1029
  %1159 = vst.msk [vmem:[%s4 + $0xf0] sm:$0xf] %vm1098, %v1030
  %1160 = vst.msk [vmem:[%s4 + $0xf4] sm:$0xf] %vm1098, %v1031
  %1161 = vst.msk [vmem:[%s4 + $0xf8] sm:$0xf] %vm1098, %v1032
  %1162 = vst.msk [vmem:[%s4 + $0xfc] sm:$0xf] %vm1098, %v1033
  // Predicated region
  $region18: #{bottleneck_forward.2} parent=0 // pred_check
    _
  $region19: #{bottleneck_forward.2} parent=0 // pred_check_branch
    %1164 = sbr.rel (0) target = $region21
  $region20: #{bottleneck_forward.2} parent=0 // pred_region
    _
  $region21: #{bottleneck_forward.2} parent=0 // pred_fallthru
    _
  // Predicated region
  $region22: #{bottleneck_forward.2} parent=0 // pred_check
    _
  $region23: #{bottleneck_forward.2} parent=0 // pred_check_branch
    %1166 = sbr.rel (0) target = $region25
  $region24: #{bottleneck_forward.2} parent=0 // pred_region
    _
  $region25: #{bottleneck_forward.2} parent=0 // pred_fallthru
    _

// kernel: bottleneck_forward.3
$region0: #{bottleneck_forward.3}
  #allocation0 [shape = 'u32[]', space=smem, size = 0x4, offset = 0x4, fixed_abs, tag = 'smem constant byte address 0x4 - core index']
  #allocation1 [shape = 'u32[144,128]{1,0:T(1,128)}', space=vmem, size = 0x12000, scoped, tag = 'internal scratch']
  %s0 = inlined_call_operand.vmem [shape: f32[2,644,8], index: 0, kind: input, shape index: {}]
  %s1 = inlined_call_operand.vmem [shape: bf16[2,512,16], index: 1, kind: input, shape index: {}]
  %s2 = inlined_call_operand.vmem [shape: bf16[9,8,8], index: 2, kind: input, shape index: {}]
  %s3 = inlined_call_operand.vmem [shape: f32[1,8], index: 3, kind: input, shape index: {}]
  %s4 = inlined_call_operand.vmem [shape: f32[1,8], index: 4, kind: input, shape index: {}]
  %s5 = inlined_call_operand.vmem [shape: bf16[8,32], index: 5, kind: input, shape index: {}]
  %s6 = inlined_call_operand.vmem [shape: f32[1,32], index: 6, kind: input, shape index: {}]
  %s7 = inlined_call_operand.vmem [shape: f32[1,32], index: 7, kind: input, shape index: {}]
  %s8 = inlined_call_operand.vmem [shape: bf16[16,32], index: 8, kind: input, shape index: {}]
  %s9 = inlined_call_operand.vmem [shape: f32[1,32], index: 9, kind: input, shape index: {}]
  %s10 = inlined_call_operand.vmem [shape: f32[1,32], index: 10, kind: input, shape index: {}]
  %s11 = inlined_call_operand.vmem [shape: f32[2,512,32], index: 11, kind: output, shape index: {}]
  %s12 = sld [smem:[#allocation0]]
  $region77: #{bottleneck_forward.3} parent=0
    _
  %s14 = ssub.s32 1, %s12
  %s15 = scalar_select 0, %s14, %s12
  loop: start=0, step=1, limit=4
  $region2: #{bottleneck_forward.3} parent=0 // loop_pre_header
    _
  $region3: #{bottleneck_forward.3} parent=0 // loop_header
    %s17 = sphi 0, %s21
    %p18 = scmp.ge.s32.totalorder %s17, 4
    %s24 = sphi 0, %s36
    %s25 = sphi 0, %s32
    %s26 = sphi 0, %s24
    %s27 = sphi 0, %s25
    %s28 = sphi 0, %s26
    %s29 = sphi 0, %s27
    %s39 = sphi 0, %s41
    %s42 = sphi 0, %s39
    %s43 = sphi 0, %s42
    %s59 = sphi 0, %s43
    %s67 = sphi 0, %s69
    %s70 = sphi 0, %s67
    %s71 = sphi 0, %s70
    %s87 = sphi 0, %s71
    %s91 = sphi 0, %s91
    %s93 = sphi 0, %s91
    %s94 = sphi 0, %s93
    %s108 = sphi 0, %s94
    %s112 = sphi 0, %s112
    %s114 = sphi 0, %s112
    %s115 = sphi 0, %s114
    %s129 = sphi 0, %s115
    %s133 = sphi 0, %s133
    %s135 = sphi 0, %s133
    %s136 = sphi 0, %s135
    %s150 = sphi 0, %s136
    %s154 = sphi 0, %s154
    %s156 = sphi 0, %s154
    %s157 = sphi 0, %s156
    %s171 = sphi 0, %s157
    %s175 = sphi 0, %s175
    %s177 = sphi 0, %s175
    %s178 = sphi 0, %s177
    %s192 = sphi 0, %s178
    %s196 = sphi 0, %s196
    %s198 = sphi 0, %s196
    %s199 = sphi 0, %s198
    %s213 = sphi 0, %s199
    %s217 = sphi 0, %s217
    %s219 = sphi 0, %s217
    %s220 = sphi 0, %s219
    %s234 = sphi 0, %s220
    %s238 = sphi 0, %s238
    %s240 = sphi 0, %s238
    %s241 = sphi 0, %s240
    %s255 = sphi 0, %s241
    %s259 = sphi 0, %s259
    %s261 = sphi 0, %s259
    %s262 = sphi 0, %s261
    %s276 = sphi 0, %s262
    %s284 = sphi 0, %s286
    %s287 = sphi 0, %s284
    %s288 = sphi 0, %s287
    %s304 = sphi 0, %s288
  $region4: #{bottleneck_forward.3} parent=0 // loop_header_branch
    %20 = sbr.rel (%p18) target = $region8
  $region5: #{bottleneck_forward.3} parent=0 // loop_body
    %s22 = ssub.s32 %s17, 1
    %s23 = ssub.s32 %s17, 2
    %s30 = sadd.s32 1, %s25
    %p31 = scmp.ge.s32.totalorder %s30, 1
    %s32 = scalar_select %p31, 0, %s30
    %s33 = sadd.s32 1, %s24
    %s34 = scalar_select %p31, %s33, %s24
    %p35 = scmp.ge.s32.totalorder %s34, 2
    %s36 = scalar_select %p35, 0, %s34
    %s37 = ssub.s32 %s24, %s36
    %p38 = scmp.eq.s32.totalorder %s37, 0
    %s40 = sadd.s32 %s39, 1
    %s41 = scalar_select %p38, %s39, %s40
    %p44 = pneg %p38
    %p45 = scmp.eq.s32.totalorder %s17, 1
    %p46 = por %p44, %p45
    %p47 = scmp.ne.s32.totalorder %s39, %s42
    %p48 = scmp.eq.s32.totalorder %s17, 0
    %p49 = por %p47, %p48
    %p50 = scmp.ne.s32.totalorder %s39, %s42
    %p51 = scmp.eq.s32.totalorder %s22, 1
    %p52 = por %p50, %p51
    %p53 = scmp.ne.s32.totalorder %s42, %s43
    %p54 = scmp.eq.s32.totalorder %s22, 0
    %p55 = por %p53, %p54
    %p56 = scmp.ne.s32.totalorder %s42, %s43
    %p57 = scmp.eq.s32.totalorder %s23, 1
    %p58 = por %p56, %p57
    %p60 = scmp.ne.s32.totalorder %s43, %s59
    %p61 = scmp.eq.s32.totalorder %s23, 0
    %p62 = por %p60, %p61
    %s63 = ssub.s32 %s24, %s36
    %s64 = ssub.s32 %s25, %s32
    %s65 = sor.u32 %s63, %s64
    %p66 = scmp.eq.s32.totalorder %s65, 0
    %s68 = sadd.s32 %s67, 1
    %s69 = scalar_select %p66, %s67, %s68
    %p72 = pneg %p66
    %p73 = scmp.eq.s32.totalorder %s17, 1
    %p74 = por %p72, %p73
    %p75 = scmp.ne.s32.totalorder %s67, %s70
    %p76 = scmp.eq.s32.totalorder %s17, 0
    %p77 = por %p75, %p76
    %p78 = scmp.ne.s32.totalorder %s67, %s70
    %p79 = scmp.eq.s32.totalorder %s22, 1
    %p80 = por %p78, %p79
    %p81 = scmp.ne.s32.totalorder %s70, %s71
    %p82 = scmp.eq.s32.totalorder %s22, 0
    %p83 = por %p81, %p82
    %p84 = scmp.ne.s32.totalorder %s70, %s71
    %p85 = scmp.eq.s32.totalorder %s23, 1
    %p86 = por %p84, %p85
    %p88 = scmp.ne.s32.totalorder %s71, %s87
    %p89 = scmp.eq.s32.totalorder %s23, 0
    %p90 = por %p88, %p89
    %s92 = sadd.s32 %s91, 1
    %p95 = scmp.eq.s32.totalorder %s17, 1
    %p96 = scmp.ne.s32.totalorder %s91, %s93
    %p97 = scmp.eq.s32.totalorder %s17, 0
    %p98 = por %p96, %p97
    %p99 = scmp.ne.s32.totalorder %s91, %s93
    %p100 = scmp.eq.s32.totalorder %s22, 1
    %p101 = por %p99, %p100
    %p102 = scmp.ne.s32.totalorder %s93, %s94
    %p103 = scmp.eq.s32.totalorder %s22, 0
    %p104 = por %p102, %p103
    %p105 = scmp.ne.s32.totalorder %s93, %s94
    %p106 = scmp.eq.s32.totalorder %s23, 1
    %p107 = por %p105, %p106
    %p109 = scmp.ne.s32.totalorder %s94, %s108
    %p110 = scmp.eq.s32.totalorder %s23, 0
    %p111 = por %p109, %p110
    %s113 = sadd.s32 %s112, 1
    %p116 = scmp.eq.s32.totalorder %s17, 1
    %p117 = scmp.ne.s32.totalorder %s112, %s114
    %p118 = scmp.eq.s32.totalorder %s17, 0
    %p119 = por %p117, %p118
    %p120 = scmp.ne.s32.totalorder %s112, %s114
    %p121 = scmp.eq.s32.totalorder %s22, 1
    %p122 = por %p120, %p121
    %p123 = scmp.ne.s32.totalorder %s114, %s115
    %p124 = scmp.eq.s32.totalorder %s22, 0
    %p125 = por %p123, %p124
    %p126 = scmp.ne.s32.totalorder %s114, %s115
    %p127 = scmp.eq.s32.totalorder %s23, 1
    %p128 = por %p126, %p127
    %p130 = scmp.ne.s32.totalorder %s115, %s129
    %p131 = scmp.eq.s32.totalorder %s23, 0
    %p132 = por %p130, %p131
    %s134 = sadd.s32 %s133, 1
    %p137 = scmp.eq.s32.totalorder %s17, 1
    %p138 = scmp.ne.s32.totalorder %s133, %s135
    %p139 = scmp.eq.s32.totalorder %s17, 0
    %p140 = por %p138, %p139
    %p141 = scmp.ne.s32.totalorder %s133, %s135
    %p142 = scmp.eq.s32.totalorder %s22, 1
    %p143 = por %p141, %p142
    %p144 = scmp.ne.s32.totalorder %s135, %s136
    %p145 = scmp.eq.s32.totalorder %s22, 0
    %p146 = por %p144, %p145
    %p147 = scmp.ne.s32.totalorder %s135, %s136
    %p148 = scmp.eq.s32.totalorder %s23, 1
    %p149 = por %p147, %p148
    %p151 = scmp.ne.s32.totalorder %s136, %s150
    %p152 = scmp.eq.s32.totalorder %s23, 0
    %p153 = por %p151, %p152
    %s155 = sadd.s32 %s154, 1
    %p158 = scmp.eq.s32.totalorder %s17, 1
    %p159 = scmp.ne.s32.totalorder %s154, %s156
    %p160 = scmp.eq.s32.totalorder %s17, 0
    %p161 = por %p159, %p160
    %p162 = scmp.ne.s32.totalorder %s154, %s156
    %p163 = scmp.eq.s32.totalorder %s22, 1
    %p164 = por %p162, %p163
    %p165 = scmp.ne.s32.totalorder %s156, %s157
    %p166 = scmp.eq.s32.totalorder %s22, 0
    %p167 = por %p165, %p166
    %p168 = scmp.ne.s32.totalorder %s156, %s157
    %p169 = scmp.eq.s32.totalorder %s23, 1
    %p170 = por %p168, %p169
    %p172 = scmp.ne.s32.totalorder %s157, %s171
    %p173 = scmp.eq.s32.totalorder %s23, 0
    %p174 = por %p172, %p173
    %s176 = sadd.s32 %s175, 1
    %p179 = scmp.eq.s32.totalorder %s17, 1
    %p180 = scmp.ne.s32.totalorder %s175, %s177
    %p181 = scmp.eq.s32.totalorder %s17, 0
    %p182 = por %p180, %p181
    %p183 = scmp.ne.s32.totalorder %s175, %s177
    %p184 = scmp.eq.s32.totalorder %s22, 1
    %p185 = por %p183, %p184
    %p186 = scmp.ne.s32.totalorder %s177, %s178
    %p187 = scmp.eq.s32.totalorder %s22, 0
    %p188 = por %p186, %p187
    %p189 = scmp.ne.s32.totalorder %s177, %s178
    %p190 = scmp.eq.s32.totalorder %s23, 1
    %p191 = por %p189, %p190
    %p193 = scmp.ne.s32.totalorder %s178, %s192
    %p194 = scmp.eq.s32.totalorder %s23, 0
    %p195 = por %p193, %p194
    %s197 = sadd.s32 %s196, 1
    %p200 = scmp.eq.s32.totalorder %s17, 1
    %p201 = scmp.ne.s32.totalorder %s196, %s198
    %p202 = scmp.eq.s32.totalorder %s17, 0
    %p203 = por %p201, %p202
    %p204 = scmp.ne.s32.totalorder %s196, %s198
    %p205 = scmp.eq.s32.totalorder %s22, 1
    %p206 = por %p204, %p205
    %p207 = scmp.ne.s32.totalorder %s198, %s199
    %p208 = scmp.eq.s32.totalorder %s22, 0
    %p209 = por %p207, %p208
    %p210 = scmp.ne.s32.totalorder %s198, %s199
    %p211 = scmp.eq.s32.totalorder %s23, 1
    %p212 = por %p210, %p211
    %p214 = scmp.ne.s32.totalorder %s199, %s213
    %p215 = scmp.eq.s32.totalorder %s23, 0
    %p216 = por %p214, %p215
    %s218 = sadd.s32 %s217, 1
    %p221 = scmp.eq.s32.totalorder %s17, 1
    %p222 = scmp.ne.s32.totalorder %s217, %s219
    %p223 = scmp.eq.s32.totalorder %s17, 0
    %p224 = por %p222, %p223
    %p225 = scmp.ne.s32.totalorder %s217, %s219
    %p226 = scmp.eq.s32.totalorder %s22, 1
    %p227 = por %p225, %p226
    %p228 = scmp.ne.s32.totalorder %s219, %s220
    %p229 = scmp.eq.s32.totalorder %s22, 0
    %p230 = por %p228, %p229
    %p231 = scmp.ne.s32.totalorder %s219, %s220
    %p232 = scmp.eq.s32.totalorder %s23, 1
    %p233 = por %p231, %p232
    %p235 = scmp.ne.s32.totalorder %s220, %s234
    %p236 = scmp.eq.s32.totalorder %s23, 0
    %p237 = por %p235, %p236
    %s239 = sadd.s32 %s238, 1
    %p242 = scmp.eq.s32.totalorder %s17, 1
    %p243 = scmp.ne.s32.totalorder %s238, %s240
    %p244 = scmp.eq.s32.totalorder %s17, 0
    %p245 = por %p243, %p244
    %p246 = scmp.ne.s32.totalorder %s238, %s240
    %p247 = scmp.eq.s32.totalorder %s22, 1
    %p248 = por %p246, %p247
    %p249 = scmp.ne.s32.totalorder %s240, %s241
    %p250 = scmp.eq.s32.totalorder %s22, 0
    %p251 = por %p249, %p250
    %p252 = scmp.ne.s32.totalorder %s240, %s241
    %p253 = scmp.eq.s32.totalorder %s23, 1
    %p254 = por %p252, %p253
    %p256 = scmp.ne.s32.totalorder %s241, %s255
    %p257 = scmp.eq.s32.totalorder %s23, 0
    %p258 = por %p256, %p257
    %s260 = sadd.s32 %s259, 1
    %p263 = scmp.eq.s32.totalorder %s17, 1
    %p264 = scmp.ne.s32.totalorder %s259, %s261
    %p265 = scmp.eq.s32.totalorder %s17, 0
    %p266 = por %p264, %p265
    %p267 = scmp.ne.s32.totalorder %s259, %s261
    %p268 = scmp.eq.s32.totalorder %s22, 1
    %p269 = por %p267, %p268
    %p270 = scmp.ne.s32.totalorder %s261, %s262
    %p271 = scmp.eq.s32.totalorder %s22, 0
    %p272 = por %p270, %p271
    %p273 = scmp.ne.s32.totalorder %s261, %s262
    %p274 = scmp.eq.s32.totalorder %s23, 1
    %p275 = por %p273, %p274
    %p277 = scmp.ne.s32.totalorder %s262, %s276
    %p278 = scmp.eq.s32.totalorder %s23, 0
    %p279 = por %p277, %p278
    %s280 = ssub.s32 %s24, %s36
    %s281 = ssub.s32 %s25, %s32
    %s282 = sor.u32 %s280, %s281
    %p283 = scmp.eq.s32.totalorder %s282, 0
    %s285 = sadd.s32 %s284, 1
    %s286 = scalar_select %p283, %s284, %s285
    %p289 = pneg %p283
    %p290 = scmp.eq.s32.totalorder %s17, 1
    %p291 = por %p289, %p290
    %p292 = scmp.ne.s32.totalorder %s284, %s287
    %p293 = scmp.eq.s32.totalorder %s17, 0
    %p294 = por %p292, %p293
    %p295 = scmp.ne.s32.totalorder %s284, %s287
    %p296 = scmp.eq.s32.totalorder %s22, 1
    %p297 = por %p295, %p296
    %p298 = scmp.ne.s32.totalorder %s287, %s288
    %p299 = scmp.eq.s32.totalorder %s22, 0
    %p300 = por %p298, %p299
    %p301 = scmp.ne.s32.totalorder %s287, %s288
    %p302 = scmp.eq.s32.totalorder %s23, 1
    %p303 = por %p301, %p302
    %p305 = scmp.ne.s32.totalorder %s288, %s304
    %p306 = scmp.eq.s32.totalorder %s23, 0
    %p307 = por %p305, %p306
    %p308 = scmp.le.s32.totalorder 1, %s17
    %p309 = scmp.lt.s32.totalorder %s17, 3
    %p310 = pnand %p308, %p309
    %p311 = pneg %p310
    // Predicated region
    $region9: #{bottleneck_forward.3} parent=5 // pred_check
      _
    $region10: #{bottleneck_forward.3} parent=5 // pred_check_branch
      %313 = sbr.rel (%p310) target = $region12
    $region11: #{bottleneck_forward.3} parent=5 // pred_region
      %s314 = ssub.s32 %s17, 1
      // Predicated region
      $region13: #{bottleneck_forward.3} parent=11 // pred_check
        %p315 = pneg %p104
      $region14: #{bottleneck_forward.3} parent=11 // pred_check_branch
        %317 = sbr.rel (%p315) target = $region16
      $region15: #{bottleneck_forward.3} parent=11 // pred_region
        _
      $region16: #{bottleneck_forward.3} parent=11 // pred_fallthru
        _
      // Predicated region
      $region17: #{bottleneck_forward.3} parent=11 // pred_check
        %p318 = pneg %p125
      $region18: #{bottleneck_forward.3} parent=11 // pred_check_branch
        %320 = sbr.rel (%p318) target = $region20
      $region19: #{bottleneck_forward.3} parent=11 // pred_region
        _
      $region20: #{bottleneck_forward.3} parent=11 // pred_fallthru
        _
      // Predicated region
      $region21: #{bottleneck_forward.3} parent=11 // pred_check
        %p321 = pneg %p146
      $region22: #{bottleneck_forward.3} parent=11 // pred_check_branch
        %323 = sbr.rel (%p321) target = $region24
      $region23: #{bottleneck_forward.3} parent=11 // pred_region
        _
      $region24: #{bottleneck_forward.3} parent=11 // pred_fallthru
        _
      // Predicated region
      $region25: #{bottleneck_forward.3} parent=11 // pred_check
        %p324 = pneg %p167
      $region26: #{bottleneck_forward.3} parent=11 // pred_check_branch
        %326 = sbr.rel (%p324) target = $region28
      $region27: #{bottleneck_forward.3} parent=11 // pred_region
        _
      $region28: #{bottleneck_forward.3} parent=11 // pred_fallthru
        _
      // Predicated region
      $region29: #{bottleneck_forward.3} parent=11 // pred_check
        %p327 = pneg %p188
      $region30: #{bottleneck_forward.3} parent=11 // pred_check_branch
        %329 = sbr.rel (%p327) target = $region32
      $region31: #{bottleneck_forward.3} parent=11 // pred_region
        _
      $region32: #{bottleneck_forward.3} parent=11 // pred_fallthru
        _
      // Predicated region
      $region33: #{bottleneck_forward.3} parent=11 // pred_check
        %p330 = pneg %p209
      $region34: #{bottleneck_forward.3} parent=11 // pred_check_branch
        %332 = sbr.rel (%p330) target = $region36
      $region35: #{bottleneck_forward.3} parent=11 // pred_region
        _
      $region36: #{bottleneck_forward.3} parent=11 // pred_fallthru
        _
      // Predicated region
      $region37: #{bottleneck_forward.3} parent=11 // pred_check
        %p333 = pneg %p230
      $region38: #{bottleneck_forward.3} parent=11 // pred_check_branch
        %335 = sbr.rel (%p333) target = $region40
      $region39: #{bottleneck_forward.3} parent=11 // pred_region
        _
      $region40: #{bottleneck_forward.3} parent=11 // pred_fallthru
        _
      // Predicated region
      $region41: #{bottleneck_forward.3} parent=11 // pred_check
        %p336 = pneg %p251
      $region42: #{bottleneck_forward.3} parent=11 // pred_check_branch
        %338 = sbr.rel (%p336) target = $region44
      $region43: #{bottleneck_forward.3} parent=11 // pred_region
        _
      $region44: #{bottleneck_forward.3} parent=11 // pred_fallthru
        _
      // Predicated region
      $region45: #{bottleneck_forward.3} parent=11 // pred_check
        %p339 = pneg %p272
      $region46: #{bottleneck_forward.3} parent=11 // pred_check_branch
        %341 = sbr.rel (%p339) target = $region48
      $region47: #{bottleneck_forward.3} parent=11 // pred_region
        _
      $region48: #{bottleneck_forward.3} parent=11 // pred_fallthru
        _
    $region12: #{bottleneck_forward.3} parent=5 // pred_fallthru
      _
    %p342 = scmp.lt.s32.totalorder %s17, 2
    // Predicated region
    $region49: #{bottleneck_forward.3} parent=5 // pred_check
      %p343 = pneg %p342
    $region50: #{bottleneck_forward.3} parent=5 // pred_check_branch
      %345 = sbr.rel (%p343) target = $region52
    $region51: #{bottleneck_forward.3} parent=5 // pred_region
      // Predicated region
      $region53: #{bottleneck_forward.3} parent=51 // pred_check
        %p346 = pneg %p49
      $region54: #{bottleneck_forward.3} parent=51 // pred_check_branch
        %348 = sbr.rel (%p346) target = $region56
      $region55: #{bottleneck_forward.3} parent=51 // pred_region
        %p349 = scmp.lt.s32.totalorder %s24, 1
        %s350 = scalar_select %p349, %s24, 1
        %s351 = smul.addr %s350, 81
        %s352 = smul.addr %s351, 8
        %s353 = scalar_lea.vmem %s0, %s352
      $region56: #{bottleneck_forward.3} parent=51 // pred_fallthru
        _
      // Predicated region
      $region57: #{bottleneck_forward.3} parent=51 // pred_check
        %p354 = pneg %p77
      $region58: #{bottleneck_forward.3} parent=51 // pred_check_branch
        %356 = sbr.rel (%p354) target = $region60
      $region59: #{bottleneck_forward.3} parent=51 // pred_region
        %s357 = smul.u32 64, %s25
        %p358 = scmp.lt.s32.totalorder %s24, 1
        %s359 = scalar_select %p358, %s24, 1
        %p360 = scmp.lt.s32.totalorder %s357, 63
        %s361 = scalar_select %p360, %s357, 63
        %s362 = smul.addr %s359, 64
        %s363 = sadd.s32 %s361, %s362
        %s364 = smul.addr %s363, 4
        %s365 = scalar_lea.vmem %s1, %s364
        %s366 = smul.u32 64, %s25
      $region60: #{bottleneck_forward.3} parent=51 // pred_fallthru
        _
    $region52: #{bottleneck_forward.3} parent=5 // pred_fallthru
      _
    %p367 = scmp.le.s32.totalorder 1, %s17
    %p368 = scmp.lt.s32.totalorder %s17, 3
    %p369 = pnand %p367, %p368
    %p370 = pneg %p369
    // Predicated region
    $region61: #{bottleneck_forward.3} parent=5 // pred_check
      _
    $region62: #{bottleneck_forward.3} parent=5 // pred_check_branch
      %372 = sbr.rel (%p369) target = $region64
    $region63: #{bottleneck_forward.3} parent=5 // pred_region
      %s373 = ssub.s32 %s17, 1
      %p374 = scmp.lt.s32.totalorder %s26, 1
      %s375 = scalar_select %p374, %s26, 1
      %s376 = smul.addr %s375, 81
      %s377 = smul.addr %s376, 8
      %s378 = scalar_lea.vmem %s0, %s377
      %p379 = pneg %p55
      %p380 = pneg %p52
      %s381 = smul.u32 64, %s27
      %p382 = scmp.lt.s32.totalorder %s26, 1
      %s383 = scalar_select %p382, %s26, 1
      %p384 = scmp.lt.s32.totalorder %s381, 63
      %s385 = scalar_select %p384, %s381, 63
      %s386 = smul.addr %s383, 64
      %s387 = sadd.s32 %s385, %s386
      %s388 = smul.addr %s387, 4
      %s389 = scalar_lea.vmem %s1, %s388
      %p390 = pneg %p83
      %p391 = pneg %p80
      %p392 = pneg %p104
      %p393 = pneg %p101
      %p394 = pneg %p125
      %p395 = pneg %p122
      %p396 = pneg %p146
      %p397 = pneg %p143
      %p398 = pneg %p167
      %p399 = pneg %p164
      %p400 = pneg %p188
      %p401 = pneg %p185
      %p402 = pneg %p209
      %p403 = pneg %p206
      %p404 = pneg %p230
      %p405 = pneg %p227
      %p406 = pneg %p251
      %p407 = pneg %p248
      %p408 = pneg %p272
      %p409 = pneg %p269
      %p410 = pneg %p300
      %p411 = pneg %p297
      %s412 = smul.u32 64, %s27
      %p413 = scmp.lt.s32.totalorder %s26, 1
      %s414 = scalar_select %p413, %s26, 1
      %p415 = scmp.lt.s32.totalorder %s412, 63
      %s416 = scalar_select %p415, %s412, 63
      %s417 = smul.addr %s414, 64
      %s418 = sadd.s32 %s416, %s417
      %s419 = smul.addr %s418, 8
      %s420 = scalar_lea.vmem %s11, %s419
      %p421 = scmp.lt.s32.totalorder %s26, 1
      %s422 = scalar_select %p421, %s26, 1
      %s423 = smul.addr %s422, 81
      %s424 = smul.addr %s423, 8
      %s425 = scalar_lea.vmem %s0, %s424
      %s426 = smul.u32 64, %s27
      %p427 = scmp.lt.s32.totalorder %s26, 1
      %s428 = scalar_select %p427, %s26, 1
      %p429 = scmp.lt.s32.totalorder %s426, 63
      %s430 = scalar_select %p429, %s426, 63
      %s431 = smul.addr %s428, 64
      %s432 = sadd.s32 %s430, %s431
      %s433 = smul.addr %s432, 4
      %s434 = scalar_lea.vmem %s1, %s433
      %s435 = smul.u32 64, %s27
      %s436 = smul.u32 64, %s27
      %p437 = scmp.lt.s32.totalorder %s26, 1
      %s438 = scalar_select %p437, %s26, 1
      %p439 = scmp.lt.s32.totalorder %s436, 63
      %s440 = scalar_select %p439, %s436, 63
      %s441 = smul.addr %s438, 64
      %s442 = sadd.s32 %s440, %s441
      %s443 = smul.addr %s442, 8
      %s444 = scalar_lea.vmem %s11, %s443
      %s445 = smul.u32 64, %s27
      %s447 = smul.u32 %s27, 512
      %s448 = scalar_lea.vmem %s425, %s447
      %v449 = vld [vmem:[%s448] sm:$0xff]
      %v450 = vld [vmem:[%s448 + $0x8] sm:$0xff]
      %v451 = vld [vmem:[%s448 + $0x10] sm:$0xff]
      %v452 = vld [vmem:[%s448 + $0x18] sm:$0xff]
      %v453 = vld [vmem:[%s448 + $0x20] sm:$0xff]
      %v454 = vld [vmem:[%s448 + $0x28] sm:$0xff]
      %v455 = vld [vmem:[%s448 + $0x30] sm:$0xff]
      %v456 = vld [vmem:[%s448 + $0x38] sm:$0xff]
      %v457 = vld [vmem:[%s448 + $0x40] sm:$0xff]
      %v458 = vld [vmem:[%s448 + $0x48] sm:$0xff]
      %v459 = vld [vmem:[%s448 + $0x50] sm:$0xff]
      %v460 = vld [vmem:[%s448 + $0x58] sm:$0xff]
      %v461 = vld [vmem:[%s448 + $0x60] sm:$0xff]
      %v462 = vld [vmem:[%s448 + $0x68] sm:$0xff]
      %v463 = vld [vmem:[%s448 + $0x70] sm:$0xff]
      %v464 = vld [vmem:[%s448 + $0x78] sm:$0xff]
      %v465 = vld [vmem:[%s448 + $0x80] sm:$0xff]
      %v466 = vld [vmem:[%s448 + $0x88] sm:$0xff]
      %v467 = vld [vmem:[%s448 + $0x90] sm:$0xff]
      %v468 = vld [vmem:[%s448 + $0x98] sm:$0xff]
      %v469 = vld [vmem:[%s448 + $0xa0] sm:$0xff]
      %v470 = vld [vmem:[%s448 + $0xa8] sm:$0xff]
      %v471 = vld [vmem:[%s448 + $0xb0] sm:$0xff]
      %v472 = vld [vmem:[%s448 + $0xb8] sm:$0xff]
      %v473 = vld [vmem:[%s448 + $0xc0] sm:$0xff]
      %v474 = vld [vmem:[%s448 + $0xc8] sm:$0xff]
      %v475 = vld [vmem:[%s448 + $0xd0] sm:$0xff]
      %v476 = vld [vmem:[%s448 + $0xd8] sm:$0xff]
      %v477 = vld [vmem:[%s448 + $0xe0] sm:$0xff]
      %v478 = vld [vmem:[%s448 + $0xe8] sm:$0xff]
      %v479 = vld [vmem:[%s448 + $0xf0] sm:$0xff]
      %v480 = vld [vmem:[%s448 + $0xf8] sm:$0xff]
      %v481 = vld [vmem:[%s448 + $0x100] sm:$0xff]
      %v482 = vld [vmem:[%s448 + $0x108] sm:$0xff]
      %v483 = vld [vmem:[%s448 + $0x110] sm:$0xff]
      %v484 = vld [vmem:[%s448 + $0x118] sm:$0xff]
      %v485 = vld [vmem:[%s448 + $0x120] sm:$0xff]
      %v486 = vld [vmem:[%s448 + $0x128] sm:$0xff]
      %v487 = vld [vmem:[%s448 + $0x130] sm:$0xff]
      %v488 = vld [vmem:[%s448 + $0x138] sm:$0xff]
      %v489 = vld [vmem:[%s448 + $0x140] sm:$0xff]
      %v490 = vld [vmem:[%s448 + $0x148] sm:$0xff]
      %v491 = vld [vmem:[%s448 + $0x150] sm:$0xff]
      %v492 = vld [vmem:[%s448 + $0x158] sm:$0xff]
      %v493 = vld [vmem:[%s448 + $0x160] sm:$0xff]
      %v494 = vld [vmem:[%s448 + $0x168] sm:$0xff]
      %v495 = vld [vmem:[%s448 + $0x170] sm:$0xff]
      %v496 = vld [vmem:[%s448 + $0x178] sm:$0xff]
      %v497 = vld [vmem:[%s448 + $0x180] sm:$0xff]
      %v498 = vld [vmem:[%s448 + $0x188] sm:$0xff]
      %v499 = vld [vmem:[%s448 + $0x190] sm:$0xff]
      %v500 = vld [vmem:[%s448 + $0x198] sm:$0xff]
      %v501 = vld [vmem:[%s448 + $0x1a0] sm:$0xff]
      %v502 = vld [vmem:[%s448 + $0x1a8] sm:$0xff]
      %v503 = vld [vmem:[%s448 + $0x1b0] sm:$0xff]
      %v504 = vld [vmem:[%s448 + $0x1b8] sm:$0xff]
      %v505 = vld [vmem:[%s448 + $0x1c0] sm:$0xff]
      %v506 = vld [vmem:[%s448 + $0x1c8] sm:$0xff]
      %v507 = vld [vmem:[%s448 + $0x1d0] sm:$0xff]
      %v508 = vld [vmem:[%s448 + $0x1d8] sm:$0xff]
      %v509 = vld [vmem:[%s448 + $0x1e0] sm:$0xff]
      %v510 = vld [vmem:[%s448 + $0x1e8] sm:$0xff]
      %v511 = vld [vmem:[%s448 + $0x1f0] sm:$0xff]
      %v512 = vld [vmem:[%s448 + $0x1f8] sm:$0xff]
      %v513 = vpack.c.bf16 %v450, %v449
      %v514 = vpack.c.bf16 %v452, %v451
      %v515 = vpack.c.bf16 %v454, %v453
      %v516 = vpack.c.bf16 %v456, %v455
      %v517 = vpack.c.bf16 %v458, %v457
      %v518 = vpack.c.bf16 %v460, %v459
      %v519 = vpack.c.bf16 %v462, %v461
      %v520 = vpack.c.bf16 %v464, %v463
      %v521 = vpack.c.bf16 %v466, %v465
      %v522 = vpack.c.bf16 %v468, %v467
      %v523 = vpack.c.bf16 %v470, %v469
      %v524 = vpack.c.bf16 %v472, %v471
      %v525 = vpack.c.bf16 %v474, %v473
      %v526 = vpack.c.bf16 %v476, %v475
      %v527 = vpack.c.bf16 %v478, %v477
      %v528 = vpack.c.bf16 %v480, %v479
      %v529 = vpack.c.bf16 %v482, %v481
      %v530 = vpack.c.bf16 %v484, %v483
      %v531 = vpack.c.bf16 %v486, %v485
      %v532 = vpack.c.bf16 %v488, %v487
      %v533 = vpack.c.bf16 %v490, %v489
      %v534 = vpack.c.bf16 %v492, %v491
      %v535 = vpack.c.bf16 %v494, %v493
      %v536 = vpack.c.bf16 %v496, %v495
      %v537 = vpack.c.bf16 %v498, %v497
      %v538 = vpack.c.bf16 %v500, %v499
      %v539 = vpack.c.bf16 %v502, %v501
      %v540 = vpack.c.bf16 %v504, %v503
      %v541 = vpack.c.bf16 %v506, %v505
      %v542 = vpack.c.bf16 %v508, %v507
      %v543 = vpack.c.bf16 %v510, %v509
      %v544 = vpack.c.bf16 %v512, %v511
      %v545 = vld [vmem:[%s2] sm:$0xf]
      %s546 = sadd.s32 %s447, 2
      %s547 = scalar_lea.vmem %s425, %s546
      %v548 = vld [vmem:[%s547] sm:$0xff]
      %v549 = vld [vmem:[%s547 + $0x8] sm:$0xff]
      %v550 = vld [vmem:[%s547 + $0x10] sm:$0xff]
      %v551 = vld [vmem:[%s547 + $0x18] sm:$0xff]
      %v552 = vld [vmem:[%s547 + $0x20] sm:$0xff]
      %v553 = vld [vmem:[%s547 + $0x28] sm:$0xff]
      %v554 = vld [vmem:[%s547 + $0x30] sm:$0xff]
      %v555 = vld [vmem:[%s547 + $0x38] sm:$0xff]
      %v556 = vld [vmem:[%s547 + $0x40] sm:$0xff]
      %v557 = vld [vmem:[%s547 + $0x48] sm:$0xff]
      %v558 = vld [vmem:[%s547 + $0x50] sm:$0xff]
      %v559 = vld [vmem:[%s547 + $0x58] sm:$0xff]
      %v560 = vld [vmem:[%s547 + $0x60] sm:$0xff]
      %v561 = vld [vmem:[%s547 + $0x68] sm:$0xff]
      %v562 = vld [vmem:[%s547 + $0x70] sm:$0xff]
      %v563 = vld [vmem:[%s547 + $0x78] sm:$0xff]
      %v564 = vld [vmem:[%s547 + $0x80] sm:$0xff]
      %v565 = vld [vmem:[%s547 + $0x88] sm:$0xff]
      %v566 = vld [vmem:[%s547 + $0x90] sm:$0xff]
      %v567 = vld [vmem:[%s547 + $0x98] sm:$0xff]
      %v568 = vld [vmem:[%s547 + $0xa0] sm:$0xff]
      %v569 = vld [vmem:[%s547 + $0xa8] sm:$0xff]
      %v570 = vld [vmem:[%s547 + $0xb0] sm:$0xff]
      %v571 = vld [vmem:[%s547 + $0xb8] sm:$0xff]
      %v572 = vld [vmem:[%s547 + $0xc0] sm:$0xff]
      %v573 = vld [vmem:[%s547 + $0xc8] sm:$0xff]
      %v574 = vld [vmem:[%s547 + $0xd0] sm:$0xff]
      %v575 = vld [vmem:[%s547 + $0xd8] sm:$0xff]
      %v576 = vld [vmem:[%s547 + $0xe0] sm:$0xff]
      %v577 = vld [vmem:[%s547 + $0xe8] sm:$0xff]
      %v578 = vld [vmem:[%s547 + $0xf0] sm:$0xff]
      %v579 = vld [vmem:[%s547 + $0xf8] sm:$0xff]
      %v580 = vld [vmem:[%s547 + $0x100] sm:$0xff]
      %v581 = vld [vmem:[%s547 + $0x108] sm:$0xff]
      %v582 = vld [vmem:[%s547 + $0x110] sm:$0xff]
      %v583 = vld [vmem:[%s547 + $0x118] sm:$0xff]
      %v584 = vld [vmem:[%s547 + $0x120] sm:$0xff]
      %v585 = vld [vmem:[%s547 + $0x128] sm:$0xff]
      %v586 = vld [vmem:[%s547 + $0x130] sm:$0xff]
      %v587 = vld [vmem:[%s547 + $0x138] sm:$0xff]
      %v588 = vld [vmem:[%s547 + $0x140] sm:$0xff]
      %v589 = vld [vmem:[%s547 + $0x148] sm:$0xff]
      %v590 = vld [vmem:[%s547 + $0x150] sm:$0xff]
      %v591 = vld [vmem:[%s547 + $0x158] sm:$0xff]
      %v592 = vld [vmem:[%s547 + $0x160] sm:$0xff]
      %v593 = vld [vmem:[%s547 + $0x168] sm:$0xff]
      %v594 = vld [vmem:[%s547 + $0x170] sm:$0xff]
      %v595 = vld [vmem:[%s547 + $0x178] sm:$0xff]
      %v596 = vld [vmem:[%s547 + $0x180] sm:$0xff]
      %v597 = vld [vmem:[%s547 + $0x188] sm:$0xff]
      %v598 = vld [vmem:[%s547 + $0x190] sm:$0xff]
      %v599 = vld [vmem:[%s547 + $0x198] sm:$0xff]
      %v600 = vld [vmem:[%s547 + $0x1a0] sm:$0xff]
      %v601 = vld [vmem:[%s547 + $0x1a8] sm:$0xff]
      %v602 = vld [vmem:[%s547 + $0x1b0] sm:$0xff]
      %v603 = vld [vmem:[%s547 + $0x1b8] sm:$0xff]
      %v604 = vld [vmem:[%s547 + $0x1c0] sm:$0xff]
      %v605 = vld [vmem:[%s547 + $0x1c8] sm:$0xff]
      %v606 = vld [vmem:[%s547 + $0x1d0] sm:$0xff]
      %v607 = vld [vmem:[%s547 + $0x1d8] sm:$0xff]
      %v608 = vld [vmem:[%s547 + $0x1e0] sm:$0xff]
      %v609 = vld [vmem:[%s547 + $0x1e8] sm:$0xff]
      %v610 = vld [vmem:[%s547 + $0x1f0] sm:$0xff]
      %v611 = vld [vmem:[%s547 + $0x1f8] sm:$0xff]
      %v612 = vpack.c.bf16 %v549, %v548
      %v613 = vpack.c.bf16 %v551, %v550
      %v614 = vpack.c.bf16 %v553, %v552
      %v615 = vpack.c.bf16 %v555, %v554
      %v616 = vpack.c.bf16 %v557, %v556
      %v617 = vpack.c.bf16 %v559, %v558
      %v618 = vpack.c.bf16 %v561, %v560
      %v619 = vpack.c.bf16 %v563, %v562
      %v620 = vpack.c.bf16 %v565, %v564
      %v621 = vpack.c.bf16 %v567, %v566
      %v622 = vpack.c.bf16 %v569, %v568
      %v623 = vpack.c.bf16 %v571, %v570
      %v624 = vpack.c.bf16 %v573, %v572
      %v625 = vpack.c.bf16 %v575, %v574
      %v626 = vpack.c.bf16 %v577, %v576
      %v627 = vpack.c.bf16 %v579, %v578
      %v628 = vpack.c.bf16 %v581, %v580
      %v629 = vpack.c.bf16 %v583, %v582
      %v630 = vpack.c.bf16 %v585, %v584
      %v631 = vpack.c.bf16 %v587, %v586
      %v632 = vpack.c.bf16 %v589, %v588
      %v633 = vpack.c.bf16 %v591, %v590
      %v634 = vpack.c.bf16 %v593, %v592
      %v635 = vpack.c.bf16 %v595, %v594
      %v636 = vpack.c.bf16 %v597, %v596
      %v637 = vpack.c.bf16 %v599, %v598
      %v638 = vpack.c.bf16 %v601, %v600
      %v639 = vpack.c.bf16 %v603, %v602
      %v640 = vpack.c.bf16 %v605, %v604
      %v641 = vpack.c.bf16 %v607, %v606
      %v642 = vpack.c.bf16 %v609, %v608
      %v643 = vpack.c.bf16 %v611, %v610
      %s644 = scalar_lea.vmem %s2, 4
      %v645 = vld [vmem:[%s644] sm:$0xf]
      %vm646 = vcmask 64512
      %v648 = vsel %vm646, %v612, 0
      %v651 = vsel %vm646, %v613, 0
      %v654 = vsel %vm646, %v614, 0
      %v657 = vsel %vm646, %v615, 0
      %v660 = vsel %vm646, %v616, 0
      %v663 = vsel %vm646, %v617, 0
      %v666 = vsel %vm646, %v618, 0
      %v669 = vsel %vm646, %v619, 0
      %v672 = vsel %vm646, %v620, 0
      %v675 = vsel %vm646, %v621, 0
      %v678 = vsel %vm646, %v622, 0
      %v681 = vsel %vm646, %v623, 0
      %v684 = vsel %vm646, %v624, 0
      %v687 = vsel %vm646, %v625, 0
      %v690 = vsel %vm646, %v626, 0
      %v693 = vsel %vm646, %v627, 0
      %v696 = vsel %vm646, %v628, 0
      %v699 = vsel %vm646, %v629, 0
      %v702 = vsel %vm646, %v630, 0
      %v705 = vsel %vm646, %v631, 0
      %v708 = vsel %vm646, %v632, 0
      %v711 = vsel %vm646, %v633, 0
      %v714 = vsel %vm646, %v634, 0
      %v717 = vsel %vm646, %v635, 0
      %v720 = vsel %vm646, %v636, 0
      %v723 = vsel %vm646, %v637, 0
      %v726 = vsel %vm646, %v638, 0
      %v729 = vsel %vm646, %v639, 0
      %v732 = vsel %vm646, %v640, 0
      %v735 = vsel %vm646, %v641, 0
      %v738 = vsel %vm646, %v642, 0
      %v741 = vsel %vm646, %v643, 0
      %vm743 = vcmask 1043456
      %v745 = vsel %vm743, %v645, 0
      %747 = vmatprep.subr.bf16.mxu0 0
      %748 = vmatpush1.bf16.msra.mxu0 0
      %749 = vmatprep.subr.bf16.mxu0 0
      %750 = vmatpush1.bf16.msra.mxu0 0
      %751 = vmatprep.subr.bf16.mxu0 0
      %752 = vmatpush1.bf16.msra.mxu0 0
      %753 = vmatprep.subr.bf16.mxu0 0
      %754 = vmatpush1.bf16.msra.mxu0 0
      %755 = vmatprep.subr.bf16.mxu0 0
      %756 = vmatpush1.bf16.msra.mxu0 0
      %757 = vmatprep.subr.bf16.mxu0 0
      %758 = vmatpush1.bf16.msra.mxu0 0
      %759 = vmatprep.subr.bf16.mxu0 0
      %760 = vmatpush1.bf16.msra.mxu0 0
      %761 = vmatprep.subr.bf16.mxu0 0
      %762 = vmatpush1.bf16.msra.mxu0 %v745
      %763 = vmatprep.subr.bf16.mxu0 0
      %764 = vmatpush2.bf16.msra.mxu0 0
      %765 = vmatprep.subr.bf16.mxu0 0
      %766 = vmatpush2.bf16.msra.mxu0 0
      %767 = vmatprep.subr.bf16.mxu0 0
      %768 = vmatpush2.bf16.msra.mxu0 0
      %769 = vmatprep.subr.bf16.mxu0 0
      %770 = vmatpush2.bf16.msra.mxu0 0
      %771 = vmatprep.subr.bf16.mxu0 0
      %772 = vmatpush2.bf16.msra.mxu0 0
      %773 = vmatprep.subr.bf16.mxu0 0
      %774 = vmatpush2.bf16.msra.mxu0 0
      %775 = vmatprep.subr.bf16.mxu0 0
      %776 = vmatpush2.bf16.msra.mxu0 0
      %777 = vmatprep.subr.bf16.mxu0 0
      %778 = vmatpush2.bf16.msra.mxu0 0
      %779 = vmatprep.mubr.bf16.mxu0 0
      %780 = vmatmul.mubr.bf16.gmra.mxu0 %v648
      %v781 = vpop.f32.mrf.mxu0
      %v782 = vadd.f32 0.0, %v781
      %v783 = vpop.f32.mrf.mxu0
      %v784 = vpop.f32.mrf.mxu0
      %v785 = vadd.f32 0.0, %v784
      %v786 = vpop.f32.mrf.mxu0
      %787 = vmatprep.mubr.bf16.mxu0 0
      %788 = vmatmul.mubr.bf16.gmra.mxu0 %v651
      %v789 = vpop.f32.mrf.mxu0
      %v790 = vadd.f32 0.0, %v789
      %v791 = vpop.f32.mrf.mxu0
      %v792 = vpop.f32.mrf.mxu0
      %v793 = vadd.f32 0.0, %v792
      %v794 = vpop.f32.mrf.mxu0
      %795 = vmatprep.mubr.bf16.mxu0 0
      %796 = vmatmul.mubr.bf16.gmra.mxu0 %v654
      %v797 = vpop.f32.mrf.mxu0
      %v798 = vadd.f32 0.0, %v797
      %v799 = vpop.f32.mrf.mxu0
      %v800 = vpop.f32.mrf.mxu0
      %v801 = vadd.f32 0.0, %v800
      %v802 = vpop.f32.mrf.mxu0
      %803 = vmatprep.mubr.bf16.mxu0 0
      %804 = vmatmul.mubr.bf16.gmra.mxu0 %v657
      %v805 = vpop.f32.mrf.mxu0
      %v806 = vadd.f32 0.0, %v805
      %v807 = vpop.f32.mrf.mxu0
      %v808 = vpop.f32.mrf.mxu0
      %v809 = vadd.f32 0.0, %v808
      %v810 = vpop.f32.mrf.mxu0
      %811 = vmatprep.mubr.bf16.mxu0 0
      %812 = vmatmul.mubr.bf16.gmra.mxu0 %v660
      %v813 = vpop.f32.mrf.mxu0
      %v814 = vadd.f32 0.0, %v813
      %v815 = vpop.f32.mrf.mxu0
      %v816 = vpop.f32.mrf.mxu0
      %v817 = vadd.f32 0.0, %v816
      %v818 = vpop.f32.mrf.mxu0
      %819 = vmatprep.mubr.bf16.mxu0 0
      %820 = vmatmul.mubr.bf16.gmra.mxu0 %v663
      %v821 = vpop.f32.mrf.mxu0
      %v822 = vadd.f32 0.0, %v821
      %v823 = vpop.f32.mrf.mxu0
      %v824 = vpop.f32.mrf.mxu0
      %v825 = vadd.f32 0.0, %v824
      %v826 = vpop.f32.mrf.mxu0
      %827 = vmatprep.mubr.bf16.mxu0 0
      %828 = vmatmul.mubr.bf16.gmra.mxu0 %v666
      %v829 = vpop.f32.mrf.mxu0
      %v830 = vadd.f32 0.0, %v829
      %v831 = vpop.f32.mrf.mxu0
      %v832 = vpop.f32.mrf.mxu0
      %v833 = vadd.f32 0.0, %v832
      %v834 = vpop.f32.mrf.mxu0
      %835 = vmatprep.mubr.bf16.mxu0 0
      %836 = vmatmul.mubr.bf16.gmra.mxu0 %v669
      %v837 = vpop.f32.mrf.mxu0
      %v838 = vadd.f32 0.0, %v837
      %v839 = vpop.f32.mrf.mxu0
      %v840 = vpop.f32.mrf.mxu0
      %v841 = vadd.f32 0.0, %v840
      %v842 = vpop.f32.mrf.mxu0
      %843 = vmatprep.mubr.bf16.mxu0 0
      %844 = vmatmul.mubr.bf16.gmra.mxu0 %v672
      %v845 = vpop.f32.mrf.mxu0
      %v846 = vadd.f32 0.0, %v845
      %v847 = vpop.f32.mrf.mxu0
      %v848 = vpop.f32.mrf.mxu0
      %v849 = vadd.f32 0.0, %v848
      %v850 = vpop.f32.mrf.mxu0
      %851 = vmatprep.mubr.bf16.mxu0 0
      %852 = vmatmul.mubr.bf16.gmra.mxu0 %v675
      %v853 = vpop.f32.mrf.mxu0
      %v854 = vadd.f32 0.0, %v853
      %v855 = vpop.f32.mrf.mxu0
      %v856 = vpop.f32.mrf.mxu0
      %v857 = vadd.f32 0.0, %v856
      %v858 = vpop.f32.mrf.mxu0
      %859 = vmatprep.mubr.bf16.mxu0 0
      %860 = vmatmul.mubr.bf16.gmra.mxu0 %v678
      %v861 = vpop.f32.mrf.mxu0
      %v862 = vadd.f32 0.0, %v861
      %v863 = vpop.f32.mrf.mxu0
      %v864 = vpop.f32.mrf.mxu0
      %v865 = vadd.f32 0.0, %v864
      %v866 = vpop.f32.mrf.mxu0
      %867 = vmatprep.mubr.bf16.mxu0 0
      %868 = vmatmul.mubr.bf16.gmra.mxu0 %v681
      %v869 = vpop.f32.mrf.mxu0
      %v870 = vadd.f32 0.0, %v869
      %v871 = vpop.f32.mrf.mxu0
      %v872 = vpop.f32.mrf.mxu0
      %v873 = vadd.f32 0.0, %v872
      %v874 = vpop.f32.mrf.mxu0
      %875 = vmatprep.mubr.bf16.mxu0 0
      %876 = vmatmul.mubr.bf16.gmra.mxu0 %v684
      %v877 = vpop.f32.mrf.mxu0
      %v878 = vadd.f32 0.0, %v877
      %v879 = vpop.f32.mrf.mxu0
      %v880 = vpop.f32.mrf.mxu0
      %v881 = vadd.f32 0.0, %v880
      %v882 = vpop.f32.mrf.mxu0
      %883 = vmatprep.mubr.bf16.mxu0 0
      %884 = vmatmul.mubr.bf16.gmra.mxu0 %v687
      %v885 = vpop.f32.mrf.mxu0
      %v886 = vadd.f32 0.0, %v885
      %v887 = vpop.f32.mrf.mxu0
      %v888 = vpop.f32.mrf.mxu0
      %v889 = vadd.f32 0.0, %v888
      %v890 = vpop.f32.mrf.mxu0
      %891 = vmatprep.mubr.bf16.mxu0 0
      %892 = vmatmul.mubr.bf16.gmra.mxu0 %v690
      %v893 = vpop.f32.mrf.mxu0
      %v894 = vadd.f32 0.0, %v893
      %v895 = vpop.f32.mrf.mxu0
      %v896 = vpop.f32.mrf.mxu0
      %v897 = vadd.f32 0.0, %v896
      %v898 = vpop.f32.mrf.mxu0
      %899 = vmatprep.mubr.bf16.mxu0 0
      %900 = vmatmul.mubr.bf16.gmra.mxu0 %v693
      %v901 = vpop.f32.mrf.mxu0
      %v902 = vadd.f32 0.0, %v901
      %v903 = vpop.f32.mrf.mxu0
      %v904 = vpop.f32.mrf.mxu0
      %v905 = vadd.f32 0.0, %v904
      %v906 = vpop.f32.mrf.mxu0
      %907 = vmatprep.mubr.bf16.mxu0 0
      %908 = vmatmul.mubr.bf16.gmra.mxu0 %v696
      %v909 = vpop.f32.mrf.mxu0
      %v910 = vadd.f32 0.0, %v909
      %v911 = vpop.f32.mrf.mxu0
      %v912 = vpop.f32.mrf.mxu0
      %v913 = vadd.f32 0.0, %v912
      %v914 = vpop.f32.mrf.mxu0
      %915 = vmatprep.mubr.bf16.mxu0 0
      %916 = vmatmul.mubr.bf16.gmra.mxu0 %v699
      %v917 = vpop.f32.mrf.mxu0
      %v918 = vadd.f32 0.0, %v917
      %v919 = vpop.f32.mrf.mxu0
      %v920 = vpop.f32.mrf.mxu0
      %v921 = vadd.f32 0.0, %v920
      %v922 = vpop.f32.mrf.mxu0
      %923 = vmatprep.mubr.bf16.mxu0 0
      %924 = vmatmul.mubr.bf16.gmra.mxu0 %v702
      %v925 = vpop.f32.mrf.mxu0
      %v926 = vadd.f32 0.0, %v925
      %v927 = vpop.f32.mrf.mxu0
      %v928 = vpop.f32.mrf.mxu0
      %v929 = vadd.f32 0.0, %v928
      %v930 = vpop.f32.mrf.mxu0
      %931 = vmatprep.mubr.bf16.mxu0 0
      %932 = vmatmul.mubr.bf16.gmra.mxu0 %v705
      %v933 = vpop.f32.mrf.mxu0
      %v934 = vadd.f32 0.0, %v933
      %v935 = vpop.f32.mrf.mxu0
      %v936 = vpop.f32.mrf.mxu0
      %v937 = vadd.f32 0.0, %v936
      %v938 = vpop.f32.mrf.mxu0
      %939 = vmatprep.mubr.bf16.mxu0 0
      %940 = vmatmul.mubr.bf16.gmra.mxu0 %v708
      %v941 = vpop.f32.mrf.mxu0
      %v942 = vadd.f32 0.0, %v941
      %v943 = vpop.f32.mrf.mxu0
      %v944 = vpop.f32.mrf.mxu0
      %v945 = vadd.f32 0.0, %v944
      %v946 = vpop.f32.mrf.mxu0
      %947 = vmatprep.mubr.bf16.mxu0 0
      %948 = vmatmul.mubr.bf16.gmra.mxu0 %v711
      %v949 = vpop.f32.mrf.mxu0
      %v950 = vadd.f32 0.0, %v949
      %v951 = vpop.f32.mrf.mxu0
      %v952 = vpop.f32.mrf.mxu0
      %v953 = vadd.f32 0.0, %v952
      %v954 = vpop.f32.mrf.mxu0
      %955 = vmatprep.mubr.bf16.mxu0 0
      %956 = vmatmul.mubr.bf16.gmra.mxu0 %v714
      %v957 = vpop.f32.mrf.mxu0
      %v958 = vadd.f32 0.0, %v957
      %v959 = vpop.f32.mrf.mxu0
      %v960 = vpop.f32.mrf.mxu0
      %v961 = vadd.f32 0.0, %v960
      %v962 = vpop.f32.mrf.mxu0
      %963 = vmatprep.mubr.bf16.mxu0 0
      %964 = vmatmul.mubr.bf16.gmra.mxu0 %v717
      %v965 = vpop.f32.mrf.mxu0
      %v966 = vadd.f32 0.0, %v965
      %v967 = vpop.f32.mrf.mxu0
      %v968 = vpop.f32.mrf.mxu0
      %v969 = vadd.f32 0.0, %v968
      %v970 = vpop.f32.mrf.mxu0
      %971 = vmatprep.mubr.bf16.mxu0 0
      %972 = vmatmul.mubr.bf16.gmra.mxu0 %v720
      %v973 = vpop.f32.mrf.mxu0
      %v974 = vadd.f32 0.0, %v973
      %v975 = vpop.f32.mrf.mxu0
      %v976 = vpop.f32.mrf.mxu0
      %v977 = vadd.f32 0.0, %v976
      %v978 = vpop.f32.mrf.mxu0
      %979 = vmatprep.mubr.bf16.mxu0 0
      %980 = vmatmul.mubr.bf16.gmra.mxu0 %v723
      %v981 = vpop.f32.mrf.mxu0
      %v982 = vadd.f32 0.0, %v981
      %v983 = vpop.f32.mrf.mxu0
      %v984 = vpop.f32.mrf.mxu0
      %v985 = vadd.f32 0.0, %v984
      %v986 = vpop.f32.mrf.mxu0
      %987 = vmatprep.mubr.bf16.mxu0 0
      %988 = vmatmul.mubr.bf16.gmra.mxu0 %v726
      %v989 = vpop.f32.mrf.mxu0
      %v990 = vadd.f32 0.0, %v989
      %v991 = vpop.f32.mrf.mxu0
      %v992 = vpop.f32.mrf.mxu0
      %v993 = vadd.f32 0.0, %v992
      %v994 = vpop.f32.mrf.mxu0
      %995 = vmatprep.mubr.bf16.mxu0 0
      %996 = vmatmul.mubr.bf16.gmra.mxu0 %v729
      %v997 = vpop.f32.mrf.mxu0
      %v998 = vadd.f32 0.0, %v997
      %v999 = vpop.f32.mrf.mxu0
      %v1000 = vpop.f32.mrf.mxu0
      %v1001 = vadd.f32 0.0, %v1000
      %v1002 = vpop.f32.mrf.mxu0
      %1003 = vmatprep.mubr.bf16.mxu0 0
      %1004 = vmatmul.mubr.bf16.gmra.mxu0 %v732
      %v1005 = vpop.f32.mrf.mxu0
      %v1006 = vadd.f32 0.0, %v1005
      %v1007 = vpop.f32.mrf.mxu0
      %v1008 = vpop.f32.mrf.mxu0
      %v1009 = vadd.f32 0.0, %v1008
      %v1010 = vpop.f32.mrf.mxu0
      %1011 = vmatprep.mubr.bf16.mxu0 0
      %1012 = vmatmul.mubr.bf16.gmra.mxu0 %v735
      %v1013 = vpop.f32.mrf.mxu0
      %v1014 = vadd.f32 0.0, %v1013
      %v1015 = vpop.f32.mrf.mxu0
      %v1016 = vpop.f32.mrf.mxu0
      %v1017 = vadd.f32 0.0, %v1016
      %v1018 = vpop.f32.mrf.mxu0
      %1019 = vmatprep.mubr.bf16.mxu0 0
      %1020 = vmatmul.mubr.bf16.gmra.mxu0 %v738
      %v1021 = vpop.f32.mrf.mxu0
      %v1022 = vadd.f32 0.0, %v1021
      %v1023 = vpop.f32.mrf.mxu0
      %v1024 = vpop.f32.mrf.mxu0
      %v1025 = vadd.f32 0.0, %v1024
      %v1026 = vpop.f32.mrf.mxu0
      %1027 = vmatprep.mubr.bf16.mxu0 0
      %1028 = vmatmul.mubr.bf16.gmra.mxu0 %v741
      %v1029 = vpop.f32.mrf.mxu0
      %v1030 = vadd.f32 0.0, %v1029
      %v1031 = vpop.f32.mrf.mxu0
      %v1032 = vpop.f32.mrf.mxu0
      %v1033 = vadd.f32 0.0, %v1032
      %v1034 = vpop.f32.mrf.mxu0
      %1035 = vdwg.mxu0
      %v1037 = vsel %vm646, %v513, 0
      %v1040 = vsel %vm646, %v514, 0
      %v1043 = vsel %vm646, %v515, 0
      %v1046 = vsel %vm646, %v516, 0
      %v1049 = vsel %vm646, %v517, 0
      %v1052 = vsel %vm646, %v518, 0
      %v1055 = vsel %vm646, %v519, 0
      %v1058 = vsel %vm646, %v520, 0
      %v1061 = vsel %vm646, %v521, 0
      %v1064 = vsel %vm646, %v522, 0
      %v1067 = vsel %vm646, %v523, 0
      %v1070 = vsel %vm646, %v524, 0
      %v1073 = vsel %vm646, %v525, 0
      %v1076 = vsel %vm646, %v526, 0
      %v1079 = vsel %vm646, %v527, 0
      %v1082 = vsel %vm646, %v528, 0
      %v1085 = vsel %vm646, %v529, 0
      %v1088 = vsel %vm646, %v530, 0
      %v1091 = vsel %vm646, %v531, 0
      %v1094 = vsel %vm646, %v532, 0
      %v1097 = vsel %vm646, %v533, 0
      %v1100 = vsel %vm646, %v534, 0
      %v1103 = vsel %vm646, %v535, 0
      %v1106 = vsel %vm646, %v536, 0
      %v1109 = vsel %vm646, %v537, 0
      %v1112 = vsel %vm646, %v538, 0
      %v1115 = vsel %vm646, %v539, 0
      %v1118 = vsel %vm646, %v540, 0
      %v1121 = vsel %vm646, %v541, 0
      %v1124 = vsel %vm646, %v542, 0
      %v1127 = vsel %vm646, %v543, 0
      %v1130 = vsel %vm646, %v544, 0
      %v1133 = vsel %vm743, %v545, 0
      %1135 = vmatprep.subr.bf16.mxu0 0
      %1136 = vmatpush1.bf16.msra.mxu0 0
      %1137 = vmatprep.subr.bf16.mxu0 0
      %1138 = vmatpush1.bf16.msra.mxu0 0
      %1139 = vmatprep.subr.bf16.mxu0 0
      %1140 = vmatpush1.bf16.msra.mxu0 0
      %1141 = vmatprep.subr.bf16.mxu0 0
      %1142 = vmatpush1.bf16.msra.mxu0 0
      %1143 = vmatprep.subr.bf16.mxu0 0
      %1144 = vmatpush1.bf16.msra.mxu0 0
      %1145 = vmatprep.subr.bf16.mxu0 0
      %1146 = vmatpush1.bf16.msra.mxu0 0
      %1147 = vmatprep.subr.bf16.mxu0 0
      %1148 = vmatpush1.bf16.msra.mxu0 0
      %1149 = vmatprep.subr.bf16.mxu0 0
      %1150 = vmatpush1.bf16.msra.mxu0 %v1133
      %1151 = vmatprep.subr.bf16.mxu0 0
      %1152 = vmatpush2.bf16.msra.mxu0 0
      %1153 = vmatprep.subr.bf16.mxu0 0
      %1154 = vmatpush2.bf16.msra.mxu0 0
      %1155 = vmatprep.subr.bf16.mxu0 0
      %1156 = vmatpush2.bf16.msra.mxu0 0
      %1157 = vmatprep.subr.bf16.mxu0 0
      %1158 = vmatpush2.bf16.msra.mxu0 0
      %1159 = vmatprep.subr.bf16.mxu0 0
      %1160 = vmatpush2.bf16.msra.mxu0 0
      %1161 = vmatprep.subr.bf16.mxu0 0
      %1162 = vmatpush2.bf16.msra.mxu0 0
      %1163 = vmatprep.subr.bf16.mxu0 0
      %1164 = vmatpush2.bf16.msra.mxu0 0
      %1165 = vmatprep.subr.bf16.mxu0 0
      %1166 = vmatpush2.bf16.msra.mxu0 0
      %1167 = vmatprep.mubr.bf16.mxu0 0
      %1168 = vmatmul.mubr.bf16.gmra.mxu0 %v1037
      %v1169 = vpop.f32.mrf.mxu0
      %v1170 = vadd.f32 %v782, %v1169
      %v1171 = vpop.f32.mrf.mxu0
      %v1172 = vpop.f32.mrf.mxu0
      %v1173 = vadd.f32 %v785, %v1172
      %v1174 = vpop.f32.mrf.mxu0
      %1175 = vmatprep.mubr.bf16.mxu0 0
      %1176 = vmatmul.mubr.bf16.gmra.mxu0 %v1040
      %v1177 = vpop.f32.mrf.mxu0
      %v1178 = vadd.f32 %v790, %v1177
      %v1179 = vpop.f32.mrf.mxu0
      %v1180 = vpop.f32.mrf.mxu0
      %v1181 = vadd.f32 %v793, %v1180
      %v1182 = vpop.f32.mrf.mxu0
      %1183 = vmatprep.mubr.bf16.mxu0 0
      %1184 = vmatmul.mubr.bf16.gmra.mxu0 %v1043
      %v1185 = vpop.f32.mrf.mxu0
      %v1186 = vadd.f32 %v798, %v1185
      %v1187 = vpop.f32.mrf.mxu0
      %v1188 = vpop.f32.mrf.mxu0
      %v1189 = vadd.f32 %v801, %v1188
      %v1190 = vpop.f32.mrf.mxu0
      %1191 = vmatprep.mubr.bf16.mxu0 0
      %1192 = vmatmul.mubr.bf16.gmra.mxu0 %v1046
      %v1193 = vpop.f32.mrf.mxu0
      %v1194 = vadd.f32 %v806, %v1193
      %v1195 = vpop.f32.mrf.mxu0
      %v1196 = vpop.f32.mrf.mxu0
      %v1197 = vadd.f32 %v809, %v1196
      %v1198 = vpop.f32.mrf.mxu0
      %1199 = vmatprep.mubr.bf16.mxu0 0
      %1200 = vmatmul.mubr.bf16.gmra.mxu0 %v1049
      %v1201 = vpop.f32.mrf.mxu0
      %v1202 = vadd.f32 %v814, %v1201
      %v1203 = vpop.f32.mrf.mxu0
      %v1204 = vpop.f32.mrf.mxu0
      %v1205 = vadd.f32 %v817, %v1204
      %v1206 = vpop.f32.mrf.mxu0
      %1207 = vmatprep.mubr.bf16.mxu0 0
      %1208 = vmatmul.mubr.bf16.gmra.mxu0 %v1052
      %v1209 = vpop.f32.mrf.mxu0
      %v1210 = vadd.f32 %v822, %v1209
      %v1211 = vpop.f32.mrf.mxu0
      %v1212 = vpop.f32.mrf.mxu0
      %v1213 = vadd.f32 %v825, %v1212
      %v1214 = vpop.f32.mrf.mxu0
      %1215 = vmatprep.mubr.bf16.mxu0 0
      %1216 = vmatmul.mubr.bf16.gmra.mxu0 %v1055
      %v1217 = vpop.f32.mrf.mxu0
      %v1218 = vadd.f32 %v830, %v1217
      %v1219 = vpop.f32.mrf.mxu0
      %v1220 = vpop.f32.mrf.mxu0
      %v1221 = vadd.f32 %v833, %v1220
      %v1222 = vpop.f32.mrf.mxu0
      %1223 = vmatprep.mubr.bf16.mxu0 0
      %1224 = vmatmul.mubr.bf16.gmra.mxu0 %v1058
      %v1225 = vpop.f32.mrf.mxu0
      %v1226 = vadd.f32 %v838, %v1225
      %v1227 = vpop.f32.mrf.mxu0
      %v1228 = vpop.f32.mrf.mxu0
      %v1229 = vadd.f32 %v841, %v1228
      %v1230 = vpop.f32.mrf.mxu0
      %1231 = vmatprep.mubr.bf16.mxu0 0
      %1232 = vmatmul.mubr.bf16.gmra.mxu0 %v1061
      %v1233 = vpop.f32.mrf.mxu0
      %v1234 = vadd.f32 %v846, %v1233
      %v1235 = vpop.f32.mrf.mxu0
      %v1236 = vpop.f32.mrf.mxu0
      %v1237 = vadd.f32 %v849, %v1236
      %v1238 = vpop.f32.mrf.mxu0
      %1239 = vmatprep.mubr.bf16.mxu0 0
      %1240 = vmatmul.mubr.bf16.gmra.mxu0 %v1064
      %v1241 = vpop.f32.mrf.mxu0
      %v1242 = vadd.f32 %v854, %v1241
      %v1243 = vpop.f32.mrf.mxu0
      %v1244 = vpop.f32.mrf.mxu0
      %v1245 = vadd.f32 %v857, %v1244
      %v1246 = vpop.f32.mrf.mxu0
      %1247 = vmatprep.mubr.bf16.mxu0 0
      %1248 = vmatmul.mubr.bf16.gmra.mxu0 %v1067
      %v1249 = vpop.f32.mrf.mxu0
      %v1250 = vadd.f32 %v862, %v1249
      %v1251 = vpop.f32.mrf.mxu0
      %v1252 = vpop.f32.mrf.mxu0
      %v1253 = vadd.f32 %v865, %v1252
      %v1254 = vpop.f32.mrf.mxu0
      %1255 = vmatprep.mubr.bf16.mxu0 0
      %1256 = vmatmul.mubr.bf16.gmra.mxu0 %v1070
      %v1257 = vpop.f32.mrf.mxu0
      %v1258 = vadd.f32 %v870, %v1257
      %v1259 = vpop.f32.mrf.mxu0
      %v1260 = vpop.f32.mrf.mxu0
      %v1261 = vadd.f32 %v873, %v1260
      %v1262 = vpop.f32.mrf.mxu0
      %1263 = vmatprep.mubr.bf16.mxu0 0
      %1264 = vmatmul.mubr.bf16.gmra.mxu0 %v1073
      %v1265 = vpop.f32.mrf.mxu0
      %v1266 = vadd.f32 %v878, %v1265
      %v1267 = vpop.f32.mrf.mxu0
      %v1268 = vpop.f32.mrf.mxu0
      %v1269 = vadd.f32 %v881, %v1268
      %v1270 = vpop.f32.mrf.mxu0
      %1271 = vmatprep.mubr.bf16.mxu0 0
      %1272 = vmatmul.mubr.bf16.gmra.mxu0 %v1076
      %v1273 = vpop.f32.mrf.mxu0
      %v1274 = vadd.f32 %v886, %v1273
      %v1275 = vpop.f32.mrf.mxu0
      %v1276 = vpop.f32.mrf.mxu0
      %v1277 = vadd.f32 %v889, %v1276
      %v1278 = vpop.f32.mrf.mxu0
      %1279 = vmatprep.mubr.bf16.mxu0 0
      %1280 = vmatmul.mubr.bf16.gmra.mxu0 %v1079
      %v1281 = vpop.f32.mrf.mxu0
      %v1282 = vadd.f32 %v894, %v1281
      %v1283 = vpop.f32.mrf.mxu0
      %v1284 = vpop.f32.mrf.mxu0
      %v1285 = vadd.f32 %v897, %v1284
      %v1286 = vpop.f32.mrf.mxu0
      %1287 = vmatprep.mubr.bf16.mxu0 0
      %1288 = vmatmul.mubr.bf16.gmra.mxu0 %v1082
      %v1289 = vpop.f32.mrf.mxu0
      %v1290 = vadd.f32 %v902, %v1289
      %v1291 = vpop.f32.mrf.mxu0
      %v1292 = vpop.f32.mrf.mxu0
      %v1293 = vadd.f32 %v905, %v1292
      %v1294 = vpop.f32.mrf.mxu0
      %1295 = vmatprep.mubr.bf16.mxu0 0
      %1296 = vmatmul.mubr.bf16.gmra.mxu0 %v1085
      %v1297 = vpop.f32.mrf.mxu0
      %v1298 = vadd.f32 %v910, %v1297
      %v1299 = vpop.f32.mrf.mxu0
      %v1300 = vpop.f32.mrf.mxu0
      %v1301 = vadd.f32 %v913, %v1300
      %v1302 = vpop.f32.mrf.mxu0
      %1303 = vmatprep.mubr.bf16.mxu0 0
      %1304 = vmatmul.mubr.bf16.gmra.mxu0 %v1088
      %v1305 = vpop.f32.mrf.mxu0
      %v1306 = vadd.f32 %v918, %v1305
      %v1307 = vpop.f32.mrf.mxu0
      %v1308 = vpop.f32.mrf.mxu0
      %v1309 = vadd.f32 %v921, %v1308
      %v1310 = vpop.f32.mrf.mxu0
      %1311 = vmatprep.mubr.bf16.mxu0 0
      %1312 = vmatmul.mubr.bf16.gmra.mxu0 %v1091
      %v1313 = vpop.f32.mrf.mxu0
      %v1314 = vadd.f32 %v926, %v1313
      %v1315 = vpop.f32.mrf.mxu0
      %v1316 = vpop.f32.mrf.mxu0
      %v1317 = vadd.f32 %v929, %v1316
      %v1318 = vpop.f32.mrf.mxu0
      %1319 = vmatprep.mubr.bf16.mxu0 0
      %1320 = vmatmul.mubr.bf16.gmra.mxu0 %v1094
      %v1321 = vpop.f32.mrf.mxu0
      %v1322 = vadd.f32 %v934, %v1321
      %v1323 = vpop.f32.mrf.mxu0
      %v1324 = vpop.f32.mrf.mxu0
      %v1325 = vadd.f32 %v937, %v1324
      %v1326 = vpop.f32.mrf.mxu0
      %1327 = vmatprep.mubr.bf16.mxu0 0
      %1328 = vmatmul.mubr.bf16.gmra.mxu0 %v1097
      %v1329 = vpop.f32.mrf.mxu0
      %v1330 = vadd.f32 %v942, %v1329
      %v1331 = vpop.f32.mrf.mxu0
      %v1332 = vpop.f32.mrf.mxu0
      %v1333 = vadd.f32 %v945, %v1332
      %v1334 = vpop.f32.mrf.mxu0
      %1335 = vmatprep.mubr.bf16.mxu0 0
      %1336 = vmatmul.mubr.bf16.gmra.mxu0 %v1100
      %v1337 = vpop.f32.mrf.mxu0
      %v1338 = vadd.f32 %v950, %v1337
      %v1339 = vpop.f32.mrf.mxu0
      %v1340 = vpop.f32.mrf.mxu0
      %v1341 = vadd.f32 %v953, %v1340
      %v1342 = vpop.f32.mrf.mxu0
      %1343 = vmatprep.mubr.bf16.mxu0 0
      %1344 = vmatmul.mubr.bf16.gmra.mxu0 %v1103
      %v1345 = vpop.f32.mrf.mxu0
      %v1346 = vadd.f32 %v958, %v1345
      %v1347 = vpop.f32.mrf.mxu0
      %v1348 = vpop.f32.mrf.mxu0
      %v1349 = vadd.f32 %v961, %v1348
      %v1350 = vpop.f32.mrf.mxu0
      %1351 = vmatprep.mubr.bf16.mxu0 0
      %1352 = vmatmul.mubr.bf16.gmra.mxu0 %v1106
      %v1353 = vpop.f32.mrf.mxu0
      %v1354 = vadd.f32 %v966, %v1353
      %v1355 = vpop.f32.mrf.mxu0
      %v1356 = vpop.f32.mrf.mxu0
      %v1357 = vadd.f32 %v969, %v1356
      %v1358 = vpop.f32.mrf.mxu0
      %1359 = vmatprep.mubr.bf16.mxu0 0
      %1360 = vmatmul.mubr.bf16.gmra.mxu0 %v1109
      %v1361 = vpop.f32.mrf.mxu0
      %v1362 = vadd.f32 %v974, %v1361
      %v1363 = vpop.f32.mrf.mxu0
      %v1364 = vpop.f32.mrf.mxu0
      %v1365 = vadd.f32 %v977, %v1364
      %v1366 = vpop.f32.mrf.mxu0
      %1367 = vmatprep.mubr.bf16.mxu0 0
      %1368 = vmatmul.mubr.bf16.gmra.mxu0 %v1112
      %v1369 = vpop.f32.mrf.mxu0
      %v1370 = vadd.f32 %v982, %v1369
      %v1371 = vpop.f32.mrf.mxu0
      %v1372 = vpop.f32.mrf.mxu0
      %v1373 = vadd.f32 %v985, %v1372
      %v1374 = vpop.f32.mrf.mxu0
      %1375 = vmatprep.mubr.bf16.mxu0 0
      %1376 = vmatmul.mubr.bf16.gmra.mxu0 %v1115
      %v1377 = vpop.f32.mrf.mxu0
      %v1378 = vadd.f32 %v990, %v1377
      %v1379 = vpop.f32.mrf.mxu0
      %v1380 = vpop.f32.mrf.mxu0
      %v1381 = vadd.f32 %v993, %v1380
      %v1382 = vpop.f32.mrf.mxu0
      %1383 = vmatprep.mubr.bf16.mxu0 0
      %1384 = vmatmul.mubr.bf16.gmra.mxu0 %v1118
      %v1385 = vpop.f32.mrf.mxu0
      %v1386 = vadd.f32 %v998, %v1385
      %v1387 = vpop.f32.mrf.mxu0
      %v1388 = vpop.f32.mrf.mxu0
      %v1389 = vadd.f32 %v1001, %v1388
      %v1390 = vpop.f32.mrf.mxu0
      %1391 = vmatprep.mubr.bf16.mxu0 0
      %1392 = vmatmul.mubr.bf16.gmra.mxu0 %v1121
      %v1393 = vpop.f32.mrf.mxu0
      %v1394 = vadd.f32 %v1006, %v1393
      %v1395 = vpop.f32.mrf.mxu0
      %v1396 = vpop.f32.mrf.mxu0
      %v1397 = vadd.f32 %v1009, %v1396
      %v1398 = vpop.f32.mrf.mxu0
      %1399 = vmatprep.mubr.bf16.mxu0 0
      %1400 = vmatmul.mubr.bf16.gmra.mxu0 %v1124
      %v1401 = vpop.f32.mrf.mxu0
      %v1402 = vadd.f32 %v1014, %v1401
      %v1403 = vpop.f32.mrf.mxu0
      %v1404 = vpop.f32.mrf.mxu0
      %v1405 = vadd.f32 %v1017, %v1404
      %v1406 = vpop.f32.mrf.mxu0
      %1407 = vmatprep.mubr.bf16.mxu0 0
      %1408 = vmatmul.mubr.bf16.gmra.mxu0 %v1127
      %v1409 = vpop.f32.mrf.mxu0
      %v1410 = vadd.f32 %v1022, %v1409
      %v1411 = vpop.f32.mrf.mxu0
      %v1412 = vpop.f32.mrf.mxu0
      %v1413 = vadd.f32 %v1025, %v1412
      %v1414 = vpop.f32.mrf.mxu0
      %1415 = vmatprep.mubr.bf16.mxu0 0
      %1416 = vmatmul.mubr.bf16.gmra.mxu0 %v1130
      %v1417 = vpop.f32.mrf.mxu0
      %v1418 = vadd.f32 %v1030, %v1417
      %v1419 = vpop.f32.mrf.mxu0
      %v1420 = vpop.f32.mrf.mxu0
      %v1421 = vadd.f32 %v1033, %v1420
      %v1422 = vpop.f32.mrf.mxu0
      %1423 = vdwg.mxu0
      %s1424 = sadd.s32 %s447, 4
      %s1425 = scalar_lea.vmem %s425, %s1424
      %v1426 = vld [vmem:[%s1425] sm:$0xff]
      %v1427 = vld [vmem:[%s1425 + $0x8] sm:$0xff]
      %v1428 = vld [vmem:[%s1425 + $0x10] sm:$0xff]
      %v1429 = vld [vmem:[%s1425 + $0x18] sm:$0xff]
      %v1430 = vld [vmem:[%s1425 + $0x20] sm:$0xff]
      %v1431 = vld [vmem:[%s1425 + $0x28] sm:$0xff]
      %v1432 = vld [vmem:[%s1425 + $0x30] sm:$0xff]
      %v1433 = vld [vmem:[%s1425 + $0x38] sm:$0xff]
      %v1434 = vld [vmem:[%s1425 + $0x40] sm:$0xff]
      %v1435 = vld [vmem:[%s1425 + $0x48] sm:$0xff]
      %v1436 = vld [vmem:[%s1425 + $0x50] sm:$0xff]
      %v1437 = vld [vmem:[%s1425 + $0x58] sm:$0xff]
      %v1438 = vld [vmem:[%s1425 + $0x60] sm:$0xff]
      %v1439 = vld [vmem:[%s1425 + $0x68] sm:$0xff]
      %v1440 = vld [vmem:[%s1425 + $0x70] sm:$0xff]
      %v1441 = vld [vmem:[%s1425 + $0x78] sm:$0xff]
      %v1442 = vld [vmem:[%s1425 + $0x80] sm:$0xff]
      %v1443 = vld [vmem:[%s1425 + $0x88] sm:$0xff]
      %v1444 = vld [vmem:[%s1425 + $0x90] sm:$0xff]
      %v1445 = vld [vmem:[%s1425 + $0x98] sm:$0xff]
      %v1446 = vld [vmem:[%s1425 + $0xa0] sm:$0xff]
      %v1447 = vld [vmem:[%s1425 + $0xa8] sm:$0xff]
      %v1448 = vld [vmem:[%s1425 + $0xb0] sm:$0xff]
      %v1449 = vld [vmem:[%s1425 + $0xb8] sm:$0xff]
      %v1450 = vld [vmem:[%s1425 + $0xc0] sm:$0xff]
      %v1451 = vld [vmem:[%s1425 + $0xc8] sm:$0xff]
      %v1452 = vld [vmem:[%s1425 + $0xd0] sm:$0xff]
      %v1453 = vld [vmem:[%s1425 + $0xd8] sm:$0xff]
      %v1454 = vld [vmem:[%s1425 + $0xe0] sm:$0xff]
      %v1455 = vld [vmem:[%s1425 + $0xe8] sm:$0xff]
      %v1456 = vld [vmem:[%s1425 + $0xf0] sm:$0xff]
      %v1457 = vld [vmem:[%s1425 + $0xf8] sm:$0xff]
      %v1458 = vld [vmem:[%s1425 + $0x100] sm:$0xff]
      %v1459 = vld [vmem:[%s1425 + $0x108] sm:$0xff]
      %v1460 = vld [vmem:[%s1425 + $0x110] sm:$0xff]
      %v1461 = vld [vmem:[%s1425 + $0x118] sm:$0xff]
      %v1462 = vld [vmem:[%s1425 + $0x120] sm:$0xff]
      %v1463 = vld [vmem:[%s1425 + $0x128] sm:$0xff]
      %v1464 = vld [vmem:[%s1425 + $0x130] sm:$0xff]
      %v1465 = vld [vmem:[%s1425 + $0x138] sm:$0xff]
      %v1466 = vld [vmem:[%s1425 + $0x140] sm:$0xff]
      %v1467 = vld [vmem:[%s1425 + $0x148] sm:$0xff]
      %v1468 = vld [vmem:[%s1425 + $0x150] sm:$0xff]
      %v1469 = vld [vmem:[%s1425 + $0x158] sm:$0xff]
      %v1470 = vld [vmem:[%s1425 + $0x160] sm:$0xff]
      %v1471 = vld [vmem:[%s1425 + $0x168] sm:$0xff]
      %v1472 = vld [vmem:[%s1425 + $0x170] sm:$0xff]
      %v1473 = vld [vmem:[%s1425 + $0x178] sm:$0xff]
      %v1474 = vld [vmem:[%s1425 + $0x180] sm:$0xff]
      %v1475 = vld [vmem:[%s1425 + $0x188] sm:$0xff]
      %v1476 = vld [vmem:[%s1425 + $0x190] sm:$0xff]
      %v1477 = vld [vmem:[%s1425 + $0x198] sm:$0xff]
      %v1478 = vld [vmem:[%s1425 + $0x1a0] sm:$0xff]
      %v1479 = vld [vmem:[%s1425 + $0x1a8] sm:$0xff]
      %v1480 = vld [vmem:[%s1425 + $0x1b0] sm:$0xff]
      %v1481 = vld [vmem:[%s1425 + $0x1b8] sm:$0xff]
      %v1482 = vld [vmem:[%s1425 + $0x1c0] sm:$0xff]
      %v1483 = vld [vmem:[%s1425 + $0x1c8] sm:$0xff]
      %v1484 = vld [vmem:[%s1425 + $0x1d0] sm:$0xff]
      %v1485 = vld [vmem:[%s1425 + $0x1d8] sm:$0xff]
      %v1486 = vld [vmem:[%s1425 + $0x1e0] sm:$0xff]
      %v1487 = vld [vmem:[%s1425 + $0x1e8] sm:$0xff]
      %v1488 = vld [vmem:[%s1425 + $0x1f0] sm:$0xff]
      %v1489 = vld [vmem:[%s1425 + $0x1f8] sm:$0xff]
      %v1490 = vpack.c.bf16 %v1427, %v1426
      %v1491 = vpack.c.bf16 %v1429, %v1428
      %v1492 = vpack.c.bf16 %v1431, %v1430
      %v1493 = vpack.c.bf16 %v1433, %v1432
      %v1494 = vpack.c.bf16 %v1435, %v1434
      %v1495 = vpack.c.bf16 %v1437, %v1436
      %v1496 = vpack.c.bf16 %v1439, %v1438
      %v1497 = vpack.c.bf16 %v1441, %v1440
      %v1498 = vpack.c.bf16 %v1443, %v1442
      %v1499 = vpack.c.bf16 %v1445, %v1444
      %v1500 = vpack.c.bf16 %v1447, %v1446
      %v1501 = vpack.c.bf16 %v1449, %v1448
      %v1502 = vpack.c.bf16 %v1451, %v1450
      %v1503 = vpack.c.bf16 %v1453, %v1452
      %v1504 = vpack.c.bf16 %v1455, %v1454
      %v1505 = vpack.c.bf16 %v1457, %v1456
      %v1506 = vpack.c.bf16 %v1459, %v1458
      %v1507 = vpack.c.bf16 %v1461, %v1460
      %v1508 = vpack.c.bf16 %v1463, %v1462
      %v1509 = vpack.c.bf16 %v1465, %v1464
      %v1510 = vpack.c.bf16 %v1467, %v1466
      %v1511 = vpack.c.bf16 %v1469, %v1468
      %v1512 = vpack.c.bf16 %v1471, %v1470
      %v1513 = vpack.c.bf16 %v1473, %v1472
      %v1514 = vpack.c.bf16 %v1475, %v1474
      %v1515 = vpack.c.bf16 %v1477, %v1476
      %v1516 = vpack.c.bf16 %v1479, %v1478
      %v1517 = vpack.c.bf16 %v1481, %v1480
      %v1518 = vpack.c.bf16 %v1483, %v1482
      %v1519 = vpack.c.bf16 %v1485, %v1484
      %v1520 = vpack.c.bf16 %v1487, %v1486
      %v1521 = vpack.c.bf16 %v1489, %v1488
      %s1522 = scalar_lea.vmem %s2, 8
      %v1523 = vld [vmem:[%s1522] sm:$0xf]
      %v1525 = vsel %vm646, %v1490, 0
      %v1528 = vsel %vm646, %v1491, 0
      %v1531 = vsel %vm646, %v1492, 0
      %v1534 = vsel %vm646, %v1493, 0
      %v1537 = vsel %vm646, %v1494, 0
      %v1540 = vsel %vm646, %v1495, 0
      %v1543 = vsel %vm646, %v1496, 0
      %v1546 = vsel %vm646, %v1497, 0
      %v1549 = vsel %vm646, %v1498, 0
      %v1552 = vsel %vm646, %v1499, 0
      %v1555 = vsel %vm646, %v1500, 0
      %v1558 = vsel %vm646, %v1501, 0
      %v1561 = vsel %vm646, %v1502, 0
      %v1564 = vsel %vm646, %v1503, 0
      %v1567 = vsel %vm646, %v1504, 0
      %v1570 = vsel %vm646, %v1505, 0
      %v1573 = vsel %vm646, %v1506, 0
      %v1576 = vsel %vm646, %v1507, 0
      %v1579 = vsel %vm646, %v1508, 0
      %v1582 = vsel %vm646, %v1509, 0
      %v1585 = vsel %vm646, %v1510, 0
      %v1588 = vsel %vm646, %v1511, 0
      %v1591 = vsel %vm646, %v1512, 0
      %v1594 = vsel %vm646, %v1513, 0
      %v1597 = vsel %vm646, %v1514, 0
      %v1600 = vsel %vm646, %v1515, 0
      %v1603 = vsel %vm646, %v1516, 0
      %v1606 = vsel %vm646, %v1517, 0
      %v1609 = vsel %vm646, %v1518, 0
      %v1612 = vsel %vm646, %v1519, 0
      %v1615 = vsel %vm646, %v1520, 0
      %v1618 = vsel %vm646, %v1521, 0
      %v1621 = vsel %vm743, %v1523, 0
      %1623 = vmatprep.subr.bf16.mxu0 0
      %1624 = vmatpush1.bf16.msra.mxu0 0
      %1625 = vmatprep.subr.bf16.mxu0 0
      %1626 = vmatpush1.bf16.msra.mxu0 0
      %1627 = vmatprep.subr.bf16.mxu0 0
      %1628 = vmatpush1.bf16.msra.mxu0 0
      %1629 = vmatprep.subr.bf16.mxu0 0
      %1630 = vmatpush1.bf16.msra.mxu0 0
      %1631 = vmatprep.subr.bf16.mxu0 0
      %1632 = vmatpush1.bf16.msra.mxu0 0
      %1633 = vmatprep.subr.bf16.mxu0 0
      %1634 = vmatpush1.bf16.msra.mxu0 0
      %1635 = vmatprep.subr.bf16.mxu0 0
      %1636 = vmatpush1.bf16.msra.mxu0 0
      %1637 = vmatprep.subr.bf16.mxu0 0
      %1638 = vmatpush1.bf16.msra.mxu0 %v1621
      %1639 = vmatprep.subr.bf16.mxu0 0
      %1640 = vmatpush2.bf16.msra.mxu0 0
      %1641 = vmatprep.subr.bf16.mxu0 0
      %1642 = vmatpush2.bf16.msra.mxu0 0
      %1643 = vmatprep.subr.bf16.mxu0 0
      %1644 = vmatpush2.bf16.msra.mxu0 0
      %1645 = vmatprep.subr.bf16.mxu0 0
      %1646 = vmatpush2.bf16.msra.mxu0 0
      %1647 = vmatprep.subr.bf16.mxu0 0
      %1648 = vmatpush2.bf16.msra.mxu0 0
      %1649 = vmatprep.subr.bf16.mxu0 0
      %1650 = vmatpush2.bf16.msra.mxu0 0
      %1651 = vmatprep.subr.bf16.mxu0 0
      %1652 = vmatpush2.bf16.msra.mxu0 0
      %1653 = vmatprep.subr.bf16.mxu0 0
      %1654 = vmatpush2.bf16.msra.mxu0 0
      %1655 = vmatprep.mubr.bf16.mxu0 0
      %1656 = vmatmul.mubr.bf16.gmra.mxu0 %v1525
      %v1657 = vpop.f32.mrf.mxu0
      %v1658 = vadd.f32 0.0, %v1657
      %v1659 = vpop.f32.mrf.mxu0
      %v1660 = vpop.f32.mrf.mxu0
      %v1661 = vadd.f32 0.0, %v1660
      %v1662 = vpop.f32.mrf.mxu0
      %1663 = vmatprep.mubr.bf16.mxu0 0
      %1664 = vmatmul.mubr.bf16.gmra.mxu0 %v1528
      %v1665 = vpop.f32.mrf.mxu0
      %v1666 = vadd.f32 0.0, %v1665
      %v1667 = vpop.f32.mrf.mxu0
      %v1668 = vpop.f32.mrf.mxu0
      %v1669 = vadd.f32 0.0, %v1668
      %v1670 = vpop.f32.mrf.mxu0
      %1671 = vmatprep.mubr.bf16.mxu0 0
      %1672 = vmatmul.mubr.bf16.gmra.mxu0 %v1531
      %v1673 = vpop.f32.mrf.mxu0
      %v1674 = vadd.f32 0.0, %v1673
      %v1675 = vpop.f32.mrf.mxu0
      %v1676 = vpop.f32.mrf.mxu0
      %v1677 = vadd.f32 0.0, %v1676
      %v1678 = vpop.f32.mrf.mxu0
      %1679 = vmatprep.mubr.bf16.mxu0 0
      %1680 = vmatmul.mubr.bf16.gmra.mxu0 %v1534
      %v1681 = vpop.f32.mrf.mxu0
      %v1682 = vadd.f32 0.0, %v1681
      %v1683 = vpop.f32.mrf.mxu0
      %v1684 = vpop.f32.mrf.mxu0
      %v1685 = vadd.f32 0.0, %v1684
      %v1686 = vpop.f32.mrf.mxu0
      %1687 = vmatprep.mubr.bf16.mxu0 0
      %1688 = vmatmul.mubr.bf16.gmra.mxu0 %v1537
      %v1689 = vpop.f32.mrf.mxu0
      %v1690 = vadd.f32 0.0, %v1689
      %v1691 = vpop.f32.mrf.mxu0
      %v1692 = vpop.f32.mrf.mxu0
      %v1693 = vadd.f32 0.0, %v1692
      %v1694 = vpop.f32.mrf.mxu0
      %1695 = vmatprep.mubr.bf16.mxu0 0
      %1696 = vmatmul.mubr.bf16.gmra.mxu0 %v1540
      %v1697 = vpop.f32.mrf.mxu0
      %v1698 = vadd.f32 0.0, %v1697
      %v1699 = vpop.f32.mrf.mxu0
      %v1700 = vpop.f32.mrf.mxu0
      %v1701 = vadd.f32 0.0, %v1700
      %v1702 = vpop.f32.mrf.mxu0
      %1703 = vmatprep.mubr.bf16.mxu0 0
      %1704 = vmatmul.mubr.bf16.gmra.mxu0 %v1543
      %v1705 = vpop.f32.mrf.mxu0
      %v1706 = vadd.f32 0.0, %v1705
      %v1707 = vpop.f32.mrf.mxu0
      %v1708 = vpop.f32.mrf.mxu0
      %v1709 = vadd.f32 0.0, %v1708
      %v1710 = vpop.f32.mrf.mxu0
      %1711 = vmatprep.mubr.bf16.mxu0 0
      %1712 = vmatmul.mubr.bf16.gmra.mxu0 %v1546
      %v1713 = vpop.f32.mrf.mxu0
      %v1714 = vadd.f32 0.0, %v1713
      %v1715 = vpop.f32.mrf.mxu0
      %v1716 = vpop.f32.mrf.mxu0
      %v1717 = vadd.f32 0.0, %v1716
      %v1718 = vpop.f32.mrf.mxu0
      %1719 = vmatprep.mubr.bf16.mxu0 0
      %1720 = vmatmul.mubr.bf16.gmra.mxu0 %v1549
      %v1721 = vpop.f32.mrf.mxu0
      %v1722 = vadd.f32 0.0, %v1721
      %v1723 = vpop.f32.mrf.mxu0
      %v1724 = vpop.f32.mrf.mxu0
      %v1725 = vadd.f32 0.0, %v1724
      %v1726 = vpop.f32.mrf.mxu0
      %1727 = vmatprep.mubr.bf16.mxu0 0
      %1728 = vmatmul.mubr.bf16.gmra.mxu0 %v1552
      %v1729 = vpop.f32.mrf.mxu0
      %v1730 = vadd.f32 0.0, %v1729
      %v1731 = vpop.f32.mrf.mxu0
      %v1732 = vpop.f32.mrf.mxu0
      %v1733 = vadd.f32 0.0, %v1732
      %v1734 = vpop.f32.mrf.mxu0
      %1735 = vmatprep.mubr.bf16.mxu0 0
      %1736 = vmatmul.mubr.bf16.gmra.mxu0 %v1555
      %v1737 = vpop.f32.mrf.mxu0
      %v1738 = vadd.f32 0.0, %v1737
      %v1739 = vpop.f32.mrf.mxu0
      %v1740 = vpop.f32.mrf.mxu0
      %v1741 = vadd.f32 0.0, %v1740
      %v1742 = vpop.f32.mrf.mxu0
      %1743 = vmatprep.mubr.bf16.mxu0 0
      %1744 = vmatmul.mubr.bf16.gmra.mxu0 %v1558
      %v1745 = vpop.f32.mrf.mxu0
      %v1746 = vadd.f32 0.0, %v1745
      %v1747 = vpop.f32.mrf.mxu0
      %v1748 = vpop.f32.mrf.mxu0
      %v1749 = vadd.f32 0.0, %v1748
      %v1750 = vpop.f32.mrf.mxu0
      %1751 = vmatprep.mubr.bf16.mxu0 0
      %1752 = vmatmul.mubr.bf16.gmra.mxu0 %v1561
      %v1753 = vpop.f32.mrf.mxu0
      %v1754 = vadd.f32 0.0, %v1753
      %v1755 = vpop.f32.mrf.mxu0
      %v1756 = vpop.f32.mrf.mxu0
      %v1757 = vadd.f32 0.0, %v1756
      %v1758 = vpop.f32.mrf.mxu0
      %1759 = vmatprep.mubr.bf16.mxu0 0
      %1760 = vmatmul.mubr.bf16.gmra.mxu0 %v1564
      %v1761 = vpop.f32.mrf.mxu0
      %v1762 = vadd.f32 0.0, %v1761
      %v1763 = vpop.f32.mrf.mxu0
      %v1764 = vpop.f32.mrf.mxu0
      %v1765 = vadd.f32 0.0, %v1764
      %v1766 = vpop.f32.mrf.mxu0
      %1767 = vmatprep.mubr.bf16.mxu0 0
      %1768 = vmatmul.mubr.bf16.gmra.mxu0 %v1567
      %v1769 = vpop.f32.mrf.mxu0
      %v1770 = vadd.f32 0.0, %v1769
      %v1771 = vpop.f32.mrf.mxu0
      %v1772 = vpop.f32.mrf.mxu0
      %v1773 = vadd.f32 0.0, %v1772
      %v1774 = vpop.f32.mrf.mxu0
      %1775 = vmatprep.mubr.bf16.mxu0 0
      %1776 = vmatmul.mubr.bf16.gmra.mxu0 %v1570
      %v1777 = vpop.f32.mrf.mxu0
      %v1778 = vadd.f32 0.0, %v1777
      %v1779 = vpop.f32.mrf.mxu0
      %v1780 = vpop.f32.mrf.mxu0
      %v1781 = vadd.f32 0.0, %v1780
      %v1782 = vpop.f32.mrf.mxu0
      %1783 = vmatprep.mubr.bf16.mxu0 0
      %1784 = vmatmul.mubr.bf16.gmra.mxu0 %v1573
      %v1785 = vpop.f32.mrf.mxu0
      %v1786 = vadd.f32 0.0, %v1785
      %v1787 = vpop.f32.mrf.mxu0
      %v1788 = vpop.f32.mrf.mxu0
      %v1789 = vadd.f32 0.0, %v1788
      %v1790 = vpop.f32.mrf.mxu0
      %1791 = vmatprep.mubr.bf16.mxu0 0
      %1792 = vmatmul.mubr.bf16.gmra.mxu0 %v1576
      %v1793 = vpop.f32.mrf.mxu0
      %v1794 = vadd.f32 0.0, %v1793
      %v1795 = vpop.f32.mrf.mxu0
      %v1796 = vpop.f32.mrf.mxu0
      %v1797 = vadd.f32 0.0, %v1796
      %v1798 = vpop.f32.mrf.mxu0
      %1799 = vmatprep.mubr.bf16.mxu0 0
      %1800 = vmatmul.mubr.bf16.gmra.mxu0 %v1579
      %v1801 = vpop.f32.mrf.mxu0
      %v1802 = vadd.f32 0.0, %v1801
      %v1803 = vpop.f32.mrf.mxu0
      %v1804 = vpop.f32.mrf.mxu0
      %v1805 = vadd.f32 0.0, %v1804
      %v1806 = vpop.f32.mrf.mxu0
      %1807 = vmatprep.mubr.bf16.mxu0 0
      %1808 = vmatmul.mubr.bf16.gmra.mxu0 %v1582
      %v1809 = vpop.f32.mrf.mxu0
      %v1810 = vadd.f32 0.0, %v1809
      %v1811 = vpop.f32.mrf.mxu0
      %v1812 = vpop.f32.mrf.mxu0
      %v1813 = vadd.f32 0.0, %v1812
      %v1814 = vpop.f32.mrf.mxu0
      %1815 = vmatprep.mubr.bf16.mxu0 0
      %1816 = vmatmul.mubr.bf16.gmra.mxu0 %v1585
      %v1817 = vpop.f32.mrf.mxu0
      %v1818 = vadd.f32 0.0, %v1817
      %v1819 = vpop.f32.mrf.mxu0
      %v1820 = vpop.f32.mrf.mxu0
      %v1821 = vadd.f32 0.0, %v1820
      %v1822 = vpop.f32.mrf.mxu0
      %1823 = vmatprep.mubr.bf16.mxu0 0
      %1824 = vmatmul.mubr.bf16.gmra.mxu0 %v1588
      %v1825 = vpop.f32.mrf.mxu0
      %v1826 = vadd.f32 0.0, %v1825
      %v1827 = vpop.f32.mrf.mxu0
      %v1828 = vpop.f32.mrf.mxu0
      %v1829 = vadd.f32 0.0, %v1828
      %v1830 = vpop.f32.mrf.mxu0
      %1831 = vmatprep.mubr.bf16.mxu0 0
      %1832 = vmatmul.mubr.bf16.gmra.mxu0 %v1591
      %v1833 = vpop.f32.mrf.mxu0
      %v1834 = vadd.f32 0.0, %v1833
      %v1835 = vpop.f32.mrf.mxu0
      %v1836 = vpop.f32.mrf.mxu0
      %v1837 = vadd.f32 0.0, %v1836
      %v1838 = vpop.f32.mrf.mxu0
      %1839 = vmatprep.mubr.bf16.mxu0 0
      %1840 = vmatmul.mubr.bf16.gmra.mxu0 %v1594
      %v1841 = vpop.f32.mrf.mxu0
      %v1842 = vadd.f32 0.0, %v1841
      %v1843 = vpop.f32.mrf.mxu0
      %v1844 = vpop.f32.mrf.mxu0
      %v1845 = vadd.f32 0.0, %v1844
      %v1846 = vpop.f32.mrf.mxu0
      %1847 = vmatprep.mubr.bf16.mxu0 0
      %1848 = vmatmul.mubr.bf16.gmra.mxu0 %v1597
      %v1849 = vpop.f32.mrf.mxu0
      %v1850 = vadd.f32 0.0, %v1849
      %v1851 = vpop.f32.mrf.mxu0
      %v1852 = vpop.f32.mrf.mxu0
      %v1853 = vadd.f32 0.0, %v1852
      %v1854 = vpop.f32.mrf.mxu0
      %1855 = vmatprep.mubr.bf16.mxu0 0
      %1856 = vmatmul.mubr.bf16.gmra.mxu0 %v1600
      %v1857 = vpop.f32.mrf.mxu0
      %v1858 = vadd.f32 0.0, %v1857
      %v1859 = vpop.f32.mrf.mxu0
      %v1860 = vpop.f32.mrf.mxu0
      %v1861 = vadd.f32 0.0, %v1860
      %v1862 = vpop.f32.mrf.mxu0
      %1863 = vmatprep.mubr.bf16.mxu0 0
      %1864 = vmatmul.mubr.bf16.gmra.mxu0 %v1603
      %v1865 = vpop.f32.mrf.mxu0
      %v1866 = vadd.f32 0.0, %v1865
      %v1867 = vpop.f32.mrf.mxu0
      %v1868 = vpop.f32.mrf.mxu0
      %v1869 = vadd.f32 0.0, %v1868
      %v1870 = vpop.f32.mrf.mxu0
      %1871 = vmatprep.mubr.bf16.mxu0 0
      %1872 = vmatmul.mubr.bf16.gmra.mxu0 %v1606
      %v1873 = vpop.f32.mrf.mxu0
      %v1874 = vadd.f32 0.0, %v1873
      %v1875 = vpop.f32.mrf.mxu0
      %v1876 = vpop.f32.mrf.mxu0
      %v1877 = vadd.f32 0.0, %v1876
      %v1878 = vpop.f32.mrf.mxu0
      %1879 = vmatprep.mubr.bf16.mxu0 0
      %1880 = vmatmul.mubr.bf16.gmra.mxu0 %v1609
      %v1881 = vpop.f32.mrf.mxu0
      %v1882 = vadd.f32 0.0, %v1881
      %v1883 = vpop.f32.mrf.mxu0
      %v1884 = vpop.f32.mrf.mxu0
      %v1885 = vadd.f32 0.0, %v1884
      %v1886 = vpop.f32.mrf.mxu0
      %1887 = vmatprep.mubr.bf16.mxu0 0
      %1888 = vmatmul.mubr.bf16.gmra.mxu0 %v1612
      %v1889 = vpop.f32.mrf.mxu0
      %v1890 = vadd.f32 0.0, %v1889
      %v1891 = vpop.f32.mrf.mxu0
      %v1892 = vpop.f32.mrf.mxu0
      %v1893 = vadd.f32 0.0, %v1892
      %v1894 = vpop.f32.mrf.mxu0
      %1895 = vmatprep.mubr.bf16.mxu0 0
      %1896 = vmatmul.mubr.bf16.gmra.mxu0 %v1615
      %v1897 = vpop.f32.mrf.mxu0
      %v1898 = vadd.f32 0.0, %v1897
      %v1899 = vpop.f32.mrf.mxu0
      %v1900 = vpop.f32.mrf.mxu0
      %v1901 = vadd.f32 0.0, %v1900
      %v1902 = vpop.f32.mrf.mxu0
      %1903 = vmatprep.mubr.bf16.mxu0 0
      %1904 = vmatmul.mubr.bf16.gmra.mxu0 %v1618
      %v1905 = vpop.f32.mrf.mxu0
      %v1906 = vadd.f32 0.0, %v1905
      %v1907 = vpop.f32.mrf.mxu0
      %v1908 = vpop.f32.mrf.mxu0
      %v1909 = vadd.f32 0.0, %v1908
      %v1910 = vpop.f32.mrf.mxu0
      %1911 = vdwg.mxu0
      %v1912 = vadd.f32 %v1170, %v1658
      %v1913 = vadd.f32 %v1173, %v1661
      %v1914 = vadd.f32 %v1178, %v1666
      %v1915 = vadd.f32 %v1181, %v1669
      %v1916 = vadd.f32 %v1186, %v1674
      %v1917 = vadd.f32 %v1189, %v1677
      %v1918 = vadd.f32 %v1194, %v1682
      %v1919 = vadd.f32 %v1197, %v1685
      %v1920 = vadd.f32 %v1202, %v1690
      %v1921 = vadd.f32 %v1205, %v1693
      %v1922 = vadd.f32 %v1210, %v1698
      %v1923 = vadd.f32 %v1213, %v1701
      %v1924 = vadd.f32 %v1218, %v1706
      %v1925 = vadd.f32 %v1221, %v1709
      %v1926 = vadd.f32 %v1226, %v1714
      %v1927 = vadd.f32 %v1229, %v1717
      %v1928 = vadd.f32 %v1234, %v1722
      %v1929 = vadd.f32 %v1237, %v1725
      %v1930 = vadd.f32 %v1242, %v1730
      %v1931 = vadd.f32 %v1245, %v1733
      %v1932 = vadd.f32 %v1250, %v1738
      %v1933 = vadd.f32 %v1253, %v1741
      %v1934 = vadd.f32 %v1258, %v1746
      %v1935 = vadd.f32 %v1261, %v1749
      %v1936 = vadd.f32 %v1266, %v1754
      %v1937 = vadd.f32 %v1269, %v1757
      %v1938 = vadd.f32 %v1274, %v1762
      %v1939 = vadd.f32 %v1277, %v1765
      %v1940 = vadd.f32 %v1282, %v1770
      %v1941 = vadd.f32 %v1285, %v1773
      %v1942 = vadd.f32 %v1290, %v1778
      %v1943 = vadd.f32 %v1293, %v1781
      %v1944 = vadd.f32 %v1298, %v1786
      %v1945 = vadd.f32 %v1301, %v1789
      %v1946 = vadd.f32 %v1306, %v1794
      %v1947 = vadd.f32 %v1309, %v1797
      %v1948 = vadd.f32 %v1314, %v1802
      %v1949 = vadd.f32 %v1317, %v1805
      %v1950 = vadd.f32 %v1322, %v1810
      %v1951 = vadd.f32 %v1325, %v1813
      %v1952 = vadd.f32 %v1330, %v1818
      %v1953 = vadd.f32 %v1333, %v1821
      %v1954 = vadd.f32 %v1338, %v1826
      %v1955 = vadd.f32 %v1341, %v1829
      %v1956 = vadd.f32 %v1346, %v1834
      %v1957 = vadd.f32 %v1349, %v1837
      %v1958 = vadd.f32 %v1354, %v1842
      %v1959 = vadd.f32 %v1357, %v1845
      %v1960 = vadd.f32 %v1362, %v1850
      %v1961 = vadd.f32 %v1365, %v1853
      %v1962 = vadd.f32 %v1370, %v1858
      %v1963 = vadd.f32 %v1373, %v1861
      %v1964 = vadd.f32 %v1378, %v1866
      %v1965 = vadd.f32 %v1381, %v1869
      %v1966 = vadd.f32 %v1386, %v1874
      %v1967 = vadd.f32 %v1389, %v1877
      %v1968 = vadd.f32 %v1394, %v1882
      %v1969 = vadd.f32 %v1397, %v1885
      %v1970 = vadd.f32 %v1402, %v1890
      %v1971 = vadd.f32 %v1405, %v1893
      %v1972 = vadd.f32 %v1410, %v1898
      %v1973 = vadd.f32 %v1413, %v1901
      %v1974 = vadd.f32 %v1418, %v1906
      %v1975 = vadd.f32 %v1421, %v1909
      %s1976 = sadd.s32 %s447, 64
      %s1977 = scalar_lea.vmem %s425, %s1976
      %v1978 = vld [vmem:[%s1977] sm:$0xff]
      %v1979 = vld [vmem:[%s1977 + $0x8] sm:$0xff]
      %v1980 = vld [vmem:[%s1977 + $0x10] sm:$0xff]
      %v1981 = vld [vmem:[%s1977 + $0x18] sm:$0xff]
      %v1982 = vld [vmem:[%s1977 + $0x20] sm:$0xff]
      %v1983 = vld [vmem:[%s1977 + $0x28] sm:$0xff]
      %v1984 = vld [vmem:[%s1977 + $0x30] sm:$0xff]
      %v1985 = vld [vmem:[%s1977 + $0x38] sm:$0xff]
      %v1986 = vld [vmem:[%s1977 + $0x40] sm:$0xff]
      %v1987 = vld [vmem:[%s1977 + $0x48] sm:$0xff]
      %v1988 = vld [vmem:[%s1977 + $0x50] sm:$0xff]
      %v1989 = vld [vmem:[%s1977 + $0x58] sm:$0xff]
      %v1990 = vld [vmem:[%s1977 + $0x60] sm:$0xff]
      %v1991 = vld [vmem:[%s1977 + $0x68] sm:$0xff]
      %v1992 = vld [vmem:[%s1977 + $0x70] sm:$0xff]
      %v1993 = vld [vmem:[%s1977 + $0x78] sm:$0xff]
      %v1994 = vld [vmem:[%s1977 + $0x80] sm:$0xff]
      %v1995 = vld [vmem:[%s1977 + $0x88] sm:$0xff]
      %v1996 = vld [vmem:[%s1977 + $0x90] sm:$0xff]
      %v1997 = vld [vmem:[%s1977 + $0x98] sm:$0xff]
      %v1998 = vld [vmem:[%s1977 + $0xa0] sm:$0xff]
      %v1999 = vld [vmem:[%s1977 + $0xa8] sm:$0xff]
      %v2000 = vld [vmem:[%s1977 + $0xb0] sm:$0xff]
      %v2001 = vld [vmem:[%s1977 + $0xb8] sm:$0xff]
      %v2002 = vld [vmem:[%s1977 + $0xc0] sm:$0xff]
      %v2003 = vld [vmem:[%s1977 + $0xc8] sm:$0xff]
      %v2004 = vld [vmem:[%s1977 + $0xd0] sm:$0xff]
      %v2005 = vld [vmem:[%s1977 + $0xd8] sm:$0xff]
      %v2006 = vld [vmem:[%s1977 + $0xe0] sm:$0xff]
      %v2007 = vld [vmem:[%s1977 + $0xe8] sm:$0xff]
      %v2008 = vld [vmem:[%s1977 + $0xf0] sm:$0xff]
      %v2009 = vld [vmem:[%s1977 + $0xf8] sm:$0xff]
      %v2010 = vld [vmem:[%s1977 + $0x100] sm:$0xff]
      %v2011 = vld [vmem:[%s1977 + $0x108] sm:$0xff]
      %v2012 = vld [vmem:[%s1977 + $0x110] sm:$0xff]
      %v2013 = vld [vmem:[%s1977 + $0x118] sm:$0xff]
      %v2014 = vld [vmem:[%s1977 + $0x120] sm:$0xff]
      %v2015 = vld [vmem:[%s1977 + $0x128] sm:$0xff]
      %v2016 = vld [vmem:[%s1977 + $0x130] sm:$0xff]
      %v2017 = vld [vmem:[%s1977 + $0x138] sm:$0xff]
      %v2018 = vld [vmem:[%s1977 + $0x140] sm:$0xff]
      %v2019 = vld [vmem:[%s1977 + $0x148] sm:$0xff]
      %v2020 = vld [vmem:[%s1977 + $0x150] sm:$0xff]
      %v2021 = vld [vmem:[%s1977 + $0x158] sm:$0xff]
      %v2022 = vld [vmem:[%s1977 + $0x160] sm:$0xff]
      %v2023 = vld [vmem:[%s1977 + $0x168] sm:$0xff]
      %v2024 = vld [vmem:[%s1977 + $0x170] sm:$0xff]
      %v2025 = vld [vmem:[%s1977 + $0x178] sm:$0xff]
      %v2026 = vld [vmem:[%s1977 + $0x180] sm:$0xff]
      %v2027 = vld [vmem:[%s1977 + $0x188] sm:$0xff]
      %v2028 = vld [vmem:[%s1977 + $0x190] sm:$0xff]
      %v2029 = vld [vmem:[%s1977 + $0x198] sm:$0xff]
      %v2030 = vld [vmem:[%s1977 + $0x1a0] sm:$0xff]
      %v2031 = vld [vmem:[%s1977 + $0x1a8] sm:$0xff]
      %v2032 = vld [vmem:[%s1977 + $0x1b0] sm:$0xff]
      %v2033 = vld [vmem:[%s1977 + $0x1b8] sm:$0xff]
      %v2034 = vld [vmem:[%s1977 + $0x1c0] sm:$0xff]
      %v2035 = vld [vmem:[%s1977 + $0x1c8] sm:$0xff]
      %v2036 = vld [vmem:[%s1977 + $0x1d0] sm:$0xff]
      %v2037 = vld [vmem:[%s1977 + $0x1d8] sm:$0xff]
      %v2038 = vld [vmem:[%s1977 + $0x1e0] sm:$0xff]
      %v2039 = vld [vmem:[%s1977 + $0x1e8] sm:$0xff]
      %v2040 = vld [vmem:[%s1977 + $0x1f0] sm:$0xff]
      %v2041 = vld [vmem:[%s1977 + $0x1f8] sm:$0xff]
      %v2042 = vpack.c.bf16 %v1979, %v1978
      %v2043 = vpack.c.bf16 %v1981, %v1980
      %v2044 = vpack.c.bf16 %v1983, %v1982
      %v2045 = vpack.c.bf16 %v1985, %v1984
      %v2046 = vpack.c.bf16 %v1987, %v1986
      %v2047 = vpack.c.bf16 %v1989, %v1988
      %v2048 = vpack.c.bf16 %v1991, %v1990
      %v2049 = vpack.c.bf16 %v1993, %v1992
      %v2050 = vpack.c.bf16 %v1995, %v1994
      %v2051 = vpack.c.bf16 %v1997, %v1996
      %v2052 = vpack.c.bf16 %v1999, %v1998
      %v2053 = vpack.c.bf16 %v2001, %v2000
      %v2054 = vpack.c.bf16 %v2003, %v2002
      %v2055 = vpack.c.bf16 %v2005, %v2004
      %v2056 = vpack.c.bf16 %v2007, %v2006
      %v2057 = vpack.c.bf16 %v2009, %v2008
      %v2058 = vpack.c.bf16 %v2011, %v2010
      %v2059 = vpack.c.bf16 %v2013, %v2012
      %v2060 = vpack.c.bf16 %v2015, %v2014
      %v2061 = vpack.c.bf16 %v2017, %v2016
      %v2062 = vpack.c.bf16 %v2019, %v2018
      %v2063 = vpack.c.bf16 %v2021, %v2020
      %v2064 = vpack.c.bf16 %v2023, %v2022
      %v2065 = vpack.c.bf16 %v2025, %v2024
      %v2066 = vpack.c.bf16 %v2027, %v2026
      %v2067 = vpack.c.bf16 %v2029, %v2028
      %v2068 = vpack.c.bf16 %v2031, %v2030
      %v2069 = vpack.c.bf16 %v2033, %v2032
      %v2070 = vpack.c.bf16 %v2035, %v2034
      %v2071 = vpack.c.bf16 %v2037, %v2036
      %v2072 = vpack.c.bf16 %v2039, %v2038
      %v2073 = vpack.c.bf16 %v2041, %v2040
      %s2074 = scalar_lea.vmem %s2, 12
      %v2075 = vld [vmem:[%s2074] sm:$0xf]
      %v2077 = vsel %vm646, %v2042, 0
      %v2080 = vsel %vm646, %v2043, 0
      %v2083 = vsel %vm646, %v2044, 0
      %v2086 = vsel %vm646, %v2045, 0
      %v2089 = vsel %vm646, %v2046, 0
      %v2092 = vsel %vm646, %v2047, 0
      %v2095 = vsel %vm646, %v2048, 0
      %v2098 = vsel %vm646, %v2049, 0
      %v2101 = vsel %vm646, %v2050, 0
      %v2104 = vsel %vm646, %v2051, 0
      %v2107 = vsel %vm646, %v2052, 0
      %v2110 = vsel %vm646, %v2053, 0
      %v2113 = vsel %vm646, %v2054, 0
      %v2116 = vsel %vm646, %v2055, 0
      %v2119 = vsel %vm646, %v2056, 0
      %v2122 = vsel %vm646, %v2057, 0
      %v2125 = vsel %vm646, %v2058, 0
      %v2128 = vsel %vm646, %v2059, 0
      %v2131 = vsel %vm646, %v2060, 0
      %v2134 = vsel %vm646, %v2061, 0
      %v2137 = vsel %vm646, %v2062, 0
      %v2140 = vsel %vm646, %v2063, 0
      %v2143 = vsel %vm646, %v2064, 0
      %v2146 = vsel %vm646, %v2065, 0
      %v2149 = vsel %vm646, %v2066, 0
      %v2152 = vsel %vm646, %v2067, 0
      %v2155 = vsel %vm646, %v2068, 0
      %v2158 = vsel %vm646, %v2069, 0
      %v2161 = vsel %vm646, %v2070, 0
      %v2164 = vsel %vm646, %v2071, 0
      %v2167 = vsel %vm646, %v2072, 0
      %v2170 = vsel %vm646, %v2073, 0
      %v2173 = vsel %vm743, %v2075, 0
      %2175 = vmatprep.subr.bf16.mxu0 0
      %2176 = vmatpush1.bf16.msra.mxu0 0
      %2177 = vmatprep.subr.bf16.mxu0 0
      %2178 = vmatpush1.bf16.msra.mxu0 0
      %2179 = vmatprep.subr.bf16.mxu0 0
      %2180 = vmatpush1.bf16.msra.mxu0 0
      %2181 = vmatprep.subr.bf16.mxu0 0
      %2182 = vmatpush1.bf16.msra.mxu0 0
      %2183 = vmatprep.subr.bf16.mxu0 0
      %2184 = vmatpush1.bf16.msra.mxu0 0
      %2185 = vmatprep.subr.bf16.mxu0 0
      %2186 = vmatpush1.bf16.msra.mxu0 0
      %2187 = vmatprep.subr.bf16.mxu0 0
      %2188 = vmatpush1.bf16.msra.mxu0 0
      %2189 = vmatprep.subr.bf16.mxu0 0
      %2190 = vmatpush1.bf16.msra.mxu0 %v2173
      %2191 = vmatprep.subr.bf16.mxu0 0
      %2192 = vmatpush2.bf16.msra.mxu0 0
      %2193 = vmatprep.subr.bf16.mxu0 0
      %2194 = vmatpush2.bf16.msra.mxu0 0
      %2195 = vmatprep.subr.bf16.mxu0 0
      %2196 = vmatpush2.bf16.msra.mxu0 0
      %2197 = vmatprep.subr.bf16.mxu0 0
      %2198 = vmatpush2.bf16.msra.mxu0 0
      %2199 = vmatprep.subr.bf16.mxu0 0
      %2200 = vmatpush2.bf16.msra.mxu0 0
      %2201 = vmatprep.subr.bf16.mxu0 0
      %2202 = vmatpush2.bf16.msra.mxu0 0
      %2203 = vmatprep.subr.bf16.mxu0 0
      %2204 = vmatpush2.bf16.msra.mxu0 0
      %2205 = vmatprep.subr.bf16.mxu0 0
      %2206 = vmatpush2.bf16.msra.mxu0 0
      %2207 = vmatprep.mubr.bf16.mxu0 0
      %2208 = vmatmul.mubr.bf16.gmra.mxu0 %v2077
      %v2209 = vpop.f32.mrf.mxu0
      %v2210 = vadd.f32 0.0, %v2209
      %v2211 = vpop.f32.mrf.mxu0
      %v2212 = vpop.f32.mrf.mxu0
      %v2213 = vadd.f32 0.0, %v2212
      %v2214 = vpop.f32.mrf.mxu0
      %2215 = vmatprep.mubr.bf16.mxu0 0
      %2216 = vmatmul.mubr.bf16.gmra.mxu0 %v2080
      %v2217 = vpop.f32.mrf.mxu0
      %v2218 = vadd.f32 0.0, %v2217
      %v2219 = vpop.f32.mrf.mxu0
      %v2220 = vpop.f32.mrf.mxu0
      %v2221 = vadd.f32 0.0, %v2220
      %v2222 = vpop.f32.mrf.mxu0
      %2223 = vmatprep.mubr.bf16.mxu0 0
      %2224 = vmatmul.mubr.bf16.gmra.mxu0 %v2083
      %v2225 = vpop.f32.mrf.mxu0
      %v2226 = vadd.f32 0.0, %v2225
      %v2227 = vpop.f32.mrf.mxu0
      %v2228 = vpop.f32.mrf.mxu0
      %v2229 = vadd.f32 0.0, %v2228
      %v2230 = vpop.f32.mrf.mxu0
      %2231 = vmatprep.mubr.bf16.mxu0 0
      %2232 = vmatmul.mubr.bf16.gmra.mxu0 %v2086
      %v2233 = vpop.f32.mrf.mxu0
      %v2234 = vadd.f32 0.0, %v2233
      %v2235 = vpop.f32.mrf.mxu0
      %v2236 = vpop.f32.mrf.mxu0
      %v2237 = vadd.f32 0.0, %v2236
      %v2238 = vpop.f32.mrf.mxu0
      %2239 = vmatprep.mubr.bf16.mxu0 0
      %2240 = vmatmul.mubr.bf16.gmra.mxu0 %v2089
      %v2241 = vpop.f32.mrf.mxu0
      %v2242 = vadd.f32 0.0, %v2241
      %v2243 = vpop.f32.mrf.mxu0
      %v2244 = vpop.f32.mrf.mxu0
      %v2245 = vadd.f32 0.0, %v2244
      %v2246 = vpop.f32.mrf.mxu0
      %2247 = vmatprep.mubr.bf16.mxu0 0
      %2248 = vmatmul.mubr.bf16.gmra.mxu0 %v2092
      %v2249 = vpop.f32.mrf.mxu0
      %v2250 = vadd.f32 0.0, %v2249
      %v2251 = vpop.f32.mrf.mxu0
      %v2252 = vpop.f32.mrf.mxu0
      %v2253 = vadd.f32 0.0, %v2252
      %v2254 = vpop.f32.mrf.mxu0
      %2255 = vmatprep.mubr.bf16.mxu0 0
      %2256 = vmatmul.mubr.bf16.gmra.mxu0 %v2095
      %v2257 = vpop.f32.mrf.mxu0
      %v2258 = vadd.f32 0.0, %v2257
      %v2259 = vpop.f32.mrf.mxu0
      %v2260 = vpop.f32.mrf.mxu0
      %v2261 = vadd.f32 0.0, %v2260
      %v2262 = vpop.f32.mrf.mxu0
      %2263 = vmatprep.mubr.bf16.mxu0 0
      %2264 = vmatmul.mubr.bf16.gmra.mxu0 %v2098
      %v2265 = vpop.f32.mrf.mxu0
      %v2266 = vadd.f32 0.0, %v2265
      %v2267 = vpop.f32.mrf.mxu0
      %v2268 = vpop.f32.mrf.mxu0
      %v2269 = vadd.f32 0.0, %v2268
      %v2270 = vpop.f32.mrf.mxu0
      %2271 = vmatprep.mubr.bf16.mxu0 0
      %2272 = vmatmul.mubr.bf16.gmra.mxu0 %v2101
      %v2273 = vpop.f32.mrf.mxu0
      %v2274 = vadd.f32 0.0, %v2273
      %v2275 = vpop.f32.mrf.mxu0
      %v2276 = vpop.f32.mrf.mxu0
      %v2277 = vadd.f32 0.0, %v2276
      %v2278 = vpop.f32.mrf.mxu0
      %2279 = vmatprep.mubr.bf16.mxu0 0
      %2280 = vmatmul.mubr.bf16.gmra.mxu0 %v2104
      %v2281 = vpop.f32.mrf.mxu0
      %v2282 = vadd.f32 0.0, %v2281
      %v2283 = vpop.f32.mrf.mxu0
      %v2284 = vpop.f32.mrf.mxu0
      %v2285 = vadd.f32 0.0, %v2284
      %v2286 = vpop.f32.mrf.mxu0
      %2287 = vmatprep.mubr.bf16.mxu0 0
      %2288 = vmatmul.mubr.bf16.gmra.mxu0 %v2107
      %v2289 = vpop.f32.mrf.mxu0
      %v2290 = vadd.f32 0.0, %v2289
      %v2291 = vpop.f32.mrf.mxu0
      %v2292 = vpop.f32.mrf.mxu0
      %v2293 = vadd.f32 0.0, %v2292
      %v2294 = vpop.f32.mrf.mxu0
      %2295 = vmatprep.mubr.bf16.mxu0 0
      %2296 = vmatmul.mubr.bf16.gmra.mxu0 %v2110
      %v2297 = vpop.f32.mrf.mxu0
      %v2298 = vadd.f32 0.0, %v2297
      %v2299 = vpop.f32.mrf.mxu0
      %v2300 = vpop.f32.mrf.mxu0
      %v2301 = vadd.f32 0.0, %v2300
      %v2302 = vpop.f32.mrf.mxu0
      %2303 = vmatprep.mubr.bf16.mxu0 0
      %2304 = vmatmul.mubr.bf16.gmra.mxu0 %v2113
      %v2305 = vpop.f32.mrf.mxu0
      %v2306 = vadd.f32 0.0, %v2305
      %v2307 = vpop.f32.mrf.mxu0
      %v2308 = vpop.f32.mrf.mxu0
      %v2309 = vadd.f32 0.0, %v2308
      %v2310 = vpop.f32.mrf.mxu0
      %2311 = vmatprep.mubr.bf16.mxu0 0
      %2312 = vmatmul.mubr.bf16.gmra.mxu0 %v2116
      %v2313 = vpop.f32.mrf.mxu0
      %v2314 = vadd.f32 0.0, %v2313
      %v2315 = vpop.f32.mrf.mxu0
      %v2316 = vpop.f32.mrf.mxu0
      %v2317 = vadd.f32 0.0, %v2316
      %v2318 = vpop.f32.mrf.mxu0
      %2319 = vmatprep.mubr.bf16.mxu0 0
      %2320 = vmatmul.mubr.bf16.gmra.mxu0 %v2119
      %v2321 = vpop.f32.mrf.mxu0
      %v2322 = vadd.f32 0.0, %v2321
      %v2323 = vpop.f32.mrf.mxu0
      %v2324 = vpop.f32.mrf.mxu0
      %v2325 = vadd.f32 0.0, %v2324
      %v2326 = vpop.f32.mrf.mxu0
      %2327 = vmatprep.mubr.bf16.mxu0 0
      %2328 = vmatmul.mubr.bf16.gmra.mxu0 %v2122
      %v2329 = vpop.f32.mrf.mxu0
      %v2330 = vadd.f32 0.0, %v2329
      %v2331 = vpop.f32.mrf.mxu0
      %v2332 = vpop.f32.mrf.mxu0
      %v2333 = vadd.f32 0.0, %v2332
      %v2334 = vpop.f32.mrf.mxu0
      %2335 = vmatprep.mubr.bf16.mxu0 0
      %2336 = vmatmul.mubr.bf16.gmra.mxu0 %v2125
      %v2337 = vpop.f32.mrf.mxu0
      %v2338 = vadd.f32 0.0, %v2337
      %v2339 = vpop.f32.mrf.mxu0
      %v2340 = vpop.f32.mrf.mxu0
      %v2341 = vadd.f32 0.0, %v2340
      %v2342 = vpop.f32.mrf.mxu0
      %2343 = vmatprep.mubr.bf16.mxu0 0
      %2344 = vmatmul.mubr.bf16.gmra.mxu0 %v2128
      %v2345 = vpop.f32.mrf.mxu0
      %v2346 = vadd.f32 0.0, %v2345
      %v2347 = vpop.f32.mrf.mxu0
      %v2348 = vpop.f32.mrf.mxu0
      %v2349 = vadd.f32 0.0, %v2348
      %v2350 = vpop.f32.mrf.mxu0
      %2351 = vmatprep.mubr.bf16.mxu0 0
      %2352 = vmatmul.mubr.bf16.gmra.mxu0 %v2131
      %v2353 = vpop.f32.mrf.mxu0
      %v2354 = vadd.f32 0.0, %v2353
      %v2355 = vpop.f32.mrf.mxu0
      %v2356 = vpop.f32.mrf.mxu0
      %v2357 = vadd.f32 0.0, %v2356
      %v2358 = vpop.f32.mrf.mxu0
      %2359 = vmatprep.mubr.bf16.mxu0 0
      %2360 = vmatmul.mubr.bf16.gmra.mxu0 %v2134
      %v2361 = vpop.f32.mrf.mxu0
      %v2362 = vadd.f32 0.0, %v2361
      %v2363 = vpop.f32.mrf.mxu0
      %v2364 = vpop.f32.mrf.mxu0
      %v2365 = vadd.f32 0.0, %v2364
      %v2366 = vpop.f32.mrf.mxu0
      %2367 = vmatprep.mubr.bf16.mxu0 0
      %2368 = vmatmul.mubr.bf16.gmra.mxu0 %v2137
      %v2369 = vpop.f32.mrf.mxu0
      %v2370 = vadd.f32 0.0, %v2369
      %v2371 = vpop.f32.mrf.mxu0
      %v2372 = vpop.f32.mrf.mxu0
      %v2373 = vadd.f32 0.0, %v2372
      %v2374 = vpop.f32.mrf.mxu0
      %2375 = vmatprep.mubr.bf16.mxu0 0
      %2376 = vmatmul.mubr.bf16.gmra.mxu0 %v2140
      %v2377 = vpop.f32.mrf.mxu0
      %v2378 = vadd.f32 0.0, %v2377
      %v2379 = vpop.f32.mrf.mxu0
      %v2380 = vpop.f32.mrf.mxu0
      %v2381 = vadd.f32 0.0, %v2380
      %v2382 = vpop.f32.mrf.mxu0
      %2383 = vmatprep.mubr.bf16.mxu0 0
      %2384 = vmatmul.mubr.bf16.gmra.mxu0 %v2143
      %v2385 = vpop.f32.mrf.mxu0
      %v2386 = vadd.f32 0.0, %v2385
      %v2387 = vpop.f32.mrf.mxu0
      %v2388 = vpop.f32.mrf.mxu0
      %v2389 = vadd.f32 0.0, %v2388
      %v2390 = vpop.f32.mrf.mxu0
      %2391 = vmatprep.mubr.bf16.mxu0 0
      %2392 = vmatmul.mubr.bf16.gmra.mxu0 %v2146
      %v2393 = vpop.f32.mrf.mxu0
      %v2394 = vadd.f32 0.0, %v2393
      %v2395 = vpop.f32.mrf.mxu0
      %v2396 = vpop.f32.mrf.mxu0
      %v2397 = vadd.f32 0.0, %v2396
      %v2398 = vpop.f32.mrf.mxu0
      %2399 = vmatprep.mubr.bf16.mxu0 0
      %2400 = vmatmul.mubr.bf16.gmra.mxu0 %v2149
      %v2401 = vpop.f32.mrf.mxu0
      %v2402 = vadd.f32 0.0, %v2401
      %v2403 = vpop.f32.mrf.mxu0
      %v2404 = vpop.f32.mrf.mxu0
      %v2405 = vadd.f32 0.0, %v2404
      %v2406 = vpop.f32.mrf.mxu0
      %2407 = vmatprep.mubr.bf16.mxu0 0
      %2408 = vmatmul.mubr.bf16.gmra.mxu0 %v2152
      %v2409 = vpop.f32.mrf.mxu0
      %v2410 = vadd.f32 0.0, %v2409
      %v2411 = vpop.f32.mrf.mxu0
      %v2412 = vpop.f32.mrf.mxu0
      %v2413 = vadd.f32 0.0, %v2412
      %v2414 = vpop.f32.mrf.mxu0
      %2415 = vmatprep.mubr.bf16.mxu0 0
      %2416 = vmatmul.mubr.bf16.gmra.mxu0 %v2155
      %v2417 = vpop.f32.mrf.mxu0
      %v2418 = vadd.f32 0.0, %v2417
      %v2419 = vpop.f32.mrf.mxu0
      %v2420 = vpop.f32.mrf.mxu0
      %v2421 = vadd.f32 0.0, %v2420
      %v2422 = vpop.f32.mrf.mxu0
      %2423 = vmatprep.mubr.bf16.mxu0 0
      %2424 = vmatmul.mubr.bf16.gmra.mxu0 %v2158
      %v2425 = vpop.f32.mrf.mxu0
      %v2426 = vadd.f32 0.0, %v2425
      %v2427 = vpop.f32.mrf.mxu0
      %v2428 = vpop.f32.mrf.mxu0
      %v2429 = vadd.f32 0.0, %v2428
      %v2430 = vpop.f32.mrf.mxu0
      %2431 = vmatprep.mubr.bf16.mxu0 0
      %2432 = vmatmul.mubr.bf16.gmra.mxu0 %v2161
      %v2433 = vpop.f32.mrf.mxu0
      %v2434 = vadd.f32 0.0, %v2433
      %v2435 = vpop.f32.mrf.mxu0
      %v2436 = vpop.f32.mrf.mxu0
      %v2437 = vadd.f32 0.0, %v2436
      %v2438 = vpop.f32.mrf.mxu0
      %2439 = vmatprep.mubr.bf16.mxu0 0
      %2440 = vmatmul.mubr.bf16.gmra.mxu0 %v2164
      %v2441 = vpop.f32.mrf.mxu0
      %v2442 = vadd.f32 0.0, %v2441
      %v2443 = vpop.f32.mrf.mxu0
      %v2444 = vpop.f32.mrf.mxu0
      %v2445 = vadd.f32 0.0, %v2444
      %v2446 = vpop.f32.mrf.mxu0
      %2447 = vmatprep.mubr.bf16.mxu0 0
      %2448 = vmatmul.mubr.bf16.gmra.mxu0 %v2167
      %v2449 = vpop.f32.mrf.mxu0
      %v2450 = vadd.f32 0.0, %v2449
      %v2451 = vpop.f32.mrf.mxu0
      %v2452 = vpop.f32.mrf.mxu0
      %v2453 = vadd.f32 0.0, %v2452
      %v2454 = vpop.f32.mrf.mxu0
      %2455 = vmatprep.mubr.bf16.mxu0 0
      %2456 = vmatmul.mubr.bf16.gmra.mxu0 %v2170
      %v2457 = vpop.f32.mrf.mxu0
      %v2458 = vadd.f32 0.0, %v2457
      %v2459 = vpop.f32.mrf.mxu0
      %v2460 = vpop.f32.mrf.mxu0
      %v2461 = vadd.f32 0.0, %v2460
      %v2462 = vpop.f32.mrf.mxu0
      %2463 = vdwg.mxu0
      %v2464 = vadd.f32 %v1912, %v2210
      %v2465 = vadd.f32 %v1913, %v2213
      %v2466 = vadd.f32 %v1914, %v2218
      %v2467 = vadd.f32 %v1915, %v2221
      %v2468 = vadd.f32 %v1916, %v2226
      %v2469 = vadd.f32 %v1917, %v2229
      %v2470 = vadd.f32 %v1918, %v2234
      %v2471 = vadd.f32 %v1919, %v2237
      %v2472 = vadd.f32 %v1920, %v2242
      %v2473 = vadd.f32 %v1921, %v2245
      %v2474 = vadd.f32 %v1922, %v2250
      %v2475 = vadd.f32 %v1923, %v2253
      %v2476 = vadd.f32 %v1924, %v2258
      %v2477 = vadd.f32 %v1925, %v2261
      %v2478 = vadd.f32 %v1926, %v2266
      %v2479 = vadd.f32 %v1927, %v2269
      %v2480 = vadd.f32 %v1928, %v2274
      %v2481 = vadd.f32 %v1929, %v2277
      %v2482 = vadd.f32 %v1930, %v2282
      %v2483 = vadd.f32 %v1931, %v2285
      %v2484 = vadd.f32 %v1932, %v2290
      %v2485 = vadd.f32 %v1933, %v2293
      %v2486 = vadd.f32 %v1934, %v2298
      %v2487 = vadd.f32 %v1935, %v2301
      %v2488 = vadd.f32 %v1936, %v2306
      %v2489 = vadd.f32 %v1937, %v2309
      %v2490 = vadd.f32 %v1938, %v2314
      %v2491 = vadd.f32 %v1939, %v2317
      %v2492 = vadd.f32 %v1940, %v2322
      %v2493 = vadd.f32 %v1941, %v2325
      %v2494 = vadd.f32 %v1942, %v2330
      %v2495 = vadd.f32 %v1943, %v2333
      %v2496 = vadd.f32 %v1944, %v2338
      %v2497 = vadd.f32 %v1945, %v2341
      %v2498 = vadd.f32 %v1946, %v2346
      %v2499 = vadd.f32 %v1947, %v2349
      %v2500 = vadd.f32 %v1948, %v2354
      %v2501 = vadd.f32 %v1949, %v2357
      %v2502 = vadd.f32 %v1950, %v2362
      %v2503 = vadd.f32 %v1951, %v2365
      %v2504 = vadd.f32 %v1952, %v2370
      %v2505 = vadd.f32 %v1953, %v2373
      %v2506 = vadd.f32 %v1954, %v2378
      %v2507 = vadd.f32 %v1955, %v2381
      %v2508 = vadd.f32 %v1956, %v2386
      %v2509 = vadd.f32 %v1957, %v2389
      %v2510 = vadd.f32 %v1958, %v2394
      %v2511 = vadd.f32 %v1959, %v2397
      %v2512 = vadd.f32 %v1960, %v2402
      %v2513 = vadd.f32 %v1961, %v2405
      %v2514 = vadd.f32 %v1962, %v2410
      %v2515 = vadd.f32 %v1963, %v2413
      %v2516 = vadd.f32 %v1964, %v2418
      %v2517 = vadd.f32 %v1965, %v2421
      %v2518 = vadd.f32 %v1966, %v2426
      %v2519 = vadd.f32 %v1967, %v2429
      %v2520 = vadd.f32 %v1968, %v2434
      %v2521 = vadd.f32 %v1969, %v2437
      %v2522 = vadd.f32 %v1970, %v2442
      %v2523 = vadd.f32 %v1971, %v2445
      %v2524 = vadd.f32 %v1972, %v2450
      %v2525 = vadd.f32 %v1973, %v2453
      %v2526 = vadd.f32 %v1974, %v2458
      %v2527 = vadd.f32 %v1975, %v2461
      %s2528 = sadd.s32 %s447, 66
      %s2529 = scalar_lea.vmem %s425, %s2528
      %v2530 = vld [vmem:[%s2529] sm:$0xff]
      %v2531 = vld [vmem:[%s2529 + $0x8] sm:$0xff]
      %v2532 = vld [vmem:[%s2529 + $0x10] sm:$0xff]
      %v2533 = vld [vmem:[%s2529 + $0x18] sm:$0xff]
      %v2534 = vld [vmem:[%s2529 + $0x20] sm:$0xff]
      %v2535 = vld [vmem:[%s2529 + $0x28] sm:$0xff]
      %v2536 = vld [vmem:[%s2529 + $0x30] sm:$0xff]
      %v2537 = vld [vmem:[%s2529 + $0x38] sm:$0xff]
      %v2538 = vld [vmem:[%s2529 + $0x40] sm:$0xff]
      %v2539 = vld [vmem:[%s2529 + $0x48] sm:$0xff]
      %v2540 = vld [vmem:[%s2529 + $0x50] sm:$0xff]
      %v2541 = vld [vmem:[%s2529 + $0x58] sm:$0xff]
      %v2542 = vld [vmem:[%s2529 + $0x60] sm:$0xff]
      %v2543 = vld [vmem:[%s2529 + $0x68] sm:$0xff]
      %v2544 = vld [vmem:[%s2529 + $0x70] sm:$0xff]
      %v2545 = vld [vmem:[%s2529 + $0x78] sm:$0xff]
      %v2546 = vld [vmem:[%s2529 + $0x80] sm:$0xff]
      %v2547 = vld [vmem:[%s2529 + $0x88] sm:$0xff]
      %v2548 = vld [vmem:[%s2529 + $0x90] sm:$0xff]
      %v2549 = vld [vmem:[%s2529 + $0x98] sm:$0xff]
      %v2550 = vld [vmem:[%s2529 + $0xa0] sm:$0xff]
      %v2551 = vld [vmem:[%s2529 + $0xa8] sm:$0xff]
      %v2552 = vld [vmem:[%s2529 + $0xb0] sm:$0xff]
      %v2553 = vld [vmem:[%s2529 + $0xb8] sm:$0xff]
      %v2554 = vld [vmem:[%s2529 + $0xc0] sm:$0xff]
      %v2555 = vld [vmem:[%s2529 + $0xc8] sm:$0xff]
      %v2556 = vld [vmem:[%s2529 + $0xd0] sm:$0xff]
      %v2557 = vld [vmem:[%s2529 + $0xd8] sm:$0xff]
      %v2558 = vld [vmem:[%s2529 + $0xe0] sm:$0xff]
      %v2559 = vld [vmem:[%s2529 + $0xe8] sm:$0xff]
      %v2560 = vld [vmem:[%s2529 + $0xf0] sm:$0xff]
      %v2561 = vld [vmem:[%s2529 + $0xf8] sm:$0xff]
      %v2562 = vld [vmem:[%s2529 + $0x100] sm:$0xff]
      %v2563 = vld [vmem:[%s2529 + $0x108] sm:$0xff]
      %v2564 = vld [vmem:[%s2529 + $0x110] sm:$0xff]
      %v2565 = vld [vmem:[%s2529 + $0x118] sm:$0xff]
      %v2566 = vld [vmem:[%s2529 + $0x120] sm:$0xff]
      %v2567 = vld [vmem:[%s2529 + $0x128] sm:$0xff]
      %v2568 = vld [vmem:[%s2529 + $0x130] sm:$0xff]
      %v2569 = vld [vmem:[%s2529 + $0x138] sm:$0xff]
      %v2570 = vld [vmem:[%s2529 + $0x140] sm:$0xff]
      %v2571 = vld [vmem:[%s2529 + $0x148] sm:$0xff]
      %v2572 = vld [vmem:[%s2529 + $0x150] sm:$0xff]
      %v2573 = vld [vmem:[%s2529 + $0x158] sm:$0xff]
      %v2574 = vld [vmem:[%s2529 + $0x160] sm:$0xff]
      %v2575 = vld [vmem:[%s2529 + $0x168] sm:$0xff]
      %v2576 = vld [vmem:[%s2529 + $0x170] sm:$0xff]
      %v2577 = vld [vmem:[%s2529 + $0x178] sm:$0xff]
      %v2578 = vld [vmem:[%s2529 + $0x180] sm:$0xff]
      %v2579 = vld [vmem:[%s2529 + $0x188] sm:$0xff]
      %v2580 = vld [vmem:[%s2529 + $0x190] sm:$0xff]
      %v2581 = vld [vmem:[%s2529 + $0x198] sm:$0xff]
      %v2582 = vld [vmem:[%s2529 + $0x1a0] sm:$0xff]
      %v2583 = vld [vmem:[%s2529 + $0x1a8] sm:$0xff]
      %v2584 = vld [vmem:[%s2529 + $0x1b0] sm:$0xff]
      %v2585 = vld [vmem:[%s2529 + $0x1b8] sm:$0xff]
      %v2586 = vld [vmem:[%s2529 + $0x1c0] sm:$0xff]
      %v2587 = vld [vmem:[%s2529 + $0x1c8] sm:$0xff]
      %v2588 = vld [vmem:[%s2529 + $0x1d0] sm:$0xff]
      %v2589 = vld [vmem:[%s2529 + $0x1d8] sm:$0xff]
      %v2590 = vld [vmem:[%s2529 + $0x1e0] sm:$0xff]
      %v2591 = vld [vmem:[%s2529 + $0x1e8] sm:$0xff]
      %v2592 = vld [vmem:[%s2529 + $0x1f0] sm:$0xff]
      %v2593 = vld [vmem:[%s2529 + $0x1f8] sm:$0xff]
      %v2594 = vpack.c.bf16 %v2531, %v2530
      %v2595 = vpack.c.bf16 %v2533, %v2532
      %v2596 = vpack.c.bf16 %v2535, %v2534
      %v2597 = vpack.c.bf16 %v2537, %v2536
      %v2598 = vpack.c.bf16 %v2539, %v2538
      %v2599 = vpack.c.bf16 %v2541, %v2540
      %v2600 = vpack.c.bf16 %v2543, %v2542
      %v2601 = vpack.c.bf16 %v2545, %v2544
      %v2602 = vpack.c.bf16 %v2547, %v2546
      %v2603 = vpack.c.bf16 %v2549, %v2548
      %v2604 = vpack.c.bf16 %v2551, %v2550
      %v2605 = vpack.c.bf16 %v2553, %v2552
      %v2606 = vpack.c.bf16 %v2555, %v2554
      %v2607 = vpack.c.bf16 %v2557, %v2556
      %v2608 = vpack.c.bf16 %v2559, %v2558
      %v2609 = vpack.c.bf16 %v2561, %v2560
      %v2610 = vpack.c.bf16 %v2563, %v2562
      %v2611 = vpack.c.bf16 %v2565, %v2564
      %v2612 = vpack.c.bf16 %v2567, %v2566
      %v2613 = vpack.c.bf16 %v2569, %v2568
      %v2614 = vpack.c.bf16 %v2571, %v2570
      %v2615 = vpack.c.bf16 %v2573, %v2572
      %v2616 = vpack.c.bf16 %v2575, %v2574
      %v2617 = vpack.c.bf16 %v2577, %v2576
      %v2618 = vpack.c.bf16 %v2579, %v2578
      %v2619 = vpack.c.bf16 %v2581, %v2580
      %v2620 = vpack.c.bf16 %v2583, %v2582
      %v2621 = vpack.c.bf16 %v2585, %v2584
      %v2622 = vpack.c.bf16 %v2587, %v2586
      %v2623 = vpack.c.bf16 %v2589, %v2588
      %v2624 = vpack.c.bf16 %v2591, %v2590
      %v2625 = vpack.c.bf16 %v2593, %v2592
      %s2626 = scalar_lea.vmem %s2, 16
      %v2627 = vld [vmem:[%s2626] sm:$0xf]
      %v2629 = vsel %vm646, %v2594, 0
      %v2632 = vsel %vm646, %v2595, 0
      %v2635 = vsel %vm646, %v2596, 0
      %v2638 = vsel %vm646, %v2597, 0
      %v2641 = vsel %vm646, %v2598, 0
      %v2644 = vsel %vm646, %v2599, 0
      %v2647 = vsel %vm646, %v2600, 0
      %v2650 = vsel %vm646, %v2601, 0
      %v2653 = vsel %vm646, %v2602, 0
      %v2656 = vsel %vm646, %v2603, 0
      %v2659 = vsel %vm646, %v2604, 0
      %v2662 = vsel %vm646, %v2605, 0
      %v2665 = vsel %vm646, %v2606, 0
      %v2668 = vsel %vm646, %v2607, 0
      %v2671 = vsel %vm646, %v2608, 0
      %v2674 = vsel %vm646, %v2609, 0
      %v2677 = vsel %vm646, %v2610, 0
      %v2680 = vsel %vm646, %v2611, 0
      %v2683 = vsel %vm646, %v2612, 0
      %v2686 = vsel %vm646, %v2613, 0
      %v2689 = vsel %vm646, %v2614, 0
      %v2692 = vsel %vm646, %v2615, 0
      %v2695 = vsel %vm646, %v2616, 0
      %v2698 = vsel %vm646, %v2617, 0
      %v2701 = vsel %vm646, %v2618, 0
      %v2704 = vsel %vm646, %v2619, 0
      %v2707 = vsel %vm646, %v2620, 0
      %v2710 = vsel %vm646, %v2621, 0
      %v2713 = vsel %vm646, %v2622, 0
      %v2716 = vsel %vm646, %v2623, 0
      %v2719 = vsel %vm646, %v2624, 0
      %v2722 = vsel %vm646, %v2625, 0
      %v2725 = vsel %vm743, %v2627, 0
      %2727 = vmatprep.subr.bf16.mxu0 0
      %2728 = vmatpush1.bf16.msra.mxu0 0
      %2729 = vmatprep.subr.bf16.mxu0 0
      %2730 = vmatpush1.bf16.msra.mxu0 0
      %2731 = vmatprep.subr.bf16.mxu0 0
      %2732 = vmatpush1.bf16.msra.mxu0 0
      %2733 = vmatprep.subr.bf16.mxu0 0
      %2734 = vmatpush1.bf16.msra.mxu0 0
      %2735 = vmatprep.subr.bf16.mxu0 0
      %2736 = vmatpush1.bf16.msra.mxu0 0
      %2737 = vmatprep.subr.bf16.mxu0 0
      %2738 = vmatpush1.bf16.msra.mxu0 0
      %2739 = vmatprep.subr.bf16.mxu0 0
      %2740 = vmatpush1.bf16.msra.mxu0 0
      %2741 = vmatprep.subr.bf16.mxu0 0
      %2742 = vmatpush1.bf16.msra.mxu0 %v2725
      %2743 = vmatprep.subr.bf16.mxu0 0
      %2744 = vmatpush2.bf16.msra.mxu0 0
      %2745 = vmatprep.subr.bf16.mxu0 0
      %2746 = vmatpush2.bf16.msra.mxu0 0
      %2747 = vmatprep.subr.bf16.mxu0 0
      %2748 = vmatpush2.bf16.msra.mxu0 0
      %2749 = vmatprep.subr.bf16.mxu0 0
      %2750 = vmatpush2.bf16.msra.mxu0 0
      %2751 = vmatprep.subr.bf16.mxu0 0
      %2752 = vmatpush2.bf16.msra.mxu0 0
      %2753 = vmatprep.subr.bf16.mxu0 0
      %2754 = vmatpush2.bf16.msra.mxu0 0
      %2755 = vmatprep.subr.bf16.mxu0 0
      %2756 = vmatpush2.bf16.msra.mxu0 0
      %2757 = vmatprep.subr.bf16.mxu0 0
      %2758 = vmatpush2.bf16.msra.mxu0 0
      %2759 = vmatprep.mubr.bf16.mxu0 0
      %2760 = vmatmul.mubr.bf16.gmra.mxu0 %v2629
      %v2761 = vpop.f32.mrf.mxu0
      %v2762 = vadd.f32 0.0, %v2761
      %v2763 = vpop.f32.mrf.mxu0
      %v2764 = vpop.f32.mrf.mxu0
      %v2765 = vadd.f32 0.0, %v2764
      %v2766 = vpop.f32.mrf.mxu0
      %2767 = vmatprep.mubr.bf16.mxu0 0
      %2768 = vmatmul.mubr.bf16.gmra.mxu0 %v2632
      %v2769 = vpop.f32.mrf.mxu0
      %v2770 = vadd.f32 0.0, %v2769
      %v2771 = vpop.f32.mrf.mxu0
      %v2772 = vpop.f32.mrf.mxu0
      %v2773 = vadd.f32 0.0, %v2772
      %v2774 = vpop.f32.mrf.mxu0
      %2775 = vmatprep.mubr.bf16.mxu0 0
      %2776 = vmatmul.mubr.bf16.gmra.mxu0 %v2635
      %v2777 = vpop.f32.mrf.mxu0
      %v2778 = vadd.f32 0.0, %v2777
      %v2779 = vpop.f32.mrf.mxu0
      %v2780 = vpop.f32.mrf.mxu0
      %v2781 = vadd.f32 0.0, %v2780
      %v2782 = vpop.f32.mrf.mxu0
      %2783 = vmatprep.mubr.bf16.mxu0 0
      %2784 = vmatmul.mubr.bf16.gmra.mxu0 %v2638
      %v2785 = vpop.f32.mrf.mxu0
      %v2786 = vadd.f32 0.0, %v2785
      %v2787 = vpop.f32.mrf.mxu0
      %v2788 = vpop.f32.mrf.mxu0
      %v2789 = vadd.f32 0.0, %v2788
      %v2790 = vpop.f32.mrf.mxu0
      %2791 = vmatprep.mubr.bf16.mxu0 0
      %2792 = vmatmul.mubr.bf16.gmra.mxu0 %v2641
      %v2793 = vpop.f32.mrf.mxu0
      %v2794 = vadd.f32 0.0, %v2793
      %v2795 = vpop.f32.mrf.mxu0
      %v2796 = vpop.f32.mrf.mxu0
      %v2797 = vadd.f32 0.0, %v2796
      %v2798 = vpop.f32.mrf.mxu0
      %2799 = vmatprep.mubr.bf16.mxu0 0
      %2800 = vmatmul.mubr.bf16.gmra.mxu0 %v2644
      %v2801 = vpop.f32.mrf.mxu0
      %v2802 = vadd.f32 0.0, %v2801
      %v2803 = vpop.f32.mrf.mxu0
      %v2804 = vpop.f32.mrf.mxu0
      %v2805 = vadd.f32 0.0, %v2804
      %v2806 = vpop.f32.mrf.mxu0
      %2807 = vmatprep.mubr.bf16.mxu0 0
      %2808 = vmatmul.mubr.bf16.gmra.mxu0 %v2647
      %v2809 = vpop.f32.mrf.mxu0
      %v2810 = vadd.f32 0.0, %v2809
      %v2811 = vpop.f32.mrf.mxu0
      %v2812 = vpop.f32.mrf.mxu0
      %v2813 = vadd.f32 0.0, %v2812
      %v2814 = vpop.f32.mrf.mxu0
      %2815 = vmatprep.mubr.bf16.mxu0 0
      %2816 = vmatmul.mubr.bf16.gmra.mxu0 %v2650
      %v2817 = vpop.f32.mrf.mxu0
      %v2818 = vadd.f32 0.0, %v2817
      %v2819 = vpop.f32.mrf.mxu0
      %v2820 = vpop.f32.mrf.mxu0
      %v2821 = vadd.f32 0.0, %v2820
      %v2822 = vpop.f32.mrf.mxu0
      %2823 = vmatprep.mubr.bf16.mxu0 0
      %2824 = vmatmul.mubr.bf16.gmra.mxu0 %v2653
      %v2825 = vpop.f32.mrf.mxu0
      %v2826 = vadd.f32 0.0, %v2825
      %v2827 = vpop.f32.mrf.mxu0
      %v2828 = vpop.f32.mrf.mxu0
      %v2829 = vadd.f32 0.0, %v2828
      %v2830 = vpop.f32.mrf.mxu0
      %2831 = vmatprep.mubr.bf16.mxu0 0
      %2832 = vmatmul.mubr.bf16.gmra.mxu0 %v2656
      %v2833 = vpop.f32.mrf.mxu0
      %v2834 = vadd.f32 0.0, %v2833
      %v2835 = vpop.f32.mrf.mxu0
      %v2836 = vpop.f32.mrf.mxu0
      %v2837 = vadd.f32 0.0, %v2836
      %v2838 = vpop.f32.mrf.mxu0
      %2839 = vmatprep.mubr.bf16.mxu0 0
      %2840 = vmatmul.mubr.bf16.gmra.mxu0 %v2659
      %v2841 = vpop.f32.mrf.mxu0
      %v2842 = vadd.f32 0.0, %v2841
      %v2843 = vpop.f32.mrf.mxu0
      %v2844 = vpop.f32.mrf.mxu0
      %v2845 = vadd.f32 0.0, %v2844
      %v2846 = vpop.f32.mrf.mxu0
      %2847 = vmatprep.mubr.bf16.mxu0 0
      %2848 = vmatmul.mubr.bf16.gmra.mxu0 %v2662
      %v2849 = vpop.f32.mrf.mxu0
      %v2850 = vadd.f32 0.0, %v2849
      %v2851 = vpop.f32.mrf.mxu0
      %v2852 = vpop.f32.mrf.mxu0
      %v2853 = vadd.f32 0.0, %v2852
      %v2854 = vpop.f32.mrf.mxu0
      %2855 = vmatprep.mubr.bf16.mxu0 0
      %2856 = vmatmul.mubr.bf16.gmra.mxu0 %v2665
      %v2857 = vpop.f32.mrf.mxu0
      %v2858 = vadd.f32 0.0, %v2857
      %v2859 = vpop.f32.mrf.mxu0
      %v2860 = vpop.f32.mrf.mxu0
      %v2861 = vadd.f32 0.0, %v2860
      %v2862 = vpop.f32.mrf.mxu0
      %2863 = vmatprep.mubr.bf16.mxu0 0
      %2864 = vmatmul.mubr.bf16.gmra.mxu0 %v2668
      %v2865 = vpop.f32.mrf.mxu0
      %v2866 = vadd.f32 0.0, %v2865
      %v2867 = vpop.f32.mrf.mxu0
      %v2868 = vpop.f32.mrf.mxu0
      %v2869 = vadd.f32 0.0, %v2868
      %v2870 = vpop.f32.mrf.mxu0
      %2871 = vmatprep.mubr.bf16.mxu0 0
      %2872 = vmatmul.mubr.bf16.gmra.mxu0 %v2671
      %v2873 = vpop.f32.mrf.mxu0
      %v2874 = vadd.f32 0.0, %v2873
      %v2875 = vpop.f32.mrf.mxu0
      %v2876 = vpop.f32.mrf.mxu0
      %v2877 = vadd.f32 0.0, %v2876
      %v2878 = vpop.f32.mrf.mxu0
      %2879 = vmatprep.mubr.bf16.mxu0 0
      %2880 = vmatmul.mubr.bf16.gmra.mxu0 %v2674
      %v2881 = vpop.f32.mrf.mxu0
      %v2882 = vadd.f32 0.0, %v2881
      %v2883 = vpop.f32.mrf.mxu0
      %v2884 = vpop.f32.mrf.mxu0
      %v2885 = vadd.f32 0.0, %v2884
      %v2886 = vpop.f32.mrf.mxu0
      %2887 = vmatprep.mubr.bf16.mxu0 0
      %2888 = vmatmul.mubr.bf16.gmra.mxu0 %v2677
      %v2889 = vpop.f32.mrf.mxu0
      %v2890 = vadd.f32 0.0, %v2889
      %v2891 = vpop.f32.mrf.mxu0
      %v2892 = vpop.f32.mrf.mxu0
      %v2893 = vadd.f32 0.0, %v2892
      %v2894 = vpop.f32.mrf.mxu0
      %2895 = vmatprep.mubr.bf16.mxu0 0
      %2896 = vmatmul.mubr.bf16.gmra.mxu0 %v2680
      %v2897 = vpop.f32.mrf.mxu0
      %v2898 = vadd.f32 0.0, %v2897
      %v2899 = vpop.f32.mrf.mxu0
      %v2900 = vpop.f32.mrf.mxu0
      %v2901 = vadd.f32 0.0, %v2900
      %v2902 = vpop.f32.mrf.mxu0
      %2903 = vmatprep.mubr.bf16.mxu0 0
      %2904 = vmatmul.mubr.bf16.gmra.mxu0 %v2683
      %v2905 = vpop.f32.mrf.mxu0
      %v2906 = vadd.f32 0.0, %v2905
      %v2907 = vpop.f32.mrf.mxu0
      %v2908 = vpop.f32.mrf.mxu0
      %v2909 = vadd.f32 0.0, %v2908
      %v2910 = vpop.f32.mrf.mxu0
      %2911 = vmatprep.mubr.bf16.mxu0 0
      %2912 = vmatmul.mubr.bf16.gmra.mxu0 %v2686
      %v2913 = vpop.f32.mrf.mxu0
      %v2914 = vadd.f32 0.0, %v2913
      %v2915 = vpop.f32.mrf.mxu0
      %v2916 = vpop.f32.mrf.mxu0
      %v2917 = vadd.f32 0.0, %v2916
      %v2918 = vpop.f32.mrf.mxu0
      %2919 = vmatprep.mubr.bf16.mxu0 0
      %2920 = vmatmul.mubr.bf16.gmra.mxu0 %v2689
      %v2921 = vpop.f32.mrf.mxu0
      %v2922 = vadd.f32 0.0, %v2921
      %v2923 = vpop.f32.mrf.mxu0
      %v2924 = vpop.f32.mrf.mxu0
      %v2925 = vadd.f32 0.0, %v2924
      %v2926 = vpop.f32.mrf.mxu0
      %2927 = vmatprep.mubr.bf16.mxu0 0
      %2928 = vmatmul.mubr.bf16.gmra.mxu0 %v2692
      %v2929 = vpop.f32.mrf.mxu0
      %v2930 = vadd.f32 0.0, %v2929
      %v2931 = vpop.f32.mrf.mxu0
      %v2932 = vpop.f32.mrf.mxu0
      %v2933 = vadd.f32 0.0, %v2932
      %v2934 = vpop.f32.mrf.mxu0
      %2935 = vmatprep.mubr.bf16.mxu0 0
      %2936 = vmatmul.mubr.bf16.gmra.mxu0 %v2695
      %v2937 = vpop.f32.mrf.mxu0
      %v2938 = vadd.f32 0.0, %v2937
      %v2939 = vpop.f32.mrf.mxu0
      %v2940 = vpop.f32.mrf.mxu0
      %v2941 = vadd.f32 0.0, %v2940
      %v2942 = vpop.f32.mrf.mxu0
      %2943 = vmatprep.mubr.bf16.mxu0 0
      %2944 = vmatmul.mubr.bf16.gmra.mxu0 %v2698
      %v2945 = vpop.f32.mrf.mxu0
      %v2946 = vadd.f32 0.0, %v2945
      %v2947 = vpop.f32.mrf.mxu0
      %v2948 = vpop.f32.mrf.mxu0
      %v2949 = vadd.f32 0.0, %v2948
      %v2950 = vpop.f32.mrf.mxu0
      %2951 = vmatprep.mubr.bf16.mxu0 0
      %2952 = vmatmul.mubr.bf16.gmra.mxu0 %v2701
      %v2953 = vpop.f32.mrf.mxu0
      %v2954 = vadd.f32 0.0, %v2953
      %v2955 = vpop.f32.mrf.mxu0
      %v2956 = vpop.f32.mrf.mxu0
      %v2957 = vadd.f32 0.0, %v2956
      %v2958 = vpop.f32.mrf.mxu0
      %2959 = vmatprep.mubr.bf16.mxu0 0
      %2960 = vmatmul.mubr.bf16.gmra.mxu0 %v2704
      %v2961 = vpop.f32.mrf.mxu0
      %v2962 = vadd.f32 0.0, %v2961
      %v2963 = vpop.f32.mrf.mxu0
      %v2964 = vpop.f32.mrf.mxu0
      %v2965 = vadd.f32 0.0, %v2964
      %v2966 = vpop.f32.mrf.mxu0
      %2967 = vmatprep.mubr.bf16.mxu0 0
      %2968 = vmatmul.mubr.bf16.gmra.mxu0 %v2707
      %v2969 = vpop.f32.mrf.mxu0
      %v2970 = vadd.f32 0.0, %v2969
      %v2971 = vpop.f32.mrf.mxu0
      %v2972 = vpop.f32.mrf.mxu0
      %v2973 = vadd.f32 0.0, %v2972
      %v2974 = vpop.f32.mrf.mxu0
      %2975 = vmatprep.mubr.bf16.mxu0 0
      %2976 = vmatmul.mubr.bf16.gmra.mxu0 %v2710
      %v2977 = vpop.f32.mrf.mxu0
      %v2978 = vadd.f32 0.0, %v2977
      %v2979 = vpop.f32.mrf.mxu0
      %v2980 = vpop.f32.mrf.mxu0
      %v2981 = vadd.f32 0.0, %v2980
      %v2982 = vpop.f32.mrf.mxu0
      %2983 = vmatprep.mubr.bf16.mxu0 0
      %2984 = vmatmul.mubr.bf16.gmra.mxu0 %v2713
      %v2985 = vpop.f32.mrf.mxu0
      %v2986 = vadd.f32 0.0, %v2985
      %v2987 = vpop.f32.mrf.mxu0
      %v2988 = vpop.f32.mrf.mxu0
      %v2989 = vadd.f32 0.0, %v2988
      %v2990 = vpop.f32.mrf.mxu0
      %2991 = vmatprep.mubr.bf16.mxu0 0
      %2992 = vmatmul.mubr.bf16.gmra.mxu0 %v2716
      %v2993 = vpop.f32.mrf.mxu0
      %v2994 = vadd.f32 0.0, %v2993
      %v2995 = vpop.f32.mrf.mxu0
      %v2996 = vpop.f32.mrf.mxu0
      %v2997 = vadd.f32 0.0, %v2996
      %v2998 = vpop.f32.mrf.mxu0
      %2999 = vmatprep.mubr.bf16.mxu0 0
      %3000 = vmatmul.mubr.bf16.gmra.mxu0 %v2719
      %v3001 = vpop.f32.mrf.mxu0
      %v3002 = vadd.f32 0.0, %v3001
      %v3003 = vpop.f32.mrf.mxu0
      %v3004 = vpop.f32.mrf.mxu0
      %v3005 = vadd.f32 0.0, %v3004
      %v3006 = vpop.f32.mrf.mxu0
      %3007 = vmatprep.mubr.bf16.mxu0 0
      %3008 = vmatmul.mubr.bf16.gmra.mxu0 %v2722
      %v3009 = vpop.f32.mrf.mxu0
      %v3010 = vadd.f32 0.0, %v3009
      %v3011 = vpop.f32.mrf.mxu0
      %v3012 = vpop.f32.mrf.mxu0
      %v3013 = vadd.f32 0.0, %v3012
      %v3014 = vpop.f32.mrf.mxu0
      %3015 = vdwg.mxu0
      %v3016 = vadd.f32 %v2464, %v2762
      %v3017 = vadd.f32 %v2465, %v2765
      %v3018 = vadd.f32 %v2466, %v2770
      %v3019 = vadd.f32 %v2467, %v2773
      %v3020 = vadd.f32 %v2468, %v2778
      %v3021 = vadd.f32 %v2469, %v2781
      %v3022 = vadd.f32 %v2470, %v2786
      %v3023 = vadd.f32 %v2471, %v2789
      %v3024 = vadd.f32 %v2472, %v2794
      %v3025 = vadd.f32 %v2473, %v2797
      %v3026 = vadd.f32 %v2474, %v2802
      %v3027 = vadd.f32 %v2475, %v2805
      %v3028 = vadd.f32 %v2476, %v2810
      %v3029 = vadd.f32 %v2477, %v2813
      %v3030 = vadd.f32 %v2478, %v2818
      %v3031 = vadd.f32 %v2479, %v2821
      %v3032 = vadd.f32 %v2480, %v2826
      %v3033 = vadd.f32 %v2481, %v2829
      %v3034 = vadd.f32 %v2482, %v2834
      %v3035 = vadd.f32 %v2483, %v2837
      %v3036 = vadd.f32 %v2484, %v2842
      %v3037 = vadd.f32 %v2485, %v2845
      %v3038 = vadd.f32 %v2486, %v2850
      %v3039 = vadd.f32 %v2487, %v2853
      %v3040 = vadd.f32 %v2488, %v2858
      %v3041 = vadd.f32 %v2489, %v2861
      %v3042 = vadd.f32 %v2490, %v2866
      %v3043 = vadd.f32 %v2491, %v2869
      %v3044 = vadd.f32 %v2492, %v2874
      %v3045 = vadd.f32 %v2493, %v2877
      %v3046 = vadd.f32 %v2494, %v2882
      %v3047 = vadd.f32 %v2495, %v2885
      %v3048 = vadd.f32 %v2496, %v2890
      %v3049 = vadd.f32 %v2497, %v2893
      %v3050 = vadd.f32 %v2498, %v2898
      %v3051 = vadd.f32 %v2499, %v2901
      %v3052 = vadd.f32 %v2500, %v2906
      %v3053 = vadd.f32 %v2501, %v2909
      %v3054 = vadd.f32 %v2502, %v2914
      %v3055 = vadd.f32 %v2503, %v2917
      %v3056 = vadd.f32 %v2504, %v2922
      %v3057 = vadd.f32 %v2505, %v2925
      %v3058 = vadd.f32 %v2506, %v2930
      %v3059 = vadd.f32 %v2507, %v2933
      %v3060 = vadd.f32 %v2508, %v2938
      %v3061 = vadd.f32 %v2509, %v2941
      %v3062 = vadd.f32 %v2510, %v2946
      %v3063 = vadd.f32 %v2511, %v2949
      %v3064 = vadd.f32 %v2512, %v2954
      %v3065 = vadd.f32 %v2513, %v2957
      %v3066 = vadd.f32 %v2514, %v2962
      %v3067 = vadd.f32 %v2515, %v2965
      %v3068 = vadd.f32 %v2516, %v2970
      %v3069 = vadd.f32 %v2517, %v2973
      %v3070 = vadd.f32 %v2518, %v2978
      %v3071 = vadd.f32 %v2519, %v2981
      %v3072 = vadd.f32 %v2520, %v2986
      %v3073 = vadd.f32 %v2521, %v2989
      %v3074 = vadd.f32 %v2522, %v2994
      %v3075 = vadd.f32 %v2523, %v2997
      %v3076 = vadd.f32 %v2524, %v3002
      %v3077 = vadd.f32 %v2525, %v3005
      %v3078 = vadd.f32 %v2526, %v3010
      %v3079 = vadd.f32 %v2527, %v3013
      %s3080 = sadd.s32 %s447, 68
      %s3081 = scalar_lea.vmem %s425, %s3080
      %v3082 = vld [vmem:[%s3081] sm:$0xff]
      %v3083 = vld [vmem:[%s3081 + $0x8] sm:$0xff]
      %v3084 = vld [vmem:[%s3081 + $0x10] sm:$0xff]
      %v3085 = vld [vmem:[%s3081 + $0x18] sm:$0xff]
      %v3086 = vld [vmem:[%s3081 + $0x20] sm:$0xff]
      %v3087 = vld [vmem:[%s3081 + $0x28] sm:$0xff]
      %v3088 = vld [vmem:[%s3081 + $0x30] sm:$0xff]
      %v3089 = vld [vmem:[%s3081 + $0x38] sm:$0xff]
      %v3090 = vld [vmem:[%s3081 + $0x40] sm:$0xff]
      %v3091 = vld [vmem:[%s3081 + $0x48] sm:$0xff]
      %v3092 = vld [vmem:[%s3081 + $0x50] sm:$0xff]
      %v3093 = vld [vmem:[%s3081 + $0x58] sm:$0xff]
      %v3094 = vld [vmem:[%s3081 + $0x60] sm:$0xff]
      %v3095 = vld [vmem:[%s3081 + $0x68] sm:$0xff]
      %v3096 = vld [vmem:[%s3081 + $0x70] sm:$0xff]
      %v3097 = vld [vmem:[%s3081 + $0x78] sm:$0xff]
      %v3098 = vld [vmem:[%s3081 + $0x80] sm:$0xff]
      %v3099 = vld [vmem:[%s3081 + $0x88] sm:$0xff]
      %v3100 = vld [vmem:[%s3081 + $0x90] sm:$0xff]
      %v3101 = vld [vmem:[%s3081 + $0x98] sm:$0xff]
      %v3102 = vld [vmem:[%s3081 + $0xa0] sm:$0xff]
      %v3103 = vld [vmem:[%s3081 + $0xa8] sm:$0xff]
      %v3104 = vld [vmem:[%s3081 + $0xb0] sm:$0xff]
      %v3105 = vld [vmem:[%s3081 + $0xb8] sm:$0xff]
      %v3106 = vld [vmem:[%s3081 + $0xc0] sm:$0xff]
      %v3107 = vld [vmem:[%s3081 + $0xc8] sm:$0xff]
      %v3108 = vld [vmem:[%s3081 + $0xd0] sm:$0xff]
      %v3109 = vld [vmem:[%s3081 + $0xd8] sm:$0xff]
      %v3110 = vld [vmem:[%s3081 + $0xe0] sm:$0xff]
      %v3111 = vld [vmem:[%s3081 + $0xe8] sm:$0xff]
      %v3112 = vld [vmem:[%s3081 + $0xf0] sm:$0xff]
      %v3113 = vld [vmem:[%s3081 + $0xf8] sm:$0xff]
      %v3114 = vld [vmem:[%s3081 + $0x100] sm:$0xff]
      %v3115 = vld [vmem:[%s3081 + $0x108] sm:$0xff]
      %v3116 = vld [vmem:[%s3081 + $0x110] sm:$0xff]
      %v3117 = vld [vmem:[%s3081 + $0x118] sm:$0xff]
      %v3118 = vld [vmem:[%s3081 + $0x120] sm:$0xff]
      %v3119 = vld [vmem:[%s3081 + $0x128] sm:$0xff]
      %v3120 = vld [vmem:[%s3081 + $0x130] sm:$0xff]
      %v3121 = vld [vmem:[%s3081 + $0x138] sm:$0xff]
      %v3122 = vld [vmem:[%s3081 + $0x140] sm:$0xff]
      %v3123 = vld [vmem:[%s3081 + $0x148] sm:$0xff]
      %v3124 = vld [vmem:[%s3081 + $0x150] sm:$0xff]
      %v3125 = vld [vmem:[%s3081 + $0x158] sm:$0xff]
      %v3126 = vld [vmem:[%s3081 + $0x160] sm:$0xff]
      %v3127 = vld [vmem:[%s3081 + $0x168] sm:$0xff]
      %v3128 = vld [vmem:[%s3081 + $0x170] sm:$0xff]
      %v3129 = vld [vmem:[%s3081 + $0x178] sm:$0xff]
      %v3130 = vld [vmem:[%s3081 + $0x180] sm:$0xff]
      %v3131 = vld [vmem:[%s3081 + $0x188] sm:$0xff]
      %v3132 = vld [vmem:[%s3081 + $0x190] sm:$0xff]
      %v3133 = vld [vmem:[%s3081 + $0x198] sm:$0xff]
      %v3134 = vld [vmem:[%s3081 + $0x1a0] sm:$0xff]
      %v3135 = vld [vmem:[%s3081 + $0x1a8] sm:$0xff]
      %v3136 = vld [vmem:[%s3081 + $0x1b0] sm:$0xff]
      %v3137 = vld [vmem:[%s3081 + $0x1b8] sm:$0xff]
      %v3138 = vld [vmem:[%s3081 + $0x1c0] sm:$0xff]
      %v3139 = vld [vmem:[%s3081 + $0x1c8] sm:$0xff]
      %v3140 = vld [vmem:[%s3081 + $0x1d0] sm:$0xff]
      %v3141 = vld [vmem:[%s3081 + $0x1d8] sm:$0xff]
      %v3142 = vld [vmem:[%s3081 + $0x1e0] sm:$0xff]
      %v3143 = vld [vmem:[%s3081 + $0x1e8] sm:$0xff]
      %v3144 = vld [vmem:[%s3081 + $0x1f0] sm:$0xff]
      %v3145 = vld [vmem:[%s3081 + $0x1f8] sm:$0xff]
      %v3146 = vpack.c.bf16 %v3083, %v3082
      %v3147 = vpack.c.bf16 %v3085, %v3084
      %v3148 = vpack.c.bf16 %v3087, %v3086
      %v3149 = vpack.c.bf16 %v3089, %v3088
      %v3150 = vpack.c.bf16 %v3091, %v3090
      %v3151 = vpack.c.bf16 %v3093, %v3092
      %v3152 = vpack.c.bf16 %v3095, %v3094
      %v3153 = vpack.c.bf16 %v3097, %v3096
      %v3154 = vpack.c.bf16 %v3099, %v3098
      %v3155 = vpack.c.bf16 %v3101, %v3100
      %v3156 = vpack.c.bf16 %v3103, %v3102
      %v3157 = vpack.c.bf16 %v3105, %v3104
      %v3158 = vpack.c.bf16 %v3107, %v3106
      %v3159 = vpack.c.bf16 %v3109, %v3108
      %v3160 = vpack.c.bf16 %v3111, %v3110
      %v3161 = vpack.c.bf16 %v3113, %v3112
      %v3162 = vpack.c.bf16 %v3115, %v3114
      %v3163 = vpack.c.bf16 %v3117, %v3116
      %v3164 = vpack.c.bf16 %v3119, %v3118
      %v3165 = vpack.c.bf16 %v3121, %v3120
      %v3166 = vpack.c.bf16 %v3123, %v3122
      %v3167 = vpack.c.bf16 %v3125, %v3124
      %v3168 = vpack.c.bf16 %v3127, %v3126
      %v3169 = vpack.c.bf16 %v3129, %v3128
      %v3170 = vpack.c.bf16 %v3131, %v3130
      %v3171 = vpack.c.bf16 %v3133, %v3132
      %v3172 = vpack.c.bf16 %v3135, %v3134
      %v3173 = vpack.c.bf16 %v3137, %v3136
      %v3174 = vpack.c.bf16 %v3139, %v3138
      %v3175 = vpack.c.bf16 %v3141, %v3140
      %v3176 = vpack.c.bf16 %v3143, %v3142
      %v3177 = vpack.c.bf16 %v3145, %v3144
      %s3178 = scalar_lea.vmem %s2, 20
      %v3179 = vld [vmem:[%s3178] sm:$0xf]
      %v3181 = vsel %vm646, %v3146, 0
      %v3184 = vsel %vm646, %v3147, 0
      %v3187 = vsel %vm646, %v3148, 0
      %v3190 = vsel %vm646, %v3149, 0
      %v3193 = vsel %vm646, %v3150, 0
      %v3196 = vsel %vm646, %v3151, 0
      %v3199 = vsel %vm646, %v3152, 0
      %v3202 = vsel %vm646, %v3153, 0
      %v3205 = vsel %vm646, %v3154, 0
      %v3208 = vsel %vm646, %v3155, 0
      %v3211 = vsel %vm646, %v3156, 0
      %v3214 = vsel %vm646, %v3157, 0
      %v3217 = vsel %vm646, %v3158, 0
      %v3220 = vsel %vm646, %v3159, 0
      %v3223 = vsel %vm646, %v3160, 0
      %v3226 = vsel %vm646, %v3161, 0
      %v3229 = vsel %vm646, %v3162, 0
      %v3232 = vsel %vm646, %v3163, 0
      %v3235 = vsel %vm646, %v3164, 0
      %v3238 = vsel %vm646, %v3165, 0
      %v3241 = vsel %vm646, %v3166, 0
      %v3244 = vsel %vm646, %v3167, 0
      %v3247 = vsel %vm646, %v3168, 0
      %v3250 = vsel %vm646, %v3169, 0
      %v3253 = vsel %vm646, %v3170, 0
      %v3256 = vsel %vm646, %v3171, 0
      %v3259 = vsel %vm646, %v3172, 0
      %v3262 = vsel %vm646, %v3173, 0
      %v3265 = vsel %vm646, %v3174, 0
      %v3268 = vsel %vm646, %v3175, 0
      %v3271 = vsel %vm646, %v3176, 0
      %v3274 = vsel %vm646, %v3177, 0
      %v3277 = vsel %vm743, %v3179, 0
      %3279 = vmatprep.subr.bf16.mxu0 0
      %3280 = vmatpush1.bf16.msra.mxu0 0
      %3281 = vmatprep.subr.bf16.mxu0 0
      %3282 = vmatpush1.bf16.msra.mxu0 0
      %3283 = vmatprep.subr.bf16.mxu0 0
      %3284 = vmatpush1.bf16.msra.mxu0 0
      %3285 = vmatprep.subr.bf16.mxu0 0
      %3286 = vmatpush1.bf16.msra.mxu0 0
      %3287 = vmatprep.subr.bf16.mxu0 0
      %3288 = vmatpush1.bf16.msra.mxu0 0
      %3289 = vmatprep.subr.bf16.mxu0 0
      %3290 = vmatpush1.bf16.msra.mxu0 0
      %3291 = vmatprep.subr.bf16.mxu0 0
      %3292 = vmatpush1.bf16.msra.mxu0 0
      %3293 = vmatprep.subr.bf16.mxu0 0
      %3294 = vmatpush1.bf16.msra.mxu0 %v3277
      %3295 = vmatprep.subr.bf16.mxu0 0
      %3296 = vmatpush2.bf16.msra.mxu0 0
      %3297 = vmatprep.subr.bf16.mxu0 0
      %3298 = vmatpush2.bf16.msra.mxu0 0
      %3299 = vmatprep.subr.bf16.mxu0 0
      %3300 = vmatpush2.bf16.msra.mxu0 0
      %3301 = vmatprep.subr.bf16.mxu0 0
      %3302 = vmatpush2.bf16.msra.mxu0 0
      %3303 = vmatprep.subr.bf16.mxu0 0
      %3304 = vmatpush2.bf16.msra.mxu0 0
      %3305 = vmatprep.subr.bf16.mxu0 0
      %3306 = vmatpush2.bf16.msra.mxu0 0
      %3307 = vmatprep.subr.bf16.mxu0 0
      %3308 = vmatpush2.bf16.msra.mxu0 0
      %3309 = vmatprep.subr.bf16.mxu0 0
      %3310 = vmatpush2.bf16.msra.mxu0 0
      %3311 = vmatprep.mubr.bf16.mxu0 0
      %3312 = vmatmul.mubr.bf16.gmra.mxu0 %v3181
      %v3313 = vpop.f32.mrf.mxu0
      %v3314 = vadd.f32 0.0, %v3313
      %v3315 = vpop.f32.mrf.mxu0
      %v3316 = vpop.f32.mrf.mxu0
      %v3317 = vadd.f32 0.0, %v3316
      %v3318 = vpop.f32.mrf.mxu0
      %3319 = vmatprep.mubr.bf16.mxu0 0
      %3320 = vmatmul.mubr.bf16.gmra.mxu0 %v3184
      %v3321 = vpop.f32.mrf.mxu0
      %v3322 = vadd.f32 0.0, %v3321
      %v3323 = vpop.f32.mrf.mxu0
      %v3324 = vpop.f32.mrf.mxu0
      %v3325 = vadd.f32 0.0, %v3324
      %v3326 = vpop.f32.mrf.mxu0
      %3327 = vmatprep.mubr.bf16.mxu0 0
      %3328 = vmatmul.mubr.bf16.gmra.mxu0 %v3187
      %v3329 = vpop.f32.mrf.mxu0
      %v3330 = vadd.f32 0.0, %v3329
      %v3331 = vpop.f32.mrf.mxu0
      %v3332 = vpop.f32.mrf.mxu0
      %v3333 = vadd.f32 0.0, %v3332
      %v3334 = vpop.f32.mrf.mxu0
      %3335 = vmatprep.mubr.bf16.mxu0 0
      %3336 = vmatmul.mubr.bf16.gmra.mxu0 %v3190
      %v3337 = vpop.f32.mrf.mxu0
      %v3338 = vadd.f32 0.0, %v3337
      %v3339 = vpop.f32.mrf.mxu0
      %v3340 = vpop.f32.mrf.mxu0
      %v3341 = vadd.f32 0.0, %v3340
      %v3342 = vpop.f32.mrf.mxu0
      %3343 = vmatprep.mubr.bf16.mxu0 0
      %3344 = vmatmul.mubr.bf16.gmra.mxu0 %v3193
      %v3345 = vpop.f32.mrf.mxu0
      %v3346 = vadd.f32 0.0, %v3345
      %v3347 = vpop.f32.mrf.mxu0
      %v3348 = vpop.f32.mrf.mxu0
      %v3349 = vadd.f32 0.0, %v3348
      %v3350 = vpop.f32.mrf.mxu0
      %3351 = vmatprep.mubr.bf16.mxu0 0
      %3352 = vmatmul.mubr.bf16.gmra.mxu0 %v3196
      %v3353 = vpop.f32.mrf.mxu0
      %v3354 = vadd.f32 0.0, %v3353
      %v3355 = vpop.f32.mrf.mxu0
      %v3356 = vpop.f32.mrf.mxu0
      %v3357 = vadd.f32 0.0, %v3356
      %v3358 = vpop.f32.mrf.mxu0
      %3359 = vmatprep.mubr.bf16.mxu0 0
      %3360 = vmatmul.mubr.bf16.gmra.mxu0 %v3199
      %v3361 = vpop.f32.mrf.mxu0
      %v3362 = vadd.f32 0.0, %v3361
      %v3363 = vpop.f32.mrf.mxu0
      %v3364 = vpop.f32.mrf.mxu0
      %v3365 = vadd.f32 0.0, %v3364
      %v3366 = vpop.f32.mrf.mxu0
      %3367 = vmatprep.mubr.bf16.mxu0 0
      %3368 = vmatmul.mubr.bf16.gmra.mxu0 %v3202
      %v3369 = vpop.f32.mrf.mxu0
      %v3370 = vadd.f32 0.0, %v3369
      %v3371 = vpop.f32.mrf.mxu0
      %v3372 = vpop.f32.mrf.mxu0
      %v3373 = vadd.f32 0.0, %v3372
      %v3374 = vpop.f32.mrf.mxu0
      %3375 = vmatprep.mubr.bf16.mxu0 0
      %3376 = vmatmul.mubr.bf16.gmra.mxu0 %v3205
      %v3377 = vpop.f32.mrf.mxu0
      %v3378 = vadd.f32 0.0, %v3377
      %v3379 = vpop.f32.mrf.mxu0
      %v3380 = vpop.f32.mrf.mxu0
      %v3381 = vadd.f32 0.0, %v3380
      %v3382 = vpop.f32.mrf.mxu0
      %3383 = vmatprep.mubr.bf16.mxu0 0
      %3384 = vmatmul.mubr.bf16.gmra.mxu0 %v3208
      %v3385 = vpop.f32.mrf.mxu0
      %v3386 = vadd.f32 0.0, %v3385
      %v3387 = vpop.f32.mrf.mxu0
      %v3388 = vpop.f32.mrf.mxu0
      %v3389 = vadd.f32 0.0, %v3388
      %v3390 = vpop.f32.mrf.mxu0
      %3391 = vmatprep.mubr.bf16.mxu0 0
      %3392 = vmatmul.mubr.bf16.gmra.mxu0 %v3211
      %v3393 = vpop.f32.mrf.mxu0
      %v3394 = vadd.f32 0.0, %v3393
      %v3395 = vpop.f32.mrf.mxu0
      %v3396 = vpop.f32.mrf.mxu0
      %v3397 = vadd.f32 0.0, %v3396
      %v3398 = vpop.f32.mrf.mxu0
      %3399 = vmatprep.mubr.bf16.mxu0 0
      %3400 = vmatmul.mubr.bf16.gmra.mxu0 %v3214
      %v3401 = vpop.f32.mrf.mxu0
      %v3402 = vadd.f32 0.0, %v3401
      %v3403 = vpop.f32.mrf.mxu0
      %v3404 = vpop.f32.mrf.mxu0
      %v3405 = vadd.f32 0.0, %v3404
      %v3406 = vpop.f32.mrf.mxu0
      %3407 = vmatprep.mubr.bf16.mxu0 0
      %3408 = vmatmul.mubr.bf16.gmra.mxu0 %v3217
      %v3409 = vpop.f32.mrf.mxu0
      %v3410 = vadd.f32 0.0, %v3409
      %v3411 = vpop.f32.mrf.mxu0
      %v3412 = vpop.f32.mrf.mxu0
      %v3413 = vadd.f32 0.0, %v3412
      %v3414 = vpop.f32.mrf.mxu0
      %3415 = vmatprep.mubr.bf16.mxu0 0
      %3416 = vmatmul.mubr.bf16.gmra.mxu0 %v3220
      %v3417 = vpop.f32.mrf.mxu0
      %v3418 = vadd.f32 0.0, %v3417
      %v3419 = vpop.f32.mrf.mxu0
      %v3420 = vpop.f32.mrf.mxu0
      %v3421 = vadd.f32 0.0, %v3420
      %v3422 = vpop.f32.mrf.mxu0
      %3423 = vmatprep.mubr.bf16.mxu0 0
      %3424 = vmatmul.mubr.bf16.gmra.mxu0 %v3223
      %v3425 = vpop.f32.mrf.mxu0
      %v3426 = vadd.f32 0.0, %v3425
      %v3427 = vpop.f32.mrf.mxu0
      %v3428 = vpop.f32.mrf.mxu0
      %v3429 = vadd.f32 0.0, %v3428
      %v3430 = vpop.f32.mrf.mxu0
      %3431 = vmatprep.mubr.bf16.mxu0 0
      %3432 = vmatmul.mubr.bf16.gmra.mxu0 %v3226
      %v3433 = vpop.f32.mrf.mxu0
      %v3434 = vadd.f32 0.0, %v3433
      %v3435 = vpop.f32.mrf.mxu0
      %v3436 = vpop.f32.mrf.mxu0
      %v3437 = vadd.f32 0.0, %v3436
      %v3438 = vpop.f32.mrf.mxu0
      %3439 = vmatprep.mubr.bf16.mxu0 0
      %3440 = vmatmul.mubr.bf16.gmra.mxu0 %v3229
      %v3441 = vpop.f32.mrf.mxu0
      %v3442 = vadd.f32 0.0, %v3441
      %v3443 = vpop.f32.mrf.mxu0
      %v3444 = vpop.f32.mrf.mxu0
      %v3445 = vadd.f32 0.0, %v3444
      %v3446 = vpop.f32.mrf.mxu0
      %3447 = vmatprep.mubr.bf16.mxu0 0
      %3448 = vmatmul.mubr.bf16.gmra.mxu0 %v3232
      %v3449 = vpop.f32.mrf.mxu0
      %v3450 = vadd.f32 0.0, %v3449
      %v3451 = vpop.f32.mrf.mxu0
      %v3452 = vpop.f32.mrf.mxu0
      %v3453 = vadd.f32 0.0, %v3452
      %v3454 = vpop.f32.mrf.mxu0
      %3455 = vmatprep.mubr.bf16.mxu0 0
      %3456 = vmatmul.mubr.bf16.gmra.mxu0 %v3235
      %v3457 = vpop.f32.mrf.mxu0
      %v3458 = vadd.f32 0.0, %v3457
      %v3459 = vpop.f32.mrf.mxu0
      %v3460 = vpop.f32.mrf.mxu0
      %v3461 = vadd.f32 0.0, %v3460
      %v3462 = vpop.f32.mrf.mxu0
      %3463 = vmatprep.mubr.bf16.mxu0 0
      %3464 = vmatmul.mubr.bf16.gmra.mxu0 %v3238
      %v3465 = vpop.f32.mrf.mxu0
      %v3466 = vadd.f32 0.0, %v3465
      %v3467 = vpop.f32.mrf.mxu0
      %v3468 = vpop.f32.mrf.mxu0
      %v3469 = vadd.f32 0.0, %v3468
      %v3470 = vpop.f32.mrf.mxu0
      %3471 = vmatprep.mubr.bf16.mxu0 0
      %3472 = vmatmul.mubr.bf16.gmra.mxu0 %v3241
      %v3473 = vpop.f32.mrf.mxu0
      %v3474 = vadd.f32 0.0, %v3473
      %v3475 = vpop.f32.mrf.mxu0
      %v3476 = vpop.f32.mrf.mxu0
      %v3477 = vadd.f32 0.0, %v3476
      %v3478 = vpop.f32.mrf.mxu0
      %3479 = vmatprep.mubr.bf16.mxu0 0
      %3480 = vmatmul.mubr.bf16.gmra.mxu0 %v3244
      %v3481 = vpop.f32.mrf.mxu0
      %v3482 = vadd.f32 0.0, %v3481
      %v3483 = vpop.f32.mrf.mxu0
      %v3484 = vpop.f32.mrf.mxu0
      %v3485 = vadd.f32 0.0, %v3484
      %v3486 = vpop.f32.mrf.mxu0
      %3487 = vmatprep.mubr.bf16.mxu0 0
      %3488 = vmatmul.mubr.bf16.gmra.mxu0 %v3247
      %v3489 = vpop.f32.mrf.mxu0
      %v3490 = vadd.f32 0.0, %v3489
      %v3491 = vpop.f32.mrf.mxu0
      %v3492 = vpop.f32.mrf.mxu0
      %v3493 = vadd.f32 0.0, %v3492
      %v3494 = vpop.f32.mrf.mxu0
      %3495 = vmatprep.mubr.bf16.mxu0 0
      %3496 = vmatmul.mubr.bf16.gmra.mxu0 %v3250
      %v3497 = vpop.f32.mrf.mxu0
      %v3498 = vadd.f32 0.0, %v3497
      %v3499 = vpop.f32.mrf.mxu0
      %v3500 = vpop.f32.mrf.mxu0
      %v3501 = vadd.f32 0.0, %v3500
      %v3502 = vpop.f32.mrf.mxu0
      %3503 = vmatprep.mubr.bf16.mxu0 0
      %3504 = vmatmul.mubr.bf16.gmra.mxu0 %v3253
      %v3505 = vpop.f32.mrf.mxu0
      %v3506 = vadd.f32 0.0, %v3505
      %v3507 = vpop.f32.mrf.mxu0
      %v3508 = vpop.f32.mrf.mxu0
      %v3509 = vadd.f32 0.0, %v3508
      %v3510 = vpop.f32.mrf.mxu0
      %3511 = vmatprep.mubr.bf16.mxu0 0
      %3512 = vmatmul.mubr.bf16.gmra.mxu0 %v3256
      %v3513 = vpop.f32.mrf.mxu0
      %v3514 = vadd.f32 0.0, %v3513
      %v3515 = vpop.f32.mrf.mxu0
      %v3516 = vpop.f32.mrf.mxu0
      %v3517 = vadd.f32 0.0, %v3516
      %v3518 = vpop.f32.mrf.mxu0
      %3519 = vmatprep.mubr.bf16.mxu0 0
      %3520 = vmatmul.mubr.bf16.gmra.mxu0 %v3259
      %v3521 = vpop.f32.mrf.mxu0
      %v3522 = vadd.f32 0.0, %v3521
      %v3523 = vpop.f32.mrf.mxu0
      %v3524 = vpop.f32.mrf.mxu0
      %v3525 = vadd.f32 0.0, %v3524
      %v3526 = vpop.f32.mrf.mxu0
      %3527 = vmatprep.mubr.bf16.mxu0 0
      %3528 = vmatmul.mubr.bf16.gmra.mxu0 %v3262
      %v3529 = vpop.f32.mrf.mxu0
      %v3530 = vadd.f32 0.0, %v3529
      %v3531 = vpop.f32.mrf.mxu0
      %v3532 = vpop.f32.mrf.mxu0
      %v3533 = vadd.f32 0.0, %v3532
      %v3534 = vpop.f32.mrf.mxu0
      %3535 = vmatprep.mubr.bf16.mxu0 0
      %3536 = vmatmul.mubr.bf16.gmra.mxu0 %v3265
      %v3537 = vpop.f32.mrf.mxu0
      %v3538 = vadd.f32 0.0, %v3537
      %v3539 = vpop.f32.mrf.mxu0
      %v3540 = vpop.f32.mrf.mxu0
      %v3541 = vadd.f32 0.0, %v3540
      %v3542 = vpop.f32.mrf.mxu0
      %3543 = vmatprep.mubr.bf16.mxu0 0
      %3544 = vmatmul.mubr.bf16.gmra.mxu0 %v3268
      %v3545 = vpop.f32.mrf.mxu0
      %v3546 = vadd.f32 0.0, %v3545
      %v3547 = vpop.f32.mrf.mxu0
      %v3548 = vpop.f32.mrf.mxu0
      %v3549 = vadd.f32 0.0, %v3548
      %v3550 = vpop.f32.mrf.mxu0
      %3551 = vmatprep.mubr.bf16.mxu0 0
      %3552 = vmatmul.mubr.bf16.gmra.mxu0 %v3271
      %v3553 = vpop.f32.mrf.mxu0
      %v3554 = vadd.f32 0.0, %v3553
      %v3555 = vpop.f32.mrf.mxu0
      %v3556 = vpop.f32.mrf.mxu0
      %v3557 = vadd.f32 0.0, %v3556
      %v3558 = vpop.f32.mrf.mxu0
      %3559 = vmatprep.mubr.bf16.mxu0 0
      %3560 = vmatmul.mubr.bf16.gmra.mxu0 %v3274
      %v3561 = vpop.f32.mrf.mxu0
      %v3562 = vadd.f32 0.0, %v3561
      %v3563 = vpop.f32.mrf.mxu0
      %v3564 = vpop.f32.mrf.mxu0
      %v3565 = vadd.f32 0.0, %v3564
      %v3566 = vpop.f32.mrf.mxu0
      %3567 = vdwg.mxu0
      %v3568 = vadd.f32 %v3016, %v3314
      %v3569 = vadd.f32 %v3017, %v3317
      %v3570 = vadd.f32 %v3018, %v3322
      %v3571 = vadd.f32 %v3019, %v3325
      %v3572 = vadd.f32 %v3020, %v3330
      %v3573 = vadd.f32 %v3021, %v3333
      %v3574 = vadd.f32 %v3022, %v3338
      %v3575 = vadd.f32 %v3023, %v3341
      %v3576 = vadd.f32 %v3024, %v3346
      %v3577 = vadd.f32 %v3025, %v3349
      %v3578 = vadd.f32 %v3026, %v3354
      %v3579 = vadd.f32 %v3027, %v3357
      %v3580 = vadd.f32 %v3028, %v3362
      %v3581 = vadd.f32 %v3029, %v3365
      %v3582 = vadd.f32 %v3030, %v3370
      %v3583 = vadd.f32 %v3031, %v3373
      %v3584 = vadd.f32 %v3032, %v3378
      %v3585 = vadd.f32 %v3033, %v3381
      %v3586 = vadd.f32 %v3034, %v3386
      %v3587 = vadd.f32 %v3035, %v3389
      %v3588 = vadd.f32 %v3036, %v3394
      %v3589 = vadd.f32 %v3037, %v3397
      %v3590 = vadd.f32 %v3038, %v3402
      %v3591 = vadd.f32 %v3039, %v3405
      %v3592 = vadd.f32 %v3040, %v3410
      %v3593 = vadd.f32 %v3041, %v3413
      %v3594 = vadd.f32 %v3042, %v3418
      %v3595 = vadd.f32 %v3043, %v3421
      %v3596 = vadd.f32 %v3044, %v3426
      %v3597 = vadd.f32 %v3045, %v3429
      %v3598 = vadd.f32 %v3046, %v3434
      %v3599 = vadd.f32 %v3047, %v3437
      %v3600 = vadd.f32 %v3048, %v3442
      %v3601 = vadd.f32 %v3049, %v3445
      %v3602 = vadd.f32 %v3050, %v3450
      %v3603 = vadd.f32 %v3051, %v3453
      %v3604 = vadd.f32 %v3052, %v3458
      %v3605 = vadd.f32 %v3053, %v3461
      %v3606 = vadd.f32 %v3054, %v3466
      %v3607 = vadd.f32 %v3055, %v3469
      %v3608 = vadd.f32 %v3056, %v3474
      %v3609 = vadd.f32 %v3057, %v3477
      %v3610 = vadd.f32 %v3058, %v3482
      %v3611 = vadd.f32 %v3059, %v3485
      %v3612 = vadd.f32 %v3060, %v3490
      %v3613 = vadd.f32 %v3061, %v3493
      %v3614 = vadd.f32 %v3062, %v3498
      %v3615 = vadd.f32 %v3063, %v3501
      %v3616 = vadd.f32 %v3064, %v3506
      %v3617 = vadd.f32 %v3065, %v3509
      %v3618 = vadd.f32 %v3066, %v3514
      %v3619 = vadd.f32 %v3067, %v3517
      %v3620 = vadd.f32 %v3068, %v3522
      %v3621 = vadd.f32 %v3069, %v3525
      %v3622 = vadd.f32 %v3070, %v3530
      %v3623 = vadd.f32 %v3071, %v3533
      %v3624 = vadd.f32 %v3072, %v3538
      %v3625 = vadd.f32 %v3073, %v3541
      %v3626 = vadd.f32 %v3074, %v3546
      %v3627 = vadd.f32 %v3075, %v3549
      %v3628 = vadd.f32 %v3076, %v3554
      %v3629 = vadd.f32 %v3077, %v3557
      %v3630 = vadd.f32 %v3078, %v3562
      %v3631 = vadd.f32 %v3079, %v3565
      %s3632 = sadd.s32 %s447, 128
      %s3633 = scalar_lea.vmem %s425, %s3632
      %v3634 = vld [vmem:[%s3633] sm:$0xff]
      %v3635 = vld [vmem:[%s3633 + $0x8] sm:$0xff]
      %v3636 = vld [vmem:[%s3633 + $0x10] sm:$0xff]
      %v3637 = vld [vmem:[%s3633 + $0x18] sm:$0xff]
      %v3638 = vld [vmem:[%s3633 + $0x20] sm:$0xff]
      %v3639 = vld [vmem:[%s3633 + $0x28] sm:$0xff]
      %v3640 = vld [vmem:[%s3633 + $0x30] sm:$0xff]
      %v3641 = vld [vmem:[%s3633 + $0x38] sm:$0xff]
      %v3642 = vld [vmem:[%s3633 + $0x40] sm:$0xff]
      %v3643 = vld [vmem:[%s3633 + $0x48] sm:$0xff]
      %v3644 = vld [vmem:[%s3633 + $0x50] sm:$0xff]
      %v3645 = vld [vmem:[%s3633 + $0x58] sm:$0xff]
      %v3646 = vld [vmem:[%s3633 + $0x60] sm:$0xff]
      %v3647 = vld [vmem:[%s3633 + $0x68] sm:$0xff]
      %v3648 = vld [vmem:[%s3633 + $0x70] sm:$0xff]
      %v3649 = vld [vmem:[%s3633 + $0x78] sm:$0xff]
      %v3650 = vld [vmem:[%s3633 + $0x80] sm:$0xff]
      %v3651 = vld [vmem:[%s3633 + $0x88] sm:$0xff]
      %v3652 = vld [vmem:[%s3633 + $0x90] sm:$0xff]
      %v3653 = vld [vmem:[%s3633 + $0x98] sm:$0xff]
      %v3654 = vld [vmem:[%s3633 + $0xa0] sm:$0xff]
      %v3655 = vld [vmem:[%s3633 + $0xa8] sm:$0xff]
      %v3656 = vld [vmem:[%s3633 + $0xb0] sm:$0xff]
      %v3657 = vld [vmem:[%s3633 + $0xb8] sm:$0xff]
      %v3658 = vld [vmem:[%s3633 + $0xc0] sm:$0xff]
      %v3659 = vld [vmem:[%s3633 + $0xc8] sm:$0xff]
      %v3660 = vld [vmem:[%s3633 + $0xd0] sm:$0xff]
      %v3661 = vld [vmem:[%s3633 + $0xd8] sm:$0xff]
      %v3662 = vld [vmem:[%s3633 + $0xe0] sm:$0xff]
      %v3663 = vld [vmem:[%s3633 + $0xe8] sm:$0xff]
      %v3664 = vld [vmem:[%s3633 + $0xf0] sm:$0xff]
      %v3665 = vld [vmem:[%s3633 + $0xf8] sm:$0xff]
      %v3666 = vld [vmem:[%s3633 + $0x100] sm:$0xff]
      %v3667 = vld [vmem:[%s3633 + $0x108] sm:$0xff]
      %v3668 = vld [vmem:[%s3633 + $0x110] sm:$0xff]
      %v3669 = vld [vmem:[%s3633 + $0x118] sm:$0xff]
      %v3670 = vld [vmem:[%s3633 + $0x120] sm:$0xff]
      %v3671 = vld [vmem:[%s3633 + $0x128] sm:$0xff]
      %v3672 = vld [vmem:[%s3633 + $0x130] sm:$0xff]
      %v3673 = vld [vmem:[%s3633 + $0x138] sm:$0xff]
      %v3674 = vld [vmem:[%s3633 + $0x140] sm:$0xff]
      %v3675 = vld [vmem:[%s3633 + $0x148] sm:$0xff]
      %v3676 = vld [vmem:[%s3633 + $0x150] sm:$0xff]
      %v3677 = vld [vmem:[%s3633 + $0x158] sm:$0xff]
      %v3678 = vld [vmem:[%s3633 + $0x160] sm:$0xff]
      %v3679 = vld [vmem:[%s3633 + $0x168] sm:$0xff]
      %v3680 = vld [vmem:[%s3633 + $0x170] sm:$0xff]
      %v3681 = vld [vmem:[%s3633 + $0x178] sm:$0xff]
      %v3682 = vld [vmem:[%s3633 + $0x180] sm:$0xff]
      %v3683 = vld [vmem:[%s3633 + $0x188] sm:$0xff]
      %v3684 = vld [vmem:[%s3633 + $0x190] sm:$0xff]
      %v3685 = vld [vmem:[%s3633 + $0x198] sm:$0xff]
      %v3686 = vld [vmem:[%s3633 + $0x1a0] sm:$0xff]
      %v3687 = vld [vmem:[%s3633 + $0x1a8] sm:$0xff]
      %v3688 = vld [vmem:[%s3633 + $0x1b0] sm:$0xff]
      %v3689 = vld [vmem:[%s3633 + $0x1b8] sm:$0xff]
      %v3690 = vld [vmem:[%s3633 + $0x1c0] sm:$0xff]
      %v3691 = vld [vmem:[%s3633 + $0x1c8] sm:$0xff]
      %v3692 = vld [vmem:[%s3633 + $0x1d0] sm:$0xff]
      %v3693 = vld [vmem:[%s3633 + $0x1d8] sm:$0xff]
      %v3694 = vld [vmem:[%s3633 + $0x1e0] sm:$0xff]
      %v3695 = vld [vmem:[%s3633 + $0x1e8] sm:$0xff]
      %v3696 = vld [vmem:[%s3633 + $0x1f0] sm:$0xff]
      %v3697 = vld [vmem:[%s3633 + $0x1f8] sm:$0xff]
      %v3698 = vpack.c.bf16 %v3635, %v3634
      %v3699 = vpack.c.bf16 %v3637, %v3636
      %v3700 = vpack.c.bf16 %v3639, %v3638
      %v3701 = vpack.c.bf16 %v3641, %v3640
      %v3702 = vpack.c.bf16 %v3643, %v3642
      %v3703 = vpack.c.bf16 %v3645, %v3644
      %v3704 = vpack.c.bf16 %v3647, %v3646
      %v3705 = vpack.c.bf16 %v3649, %v3648
      %v3706 = vpack.c.bf16 %v3651, %v3650
      %v3707 = vpack.c.bf16 %v3653, %v3652
      %v3708 = vpack.c.bf16 %v3655, %v3654
      %v3709 = vpack.c.bf16 %v3657, %v3656
      %v3710 = vpack.c.bf16 %v3659, %v3658
      %v3711 = vpack.c.bf16 %v3661, %v3660
      %v3712 = vpack.c.bf16 %v3663, %v3662
      %v3713 = vpack.c.bf16 %v3665, %v3664
      %v3714 = vpack.c.bf16 %v3667, %v3666
      %v3715 = vpack.c.bf16 %v3669, %v3668
      %v3716 = vpack.c.bf16 %v3671, %v3670
      %v3717 = vpack.c.bf16 %v3673, %v3672
      %v3718 = vpack.c.bf16 %v3675, %v3674
      %v3719 = vpack.c.bf16 %v3677, %v3676
      %v3720 = vpack.c.bf16 %v3679, %v3678
      %v3721 = vpack.c.bf16 %v3681, %v3680
      %v3722 = vpack.c.bf16 %v3683, %v3682
      %v3723 = vpack.c.bf16 %v3685, %v3684
      %v3724 = vpack.c.bf16 %v3687, %v3686
      %v3725 = vpack.c.bf16 %v3689, %v3688
      %v3726 = vpack.c.bf16 %v3691, %v3690
      %v3727 = vpack.c.bf16 %v3693, %v3692
      %v3728 = vpack.c.bf16 %v3695, %v3694
      %v3729 = vpack.c.bf16 %v3697, %v3696
      %s3730 = scalar_lea.vmem %s2, 24
      %v3731 = vld [vmem:[%s3730] sm:$0xf]
      %v3733 = vsel %vm646, %v3698, 0
      %v3736 = vsel %vm646, %v3699, 0
      %v3739 = vsel %vm646, %v3700, 0
      %v3742 = vsel %vm646, %v3701, 0
      %v3745 = vsel %vm646, %v3702, 0
      %v3748 = vsel %vm646, %v3703, 0
      %v3751 = vsel %vm646, %v3704, 0
      %v3754 = vsel %vm646, %v3705, 0
      %v3757 = vsel %vm646, %v3706, 0
      %v3760 = vsel %vm646, %v3707, 0
      %v3763 = vsel %vm646, %v3708, 0
      %v3766 = vsel %vm646, %v3709, 0
      %v3769 = vsel %vm646, %v3710, 0
      %v3772 = vsel %vm646, %v3711, 0
      %v3775 = vsel %vm646, %v3712, 0
      %v3778 = vsel %vm646, %v3713, 0
      %v3781 = vsel %vm646, %v3714, 0
      %v3784 = vsel %vm646, %v3715, 0
      %v3787 = vsel %vm646, %v3716, 0
      %v3790 = vsel %vm646, %v3717, 0
      %v3793 = vsel %vm646, %v3718, 0
      %v3796 = vsel %vm646, %v3719, 0
      %v3799 = vsel %vm646, %v3720, 0
      %v3802 = vsel %vm646, %v3721, 0
      %v3805 = vsel %vm646, %v3722, 0
      %v3808 = vsel %vm646, %v3723, 0
      %v3811 = vsel %vm646, %v3724, 0
      %v3814 = vsel %vm646, %v3725, 0
      %v3817 = vsel %vm646, %v3726, 0
      %v3820 = vsel %vm646, %v3727, 0
      %v3823 = vsel %vm646, %v3728, 0
      %v3826 = vsel %vm646, %v3729, 0
      %v3829 = vsel %vm743, %v3731, 0
      %3831 = vmatprep.subr.bf16.mxu0 0
      %3832 = vmatpush1.bf16.msra.mxu0 0
      %3833 = vmatprep.subr.bf16.mxu0 0
      %3834 = vmatpush1.bf16.msra.mxu0 0
      %3835 = vmatprep.subr.bf16.mxu0 0
      %3836 = vmatpush1.bf16.msra.mxu0 0
      %3837 = vmatprep.subr.bf16.mxu0 0
      %3838 = vmatpush1.bf16.msra.mxu0 0
      %3839 = vmatprep.subr.bf16.mxu0 0
      %3840 = vmatpush1.bf16.msra.mxu0 0
      %3841 = vmatprep.subr.bf16.mxu0 0
      %3842 = vmatpush1.bf16.msra.mxu0 0
      %3843 = vmatprep.subr.bf16.mxu0 0
      %3844 = vmatpush1.bf16.msra.mxu0 0
      %3845 = vmatprep.subr.bf16.mxu0 0
      %3846 = vmatpush1.bf16.msra.mxu0 %v3829
      %3847 = vmatprep.subr.bf16.mxu0 0
      %3848 = vmatpush2.bf16.msra.mxu0 0
      %3849 = vmatprep.subr.bf16.mxu0 0
      %3850 = vmatpush2.bf16.msra.mxu0 0
      %3851 = vmatprep.subr.bf16.mxu0 0
      %3852 = vmatpush2.bf16.msra.mxu0 0
      %3853 = vmatprep.subr.bf16.mxu0 0
      %3854 = vmatpush2.bf16.msra.mxu0 0
      %3855 = vmatprep.subr.bf16.mxu0 0
      %3856 = vmatpush2.bf16.msra.mxu0 0
      %3857 = vmatprep.subr.bf16.mxu0 0
      %3858 = vmatpush2.bf16.msra.mxu0 0
      %3859 = vmatprep.subr.bf16.mxu0 0
      %3860 = vmatpush2.bf16.msra.mxu0 0
      %3861 = vmatprep.subr.bf16.mxu0 0
      %3862 = vmatpush2.bf16.msra.mxu0 0
      %3863 = vmatprep.mubr.bf16.mxu0 0
      %3864 = vmatmul.mubr.bf16.gmra.mxu0 %v3733
      %v3865 = vpop.f32.mrf.mxu0
      %v3866 = vadd.f32 0.0, %v3865
      %v3867 = vpop.f32.mrf.mxu0
      %v3868 = vpop.f32.mrf.mxu0
      %v3869 = vadd.f32 0.0, %v3868
      %v3870 = vpop.f32.mrf.mxu0
      %3871 = vmatprep.mubr.bf16.mxu0 0
      %3872 = vmatmul.mubr.bf16.gmra.mxu0 %v3736
      %v3873 = vpop.f32.mrf.mxu0
      %v3874 = vadd.f32 0.0, %v3873
      %v3875 = vpop.f32.mrf.mxu0
      %v3876 = vpop.f32.mrf.mxu0
      %v3877 = vadd.f32 0.0, %v3876
      %v3878 = vpop.f32.mrf.mxu0
      %3879 = vmatprep.mubr.bf16.mxu0 0
      %3880 = vmatmul.mubr.bf16.gmra.mxu0 %v3739
      %v3881 = vpop.f32.mrf.mxu0
      %v3882 = vadd.f32 0.0, %v3881
      %v3883 = vpop.f32.mrf.mxu0
      %v3884 = vpop.f32.mrf.mxu0
      %v3885 = vadd.f32 0.0, %v3884
      %v3886 = vpop.f32.mrf.mxu0
      %3887 = vmatprep.mubr.bf16.mxu0 0
      %3888 = vmatmul.mubr.bf16.gmra.mxu0 %v3742
      %v3889 = vpop.f32.mrf.mxu0
      %v3890 = vadd.f32 0.0, %v3889
      %v3891 = vpop.f32.mrf.mxu0
      %v3892 = vpop.f32.mrf.mxu0
      %v3893 = vadd.f32 0.0, %v3892
      %v3894 = vpop.f32.mrf.mxu0
      %3895 = vmatprep.mubr.bf16.mxu0 0
      %3896 = vmatmul.mubr.bf16.gmra.mxu0 %v3745
      %v3897 = vpop.f32.mrf.mxu0
      %v3898 = vadd.f32 0.0, %v3897
      %v3899 = vpop.f32.mrf.mxu0
      %v3900 = vpop.f32.mrf.mxu0
      %v3901 = vadd.f32 0.0, %v3900
      %v3902 = vpop.f32.mrf.mxu0
      %3903 = vmatprep.mubr.bf16.mxu0 0
      %3904 = vmatmul.mubr.bf16.gmra.mxu0 %v3748
      %v3905 = vpop.f32.mrf.mxu0
      %v3906 = vadd.f32 0.0, %v3905
      %v3907 = vpop.f32.mrf.mxu0
      %v3908 = vpop.f32.mrf.mxu0
      %v3909 = vadd.f32 0.0, %v3908
      %v3910 = vpop.f32.mrf.mxu0
      %3911 = vmatprep.mubr.bf16.mxu0 0
      %3912 = vmatmul.mubr.bf16.gmra.mxu0 %v3751
      %v3913 = vpop.f32.mrf.mxu0
      %v3914 = vadd.f32 0.0, %v3913
      %v3915 = vpop.f32.mrf.mxu0
      %v3916 = vpop.f32.mrf.mxu0
      %v3917 = vadd.f32 0.0, %v3916
      %v3918 = vpop.f32.mrf.mxu0
      %3919 = vmatprep.mubr.bf16.mxu0 0
      %3920 = vmatmul.mubr.bf16.gmra.mxu0 %v3754
      %v3921 = vpop.f32.mrf.mxu0
      %v3922 = vadd.f32 0.0, %v3921
      %v3923 = vpop.f32.mrf.mxu0
      %v3924 = vpop.f32.mrf.mxu0
      %v3925 = vadd.f32 0.0, %v3924
      %v3926 = vpop.f32.mrf.mxu0
      %3927 = vmatprep.mubr.bf16.mxu0 0
      %3928 = vmatmul.mubr.bf16.gmra.mxu0 %v3757
      %v3929 = vpop.f32.mrf.mxu0
      %v3930 = vadd.f32 0.0, %v3929
      %v3931 = vpop.f32.mrf.mxu0
      %v3932 = vpop.f32.mrf.mxu0
      %v3933 = vadd.f32 0.0, %v3932
      %v3934 = vpop.f32.mrf.mxu0
      %3935 = vmatprep.mubr.bf16.mxu0 0
      %3936 = vmatmul.mubr.bf16.gmra.mxu0 %v3760
      %v3937 = vpop.f32.mrf.mxu0
      %v3938 = vadd.f32 0.0, %v3937
      %v3939 = vpop.f32.mrf.mxu0
      %v3940 = vpop.f32.mrf.mxu0
      %v3941 = vadd.f32 0.0, %v3940
      %v3942 = vpop.f32.mrf.mxu0
      %3943 = vmatprep.mubr.bf16.mxu0 0
      %3944 = vmatmul.mubr.bf16.gmra.mxu0 %v3763
      %v3945 = vpop.f32.mrf.mxu0
      %v3946 = vadd.f32 0.0, %v3945
      %v3947 = vpop.f32.mrf.mxu0
      %v3948 = vpop.f32.mrf.mxu0
      %v3949 = vadd.f32 0.0, %v3948
      %v3950 = vpop.f32.mrf.mxu0
      %3951 = vmatprep.mubr.bf16.mxu0 0
      %3952 = vmatmul.mubr.bf16.gmra.mxu0 %v3766
      %v3953 = vpop.f32.mrf.mxu0
      %v3954 = vadd.f32 0.0, %v3953
      %v3955 = vpop.f32.mrf.mxu0
      %v3956 = vpop.f32.mrf.mxu0
      %v3957 = vadd.f32 0.0, %v3956
      %v3958 = vpop.f32.mrf.mxu0
      %3959 = vmatprep.mubr.bf16.mxu0 0
      %3960 = vmatmul.mubr.bf16.gmra.mxu0 %v3769
      %v3961 = vpop.f32.mrf.mxu0
      %v3962 = vadd.f32 0.0, %v3961
      %v3963 = vpop.f32.mrf.mxu0
      %v3964 = vpop.f32.mrf.mxu0
      %v3965 = vadd.f32 0.0, %v3964
      %v3966 = vpop.f32.mrf.mxu0
      %3967 = vmatprep.mubr.bf16.mxu0 0
      %3968 = vmatmul.mubr.bf16.gmra.mxu0 %v3772
      %v3969 = vpop.f32.mrf.mxu0
      %v3970 = vadd.f32 0.0, %v3969
      %v3971 = vpop.f32.mrf.mxu0
      %v3972 = vpop.f32.mrf.mxu0
      %v3973 = vadd.f32 0.0, %v3972
      %v3974 = vpop.f32.mrf.mxu0
      %3975 = vmatprep.mubr.bf16.mxu0 0
      %3976 = vmatmul.mubr.bf16.gmra.mxu0 %v3775
      %v3977 = vpop.f32.mrf.mxu0
      %v3978 = vadd.f32 0.0, %v3977
      %v3979 = vpop.f32.mrf.mxu0
      %v3980 = vpop.f32.mrf.mxu0
      %v3981 = vadd.f32 0.0, %v3980
      %v3982 = vpop.f32.mrf.mxu0
      %3983 = vmatprep.mubr.bf16.mxu0 0
      %3984 = vmatmul.mubr.bf16.gmra.mxu0 %v3778
      %v3985 = vpop.f32.mrf.mxu0
      %v3986 = vadd.f32 0.0, %v3985
      %v3987 = vpop.f32.mrf.mxu0
      %v3988 = vpop.f32.mrf.mxu0
      %v3989 = vadd.f32 0.0, %v3988
      %v3990 = vpop.f32.mrf.mxu0
      %3991 = vmatprep.mubr.bf16.mxu0 0
      %3992 = vmatmul.mubr.bf16.gmra.mxu0 %v3781
      %v3993 = vpop.f32.mrf.mxu0
      %v3994 = vadd.f32 0.0, %v3993
      %v3995 = vpop.f32.mrf.mxu0
      %v3996 = vpop.f32.mrf.mxu0
      %v3997 = vadd.f32 0.0, %v3996
      %v3998 = vpop.f32.mrf.mxu0
      %3999 = vmatprep.mubr.bf16.mxu0 0
      %4000 = vmatmul.mubr.bf16.gmra.mxu0 %v3784
      %v4001 = vpop.f32.mrf.mxu0
      %v4002 = vadd.f32 0.0, %v4001
      %v4003 = vpop.f32.mrf.mxu0
      %v4004 = vpop.f32.mrf.mxu0
      %v4005 = vadd.f32 0.0, %v4004
      %v4006 = vpop.f32.mrf.mxu0
      %4007 = vmatprep.mubr.bf16.mxu0 0
      %4008 = vmatmul.mubr.bf16.gmra.mxu0 %v3787
      %v4009 = vpop.f32.mrf.mxu0
      %v4010 = vadd.f32 0.0, %v4009
      %v4011 = vpop.f32.mrf.mxu0
      %v4012 = vpop.f32.mrf.mxu0
      %v4013 = vadd.f32 0.0, %v4012
      %v4014 = vpop.f32.mrf.mxu0
      %4015 = vmatprep.mubr.bf16.mxu0 0
      %4016 = vmatmul.mubr.bf16.gmra.mxu0 %v3790
      %v4017 = vpop.f32.mrf.mxu0
      %v4018 = vadd.f32 0.0, %v4017
      %v4019 = vpop.f32.mrf.mxu0
      %v4020 = vpop.f32.mrf.mxu0
      %v4021 = vadd.f32 0.0, %v4020
      %v4022 = vpop.f32.mrf.mxu0
      %4023 = vmatprep.mubr.bf16.mxu0 0
      %4024 = vmatmul.mubr.bf16.gmra.mxu0 %v3793
      %v4025 = vpop.f32.mrf.mxu0
      %v4026 = vadd.f32 0.0, %v4025
      %v4027 = vpop.f32.mrf.mxu0
      %v4028 = vpop.f32.mrf.mxu0
      %v4029 = vadd.f32 0.0, %v4028
      %v4030 = vpop.f32.mrf.mxu0
      %4031 = vmatprep.mubr.bf16.mxu0 0
      %4032 = vmatmul.mubr.bf16.gmra.mxu0 %v3796
      %v4033 = vpop.f32.mrf.mxu0
      %v4034 = vadd.f32 0.0, %v4033
      %v4035 = vpop.f32.mrf.mxu0
      %v4036 = vpop.f32.mrf.mxu0
      %v4037 = vadd.f32 0.0, %v4036
      %v4038 = vpop.f32.mrf.mxu0
      %4039 = vmatprep.mubr.bf16.mxu0 0
      %4040 = vmatmul.mubr.bf16.gmra.mxu0 %v3799
      %v4041 = vpop.f32.mrf.mxu0
      %v4042 = vadd.f32 0.0, %v4041
      %v4043 = vpop.f32.mrf.mxu0
      %v4044 = vpop.f32.mrf.mxu0
      %v4045 = vadd.f32 0.0, %v4044
      %v4046 = vpop.f32.mrf.mxu0
      %4047 = vmatprep.mubr.bf16.mxu0 0
      %4048 = vmatmul.mubr.bf16.gmra.mxu0 %v3802
      %v4049 = vpop.f32.mrf.mxu0
      %v4050 = vadd.f32 0.0, %v4049
      %v4051 = vpop.f32.mrf.mxu0
      %v4052 = vpop.f32.mrf.mxu0
      %v4053 = vadd.f32 0.0, %v4052
      %v4054 = vpop.f32.mrf.mxu0
      %4055 = vmatprep.mubr.bf16.mxu0 0
      %4056 = vmatmul.mubr.bf16.gmra.mxu0 %v3805
      %v4057 = vpop.f32.mrf.mxu0
      %v4058 = vadd.f32 0.0, %v4057
      %v4059 = vpop.f32.mrf.mxu0
      %v4060 = vpop.f32.mrf.mxu0
      %v4061 = vadd.f32 0.0, %v4060
      %v4062 = vpop.f32.mrf.mxu0
      %4063 = vmatprep.mubr.bf16.mxu0 0
      %4064 = vmatmul.mubr.bf16.gmra.mxu0 %v3808
      %v4065 = vpop.f32.mrf.mxu0
      %v4066 = vadd.f32 0.0, %v4065
      %v4067 = vpop.f32.mrf.mxu0
      %v4068 = vpop.f32.mrf.mxu0
      %v4069 = vadd.f32 0.0, %v4068
      %v4070 = vpop.f32.mrf.mxu0
      %4071 = vmatprep.mubr.bf16.mxu0 0
      %4072 = vmatmul.mubr.bf16.gmra.mxu0 %v3811
      %v4073 = vpop.f32.mrf.mxu0
      %v4074 = vadd.f32 0.0, %v4073
      %v4075 = vpop.f32.mrf.mxu0
      %v4076 = vpop.f32.mrf.mxu0
      %v4077 = vadd.f32 0.0, %v4076
      %v4078 = vpop.f32.mrf.mxu0
      %4079 = vmatprep.mubr.bf16.mxu0 0
      %4080 = vmatmul.mubr.bf16.gmra.mxu0 %v3814
      %v4081 = vpop.f32.mrf.mxu0
      %v4082 = vadd.f32 0.0, %v4081
      %v4083 = vpop.f32.mrf.mxu0
      %v4084 = vpop.f32.mrf.mxu0
      %v4085 = vadd.f32 0.0, %v4084
      %v4086 = vpop.f32.mrf.mxu0
      %4087 = vmatprep.mubr.bf16.mxu0 0
      %4088 = vmatmul.mubr.bf16.gmra.mxu0 %v3817
      %v4089 = vpop.f32.mrf.mxu0
      %v4090 = vadd.f32 0.0, %v4089
      %v4091 = vpop.f32.mrf.mxu0
      %v4092 = vpop.f32.mrf.mxu0
      %v4093 = vadd.f32 0.0, %v4092
      %v4094 = vpop.f32.mrf.mxu0
      %4095 = vmatprep.mubr.bf16.mxu0 0
      %4096 = vmatmul.mubr.bf16.gmra.mxu0 %v3820
      %v4097 = vpop.f32.mrf.mxu0
      %v4098 = vadd.f32 0.0, %v4097
      %v4099 = vpop.f32.mrf.mxu0
      %v4100 = vpop.f32.mrf.mxu0
      %v4101 = vadd.f32 0.0, %v4100
      %v4102 = vpop.f32.mrf.mxu0
      %4103 = vmatprep.mubr.bf16.mxu0 0
      %4104 = vmatmul.mubr.bf16.gmra.mxu0 %v3823
      %v4105 = vpop.f32.mrf.mxu0
      %v4106 = vadd.f32 0.0, %v4105
      %v4107 = vpop.f32.mrf.mxu0
      %v4108 = vpop.f32.mrf.mxu0
      %v4109 = vadd.f32 0.0, %v4108
      %v4110 = vpop.f32.mrf.mxu0
      %4111 = vmatprep.mubr.bf16.mxu0 0
      %4112 = vmatmul.mubr.bf16.gmra.mxu0 %v3826
      %v4113 = vpop.f32.mrf.mxu0
      %v4114 = vadd.f32 0.0, %v4113
      %v4115 = vpop.f32.mrf.mxu0
      %v4116 = vpop.f32.mrf.mxu0
      %v4117 = vadd.f32 0.0, %v4116
      %v4118 = vpop.f32.mrf.mxu0
      %4119 = vdwg.mxu0
      %v4120 = vadd.f32 %v3568, %v3866
      %v4121 = vadd.f32 %v3569, %v3869
      %v4122 = vadd.f32 %v3570, %v3874
      %v4123 = vadd.f32 %v3571, %v3877
      %v4124 = vadd.f32 %v3572, %v3882
      %v4125 = vadd.f32 %v3573, %v3885
      %v4126 = vadd.f32 %v3574, %v3890
      %v4127 = vadd.f32 %v3575, %v3893
      %v4128 = vadd.f32 %v3576, %v3898
      %v4129 = vadd.f32 %v3577, %v3901
      %v4130 = vadd.f32 %v3578, %v3906
      %v4131 = vadd.f32 %v3579, %v3909
      %v4132 = vadd.f32 %v3580, %v3914
      %v4133 = vadd.f32 %v3581, %v3917
      %v4134 = vadd.f32 %v3582, %v3922
      %v4135 = vadd.f32 %v3583, %v3925
      %v4136 = vadd.f32 %v3584, %v3930
      %v4137 = vadd.f32 %v3585, %v3933
      %v4138 = vadd.f32 %v3586, %v3938
      %v4139 = vadd.f32 %v3587, %v3941
      %v4140 = vadd.f32 %v3588, %v3946
      %v4141 = vadd.f32 %v3589, %v3949
      %v4142 = vadd.f32 %v3590, %v3954
      %v4143 = vadd.f32 %v3591, %v3957
      %v4144 = vadd.f32 %v3592, %v3962
      %v4145 = vadd.f32 %v3593, %v3965
      %v4146 = vadd.f32 %v3594, %v3970
      %v4147 = vadd.f32 %v3595, %v3973
      %v4148 = vadd.f32 %v3596, %v3978
      %v4149 = vadd.f32 %v3597, %v3981
      %v4150 = vadd.f32 %v3598, %v3986
      %v4151 = vadd.f32 %v3599, %v3989
      %v4152 = vadd.f32 %v3600, %v3994
      %v4153 = vadd.f32 %v3601, %v3997
      %v4154 = vadd.f32 %v3602, %v4002
      %v4155 = vadd.f32 %v3603, %v4005
      %v4156 = vadd.f32 %v3604, %v4010
      %v4157 = vadd.f32 %v3605, %v4013
      %v4158 = vadd.f32 %v3606, %v4018
      %v4159 = vadd.f32 %v3607, %v4021
      %v4160 = vadd.f32 %v3608, %v4026
      %v4161 = vadd.f32 %v3609, %v4029
      %v4162 = vadd.f32 %v3610, %v4034
      %v4163 = vadd.f32 %v3611, %v4037
      %v4164 = vadd.f32 %v3612, %v4042
      %v4165 = vadd.f32 %v3613, %v4045
      %v4166 = vadd.f32 %v3614, %v4050
      %v4167 = vadd.f32 %v3615, %v4053
      %v4168 = vadd.f32 %v3616, %v4058
      %v4169 = vadd.f32 %v3617, %v4061
      %v4170 = vadd.f32 %v3618, %v4066
      %v4171 = vadd.f32 %v3619, %v4069
      %v4172 = vadd.f32 %v3620, %v4074
      %v4173 = vadd.f32 %v3621, %v4077
      %v4174 = vadd.f32 %v3622, %v4082
      %v4175 = vadd.f32 %v3623, %v4085
      %v4176 = vadd.f32 %v3624, %v4090
      %v4177 = vadd.f32 %v3625, %v4093
      %v4178 = vadd.f32 %v3626, %v4098
      %v4179 = vadd.f32 %v3627, %v4101
      %v4180 = vadd.f32 %v3628, %v4106
      %v4181 = vadd.f32 %v3629, %v4109
      %v4182 = vadd.f32 %v3630, %v4114
      %v4183 = vadd.f32 %v3631, %v4117
      %s4184 = sadd.s32 %s447, 130
      %s4185 = scalar_lea.vmem %s425, %s4184
      %v4186 = vld [vmem:[%s4185] sm:$0xff]
      %v4187 = vld [vmem:[%s4185 + $0x8] sm:$0xff]
      %v4188 = vld [vmem:[%s4185 + $0x10] sm:$0xff]
      %v4189 = vld [vmem:[%s4185 + $0x18] sm:$0xff]
      %v4190 = vld [vmem:[%s4185 + $0x20] sm:$0xff]
      %v4191 = vld [vmem:[%s4185 + $0x28] sm:$0xff]
      %v4192 = vld [vmem:[%s4185 + $0x30] sm:$0xff]
      %v4193 = vld [vmem:[%s4185 + $0x38] sm:$0xff]
      %v4194 = vld [vmem:[%s4185 + $0x40] sm:$0xff]
      %v4195 = vld [vmem:[%s4185 + $0x48] sm:$0xff]
      %v4196 = vld [vmem:[%s4185 + $0x50] sm:$0xff]
      %v4197 = vld [vmem:[%s4185 + $0x58] sm:$0xff]
      %v4198 = vld [vmem:[%s4185 + $0x60] sm:$0xff]
      %v4199 = vld [vmem:[%s4185 + $0x68] sm:$0xff]
      %v4200 = vld [vmem:[%s4185 + $0x70] sm:$0xff]
      %v4201 = vld [vmem:[%s4185 + $0x78] sm:$0xff]
      %v4202 = vld [vmem:[%s4185 + $0x80] sm:$0xff]
      %v4203 = vld [vmem:[%s4185 + $0x88] sm:$0xff]
      %v4204 = vld [vmem:[%s4185 + $0x90] sm:$0xff]
      %v4205 = vld [vmem:[%s4185 + $0x98] sm:$0xff]
      %v4206 = vld [vmem:[%s4185 + $0xa0] sm:$0xff]
      %v4207 = vld [vmem:[%s4185 + $0xa8] sm:$0xff]
      %v4208 = vld [vmem:[%s4185 + $0xb0] sm:$0xff]
      %v4209 = vld [vmem:[%s4185 + $0xb8] sm:$0xff]
      %v4210 = vld [vmem:[%s4185 + $0xc0] sm:$0xff]
      %v4211 = vld [vmem:[%s4185 + $0xc8] sm:$0xff]
      %v4212 = vld [vmem:[%s4185 + $0xd0] sm:$0xff]
      %v4213 = vld [vmem:[%s4185 + $0xd8] sm:$0xff]
      %v4214 = vld [vmem:[%s4185 + $0xe0] sm:$0xff]
      %v4215 = vld [vmem:[%s4185 + $0xe8] sm:$0xff]
      %v4216 = vld [vmem:[%s4185 + $0xf0] sm:$0xff]
      %v4217 = vld [vmem:[%s4185 + $0xf8] sm:$0xff]
      %v4218 = vld [vmem:[%s4185 + $0x100] sm:$0xff]
      %v4219 = vld [vmem:[%s4185 + $0x108] sm:$0xff]
      %v4220 = vld [vmem:[%s4185 + $0x110] sm:$0xff]
      %v4221 = vld [vmem:[%s4185 + $0x118] sm:$0xff]
      %v4222 = vld [vmem:[%s4185 + $0x120] sm:$0xff]
      %v4223 = vld [vmem:[%s4185 + $0x128] sm:$0xff]
      %v4224 = vld [vmem:[%s4185 + $0x130] sm:$0xff]
      %v4225 = vld [vmem:[%s4185 + $0x138] sm:$0xff]
      %v4226 = vld [vmem:[%s4185 + $0x140] sm:$0xff]
      %v4227 = vld [vmem:[%s4185 + $0x148] sm:$0xff]
      %v4228 = vld [vmem:[%s4185 + $0x150] sm:$0xff]
      %v4229 = vld [vmem:[%s4185 + $0x158] sm:$0xff]
      %v4230 = vld [vmem:[%s4185 + $0x160] sm:$0xff]
      %v4231 = vld [vmem:[%s4185 + $0x168] sm:$0xff]
      %v4232 = vld [vmem:[%s4185 + $0x170] sm:$0xff]
      %v4233 = vld [vmem:[%s4185 + $0x178] sm:$0xff]
      %v4234 = vld [vmem:[%s4185 + $0x180] sm:$0xff]
      %v4235 = vld [vmem:[%s4185 + $0x188] sm:$0xff]
      %v4236 = vld [vmem:[%s4185 + $0x190] sm:$0xff]
      %v4237 = vld [vmem:[%s4185 + $0x198] sm:$0xff]
      %v4238 = vld [vmem:[%s4185 + $0x1a0] sm:$0xff]
      %v4239 = vld [vmem:[%s4185 + $0x1a8] sm:$0xff]
      %v4240 = vld [vmem:[%s4185 + $0x1b0] sm:$0xff]
      %v4241 = vld [vmem:[%s4185 + $0x1b8] sm:$0xff]
      %v4242 = vld [vmem:[%s4185 + $0x1c0] sm:$0xff]
      %v4243 = vld [vmem:[%s4185 + $0x1c8] sm:$0xff]
      %v4244 = vld [vmem:[%s4185 + $0x1d0] sm:$0xff]
      %v4245 = vld [vmem:[%s4185 + $0x1d8] sm:$0xff]
      %v4246 = vld [vmem:[%s4185 + $0x1e0] sm:$0xff]
      %v4247 = vld [vmem:[%s4185 + $0x1e8] sm:$0xff]
      %v4248 = vld [vmem:[%s4185 + $0x1f0] sm:$0xff]
      %v4249 = vld [vmem:[%s4185 + $0x1f8] sm:$0xff]
      %v4250 = vpack.c.bf16 %v4187, %v4186
      %v4251 = vpack.c.bf16 %v4189, %v4188
      %v4252 = vpack.c.bf16 %v4191, %v4190
      %v4253 = vpack.c.bf16 %v4193, %v4192
      %v4254 = vpack.c.bf16 %v4195, %v4194
      %v4255 = vpack.c.bf16 %v4197, %v4196
      %v4256 = vpack.c.bf16 %v4199, %v4198
      %v4257 = vpack.c.bf16 %v4201, %v4200
      %v4258 = vpack.c.bf16 %v4203, %v4202
      %v4259 = vpack.c.bf16 %v4205, %v4204
      %v4260 = vpack.c.bf16 %v4207, %v4206
      %v4261 = vpack.c.bf16 %v4209, %v4208
      %v4262 = vpack.c.bf16 %v4211, %v4210
      %v4263 = vpack.c.bf16 %v4213, %v4212
      %v4264 = vpack.c.bf16 %v4215, %v4214
      %v4265 = vpack.c.bf16 %v4217, %v4216
      %v4266 = vpack.c.bf16 %v4219, %v4218
      %v4267 = vpack.c.bf16 %v4221, %v4220
      %v4268 = vpack.c.bf16 %v4223, %v4222
      %v4269 = vpack.c.bf16 %v4225, %v4224
      %v4270 = vpack.c.bf16 %v4227, %v4226
      %v4271 = vpack.c.bf16 %v4229, %v4228
      %v4272 = vpack.c.bf16 %v4231, %v4230
      %v4273 = vpack.c.bf16 %v4233, %v4232
      %v4274 = vpack.c.bf16 %v4235, %v4234
      %v4275 = vpack.c.bf16 %v4237, %v4236
      %v4276 = vpack.c.bf16 %v4239, %v4238
      %v4277 = vpack.c.bf16 %v4241, %v4240
      %v4278 = vpack.c.bf16 %v4243, %v4242
      %v4279 = vpack.c.bf16 %v4245, %v4244
      %v4280 = vpack.c.bf16 %v4247, %v4246
      %v4281 = vpack.c.bf16 %v4249, %v4248
      %s4282 = scalar_lea.vmem %s2, 28
      %v4283 = vld [vmem:[%s4282] sm:$0xf]
      %v4285 = vsel %vm646, %v4250, 0
      %v4288 = vsel %vm646, %v4251, 0
      %v4291 = vsel %vm646, %v4252, 0
      %v4294 = vsel %vm646, %v4253, 0
      %v4297 = vsel %vm646, %v4254, 0
      %v4300 = vsel %vm646, %v4255, 0
      %v4303 = vsel %vm646, %v4256, 0
      %v4306 = vsel %vm646, %v4257, 0
      %v4309 = vsel %vm646, %v4258, 0
      %v4312 = vsel %vm646, %v4259, 0
      %v4315 = vsel %vm646, %v4260, 0
      %v4318 = vsel %vm646, %v4261, 0
      %v4321 = vsel %vm646, %v4262, 0
      %v4324 = vsel %vm646, %v4263, 0
      %v4327 = vsel %vm646, %v4264, 0
      %v4330 = vsel %vm646, %v4265, 0
      %v4333 = vsel %vm646, %v4266, 0
      %v4336 = vsel %vm646, %v4267, 0
      %v4339 = vsel %vm646, %v4268, 0
      %v4342 = vsel %vm646, %v4269, 0
      %v4345 = vsel %vm646, %v4270, 0
      %v4348 = vsel %vm646, %v4271, 0
      %v4351 = vsel %vm646, %v4272, 0
      %v4354 = vsel %vm646, %v4273, 0
      %v4357 = vsel %vm646, %v4274, 0
      %v4360 = vsel %vm646, %v4275, 0
      %v4363 = vsel %vm646, %v4276, 0
      %v4366 = vsel %vm646, %v4277, 0
      %v4369 = vsel %vm646, %v4278, 0
      %v4372 = vsel %vm646, %v4279, 0
      %v4375 = vsel %vm646, %v4280, 0
      %v4378 = vsel %vm646, %v4281, 0
      %v4381 = vsel %vm743, %v4283, 0
      %4383 = vmatprep.subr.bf16.mxu0 0
      %4384 = vmatpush1.bf16.msra.mxu0 0
      %4385 = vmatprep.subr.bf16.mxu0 0
      %4386 = vmatpush1.bf16.msra.mxu0 0
      %4387 = vmatprep.subr.bf16.mxu0 0
      %4388 = vmatpush1.bf16.msra.mxu0 0
      %4389 = vmatprep.subr.bf16.mxu0 0
      %4390 = vmatpush1.bf16.msra.mxu0 0
      %4391 = vmatprep.subr.bf16.mxu0 0
      %4392 = vmatpush1.bf16.msra.mxu0 0
      %4393 = vmatprep.subr.bf16.mxu0 0
      %4394 = vmatpush1.bf16.msra.mxu0 0
      %4395 = vmatprep.subr.bf16.mxu0 0
      %4396 = vmatpush1.bf16.msra.mxu0 0
      %4397 = vmatprep.subr.bf16.mxu0 0
      %4398 = vmatpush1.bf16.msra.mxu0 %v4381
      %4399 = vmatprep.subr.bf16.mxu0 0
      %4400 = vmatpush2.bf16.msra.mxu0 0
      %4401 = vmatprep.subr.bf16.mxu0 0
      %4402 = vmatpush2.bf16.msra.mxu0 0
      %4403 = vmatprep.subr.bf16.mxu0 0
      %4404 = vmatpush2.bf16.msra.mxu0 0
      %4405 = vmatprep.subr.bf16.mxu0 0
      %4406 = vmatpush2.bf16.msra.mxu0 0
      %4407 = vmatprep.subr.bf16.mxu0 0
      %4408 = vmatpush2.bf16.msra.mxu0 0
      %4409 = vmatprep.subr.bf16.mxu0 0
      %4410 = vmatpush2.bf16.msra.mxu0 0
      %4411 = vmatprep.subr.bf16.mxu0 0
      %4412 = vmatpush2.bf16.msra.mxu0 0
      %4413 = vmatprep.subr.bf16.mxu0 0
      %4414 = vmatpush2.bf16.msra.mxu0 0
      %4415 = vmatprep.mubr.bf16.mxu0 0
      %4416 = vmatmul.mubr.bf16.gmra.mxu0 %v4285
      %v4417 = vpop.f32.mrf.mxu0
      %v4418 = vadd.f32 0.0, %v4417
      %v4419 = vpop.f32.mrf.mxu0
      %v4420 = vpop.f32.mrf.mxu0
      %v4421 = vadd.f32 0.0, %v4420
      %v4422 = vpop.f32.mrf.mxu0
      %4423 = vmatprep.mubr.bf16.mxu0 0
      %4424 = vmatmul.mubr.bf16.gmra.mxu0 %v4288
      %v4425 = vpop.f32.mrf.mxu0
      %v4426 = vadd.f32 0.0, %v4425
      %v4427 = vpop.f32.mrf.mxu0
      %v4428 = vpop.f32.mrf.mxu0
      %v4429 = vadd.f32 0.0, %v4428
      %v4430 = vpop.f32.mrf.mxu0
      %4431 = vmatprep.mubr.bf16.mxu0 0
      %4432 = vmatmul.mubr.bf16.gmra.mxu0 %v4291
      %v4433 = vpop.f32.mrf.mxu0
      %v4434 = vadd.f32 0.0, %v4433
      %v4435 = vpop.f32.mrf.mxu0
      %v4436 = vpop.f32.mrf.mxu0
      %v4437 = vadd.f32 0.0, %v4436
      %v4438 = vpop.f32.mrf.mxu0
      %4439 = vmatprep.mubr.bf16.mxu0 0
      %4440 = vmatmul.mubr.bf16.gmra.mxu0 %v4294
      %v4441 = vpop.f32.mrf.mxu0
      %v4442 = vadd.f32 0.0, %v4441
      %v4443 = vpop.f32.mrf.mxu0
      %v4444 = vpop.f32.mrf.mxu0
      %v4445 = vadd.f32 0.0, %v4444
      %v4446 = vpop.f32.mrf.mxu0
      %4447 = vmatprep.mubr.bf16.mxu0 0
      %4448 = vmatmul.mubr.bf16.gmra.mxu0 %v4297
      %v4449 = vpop.f32.mrf.mxu0
      %v4450 = vadd.f32 0.0, %v4449
      %v4451 = vpop.f32.mrf.mxu0
      %v4452 = vpop.f32.mrf.mxu0
      %v4453 = vadd.f32 0.0, %v4452
      %v4454 = vpop.f32.mrf.mxu0
      %4455 = vmatprep.mubr.bf16.mxu0 0
      %4456 = vmatmul.mubr.bf16.gmra.mxu0 %v4300
      %v4457 = vpop.f32.mrf.mxu0
      %v4458 = vadd.f32 0.0, %v4457
      %v4459 = vpop.f32.mrf.mxu0
      %v4460 = vpop.f32.mrf.mxu0
      %v4461 = vadd.f32 0.0, %v4460
      %v4462 = vpop.f32.mrf.mxu0
      %4463 = vmatprep.mubr.bf16.mxu0 0
      %4464 = vmatmul.mubr.bf16.gmra.mxu0 %v4303
      %v4465 = vpop.f32.mrf.mxu0
      %v4466 = vadd.f32 0.0, %v4465
      %v4467 = vpop.f32.mrf.mxu0
      %v4468 = vpop.f32.mrf.mxu0
      %v4469 = vadd.f32 0.0, %v4468
      %v4470 = vpop.f32.mrf.mxu0
      %4471 = vmatprep.mubr.bf16.mxu0 0
      %4472 = vmatmul.mubr.bf16.gmra.mxu0 %v4306
      %v4473 = vpop.f32.mrf.mxu0
      %v4474 = vadd.f32 0.0, %v4473
      %v4475 = vpop.f32.mrf.mxu0
      %v4476 = vpop.f32.mrf.mxu0
      %v4477 = vadd.f32 0.0, %v4476
      %v4478 = vpop.f32.mrf.mxu0
      %4479 = vmatprep.mubr.bf16.mxu0 0
      %4480 = vmatmul.mubr.bf16.gmra.mxu0 %v4309
      %v4481 = vpop.f32.mrf.mxu0
      %v4482 = vadd.f32 0.0, %v4481
      %v4483 = vpop.f32.mrf.mxu0
      %v4484 = vpop.f32.mrf.mxu0
      %v4485 = vadd.f32 0.0, %v4484
      %v4486 = vpop.f32.mrf.mxu0
      %4487 = vmatprep.mubr.bf16.mxu0 0
      %4488 = vmatmul.mubr.bf16.gmra.mxu0 %v4312
      %v4489 = vpop.f32.mrf.mxu0
      %v4490 = vadd.f32 0.0, %v4489
      %v4491 = vpop.f32.mrf.mxu0
      %v4492 = vpop.f32.mrf.mxu0
      %v4493 = vadd.f32 0.0, %v4492
      %v4494 = vpop.f32.mrf.mxu0
      %4495 = vmatprep.mubr.bf16.mxu0 0
      %4496 = vmatmul.mubr.bf16.gmra.mxu0 %v4315
      %v4497 = vpop.f32.mrf.mxu0
      %v4498 = vadd.f32 0.0, %v4497
      %v4499 = vpop.f32.mrf.mxu0
      %v4500 = vpop.f32.mrf.mxu0
      %v4501 = vadd.f32 0.0, %v4500
      %v4502 = vpop.f32.mrf.mxu0
      %4503 = vmatprep.mubr.bf16.mxu0 0
      %4504 = vmatmul.mubr.bf16.gmra.mxu0 %v4318
      %v4505 = vpop.f32.mrf.mxu0
      %v4506 = vadd.f32 0.0, %v4505
      %v4507 = vpop.f32.mrf.mxu0
      %v4508 = vpop.f32.mrf.mxu0
      %v4509 = vadd.f32 0.0, %v4508
      %v4510 = vpop.f32.mrf.mxu0
      %4511 = vmatprep.mubr.bf16.mxu0 0
      %4512 = vmatmul.mubr.bf16.gmra.mxu0 %v4321
      %v4513 = vpop.f32.mrf.mxu0
      %v4514 = vadd.f32 0.0, %v4513
      %v4515 = vpop.f32.mrf.mxu0
      %v4516 = vpop.f32.mrf.mxu0
      %v4517 = vadd.f32 0.0, %v4516
      %v4518 = vpop.f32.mrf.mxu0
      %4519 = vmatprep.mubr.bf16.mxu0 0
      %4520 = vmatmul.mubr.bf16.gmra.mxu0 %v4324
      %v4521 = vpop.f32.mrf.mxu0
      %v4522 = vadd.f32 0.0, %v4521
      %v4523 = vpop.f32.mrf.mxu0
      %v4524 = vpop.f32.mrf.mxu0
      %v4525 = vadd.f32 0.0, %v4524
      %v4526 = vpop.f32.mrf.mxu0
      %4527 = vmatprep.mubr.bf16.mxu0 0
      %4528 = vmatmul.mubr.bf16.gmra.mxu0 %v4327
      %v4529 = vpop.f32.mrf.mxu0
      %v4530 = vadd.f32 0.0, %v4529
      %v4531 = vpop.f32.mrf.mxu0
      %v4532 = vpop.f32.mrf.mxu0
      %v4533 = vadd.f32 0.0, %v4532
      %v4534 = vpop.f32.mrf.mxu0
      %4535 = vmatprep.mubr.bf16.mxu0 0
      %4536 = vmatmul.mubr.bf16.gmra.mxu0 %v4330
      %v4537 = vpop.f32.mrf.mxu0
      %v4538 = vadd.f32 0.0, %v4537
      %v4539 = vpop.f32.mrf.mxu0
      %v4540 = vpop.f32.mrf.mxu0
      %v4541 = vadd.f32 0.0, %v4540
      %v4542 = vpop.f32.mrf.mxu0
      %4543 = vmatprep.mubr.bf16.mxu0 0
      %4544 = vmatmul.mubr.bf16.gmra.mxu0 %v4333
      %v4545 = vpop.f32.mrf.mxu0
      %v4546 = vadd.f32 0.0, %v4545
      %v4547 = vpop.f32.mrf.mxu0
      %v4548 = vpop.f32.mrf.mxu0
      %v4549 = vadd.f32 0.0, %v4548
      %v4550 = vpop.f32.mrf.mxu0
      %4551 = vmatprep.mubr.bf16.mxu0 0
      %4552 = vmatmul.mubr.bf16.gmra.mxu0 %v4336
      %v4553 = vpop.f32.mrf.mxu0
      %v4554 = vadd.f32 0.0, %v4553
      %v4555 = vpop.f32.mrf.mxu0
      %v4556 = vpop.f32.mrf.mxu0
      %v4557 = vadd.f32 0.0, %v4556
      %v4558 = vpop.f32.mrf.mxu0
      %4559 = vmatprep.mubr.bf16.mxu0 0
      %4560 = vmatmul.mubr.bf16.gmra.mxu0 %v4339
      %v4561 = vpop.f32.mrf.mxu0
      %v4562 = vadd.f32 0.0, %v4561
      %v4563 = vpop.f32.mrf.mxu0
      %v4564 = vpop.f32.mrf.mxu0
      %v4565 = vadd.f32 0.0, %v4564
      %v4566 = vpop.f32.mrf.mxu0
      %4567 = vmatprep.mubr.bf16.mxu0 0
      %4568 = vmatmul.mubr.bf16.gmra.mxu0 %v4342
      %v4569 = vpop.f32.mrf.mxu0
      %v4570 = vadd.f32 0.0, %v4569
      %v4571 = vpop.f32.mrf.mxu0
      %v4572 = vpop.f32.mrf.mxu0
      %v4573 = vadd.f32 0.0, %v4572
      %v4574 = vpop.f32.mrf.mxu0
      %4575 = vmatprep.mubr.bf16.mxu0 0
      %4576 = vmatmul.mubr.bf16.gmra.mxu0 %v4345
      %v4577 = vpop.f32.mrf.mxu0
      %v4578 = vadd.f32 0.0, %v4577
      %v4579 = vpop.f32.mrf.mxu0
      %v4580 = vpop.f32.mrf.mxu0
      %v4581 = vadd.f32 0.0, %v4580
      %v4582 = vpop.f32.mrf.mxu0
      %4583 = vmatprep.mubr.bf16.mxu0 0
      %4584 = vmatmul.mubr.bf16.gmra.mxu0 %v4348
      %v4585 = vpop.f32.mrf.mxu0
      %v4586 = vadd.f32 0.0, %v4585
      %v4587 = vpop.f32.mrf.mxu0
      %v4588 = vpop.f32.mrf.mxu0
      %v4589 = vadd.f32 0.0, %v4588
      %v4590 = vpop.f32.mrf.mxu0
      %4591 = vmatprep.mubr.bf16.mxu0 0
      %4592 = vmatmul.mubr.bf16.gmra.mxu0 %v4351
      %v4593 = vpop.f32.mrf.mxu0
      %v4594 = vadd.f32 0.0, %v4593
      %v4595 = vpop.f32.mrf.mxu0
      %v4596 = vpop.f32.mrf.mxu0
      %v4597 = vadd.f32 0.0, %v4596
      %v4598 = vpop.f32.mrf.mxu0
      %4599 = vmatprep.mubr.bf16.mxu0 0
      %4600 = vmatmul.mubr.bf16.gmra.mxu0 %v4354
      %v4601 = vpop.f32.mrf.mxu0
      %v4602 = vadd.f32 0.0, %v4601
      %v4603 = vpop.f32.mrf.mxu0
      %v4604 = vpop.f32.mrf.mxu0
      %v4605 = vadd.f32 0.0, %v4604
      %v4606 = vpop.f32.mrf.mxu0
      %4607 = vmatprep.mubr.bf16.mxu0 0
      %4608 = vmatmul.mubr.bf16.gmra.mxu0 %v4357
      %v4609 = vpop.f32.mrf.mxu0
      %v4610 = vadd.f32 0.0, %v4609
      %v4611 = vpop.f32.mrf.mxu0
      %v4612 = vpop.f32.mrf.mxu0
      %v4613 = vadd.f32 0.0, %v4612
      %v4614 = vpop.f32.mrf.mxu0
      %4615 = vmatprep.mubr.bf16.mxu0 0
      %4616 = vmatmul.mubr.bf16.gmra.mxu0 %v4360
      %v4617 = vpop.f32.mrf.mxu0
      %v4618 = vadd.f32 0.0, %v4617
      %v4619 = vpop.f32.mrf.mxu0
      %v4620 = vpop.f32.mrf.mxu0
      %v4621 = vadd.f32 0.0, %v4620
      %v4622 = vpop.f32.mrf.mxu0
      %4623 = vmatprep.mubr.bf16.mxu0 0
      %4624 = vmatmul.mubr.bf16.gmra.mxu0 %v4363
      %v4625 = vpop.f32.mrf.mxu0
      %v4626 = vadd.f32 0.0, %v4625
      %v4627 = vpop.f32.mrf.mxu0
      %v4628 = vpop.f32.mrf.mxu0
      %v4629 = vadd.f32 0.0, %v4628
      %v4630 = vpop.f32.mrf.mxu0
      %4631 = vmatprep.mubr.bf16.mxu0 0
      %4632 = vmatmul.mubr.bf16.gmra.mxu0 %v4366
      %v4633 = vpop.f32.mrf.mxu0
      %v4634 = vadd.f32 0.0, %v4633
      %v4635 = vpop.f32.mrf.mxu0
      %v4636 = vpop.f32.mrf.mxu0
      %v4637 = vadd.f32 0.0, %v4636
      %v4638 = vpop.f32.mrf.mxu0
      %4639 = vmatprep.mubr.bf16.mxu0 0
      %4640 = vmatmul.mubr.bf16.gmra.mxu0 %v4369
      %v4641 = vpop.f32.mrf.mxu0
      %v4642 = vadd.f32 0.0, %v4641
      %v4643 = vpop.f32.mrf.mxu0
      %v4644 = vpop.f32.mrf.mxu0
      %v4645 = vadd.f32 0.0, %v4644
      %v4646 = vpop.f32.mrf.mxu0
      %4647 = vmatprep.mubr.bf16.mxu0 0
      %4648 = vmatmul.mubr.bf16.gmra.mxu0 %v4372
      %v4649 = vpop.f32.mrf.mxu0
      %v4650 = vadd.f32 0.0, %v4649
      %v4651 = vpop.f32.mrf.mxu0
      %v4652 = vpop.f32.mrf.mxu0
      %v4653 = vadd.f32 0.0, %v4652
      %v4654 = vpop.f32.mrf.mxu0
      %4655 = vmatprep.mubr.bf16.mxu0 0
      %4656 = vmatmul.mubr.bf16.gmra.mxu0 %v4375
      %v4657 = vpop.f32.mrf.mxu0
      %v4658 = vadd.f32 0.0, %v4657
      %v4659 = vpop.f32.mrf.mxu0
      %v4660 = vpop.f32.mrf.mxu0
      %v4661 = vadd.f32 0.0, %v4660
      %v4662 = vpop.f32.mrf.mxu0
      %4663 = vmatprep.mubr.bf16.mxu0 0
      %4664 = vmatmul.mubr.bf16.gmra.mxu0 %v4378
      %v4665 = vpop.f32.mrf.mxu0
      %v4666 = vadd.f32 0.0, %v4665
      %v4667 = vpop.f32.mrf.mxu0
      %v4668 = vpop.f32.mrf.mxu0
      %v4669 = vadd.f32 0.0, %v4668
      %v4670 = vpop.f32.mrf.mxu0
      %4671 = vdwg.mxu0
      %v4672 = vadd.f32 %v4120, %v4418
      %v4673 = vadd.f32 %v4121, %v4421
      %v4674 = vadd.f32 %v4122, %v4426
      %v4675 = vadd.f32 %v4123, %v4429
      %v4676 = vadd.f32 %v4124, %v4434
      %v4677 = vadd.f32 %v4125, %v4437
      %v4678 = vadd.f32 %v4126, %v4442
      %v4679 = vadd.f32 %v4127, %v4445
      %v4680 = vadd.f32 %v4128, %v4450
      %v4681 = vadd.f32 %v4129, %v4453
      %v4682 = vadd.f32 %v4130, %v4458
      %v4683 = vadd.f32 %v4131, %v4461
      %v4684 = vadd.f32 %v4132, %v4466
      %v4685 = vadd.f32 %v4133, %v4469
      %v4686 = vadd.f32 %v4134, %v4474
      %v4687 = vadd.f32 %v4135, %v4477
      %v4688 = vadd.f32 %v4136, %v4482
      %v4689 = vadd.f32 %v4137, %v4485
      %v4690 = vadd.f32 %v4138, %v4490
      %v4691 = vadd.f32 %v4139, %v4493
      %v4692 = vadd.f32 %v4140, %v4498
      %v4693 = vadd.f32 %v4141, %v4501
      %v4694 = vadd.f32 %v4142, %v4506
      %v4695 = vadd.f32 %v4143, %v4509
      %v4696 = vadd.f32 %v4144, %v4514
      %v4697 = vadd.f32 %v4145, %v4517
      %v4698 = vadd.f32 %v4146, %v4522
      %v4699 = vadd.f32 %v4147, %v4525
      %v4700 = vadd.f32 %v4148, %v4530
      %v4701 = vadd.f32 %v4149, %v4533
      %v4702 = vadd.f32 %v4150, %v4538
      %v4703 = vadd.f32 %v4151, %v4541
      %v4704 = vadd.f32 %v4152, %v4546
      %v4705 = vadd.f32 %v4153, %v4549
      %v4706 = vadd.f32 %v4154, %v4554
      %v4707 = vadd.f32 %v4155, %v4557
      %v4708 = vadd.f32 %v4156, %v4562
      %v4709 = vadd.f32 %v4157, %v4565
      %v4710 = vadd.f32 %v4158, %v4570
      %v4711 = vadd.f32 %v4159, %v4573
      %v4712 = vadd.f32 %v4160, %v4578
      %v4713 = vadd.f32 %v4161, %v4581
      %v4714 = vadd.f32 %v4162, %v4586
      %v4715 = vadd.f32 %v4163, %v4589
      %v4716 = vadd.f32 %v4164, %v4594
      %v4717 = vadd.f32 %v4165, %v4597
      %v4718 = vadd.f32 %v4166, %v4602
      %v4719 = vadd.f32 %v4167, %v4605
      %v4720 = vadd.f32 %v4168, %v4610
      %v4721 = vadd.f32 %v4169, %v4613
      %v4722 = vadd.f32 %v4170, %v4618
      %v4723 = vadd.f32 %v4171, %v4621
      %v4724 = vadd.f32 %v4172, %v4626
      %v4725 = vadd.f32 %v4173, %v4629
      %v4726 = vadd.f32 %v4174, %v4634
      %v4727 = vadd.f32 %v4175, %v4637
      %v4728 = vadd.f32 %v4176, %v4642
      %v4729 = vadd.f32 %v4177, %v4645
      %v4730 = vadd.f32 %v4178, %v4650
      %v4731 = vadd.f32 %v4179, %v4653
      %v4732 = vadd.f32 %v4180, %v4658
      %v4733 = vadd.f32 %v4181, %v4661
      %v4734 = vadd.f32 %v4182, %v4666
      %v4735 = vadd.f32 %v4183, %v4669
      %s4736 = sadd.s32 %s447, 132
      %s4737 = scalar_lea.vmem %s425, %s4736
      %v4738 = vld [vmem:[%s4737] sm:$0xff]
      %v4739 = vld [vmem:[%s4737 + $0x8] sm:$0xff]
      %v4740 = vld [vmem:[%s4737 + $0x10] sm:$0xff]
      %v4741 = vld [vmem:[%s4737 + $0x18] sm:$0xff]
      %v4742 = vld [vmem:[%s4737 + $0x20] sm:$0xff]
      %v4743 = vld [vmem:[%s4737 + $0x28] sm:$0xff]
      %v4744 = vld [vmem:[%s4737 + $0x30] sm:$0xff]
      %v4745 = vld [vmem:[%s4737 + $0x38] sm:$0xff]
      %v4746 = vld [vmem:[%s4737 + $0x40] sm:$0xff]
      %v4747 = vld [vmem:[%s4737 + $0x48] sm:$0xff]
      %v4748 = vld [vmem:[%s4737 + $0x50] sm:$0xff]
      %v4749 = vld [vmem:[%s4737 + $0x58] sm:$0xff]
      %v4750 = vld [vmem:[%s4737 + $0x60] sm:$0xff]
      %v4751 = vld [vmem:[%s4737 + $0x68] sm:$0xff]
      %v4752 = vld [vmem:[%s4737 + $0x70] sm:$0xff]
      %v4753 = vld [vmem:[%s4737 + $0x78] sm:$0xff]
      %v4754 = vld [vmem:[%s4737 + $0x80] sm:$0xff]
      %v4755 = vld [vmem:[%s4737 + $0x88] sm:$0xff]
      %v4756 = vld [vmem:[%s4737 + $0x90] sm:$0xff]
      %v4757 = vld [vmem:[%s4737 + $0x98] sm:$0xff]
      %v4758 = vld [vmem:[%s4737 + $0xa0] sm:$0xff]
      %v4759 = vld [vmem:[%s4737 + $0xa8] sm:$0xff]
      %v4760 = vld [vmem:[%s4737 + $0xb0] sm:$0xff]
      %v4761 = vld [vmem:[%s4737 + $0xb8] sm:$0xff]
      %v4762 = vld [vmem:[%s4737 + $0xc0] sm:$0xff]
      %v4763 = vld [vmem:[%s4737 + $0xc8] sm:$0xff]
      %v4764 = vld [vmem:[%s4737 + $0xd0] sm:$0xff]
      %v4765 = vld [vmem:[%s4737 + $0xd8] sm:$0xff]
      %v4766 = vld [vmem:[%s4737 + $0xe0] sm:$0xff]
      %v4767 = vld [vmem:[%s4737 + $0xe8] sm:$0xff]
      %v4768 = vld [vmem:[%s4737 + $0xf0] sm:$0xff]
      %v4769 = vld [vmem:[%s4737 + $0xf8] sm:$0xff]
      %v4770 = vld [vmem:[%s4737 + $0x100] sm:$0xff]
      %v4771 = vld [vmem:[%s4737 + $0x108] sm:$0xff]
      %v4772 = vld [vmem:[%s4737 + $0x110] sm:$0xff]
      %v4773 = vld [vmem:[%s4737 + $0x118] sm:$0xff]
      %v4774 = vld [vmem:[%s4737 + $0x120] sm:$0xff]
      %v4775 = vld [vmem:[%s4737 + $0x128] sm:$0xff]
      %v4776 = vld [vmem:[%s4737 + $0x130] sm:$0xff]
      %v4777 = vld [vmem:[%s4737 + $0x138] sm:$0xff]
      %v4778 = vld [vmem:[%s4737 + $0x140] sm:$0xff]
      %v4779 = vld [vmem:[%s4737 + $0x148] sm:$0xff]
      %v4780 = vld [vmem:[%s4737 + $0x150] sm:$0xff]
      %v4781 = vld [vmem:[%s4737 + $0x158] sm:$0xff]
      %v4782 = vld [vmem:[%s4737 + $0x160] sm:$0xff]
      %v4783 = vld [vmem:[%s4737 + $0x168] sm:$0xff]
      %v4784 = vld [vmem:[%s4737 + $0x170] sm:$0xff]
      %v4785 = vld [vmem:[%s4737 + $0x178] sm:$0xff]
      %v4786 = vld [vmem:[%s4737 + $0x180] sm:$0xff]
      %v4787 = vld [vmem:[%s4737 + $0x188] sm:$0xff]
      %v4788 = vld [vmem:[%s4737 + $0x190] sm:$0xff]
      %v4789 = vld [vmem:[%s4737 + $0x198] sm:$0xff]
      %v4790 = vld [vmem:[%s4737 + $0x1a0] sm:$0xff]
      %v4791 = vld [vmem:[%s4737 + $0x1a8] sm:$0xff]
      %v4792 = vld [vmem:[%s4737 + $0x1b0] sm:$0xff]
      %v4793 = vld [vmem:[%s4737 + $0x1b8] sm:$0xff]
      %v4794 = vld [vmem:[%s4737 + $0x1c0] sm:$0xff]
      %v4795 = vld [vmem:[%s4737 + $0x1c8] sm:$0xff]
      %v4796 = vld [vmem:[%s4737 + $0x1d0] sm:$0xff]
      %v4797 = vld [vmem:[%s4737 + $0x1d8] sm:$0xff]
      %v4798 = vld [vmem:[%s4737 + $0x1e0] sm:$0xff]
      %v4799 = vld [vmem:[%s4737 + $0x1e8] sm:$0xff]
      %v4800 = vld [vmem:[%s4737 + $0x1f0] sm:$0xff]
      %v4801 = vld [vmem:[%s4737 + $0x1f8] sm:$0xff]
      %v4802 = vpack.c.bf16 %v4739, %v4738
      %v4803 = vpack.c.bf16 %v4741, %v4740
      %v4804 = vpack.c.bf16 %v4743, %v4742
      %v4805 = vpack.c.bf16 %v4745, %v4744
      %v4806 = vpack.c.bf16 %v4747, %v4746
      %v4807 = vpack.c.bf16 %v4749, %v4748
      %v4808 = vpack.c.bf16 %v4751, %v4750
      %v4809 = vpack.c.bf16 %v4753, %v4752
      %v4810 = vpack.c.bf16 %v4755, %v4754
      %v4811 = vpack.c.bf16 %v4757, %v4756
      %v4812 = vpack.c.bf16 %v4759, %v4758
      %v4813 = vpack.c.bf16 %v4761, %v4760
      %v4814 = vpack.c.bf16 %v4763, %v4762
      %v4815 = vpack.c.bf16 %v4765, %v4764
      %v4816 = vpack.c.bf16 %v4767, %v4766
      %v4817 = vpack.c.bf16 %v4769, %v4768
      %v4818 = vpack.c.bf16 %v4771, %v4770
      %v4819 = vpack.c.bf16 %v4773, %v4772
      %v4820 = vpack.c.bf16 %v4775, %v4774
      %v4821 = vpack.c.bf16 %v4777, %v4776
      %v4822 = vpack.c.bf16 %v4779, %v4778
      %v4823 = vpack.c.bf16 %v4781, %v4780
      %v4824 = vpack.c.bf16 %v4783, %v4782
      %v4825 = vpack.c.bf16 %v4785, %v4784
      %v4826 = vpack.c.bf16 %v4787, %v4786
      %v4827 = vpack.c.bf16 %v4789, %v4788
      %v4828 = vpack.c.bf16 %v4791, %v4790
      %v4829 = vpack.c.bf16 %v4793, %v4792
      %v4830 = vpack.c.bf16 %v4795, %v4794
      %v4831 = vpack.c.bf16 %v4797, %v4796
      %v4832 = vpack.c.bf16 %v4799, %v4798
      %v4833 = vpack.c.bf16 %v4801, %v4800
      %s4834 = scalar_lea.vmem %s2, 32
      %v4835 = vld [vmem:[%s4834] sm:$0xf]
      %v4837 = vsel %vm646, %v4802, 0
      %v4840 = vsel %vm646, %v4803, 0
      %v4843 = vsel %vm646, %v4804, 0
      %v4846 = vsel %vm646, %v4805, 0
      %v4849 = vsel %vm646, %v4806, 0
      %v4852 = vsel %vm646, %v4807, 0
      %v4855 = vsel %vm646, %v4808, 0
      %v4858 = vsel %vm646, %v4809, 0
      %v4861 = vsel %vm646, %v4810, 0
      %v4864 = vsel %vm646, %v4811, 0
      %v4867 = vsel %vm646, %v4812, 0
      %v4870 = vsel %vm646, %v4813, 0
      %v4873 = vsel %vm646, %v4814, 0
      %v4876 = vsel %vm646, %v4815, 0
      %v4879 = vsel %vm646, %v4816, 0
      %v4882 = vsel %vm646, %v4817, 0
      %v4885 = vsel %vm646, %v4818, 0
      %v4888 = vsel %vm646, %v4819, 0
      %v4891 = vsel %vm646, %v4820, 0
      %v4894 = vsel %vm646, %v4821, 0
      %v4897 = vsel %vm646, %v4822, 0
      %v4900 = vsel %vm646, %v4823, 0
      %v4903 = vsel %vm646, %v4824, 0
      %v4906 = vsel %vm646, %v4825, 0
      %v4909 = vsel %vm646, %v4826, 0
      %v4912 = vsel %vm646, %v4827, 0
      %v4915 = vsel %vm646, %v4828, 0
      %v4918 = vsel %vm646, %v4829, 0
      %v4921 = vsel %vm646, %v4830, 0
      %v4924 = vsel %vm646, %v4831, 0
      %v4927 = vsel %vm646, %v4832, 0
      %v4930 = vsel %vm646, %v4833, 0
      %v4933 = vsel %vm743, %v4835, 0
      %4935 = vmatprep.subr.bf16.mxu0 0
      %4936 = vmatpush1.bf16.msra.mxu0 0
      %4937 = vmatprep.subr.bf16.mxu0 0
      %4938 = vmatpush1.bf16.msra.mxu0 0
      %4939 = vmatprep.subr.bf16.mxu0 0
      %4940 = vmatpush1.bf16.msra.mxu0 0
      %4941 = vmatprep.subr.bf16.mxu0 0
      %4942 = vmatpush1.bf16.msra.mxu0 0
      %4943 = vmatprep.subr.bf16.mxu0 0
      %4944 = vmatpush1.bf16.msra.mxu0 0
      %4945 = vmatprep.subr.bf16.mxu0 0
      %4946 = vmatpush1.bf16.msra.mxu0 0
      %4947 = vmatprep.subr.bf16.mxu0 0
      %4948 = vmatpush1.bf16.msra.mxu0 0
      %4949 = vmatprep.subr.bf16.mxu0 0
      %4950 = vmatpush1.bf16.msra.mxu0 %v4933
      %4951 = vmatprep.subr.bf16.mxu0 0
      %4952 = vmatpush2.bf16.msra.mxu0 0
      %4953 = vmatprep.subr.bf16.mxu0 0
      %4954 = vmatpush2.bf16.msra.mxu0 0
      %4955 = vmatprep.subr.bf16.mxu0 0
      %4956 = vmatpush2.bf16.msra.mxu0 0
      %4957 = vmatprep.subr.bf16.mxu0 0
      %4958 = vmatpush2.bf16.msra.mxu0 0
      %4959 = vmatprep.subr.bf16.mxu0 0
      %4960 = vmatpush2.bf16.msra.mxu0 0
      %4961 = vmatprep.subr.bf16.mxu0 0
      %4962 = vmatpush2.bf16.msra.mxu0 0
      %4963 = vmatprep.subr.bf16.mxu0 0
      %4964 = vmatpush2.bf16.msra.mxu0 0
      %4965 = vmatprep.subr.bf16.mxu0 0
      %4966 = vmatpush2.bf16.msra.mxu0 0
      %4967 = vmatprep.mubr.bf16.mxu0 0
      %4968 = vmatmul.mubr.bf16.gmra.mxu0 %v4837
      %v4969 = vpop.f32.mrf.mxu0
      %v4970 = vadd.f32 0.0, %v4969
      %v4971 = vpop.f32.mrf.mxu0
      %v4972 = vpop.f32.mrf.mxu0
      %v4973 = vadd.f32 0.0, %v4972
      %v4974 = vpop.f32.mrf.mxu0
      %4975 = vmatprep.mubr.bf16.mxu0 0
      %4976 = vmatmul.mubr.bf16.gmra.mxu0 %v4840
      %v4977 = vpop.f32.mrf.mxu0
      %v4978 = vadd.f32 0.0, %v4977
      %v4979 = vpop.f32.mrf.mxu0
      %v4980 = vpop.f32.mrf.mxu0
      %v4981 = vadd.f32 0.0, %v4980
      %v4982 = vpop.f32.mrf.mxu0
      %4983 = vmatprep.mubr.bf16.mxu0 0
      %4984 = vmatmul.mubr.bf16.gmra.mxu0 %v4843
      %v4985 = vpop.f32.mrf.mxu0
      %v4986 = vadd.f32 0.0, %v4985
      %v4987 = vpop.f32.mrf.mxu0
      %v4988 = vpop.f32.mrf.mxu0
      %v4989 = vadd.f32 0.0, %v4988
      %v4990 = vpop.f32.mrf.mxu0
      %4991 = vmatprep.mubr.bf16.mxu0 0
      %4992 = vmatmul.mubr.bf16.gmra.mxu0 %v4846
      %v4993 = vpop.f32.mrf.mxu0
      %v4994 = vadd.f32 0.0, %v4993
      %v4995 = vpop.f32.mrf.mxu0
      %v4996 = vpop.f32.mrf.mxu0
      %v4997 = vadd.f32 0.0, %v4996
      %v4998 = vpop.f32.mrf.mxu0
      %4999 = vmatprep.mubr.bf16.mxu0 0
      %5000 = vmatmul.mubr.bf16.gmra.mxu0 %v4849
      %v5001 = vpop.f32.mrf.mxu0
      %v5002 = vadd.f32 0.0, %v5001
      %v5003 = vpop.f32.mrf.mxu0
      %v5004 = vpop.f32.mrf.mxu0
      %v5005 = vadd.f32 0.0, %v5004
      %v5006 = vpop.f32.mrf.mxu0
      %5007 = vmatprep.mubr.bf16.mxu0 0
      %5008 = vmatmul.mubr.bf16.gmra.mxu0 %v4852
      %v5009 = vpop.f32.mrf.mxu0
      %v5010 = vadd.f32 0.0, %v5009
      %v5011 = vpop.f32.mrf.mxu0
      %v5012 = vpop.f32.mrf.mxu0
      %v5013 = vadd.f32 0.0, %v5012
      %v5014 = vpop.f32.mrf.mxu0
      %5015 = vmatprep.mubr.bf16.mxu0 0
      %5016 = vmatmul.mubr.bf16.gmra.mxu0 %v4855
      %v5017 = vpop.f32.mrf.mxu0
      %v5018 = vadd.f32 0.0, %v5017
      %v5019 = vpop.f32.mrf.mxu0
      %v5020 = vpop.f32.mrf.mxu0
      %v5021 = vadd.f32 0.0, %v5020
      %v5022 = vpop.f32.mrf.mxu0
      %5023 = vmatprep.mubr.bf16.mxu0 0
      %5024 = vmatmul.mubr.bf16.gmra.mxu0 %v4858
      %v5025 = vpop.f32.mrf.mxu0
      %v5026 = vadd.f32 0.0, %v5025
      %v5027 = vpop.f32.mrf.mxu0
      %v5028 = vpop.f32.mrf.mxu0
      %v5029 = vadd.f32 0.0, %v5028
      %v5030 = vpop.f32.mrf.mxu0
      %5031 = vmatprep.mubr.bf16.mxu0 0
      %5032 = vmatmul.mubr.bf16.gmra.mxu0 %v4861
      %v5033 = vpop.f32.mrf.mxu0
      %v5034 = vadd.f32 0.0, %v5033
      %v5035 = vpop.f32.mrf.mxu0
      %v5036 = vpop.f32.mrf.mxu0
      %v5037 = vadd.f32 0.0, %v5036
      %v5038 = vpop.f32.mrf.mxu0
      %5039 = vmatprep.mubr.bf16.mxu0 0
      %5040 = vmatmul.mubr.bf16.gmra.mxu0 %v4864
      %v5041 = vpop.f32.mrf.mxu0
      %v5042 = vadd.f32 0.0, %v5041
      %v5043 = vpop.f32.mrf.mxu0
      %v5044 = vpop.f32.mrf.mxu0
      %v5045 = vadd.f32 0.0, %v5044
      %v5046 = vpop.f32.mrf.mxu0
      %5047 = vmatprep.mubr.bf16.mxu0 0
      %5048 = vmatmul.mubr.bf16.gmra.mxu0 %v4867
      %v5049 = vpop.f32.mrf.mxu0
      %v5050 = vadd.f32 0.0, %v5049
      %v5051 = vpop.f32.mrf.mxu0
      %v5052 = vpop.f32.mrf.mxu0
      %v5053 = vadd.f32 0.0, %v5052
      %v5054 = vpop.f32.mrf.mxu0
      %5055 = vmatprep.mubr.bf16.mxu0 0
      %5056 = vmatmul.mubr.bf16.gmra.mxu0 %v4870
      %v5057 = vpop.f32.mrf.mxu0
      %v5058 = vadd.f32 0.0, %v5057
      %v5059 = vpop.f32.mrf.mxu0
      %v5060 = vpop.f32.mrf.mxu0
      %v5061 = vadd.f32 0.0, %v5060
      %v5062 = vpop.f32.mrf.mxu0
      %5063 = vmatprep.mubr.bf16.mxu0 0
      %5064 = vmatmul.mubr.bf16.gmra.mxu0 %v4873
      %v5065 = vpop.f32.mrf.mxu0
      %v5066 = vadd.f32 0.0, %v5065
      %v5067 = vpop.f32.mrf.mxu0
      %v5068 = vpop.f32.mrf.mxu0
      %v5069 = vadd.f32 0.0, %v5068
      %v5070 = vpop.f32.mrf.mxu0
      %5071 = vmatprep.mubr.bf16.mxu0 0
      %5072 = vmatmul.mubr.bf16.gmra.mxu0 %v4876
      %v5073 = vpop.f32.mrf.mxu0
      %v5074 = vadd.f32 0.0, %v5073
      %v5075 = vpop.f32.mrf.mxu0
      %v5076 = vpop.f32.mrf.mxu0
      %v5077 = vadd.f32 0.0, %v5076
      %v5078 = vpop.f32.mrf.mxu0
      %5079 = vmatprep.mubr.bf16.mxu0 0
      %5080 = vmatmul.mubr.bf16.gmra.mxu0 %v4879
      %v5081 = vpop.f32.mrf.mxu0
      %v5082 = vadd.f32 0.0, %v5081
      %v5083 = vpop.f32.mrf.mxu0
      %v5084 = vpop.f32.mrf.mxu0
      %v5085 = vadd.f32 0.0, %v5084
      %v5086 = vpop.f32.mrf.mxu0
      %5087 = vmatprep.mubr.bf16.mxu0 0
      %5088 = vmatmul.mubr.bf16.gmra.mxu0 %v4882
      %v5089 = vpop.f32.mrf.mxu0
      %v5090 = vadd.f32 0.0, %v5089
      %v5091 = vpop.f32.mrf.mxu0
      %v5092 = vpop.f32.mrf.mxu0
      %v5093 = vadd.f32 0.0, %v5092
      %v5094 = vpop.f32.mrf.mxu0
      %5095 = vmatprep.mubr.bf16.mxu0 0
      %5096 = vmatmul.mubr.bf16.gmra.mxu0 %v4885
      %v5097 = vpop.f32.mrf.mxu0
      %v5098 = vadd.f32 0.0, %v5097
      %v5099 = vpop.f32.mrf.mxu0
      %v5100 = vpop.f32.mrf.mxu0
      %v5101 = vadd.f32 0.0, %v5100
      %v5102 = vpop.f32.mrf.mxu0
      %5103 = vmatprep.mubr.bf16.mxu0 0
      %5104 = vmatmul.mubr.bf16.gmra.mxu0 %v4888
      %v5105 = vpop.f32.mrf.mxu0
      %v5106 = vadd.f32 0.0, %v5105
      %v5107 = vpop.f32.mrf.mxu0
      %v5108 = vpop.f32.mrf.mxu0
      %v5109 = vadd.f32 0.0, %v5108
      %v5110 = vpop.f32.mrf.mxu0
      %5111 = vmatprep.mubr.bf16.mxu0 0
      %5112 = vmatmul.mubr.bf16.gmra.mxu0 %v4891
      %v5113 = vpop.f32.mrf.mxu0
      %v5114 = vadd.f32 0.0, %v5113
      %v5115 = vpop.f32.mrf.mxu0
      %v5116 = vpop.f32.mrf.mxu0
      %v5117 = vadd.f32 0.0, %v5116
      %v5118 = vpop.f32.mrf.mxu0
      %5119 = vmatprep.mubr.bf16.mxu0 0
      %5120 = vmatmul.mubr.bf16.gmra.mxu0 %v4894
      %v5121 = vpop.f32.mrf.mxu0
      %v5122 = vadd.f32 0.0, %v5121
      %v5123 = vpop.f32.mrf.mxu0
      %v5124 = vpop.f32.mrf.mxu0
      %v5125 = vadd.f32 0.0, %v5124
      %v5126 = vpop.f32.mrf.mxu0
      %5127 = vmatprep.mubr.bf16.mxu0 0
      %5128 = vmatmul.mubr.bf16.gmra.mxu0 %v4897
      %v5129 = vpop.f32.mrf.mxu0
      %v5130 = vadd.f32 0.0, %v5129
      %v5131 = vpop.f32.mrf.mxu0
      %v5132 = vpop.f32.mrf.mxu0
      %v5133 = vadd.f32 0.0, %v5132
      %v5134 = vpop.f32.mrf.mxu0
      %5135 = vmatprep.mubr.bf16.mxu0 0
      %5136 = vmatmul.mubr.bf16.gmra.mxu0 %v4900
      %v5137 = vpop.f32.mrf.mxu0
      %v5138 = vadd.f32 0.0, %v5137
      %v5139 = vpop.f32.mrf.mxu0
      %v5140 = vpop.f32.mrf.mxu0
      %v5141 = vadd.f32 0.0, %v5140
      %v5142 = vpop.f32.mrf.mxu0
      %5143 = vmatprep.mubr.bf16.mxu0 0
      %5144 = vmatmul.mubr.bf16.gmra.mxu0 %v4903
      %v5145 = vpop.f32.mrf.mxu0
      %v5146 = vadd.f32 0.0, %v5145
      %v5147 = vpop.f32.mrf.mxu0
      %v5148 = vpop.f32.mrf.mxu0
      %v5149 = vadd.f32 0.0, %v5148
      %v5150 = vpop.f32.mrf.mxu0
      %5151 = vmatprep.mubr.bf16.mxu0 0
      %5152 = vmatmul.mubr.bf16.gmra.mxu0 %v4906
      %v5153 = vpop.f32.mrf.mxu0
      %v5154 = vadd.f32 0.0, %v5153
      %v5155 = vpop.f32.mrf.mxu0
      %v5156 = vpop.f32.mrf.mxu0
      %v5157 = vadd.f32 0.0, %v5156
      %v5158 = vpop.f32.mrf.mxu0
      %5159 = vmatprep.mubr.bf16.mxu0 0
      %5160 = vmatmul.mubr.bf16.gmra.mxu0 %v4909
      %v5161 = vpop.f32.mrf.mxu0
      %v5162 = vadd.f32 0.0, %v5161
      %v5163 = vpop.f32.mrf.mxu0
      %v5164 = vpop.f32.mrf.mxu0
      %v5165 = vadd.f32 0.0, %v5164
      %v5166 = vpop.f32.mrf.mxu0
      %5167 = vmatprep.mubr.bf16.mxu0 0
      %5168 = vmatmul.mubr.bf16.gmra.mxu0 %v4912
      %v5169 = vpop.f32.mrf.mxu0
      %v5170 = vadd.f32 0.0, %v5169
      %v5171 = vpop.f32.mrf.mxu0
      %v5172 = vpop.f32.mrf.mxu0
      %v5173 = vadd.f32 0.0, %v5172
      %v5174 = vpop.f32.mrf.mxu0
      %5175 = vmatprep.mubr.bf16.mxu0 0
      %5176 = vmatmul.mubr.bf16.gmra.mxu0 %v4915
      %v5177 = vpop.f32.mrf.mxu0
      %v5178 = vadd.f32 0.0, %v5177
      %v5179 = vpop.f32.mrf.mxu0
      %v5180 = vpop.f32.mrf.mxu0
      %v5181 = vadd.f32 0.0, %v5180
      %v5182 = vpop.f32.mrf.mxu0
      %5183 = vmatprep.mubr.bf16.mxu0 0
      %5184 = vmatmul.mubr.bf16.gmra.mxu0 %v4918
      %v5185 = vpop.f32.mrf.mxu0
      %v5186 = vadd.f32 0.0, %v5185
      %v5187 = vpop.f32.mrf.mxu0
      %v5188 = vpop.f32.mrf.mxu0
      %v5189 = vadd.f32 0.0, %v5188
      %v5190 = vpop.f32.mrf.mxu0
      %5191 = vmatprep.mubr.bf16.mxu0 0
      %5192 = vmatmul.mubr.bf16.gmra.mxu0 %v4921
      %v5193 = vpop.f32.mrf.mxu0
      %v5194 = vadd.f32 0.0, %v5193
      %v5195 = vpop.f32.mrf.mxu0
      %v5196 = vpop.f32.mrf.mxu0
      %v5197 = vadd.f32 0.0, %v5196
      %v5198 = vpop.f32.mrf.mxu0
      %5199 = vmatprep.mubr.bf16.mxu0 0
      %5200 = vmatmul.mubr.bf16.gmra.mxu0 %v4924
      %v5201 = vpop.f32.mrf.mxu0
      %v5202 = vadd.f32 0.0, %v5201
      %v5203 = vpop.f32.mrf.mxu0
      %v5204 = vpop.f32.mrf.mxu0
      %v5205 = vadd.f32 0.0, %v5204
      %v5206 = vpop.f32.mrf.mxu0
      %5207 = vmatprep.mubr.bf16.mxu0 0
      %5208 = vmatmul.mubr.bf16.gmra.mxu0 %v4927
      %v5209 = vpop.f32.mrf.mxu0
      %v5210 = vadd.f32 0.0, %v5209
      %v5211 = vpop.f32.mrf.mxu0
      %v5212 = vpop.f32.mrf.mxu0
      %v5213 = vadd.f32 0.0, %v5212
      %v5214 = vpop.f32.mrf.mxu0
      %5215 = vmatprep.mubr.bf16.mxu0 0
      %5216 = vmatmul.mubr.bf16.gmra.mxu0 %v4930
      %v5217 = vpop.f32.mrf.mxu0
      %v5218 = vadd.f32 0.0, %v5217
      %v5219 = vpop.f32.mrf.mxu0
      %v5220 = vpop.f32.mrf.mxu0
      %v5221 = vadd.f32 0.0, %v5220
      %v5222 = vpop.f32.mrf.mxu0
      %5223 = vdwg.mxu0
      %v5224 = vadd.f32 %v4672, %v4970
      %v5225 = vadd.f32 %v4673, %v4973
      %v5226 = vadd.f32 %v4674, %v4978
      %v5227 = vadd.f32 %v4675, %v4981
      %v5228 = vadd.f32 %v4676, %v4986
      %v5229 = vadd.f32 %v4677, %v4989
      %v5230 = vadd.f32 %v4678, %v4994
      %v5231 = vadd.f32 %v4679, %v4997
      %v5232 = vadd.f32 %v4680, %v5002
      %v5233 = vadd.f32 %v4681, %v5005
      %v5234 = vadd.f32 %v4682, %v5010
      %v5235 = vadd.f32 %v4683, %v5013
      %v5236 = vadd.f32 %v4684, %v5018
      %v5237 = vadd.f32 %v4685, %v5021
      %v5238 = vadd.f32 %v4686, %v5026
      %v5239 = vadd.f32 %v4687, %v5029
      %v5240 = vadd.f32 %v4688, %v5034
      %v5241 = vadd.f32 %v4689, %v5037
      %v5242 = vadd.f32 %v4690, %v5042
      %v5243 = vadd.f32 %v4691, %v5045
      %v5244 = vadd.f32 %v4692, %v5050
      %v5245 = vadd.f32 %v4693, %v5053
      %v5246 = vadd.f32 %v4694, %v5058
      %v5247 = vadd.f32 %v4695, %v5061
      %v5248 = vadd.f32 %v4696, %v5066
      %v5249 = vadd.f32 %v4697, %v5069
      %v5250 = vadd.f32 %v4698, %v5074
      %v5251 = vadd.f32 %v4699, %v5077
      %v5252 = vadd.f32 %v4700, %v5082
      %v5253 = vadd.f32 %v4701, %v5085
      %v5254 = vadd.f32 %v4702, %v5090
      %v5255 = vadd.f32 %v4703, %v5093
      %v5256 = vadd.f32 %v4704, %v5098
      %v5257 = vadd.f32 %v4705, %v5101
      %v5258 = vadd.f32 %v4706, %v5106
      %v5259 = vadd.f32 %v4707, %v5109
      %v5260 = vadd.f32 %v4708, %v5114
      %v5261 = vadd.f32 %v4709, %v5117
      %v5262 = vadd.f32 %v4710, %v5122
      %v5263 = vadd.f32 %v4711, %v5125
      %v5264 = vadd.f32 %v4712, %v5130
      %v5265 = vadd.f32 %v4713, %v5133
      %v5266 = vadd.f32 %v4714, %v5138
      %v5267 = vadd.f32 %v4715, %v5141
      %v5268 = vadd.f32 %v4716, %v5146
      %v5269 = vadd.f32 %v4717, %v5149
      %v5270 = vadd.f32 %v4718, %v5154
      %v5271 = vadd.f32 %v4719, %v5157
      %v5272 = vadd.f32 %v4720, %v5162
      %v5273 = vadd.f32 %v4721, %v5165
      %v5274 = vadd.f32 %v4722, %v5170
      %v5275 = vadd.f32 %v4723, %v5173
      %v5276 = vadd.f32 %v4724, %v5178
      %v5277 = vadd.f32 %v4725, %v5181
      %v5278 = vadd.f32 %v4726, %v5186
      %v5279 = vadd.f32 %v4727, %v5189
      %v5280 = vadd.f32 %v4728, %v5194
      %v5281 = vadd.f32 %v4729, %v5197
      %v5282 = vadd.f32 %v4730, %v5202
      %v5283 = vadd.f32 %v4731, %v5205
      %v5284 = vadd.f32 %v4732, %v5210
      %v5285 = vadd.f32 %v4733, %v5213
      %v5286 = vadd.f32 %v4734, %v5218
      %v5287 = vadd.f32 %v4735, %v5221
      %v5288 = vld [vmem:[%s3] sm:$0x1]
      %v5290 = vlaneseq
      %v5291 = vshrl.u32 %v5290, 7
      %v5292 = vsub.s32 0, %v5291
      %v5293 = vrot.slane %v5288, %v5292
      %v5295 = vmul.f32 %v5224, %v5293
      %v5296 = vmul.f32 %v5225, %v5293
      %v5297 = vmul.f32 %v5226, %v5293
      %v5298 = vmul.f32 %v5227, %v5293
      %v5299 = vmul.f32 %v5228, %v5293
      %v5300 = vmul.f32 %v5229, %v5293
      %v5301 = vmul.f32 %v5230, %v5293
      %v5302 = vmul.f32 %v5231, %v5293
      %v5303 = vmul.f32 %v5232, %v5293
      %v5304 = vmul.f32 %v5233, %v5293
      %v5305 = vmul.f32 %v5234, %v5293
      %v5306 = vmul.f32 %v5235, %v5293
      %v5307 = vmul.f32 %v5236, %v5293
      %v5308 = vmul.f32 %v5237, %v5293
      %v5309 = vmul.f32 %v5238, %v5293
      %v5310 = vmul.f32 %v5239, %v5293
      %v5311 = vmul.f32 %v5240, %v5293
      %v5312 = vmul.f32 %v5241, %v5293
      %v5313 = vmul.f32 %v5242, %v5293
      %v5314 = vmul.f32 %v5243, %v5293
      %v5315 = vmul.f32 %v5244, %v5293
      %v5316 = vmul.f32 %v5245, %v5293
      %v5317 = vmul.f32 %v5246, %v5293
      %v5318 = vmul.f32 %v5247, %v5293
      %v5319 = vmul.f32 %v5248, %v5293
      %v5320 = vmul.f32 %v5249, %v5293
      %v5321 = vmul.f32 %v5250, %v5293
      %v5322 = vmul.f32 %v5251, %v5293
      %v5323 = vmul.f32 %v5252, %v5293
      %v5324 = vmul.f32 %v5253, %v5293
      %v5325 = vmul.f32 %v5254, %v5293
      %v5326 = vmul.f32 %v5255, %v5293
      %v5327 = vmul.f32 %v5256, %v5293
      %v5328 = vmul.f32 %v5257, %v5293
      %v5329 = vmul.f32 %v5258, %v5293
      %v5330 = vmul.f32 %v5259, %v5293
      %v5331 = vmul.f32 %v5260, %v5293
      %v5332 = vmul.f32 %v5261, %v5293
      %v5333 = vmul.f32 %v5262, %v5293
      %v5334 = vmul.f32 %v5263, %v5293
      %v5335 = vmul.f32 %v5264, %v5293
      %v5336 = vmul.f32 %v5265, %v5293
      %v5337 = vmul.f32 %v5266, %v5293
      %v5338 = vmul.f32 %v5267, %v5293
      %v5339 = vmul.f32 %v5268, %v5293
      %v5340 = vmul.f32 %v5269, %v5293
      %v5341 = vmul.f32 %v5270, %v5293
      %v5342 = vmul.f32 %v5271, %v5293
      %v5343 = vmul.f32 %v5272, %v5293
      %v5344 = vmul.f32 %v5273, %v5293
      %v5345 = vmul.f32 %v5274, %v5293
      %v5346 = vmul.f32 %v5275, %v5293
      %v5347 = vmul.f32 %v5276, %v5293
      %v5348 = vmul.f32 %v5277, %v5293
      %v5349 = vmul.f32 %v5278, %v5293
      %v5350 = vmul.f32 %v5279, %v5293
      %v5351 = vmul.f32 %v5280, %v5293
      %v5352 = vmul.f32 %v5281, %v5293
      %v5353 = vmul.f32 %v5282, %v5293
      %v5354 = vmul.f32 %v5283, %v5293
      %v5355 = vmul.f32 %v5284, %v5293
      %v5356 = vmul.f32 %v5285, %v5293
      %v5357 = vmul.f32 %v5286, %v5293
      %v5358 = vmul.f32 %v5287, %v5293
      %v5359 = vld [vmem:[%s4] sm:$0x1]
      %v5361 = vlaneseq
      %v5362 = vshrl.u32 %v5361, 7
      %v5363 = vsub.s32 0, %v5362
      %v5364 = vrot.slane %v5359, %v5363
      %v5366 = vadd.f32 %v5295, %v5364
      %v5367 = vadd.f32 %v5296, %v5364
      %v5368 = vadd.f32 %v5297, %v5364
      %v5369 = vadd.f32 %v5298, %v5364
      %v5370 = vadd.f32 %v5299, %v5364
      %v5371 = vadd.f32 %v5300, %v5364
      %v5372 = vadd.f32 %v5301, %v5364
      %v5373 = vadd.f32 %v5302, %v5364
      %v5374 = vadd.f32 %v5303, %v5364
      %v5375 = vadd.f32 %v5304, %v5364
      %v5376 = vadd.f32 %v5305, %v5364
      %v5377 = vadd.f32 %v5306, %v5364
      %v5378 = vadd.f32 %v5307, %v5364
      %v5379 = vadd.f32 %v5308, %v5364
      %v5380 = vadd.f32 %v5309, %v5364
      %v5381 = vadd.f32 %v5310, %v5364
      %v5382 = vadd.f32 %v5311, %v5364
      %v5383 = vadd.f32 %v5312, %v5364
      %v5384 = vadd.f32 %v5313, %v5364
      %v5385 = vadd.f32 %v5314, %v5364
      %v5386 = vadd.f32 %v5315, %v5364
      %v5387 = vadd.f32 %v5316, %v5364
      %v5388 = vadd.f32 %v5317, %v5364
      %v5389 = vadd.f32 %v5318, %v5364
      %v5390 = vadd.f32 %v5319, %v5364
      %v5391 = vadd.f32 %v5320, %v5364
      %v5392 = vadd.f32 %v5321, %v5364
      %v5393 = vadd.f32 %v5322, %v5364
      %v5394 = vadd.f32 %v5323, %v5364
      %v5395 = vadd.f32 %v5324, %v5364
      %v5396 = vadd.f32 %v5325, %v5364
      %v5397 = vadd.f32 %v5326, %v5364
      %v5398 = vadd.f32 %v5327, %v5364
      %v5399 = vadd.f32 %v5328, %v5364
      %v5400 = vadd.f32 %v5329, %v5364
      %v5401 = vadd.f32 %v5330, %v5364
      %v5402 = vadd.f32 %v5331, %v5364
      %v5403 = vadd.f32 %v5332, %v5364
      %v5404 = vadd.f32 %v5333, %v5364
      %v5405 = vadd.f32 %v5334, %v5364
      %v5406 = vadd.f32 %v5335, %v5364
      %v5407 = vadd.f32 %v5336, %v5364
      %v5408 = vadd.f32 %v5337, %v5364
      %v5409 = vadd.f32 %v5338, %v5364
      %v5410 = vadd.f32 %v5339, %v5364
      %v5411 = vadd.f32 %v5340, %v5364
      %v5412 = vadd.f32 %v5341, %v5364
      %v5413 = vadd.f32 %v5342, %v5364
      %v5414 = vadd.f32 %v5343, %v5364
      %v5415 = vadd.f32 %v5344, %v5364
      %v5416 = vadd.f32 %v5345, %v5364
      %v5417 = vadd.f32 %v5346, %v5364
      %v5418 = vadd.f32 %v5347, %v5364
      %v5419 = vadd.f32 %v5348, %v5364
      %v5420 = vadd.f32 %v5349, %v5364
      %v5421 = vadd.f32 %v5350, %v5364
      %v5422 = vadd.f32 %v5351, %v5364
      %v5423 = vadd.f32 %v5352, %v5364
      %v5424 = vadd.f32 %v5353, %v5364
      %v5425 = vadd.f32 %v5354, %v5364
      %v5426 = vadd.f32 %v5355, %v5364
      %v5427 = vadd.f32 %v5356, %v5364
      %v5428 = vadd.f32 %v5357, %v5364
      %v5429 = vadd.f32 %v5358, %v5364
      %v5430 = vmax.f32 %v5366, 0.0
      %v5431 = vmax.f32 %v5367, 0.0
      %v5432 = vmax.f32 %v5368, 0.0
      %v5433 = vmax.f32 %v5369, 0.0
      %v5434 = vmax.f32 %v5370, 0.0
      %v5435 = vmax.f32 %v5371, 0.0
      %v5436 = vmax.f32 %v5372, 0.0
      %v5437 = vmax.f32 %v5373, 0.0
      %v5438 = vmax.f32 %v5374, 0.0
      %v5439 = vmax.f32 %v5375, 0.0
      %v5440 = vmax.f32 %v5376, 0.0
      %v5441 = vmax.f32 %v5377, 0.0
      %v5442 = vmax.f32 %v5378, 0.0
      %v5443 = vmax.f32 %v5379, 0.0
      %v5444 = vmax.f32 %v5380, 0.0
      %v5445 = vmax.f32 %v5381, 0.0
      %v5446 = vmax.f32 %v5382, 0.0
      %v5447 = vmax.f32 %v5383, 0.0
      %v5448 = vmax.f32 %v5384, 0.0
      %v5449 = vmax.f32 %v5385, 0.0
      %v5450 = vmax.f32 %v5386, 0.0
      %v5451 = vmax.f32 %v5387, 0.0
      %v5452 = vmax.f32 %v5388, 0.0
      %v5453 = vmax.f32 %v5389, 0.0
      %v5454 = vmax.f32 %v5390, 0.0
      %v5455 = vmax.f32 %v5391, 0.0
      %v5456 = vmax.f32 %v5392, 0.0
      %v5457 = vmax.f32 %v5393, 0.0
      %v5458 = vmax.f32 %v5394, 0.0
      %v5459 = vmax.f32 %v5395, 0.0
      %v5460 = vmax.f32 %v5396, 0.0
      %v5461 = vmax.f32 %v5397, 0.0
      %v5462 = vmax.f32 %v5398, 0.0
      %v5463 = vmax.f32 %v5399, 0.0
      %v5464 = vmax.f32 %v5400, 0.0
      %v5465 = vmax.f32 %v5401, 0.0
      %v5466 = vmax.f32 %v5402, 0.0
      %v5467 = vmax.f32 %v5403, 0.0
      %v5468 = vmax.f32 %v5404, 0.0
      %v5469 = vmax.f32 %v5405, 0.0
      %v5470 = vmax.f32 %v5406, 0.0
      %v5471 = vmax.f32 %v5407, 0.0
      %v5472 = vmax.f32 %v5408, 0.0
      %v5473 = vmax.f32 %v5409, 0.0
      %v5474 = vmax.f32 %v5410, 0.0
      %v5475 = vmax.f32 %v5411, 0.0
      %v5476 = vmax.f32 %v5412, 0.0
      %v5477 = vmax.f32 %v5413, 0.0
      %v5478 = vmax.f32 %v5414, 0.0
      %v5479 = vmax.f32 %v5415, 0.0
      %v5480 = vmax.f32 %v5416, 0.0
      %v5481 = vmax.f32 %v5417, 0.0
      %v5482 = vmax.f32 %v5418, 0.0
      %v5483 = vmax.f32 %v5419, 0.0
      %v5484 = vmax.f32 %v5420, 0.0
      %v5485 = vmax.f32 %v5421, 0.0
      %v5486 = vmax.f32 %v5422, 0.0
      %v5487 = vmax.f32 %v5423, 0.0
      %v5488 = vmax.f32 %v5424, 0.0
      %v5489 = vmax.f32 %v5425, 0.0
      %v5490 = vmax.f32 %v5426, 0.0
      %v5491 = vmax.f32 %v5427, 0.0
      %v5492 = vmax.f32 %v5428, 0.0
      %v5493 = vmax.f32 %v5429, 0.0
      %v5494 = vpack.c.bf16 %v5431, %v5430
      %v5495 = vpack.c.bf16 %v5433, %v5432
      %v5496 = vpack.c.bf16 %v5435, %v5434
      %v5497 = vpack.c.bf16 %v5437, %v5436
      %v5498 = vpack.c.bf16 %v5439, %v5438
      %v5499 = vpack.c.bf16 %v5441, %v5440
      %v5500 = vpack.c.bf16 %v5443, %v5442
      %v5501 = vpack.c.bf16 %v5445, %v5444
      %v5502 = vpack.c.bf16 %v5447, %v5446
      %v5503 = vpack.c.bf16 %v5449, %v5448
      %v5504 = vpack.c.bf16 %v5451, %v5450
      %v5505 = vpack.c.bf16 %v5453, %v5452
      %v5506 = vpack.c.bf16 %v5455, %v5454
      %v5507 = vpack.c.bf16 %v5457, %v5456
      %v5508 = vpack.c.bf16 %v5459, %v5458
      %v5509 = vpack.c.bf16 %v5461, %v5460
      %v5510 = vpack.c.bf16 %v5463, %v5462
      %v5511 = vpack.c.bf16 %v5465, %v5464
      %v5512 = vpack.c.bf16 %v5467, %v5466
      %v5513 = vpack.c.bf16 %v5469, %v5468
      %v5514 = vpack.c.bf16 %v5471, %v5470
      %v5515 = vpack.c.bf16 %v5473, %v5472
      %v5516 = vpack.c.bf16 %v5475, %v5474
      %v5517 = vpack.c.bf16 %v5477, %v5476
      %v5518 = vpack.c.bf16 %v5479, %v5478
      %v5519 = vpack.c.bf16 %v5481, %v5480
      %v5520 = vpack.c.bf16 %v5483, %v5482
      %v5521 = vpack.c.bf16 %v5485, %v5484
      %v5522 = vpack.c.bf16 %v5487, %v5486
      %v5523 = vpack.c.bf16 %v5489, %v5488
      %v5524 = vpack.c.bf16 %v5491, %v5490
      %v5525 = vpack.c.bf16 %v5493, %v5492
      %v5526 = vld [vmem:[%s5] sm:$0xf]
      %v5528 = vsel %vm646, %v5494, 0
      %v5531 = vsel %vm646, %v5495, 0
      %v5534 = vsel %vm646, %v5496, 0
      %v5537 = vsel %vm646, %v5497, 0
      %v5540 = vsel %vm646, %v5498, 0
      %v5543 = vsel %vm646, %v5499, 0
      %v5546 = vsel %vm646, %v5500, 0
      %v5549 = vsel %vm646, %v5501, 0
      %v5552 = vsel %vm646, %v5502, 0
      %v5555 = vsel %vm646, %v5503, 0
      %v5558 = vsel %vm646, %v5504, 0
      %v5561 = vsel %vm646, %v5505, 0
      %v5564 = vsel %vm646, %v5506, 0
      %v5567 = vsel %vm646, %v5507, 0
      %v5570 = vsel %vm646, %v5508, 0
      %v5573 = vsel %vm646, %v5509, 0
      %v5576 = vsel %vm646, %v5510, 0
      %v5579 = vsel %vm646, %v5511, 0
      %v5582 = vsel %vm646, %v5512, 0
      %v5585 = vsel %vm646, %v5513, 0
      %v5588 = vsel %vm646, %v5514, 0
      %v5591 = vsel %vm646, %v5515, 0
      %v5594 = vsel %vm646, %v5516, 0
      %v5597 = vsel %vm646, %v5517, 0
      %v5600 = vsel %vm646, %v5518, 0
      %v5603 = vsel %vm646, %v5519, 0
      %v5606 = vsel %vm646, %v5520, 0
      %v5609 = vsel %vm646, %v5521, 0
      %v5612 = vsel %vm646, %v5522, 0
      %v5615 = vsel %vm646, %v5523, 0
      %v5618 = vsel %vm646, %v5524, 0
      %v5621 = vsel %vm646, %v5525, 0
      %v5624 = vsel %vm743, %v5526, 0
      %5626 = vmatprep.subr.bf16.mxu0 0
      %5627 = vmatpush1.bf16.msra.mxu0 0
      %5628 = vmatprep.subr.bf16.mxu0 0
      %5629 = vmatpush1.bf16.msra.mxu0 0
      %5630 = vmatprep.subr.bf16.mxu0 0
      %5631 = vmatpush1.bf16.msra.mxu0 0
      %5632 = vmatprep.subr.bf16.mxu0 0
      %5633 = vmatpush1.bf16.msra.mxu0 0
      %5634 = vmatprep.subr.bf16.mxu0 0
      %5635 = vmatpush1.bf16.msra.mxu0 0
      %5636 = vmatprep.subr.bf16.mxu0 0
      %5637 = vmatpush1.bf16.msra.mxu0 0
      %5638 = vmatprep.subr.bf16.mxu0 0
      %5639 = vmatpush1.bf16.msra.mxu0 0
      %5640 = vmatprep.subr.bf16.mxu0 0
      %5641 = vmatpush1.bf16.msra.mxu0 %v5624
      %5642 = vmatprep.subr.bf16.mxu0 0
      %5643 = vmatpush2.bf16.msra.mxu0 0
      %5644 = vmatprep.subr.bf16.mxu0 0
      %5645 = vmatpush2.bf16.msra.mxu0 0
      %5646 = vmatprep.subr.bf16.mxu0 0
      %5647 = vmatpush2.bf16.msra.mxu0 0
      %5648 = vmatprep.subr.bf16.mxu0 0
      %5649 = vmatpush2.bf16.msra.mxu0 0
      %5650 = vmatprep.subr.bf16.mxu0 0
      %5651 = vmatpush2.bf16.msra.mxu0 0
      %5652 = vmatprep.subr.bf16.mxu0 0
      %5653 = vmatpush2.bf16.msra.mxu0 0
      %5654 = vmatprep.subr.bf16.mxu0 0
      %5655 = vmatpush2.bf16.msra.mxu0 0
      %5656 = vmatprep.subr.bf16.mxu0 0
      %5657 = vmatpush2.bf16.msra.mxu0 0
      %5658 = vmatprep.mubr.bf16.mxu0 0
      %5659 = vmatmul.mubr.bf16.gmra.mxu0 %v5528
      %v5660 = vpop.f32.mrf.mxu0
      %v5661 = vadd.f32 0.0, %v5660
      %v5662 = vpop.f32.mrf.mxu0
      %v5663 = vpop.f32.mrf.mxu0
      %v5664 = vadd.f32 0.0, %v5663
      %v5665 = vpop.f32.mrf.mxu0
      %5666 = vmatprep.mubr.bf16.mxu0 0
      %5667 = vmatmul.mubr.bf16.gmra.mxu0 %v5531
      %v5668 = vpop.f32.mrf.mxu0
      %v5669 = vadd.f32 0.0, %v5668
      %v5670 = vpop.f32.mrf.mxu0
      %v5671 = vpop.f32.mrf.mxu0
      %v5672 = vadd.f32 0.0, %v5671
      %v5673 = vpop.f32.mrf.mxu0
      %5674 = vmatprep.mubr.bf16.mxu0 0
      %5675 = vmatmul.mubr.bf16.gmra.mxu0 %v5534
      %v5676 = vpop.f32.mrf.mxu0
      %v5677 = vadd.f32 0.0, %v5676
      %v5678 = vpop.f32.mrf.mxu0
      %v5679 = vpop.f32.mrf.mxu0
      %v5680 = vadd.f32 0.0, %v5679
      %v5681 = vpop.f32.mrf.mxu0
      %5682 = vmatprep.mubr.bf16.mxu0 0
      %5683 = vmatmul.mubr.bf16.gmra.mxu0 %v5537
      %v5684 = vpop.f32.mrf.mxu0
      %v5685 = vadd.f32 0.0, %v5684
      %v5686 = vpop.f32.mrf.mxu0
      %v5687 = vpop.f32.mrf.mxu0
      %v5688 = vadd.f32 0.0, %v5687
      %v5689 = vpop.f32.mrf.mxu0
      %5690 = vmatprep.mubr.bf16.mxu0 0
      %5691 = vmatmul.mubr.bf16.gmra.mxu0 %v5540
      %v5692 = vpop.f32.mrf.mxu0
      %v5693 = vadd.f32 0.0, %v5692
      %v5694 = vpop.f32.mrf.mxu0
      %v5695 = vpop.f32.mrf.mxu0
      %v5696 = vadd.f32 0.0, %v5695
      %v5697 = vpop.f32.mrf.mxu0
      %5698 = vmatprep.mubr.bf16.mxu0 0
      %5699 = vmatmul.mubr.bf16.gmra.mxu0 %v5543
      %v5700 = vpop.f32.mrf.mxu0
      %v5701 = vadd.f32 0.0, %v5700
      %v5702 = vpop.f32.mrf.mxu0
      %v5703 = vpop.f32.mrf.mxu0
      %v5704 = vadd.f32 0.0, %v5703
      %v5705 = vpop.f32.mrf.mxu0
      %5706 = vmatprep.mubr.bf16.mxu0 0
      %5707 = vmatmul.mubr.bf16.gmra.mxu0 %v5546
      %v5708 = vpop.f32.mrf.mxu0
      %v5709 = vadd.f32 0.0, %v5708
      %v5710 = vpop.f32.mrf.mxu0
      %v5711 = vpop.f32.mrf.mxu0
      %v5712 = vadd.f32 0.0, %v5711
      %v5713 = vpop.f32.mrf.mxu0
      %5714 = vmatprep.mubr.bf16.mxu0 0
      %5715 = vmatmul.mubr.bf16.gmra.mxu0 %v5549
      %v5716 = vpop.f32.mrf.mxu0
      %v5717 = vadd.f32 0.0, %v5716
      %v5718 = vpop.f32.mrf.mxu0
      %v5719 = vpop.f32.mrf.mxu0
      %v5720 = vadd.f32 0.0, %v5719
      %v5721 = vpop.f32.mrf.mxu0
      %5722 = vmatprep.mubr.bf16.mxu0 0
      %5723 = vmatmul.mubr.bf16.gmra.mxu0 %v5552
      %v5724 = vpop.f32.mrf.mxu0
      %v5725 = vadd.f32 0.0, %v5724
      %v5726 = vpop.f32.mrf.mxu0
      %v5727 = vpop.f32.mrf.mxu0
      %v5728 = vadd.f32 0.0, %v5727
      %v5729 = vpop.f32.mrf.mxu0
      %5730 = vmatprep.mubr.bf16.mxu0 0
      %5731 = vmatmul.mubr.bf16.gmra.mxu0 %v5555
      %v5732 = vpop.f32.mrf.mxu0
      %v5733 = vadd.f32 0.0, %v5732
      %v5734 = vpop.f32.mrf.mxu0
      %v5735 = vpop.f32.mrf.mxu0
      %v5736 = vadd.f32 0.0, %v5735
      %v5737 = vpop.f32.mrf.mxu0
      %5738 = vmatprep.mubr.bf16.mxu0 0
      %5739 = vmatmul.mubr.bf16.gmra.mxu0 %v5558
      %v5740 = vpop.f32.mrf.mxu0
      %v5741 = vadd.f32 0.0, %v5740
      %v5742 = vpop.f32.mrf.mxu0
      %v5743 = vpop.f32.mrf.mxu0
      %v5744 = vadd.f32 0.0, %v5743
      %v5745 = vpop.f32.mrf.mxu0
      %5746 = vmatprep.mubr.bf16.mxu0 0
      %5747 = vmatmul.mubr.bf16.gmra.mxu0 %v5561
      %v5748 = vpop.f32.mrf.mxu0
      %v5749 = vadd.f32 0.0, %v5748
      %v5750 = vpop.f32.mrf.mxu0
      %v5751 = vpop.f32.mrf.mxu0
      %v5752 = vadd.f32 0.0, %v5751
      %v5753 = vpop.f32.mrf.mxu0
      %5754 = vmatprep.mubr.bf16.mxu0 0
      %5755 = vmatmul.mubr.bf16.gmra.mxu0 %v5564
      %v5756 = vpop.f32.mrf.mxu0
      %v5757 = vadd.f32 0.0, %v5756
      %v5758 = vpop.f32.mrf.mxu0
      %v5759 = vpop.f32.mrf.mxu0
      %v5760 = vadd.f32 0.0, %v5759
      %v5761 = vpop.f32.mrf.mxu0
      %5762 = vmatprep.mubr.bf16.mxu0 0
      %5763 = vmatmul.mubr.bf16.gmra.mxu0 %v5567
      %v5764 = vpop.f32.mrf.mxu0
      %v5765 = vadd.f32 0.0, %v5764
      %v5766 = vpop.f32.mrf.mxu0
      %v5767 = vpop.f32.mrf.mxu0
      %v5768 = vadd.f32 0.0, %v5767
      %v5769 = vpop.f32.mrf.mxu0
      %5770 = vmatprep.mubr.bf16.mxu0 0
      %5771 = vmatmul.mubr.bf16.gmra.mxu0 %v5570
      %v5772 = vpop.f32.mrf.mxu0
      %v5773 = vadd.f32 0.0, %v5772
      %v5774 = vpop.f32.mrf.mxu0
      %v5775 = vpop.f32.mrf.mxu0
      %v5776 = vadd.f32 0.0, %v5775
      %v5777 = vpop.f32.mrf.mxu0
      %5778 = vmatprep.mubr.bf16.mxu0 0
      %5779 = vmatmul.mubr.bf16.gmra.mxu0 %v5573
      %v5780 = vpop.f32.mrf.mxu0
      %v5781 = vadd.f32 0.0, %v5780
      %v5782 = vpop.f32.mrf.mxu0
      %v5783 = vpop.f32.mrf.mxu0
      %v5784 = vadd.f32 0.0, %v5783
      %v5785 = vpop.f32.mrf.mxu0
      %5786 = vmatprep.mubr.bf16.mxu0 0
      %5787 = vmatmul.mubr.bf16.gmra.mxu0 %v5576
      %v5788 = vpop.f32.mrf.mxu0
      %v5789 = vadd.f32 0.0, %v5788
      %v5790 = vpop.f32.mrf.mxu0
      %v5791 = vpop.f32.mrf.mxu0
      %v5792 = vadd.f32 0.0, %v5791
      %v5793 = vpop.f32.mrf.mxu0
      %5794 = vmatprep.mubr.bf16.mxu0 0
      %5795 = vmatmul.mubr.bf16.gmra.mxu0 %v5579
      %v5796 = vpop.f32.mrf.mxu0
      %v5797 = vadd.f32 0.0, %v5796
      %v5798 = vpop.f32.mrf.mxu0
      %v5799 = vpop.f32.mrf.mxu0
      %v5800 = vadd.f32 0.0, %v5799
      %v5801 = vpop.f32.mrf.mxu0
      %5802 = vmatprep.mubr.bf16.mxu0 0
      %5803 = vmatmul.mubr.bf16.gmra.mxu0 %v5582
      %v5804 = vpop.f32.mrf.mxu0
      %v5805 = vadd.f32 0.0, %v5804
      %v5806 = vpop.f32.mrf.mxu0
      %v5807 = vpop.f32.mrf.mxu0
      %v5808 = vadd.f32 0.0, %v5807
      %v5809 = vpop.f32.mrf.mxu0
      %5810 = vmatprep.mubr.bf16.mxu0 0
      %5811 = vmatmul.mubr.bf16.gmra.mxu0 %v5585
      %v5812 = vpop.f32.mrf.mxu0
      %v5813 = vadd.f32 0.0, %v5812
      %v5814 = vpop.f32.mrf.mxu0
      %v5815 = vpop.f32.mrf.mxu0
      %v5816 = vadd.f32 0.0, %v5815
      %v5817 = vpop.f32.mrf.mxu0
      %5818 = vmatprep.mubr.bf16.mxu0 0
      %5819 = vmatmul.mubr.bf16.gmra.mxu0 %v5588
      %v5820 = vpop.f32.mrf.mxu0
      %v5821 = vadd.f32 0.0, %v5820
      %v5822 = vpop.f32.mrf.mxu0
      %v5823 = vpop.f32.mrf.mxu0
      %v5824 = vadd.f32 0.0, %v5823
      %v5825 = vpop.f32.mrf.mxu0
      %5826 = vmatprep.mubr.bf16.mxu0 0
      %5827 = vmatmul.mubr.bf16.gmra.mxu0 %v5591
      %v5828 = vpop.f32.mrf.mxu0
      %v5829 = vadd.f32 0.0, %v5828
      %v5830 = vpop.f32.mrf.mxu0
      %v5831 = vpop.f32.mrf.mxu0
      %v5832 = vadd.f32 0.0, %v5831
      %v5833 = vpop.f32.mrf.mxu0
      %5834 = vmatprep.mubr.bf16.mxu0 0
      %5835 = vmatmul.mubr.bf16.gmra.mxu0 %v5594
      %v5836 = vpop.f32.mrf.mxu0
      %v5837 = vadd.f32 0.0, %v5836
      %v5838 = vpop.f32.mrf.mxu0
      %v5839 = vpop.f32.mrf.mxu0
      %v5840 = vadd.f32 0.0, %v5839
      %v5841 = vpop.f32.mrf.mxu0
      %5842 = vmatprep.mubr.bf16.mxu0 0
      %5843 = vmatmul.mubr.bf16.gmra.mxu0 %v5597
      %v5844 = vpop.f32.mrf.mxu0
      %v5845 = vadd.f32 0.0, %v5844
      %v5846 = vpop.f32.mrf.mxu0
      %v5847 = vpop.f32.mrf.mxu0
      %v5848 = vadd.f32 0.0, %v5847
      %v5849 = vpop.f32.mrf.mxu0
      %5850 = vmatprep.mubr.bf16.mxu0 0
      %5851 = vmatmul.mubr.bf16.gmra.mxu0 %v5600
      %v5852 = vpop.f32.mrf.mxu0
      %v5853 = vadd.f32 0.0, %v5852
      %v5854 = vpop.f32.mrf.mxu0
      %v5855 = vpop.f32.mrf.mxu0
      %v5856 = vadd.f32 0.0, %v5855
      %v5857 = vpop.f32.mrf.mxu0
      %5858 = vmatprep.mubr.bf16.mxu0 0
      %5859 = vmatmul.mubr.bf16.gmra.mxu0 %v5603
      %v5860 = vpop.f32.mrf.mxu0
      %v5861 = vadd.f32 0.0, %v5860
      %v5862 = vpop.f32.mrf.mxu0
      %v5863 = vpop.f32.mrf.mxu0
      %v5864 = vadd.f32 0.0, %v5863
      %v5865 = vpop.f32.mrf.mxu0
      %5866 = vmatprep.mubr.bf16.mxu0 0
      %5867 = vmatmul.mubr.bf16.gmra.mxu0 %v5606
      %v5868 = vpop.f32.mrf.mxu0
      %v5869 = vadd.f32 0.0, %v5868
      %v5870 = vpop.f32.mrf.mxu0
      %v5871 = vpop.f32.mrf.mxu0
      %v5872 = vadd.f32 0.0, %v5871
      %v5873 = vpop.f32.mrf.mxu0
      %5874 = vmatprep.mubr.bf16.mxu0 0
      %5875 = vmatmul.mubr.bf16.gmra.mxu0 %v5609
      %v5876 = vpop.f32.mrf.mxu0
      %v5877 = vadd.f32 0.0, %v5876
      %v5878 = vpop.f32.mrf.mxu0
      %v5879 = vpop.f32.mrf.mxu0
      %v5880 = vadd.f32 0.0, %v5879
      %v5881 = vpop.f32.mrf.mxu0
      %5882 = vmatprep.mubr.bf16.mxu0 0
      %5883 = vmatmul.mubr.bf16.gmra.mxu0 %v5612
      %v5884 = vpop.f32.mrf.mxu0
      %v5885 = vadd.f32 0.0, %v5884
      %v5886 = vpop.f32.mrf.mxu0
      %v5887 = vpop.f32.mrf.mxu0
      %v5888 = vadd.f32 0.0, %v5887
      %v5889 = vpop.f32.mrf.mxu0
      %5890 = vmatprep.mubr.bf16.mxu0 0
      %5891 = vmatmul.mubr.bf16.gmra.mxu0 %v5615
      %v5892 = vpop.f32.mrf.mxu0
      %v5893 = vadd.f32 0.0, %v5892
      %v5894 = vpop.f32.mrf.mxu0
      %v5895 = vpop.f32.mrf.mxu0
      %v5896 = vadd.f32 0.0, %v5895
      %v5897 = vpop.f32.mrf.mxu0
      %5898 = vmatprep.mubr.bf16.mxu0 0
      %5899 = vmatmul.mubr.bf16.gmra.mxu0 %v5618
      %v5900 = vpop.f32.mrf.mxu0
      %v5901 = vadd.f32 0.0, %v5900
      %v5902 = vpop.f32.mrf.mxu0
      %v5903 = vpop.f32.mrf.mxu0
      %v5904 = vadd.f32 0.0, %v5903
      %v5905 = vpop.f32.mrf.mxu0
      %5906 = vmatprep.mubr.bf16.mxu0 0
      %5907 = vmatmul.mubr.bf16.gmra.mxu0 %v5621
      %v5908 = vpop.f32.mrf.mxu0
      %v5909 = vadd.f32 0.0, %v5908
      %v5910 = vpop.f32.mrf.mxu0
      %v5911 = vpop.f32.mrf.mxu0
      %v5912 = vadd.f32 0.0, %v5911
      %v5913 = vpop.f32.mrf.mxu0
      %5914 = vdwg.mxu0
      %v5915 = vld [vmem:[%s6] sm:$0x1]
      %v5917 = vlaneseq
      %v5918 = vshrl.u32 %v5917, 7
      %v5919 = vsub.s32 0, %v5918
      %v5920 = vrot.slane %v5915, %v5919
      %v5922 = vmul.f32 %v5661, %v5920
      %v5923 = vmul.f32 %v5664, %v5920
      %v5924 = vmul.f32 %v5669, %v5920
      %v5925 = vmul.f32 %v5672, %v5920
      %v5926 = vmul.f32 %v5677, %v5920
      %v5927 = vmul.f32 %v5680, %v5920
      %v5928 = vmul.f32 %v5685, %v5920
      %v5929 = vmul.f32 %v5688, %v5920
      %v5930 = vmul.f32 %v5693, %v5920
      %v5931 = vmul.f32 %v5696, %v5920
      %v5932 = vmul.f32 %v5701, %v5920
      %v5933 = vmul.f32 %v5704, %v5920
      %v5934 = vmul.f32 %v5709, %v5920
      %v5935 = vmul.f32 %v5712, %v5920
      %v5936 = vmul.f32 %v5717, %v5920
      %v5937 = vmul.f32 %v5720, %v5920
      %v5938 = vmul.f32 %v5725, %v5920
      %v5939 = vmul.f32 %v5728, %v5920
      %v5940 = vmul.f32 %v5733, %v5920
      %v5941 = vmul.f32 %v5736, %v5920
      %v5942 = vmul.f32 %v5741, %v5920
      %v5943 = vmul.f32 %v5744, %v5920
      %v5944 = vmul.f32 %v5749, %v5920
      %v5945 = vmul.f32 %v5752, %v5920
      %v5946 = vmul.f32 %v5757, %v5920
      %v5947 = vmul.f32 %v5760, %v5920
      %v5948 = vmul.f32 %v5765, %v5920
      %v5949 = vmul.f32 %v5768, %v5920
      %v5950 = vmul.f32 %v5773, %v5920
      %v5951 = vmul.f32 %v5776, %v5920
      %v5952 = vmul.f32 %v5781, %v5920
      %v5953 = vmul.f32 %v5784, %v5920
      %v5954 = vmul.f32 %v5789, %v5920
      %v5955 = vmul.f32 %v5792, %v5920
      %v5956 = vmul.f32 %v5797, %v5920
      %v5957 = vmul.f32 %v5800, %v5920
      %v5958 = vmul.f32 %v5805, %v5920
      %v5959 = vmul.f32 %v5808, %v5920
      %v5960 = vmul.f32 %v5813, %v5920
      %v5961 = vmul.f32 %v5816, %v5920
      %v5962 = vmul.f32 %v5821, %v5920
      %v5963 = vmul.f32 %v5824, %v5920
      %v5964 = vmul.f32 %v5829, %v5920
      %v5965 = vmul.f32 %v5832, %v5920
      %v5966 = vmul.f32 %v5837, %v5920
      %v5967 = vmul.f32 %v5840, %v5920
      %v5968 = vmul.f32 %v5845, %v5920
      %v5969 = vmul.f32 %v5848, %v5920
      %v5970 = vmul.f32 %v5853, %v5920
      %v5971 = vmul.f32 %v5856, %v5920
      %v5972 = vmul.f32 %v5861, %v5920
      %v5973 = vmul.f32 %v5864, %v5920
      %v5974 = vmul.f32 %v5869, %v5920
      %v5975 = vmul.f32 %v5872, %v5920
      %v5976 = vmul.f32 %v5877, %v5920
      %v5977 = vmul.f32 %v5880, %v5920
      %v5978 = vmul.f32 %v5885, %v5920
      %v5979 = vmul.f32 %v5888, %v5920
      %v5980 = vmul.f32 %v5893, %v5920
      %v5981 = vmul.f32 %v5896, %v5920
      %v5982 = vmul.f32 %v5901, %v5920
      %v5983 = vmul.f32 %v5904, %v5920
      %v5984 = vmul.f32 %v5909, %v5920
      %v5985 = vmul.f32 %v5912, %v5920
      %v5986 = vld [vmem:[%s7] sm:$0x1]
      %v5988 = vlaneseq
      %v5989 = vshrl.u32 %v5988, 7
      %v5990 = vsub.s32 0, %v5989
      %v5991 = vrot.slane %v5986, %v5990
      %v5993 = vadd.f32 %v5922, %v5991
      %v5994 = vadd.f32 %v5923, %v5991
      %v5995 = vadd.f32 %v5924, %v5991
      %v5996 = vadd.f32 %v5925, %v5991
      %v5997 = vadd.f32 %v5926, %v5991
      %v5998 = vadd.f32 %v5927, %v5991
      %v5999 = vadd.f32 %v5928, %v5991
      %v6000 = vadd.f32 %v5929, %v5991
      %v6001 = vadd.f32 %v5930, %v5991
      %v6002 = vadd.f32 %v5931, %v5991
      %v6003 = vadd.f32 %v5932, %v5991
      %v6004 = vadd.f32 %v5933, %v5991
      %v6005 = vadd.f32 %v5934, %v5991
      %v6006 = vadd.f32 %v5935, %v5991
      %v6007 = vadd.f32 %v5936, %v5991
      %v6008 = vadd.f32 %v5937, %v5991
      %v6009 = vadd.f32 %v5938, %v5991
      %v6010 = vadd.f32 %v5939, %v5991
      %v6011 = vadd.f32 %v5940, %v5991
      %v6012 = vadd.f32 %v5941, %v5991
      %v6013 = vadd.f32 %v5942, %v5991
      %v6014 = vadd.f32 %v5943, %v5991
      %v6015 = vadd.f32 %v5944, %v5991
      %v6016 = vadd.f32 %v5945, %v5991
      %v6017 = vadd.f32 %v5946, %v5991
      %v6018 = vadd.f32 %v5947, %v5991
      %v6019 = vadd.f32 %v5948, %v5991
      %v6020 = vadd.f32 %v5949, %v5991
      %v6021 = vadd.f32 %v5950, %v5991
      %v6022 = vadd.f32 %v5951, %v5991
      %v6023 = vadd.f32 %v5952, %v5991
      %v6024 = vadd.f32 %v5953, %v5991
      %v6025 = vadd.f32 %v5954, %v5991
      %v6026 = vadd.f32 %v5955, %v5991
      %v6027 = vadd.f32 %v5956, %v5991
      %v6028 = vadd.f32 %v5957, %v5991
      %v6029 = vadd.f32 %v5958, %v5991
      %v6030 = vadd.f32 %v5959, %v5991
      %v6031 = vadd.f32 %v5960, %v5991
      %v6032 = vadd.f32 %v5961, %v5991
      %v6033 = vadd.f32 %v5962, %v5991
      %v6034 = vadd.f32 %v5963, %v5991
      %v6035 = vadd.f32 %v5964, %v5991
      %v6036 = vadd.f32 %v5965, %v5991
      %v6037 = vadd.f32 %v5966, %v5991
      %v6038 = vadd.f32 %v5967, %v5991
      %v6039 = vadd.f32 %v5968, %v5991
      %v6040 = vadd.f32 %v5969, %v5991
      %v6041 = vadd.f32 %v5970, %v5991
      %v6042 = vadd.f32 %v5971, %v5991
      %v6043 = vadd.f32 %v5972, %v5991
      %v6044 = vadd.f32 %v5973, %v5991
      %v6045 = vadd.f32 %v5974, %v5991
      %v6046 = vadd.f32 %v5975, %v5991
      %v6047 = vadd.f32 %v5976, %v5991
      %v6048 = vadd.f32 %v5977, %v5991
      %v6049 = vadd.f32 %v5978, %v5991
      %v6050 = vadd.f32 %v5979, %v5991
      %v6051 = vadd.f32 %v5980, %v5991
      %v6052 = vadd.f32 %v5981, %v5991
      %v6053 = vadd.f32 %v5982, %v5991
      %v6054 = vadd.f32 %v5983, %v5991
      %v6055 = vadd.f32 %v5984, %v5991
      %v6056 = vadd.f32 %v5985, %v5991
      %v6057 = vld [vmem:[%s434] sm:$0xf]
      %v6058 = vld [vmem:[%s434 + $0x4] sm:$0xf]
      %v6059 = vld [vmem:[%s434 + $0x8] sm:$0xf]
      %v6060 = vld [vmem:[%s434 + $0xc] sm:$0xf]
      %v6061 = vld [vmem:[%s434 + $0x10] sm:$0xf]
      %v6062 = vld [vmem:[%s434 + $0x14] sm:$0xf]
      %v6063 = vld [vmem:[%s434 + $0x18] sm:$0xf]
      %v6064 = vld [vmem:[%s434 + $0x1c] sm:$0xf]
      %v6065 = vld [vmem:[%s434 + $0x20] sm:$0xf]
      %v6066 = vld [vmem:[%s434 + $0x24] sm:$0xf]
      %v6067 = vld [vmem:[%s434 + $0x28] sm:$0xf]
      %v6068 = vld [vmem:[%s434 + $0x2c] sm:$0xf]
      %v6069 = vld [vmem:[%s434 + $0x30] sm:$0xf]
      %v6070 = vld [vmem:[%s434 + $0x34] sm:$0xf]
      %v6071 = vld [vmem:[%s434 + $0x38] sm:$0xf]
      %v6072 = vld [vmem:[%s434 + $0x3c] sm:$0xf]
      %v6073 = vld [vmem:[%s434 + $0x40] sm:$0xf]
      %v6074 = vld [vmem:[%s434 + $0x44] sm:$0xf]
      %v6075 = vld [vmem:[%s434 + $0x48] sm:$0xf]
      %v6076 = vld [vmem:[%s434 + $0x4c] sm:$0xf]
      %v6077 = vld [vmem:[%s434 + $0x50] sm:$0xf]
      %v6078 = vld [vmem:[%s434 + $0x54] sm:$0xf]
      %v6079 = vld [vmem:[%s434 + $0x58] sm:$0xf]
      %v6080 = vld [vmem:[%s434 + $0x5c] sm:$0xf]
      %v6081 = vld [vmem:[%s434 + $0x60] sm:$0xf]
      %v6082 = vld [vmem:[%s434 + $0x64] sm:$0xf]
      %v6083 = vld [vmem:[%s434 + $0x68] sm:$0xf]
      %v6084 = vld [vmem:[%s434 + $0x6c] sm:$0xf]
      %v6085 = vld [vmem:[%s434 + $0x70] sm:$0xf]
      %v6086 = vld [vmem:[%s434 + $0x74] sm:$0xf]
      %v6087 = vld [vmem:[%s434 + $0x78] sm:$0xf]
      %v6088 = vld [vmem:[%s434 + $0x7c] sm:$0xf]
      %v6089 = vld [vmem:[%s434 + $0x80] sm:$0xf]
      %v6090 = vld [vmem:[%s434 + $0x84] sm:$0xf]
      %v6091 = vld [vmem:[%s434 + $0x88] sm:$0xf]
      %v6092 = vld [vmem:[%s434 + $0x8c] sm:$0xf]
      %v6093 = vld [vmem:[%s434 + $0x90] sm:$0xf]
      %v6094 = vld [vmem:[%s434 + $0x94] sm:$0xf]
      %v6095 = vld [vmem:[%s434 + $0x98] sm:$0xf]
      %v6096 = vld [vmem:[%s434 + $0x9c] sm:$0xf]
      %v6097 = vld [vmem:[%s434 + $0xa0] sm:$0xf]
      %v6098 = vld [vmem:[%s434 + $0xa4] sm:$0xf]
      %v6099 = vld [vmem:[%s434 + $0xa8] sm:$0xf]
      %v6100 = vld [vmem:[%s434 + $0xac] sm:$0xf]
      %v6101 = vld [vmem:[%s434 + $0xb0] sm:$0xf]
      %v6102 = vld [vmem:[%s434 + $0xb4] sm:$0xf]
      %v6103 = vld [vmem:[%s434 + $0xb8] sm:$0xf]
      %v6104 = vld [vmem:[%s434 + $0xbc] sm:$0xf]
      %v6105 = vld [vmem:[%s434 + $0xc0] sm:$0xf]
      %v6106 = vld [vmem:[%s434 + $0xc4] sm:$0xf]
      %v6107 = vld [vmem:[%s434 + $0xc8] sm:$0xf]
      %v6108 = vld [vmem:[%s434 + $0xcc] sm:$0xf]
      %v6109 = vld [vmem:[%s434 + $0xd0] sm:$0xf]
      %v6110 = vld [vmem:[%s434 + $0xd4] sm:$0xf]
      %v6111 = vld [vmem:[%s434 + $0xd8] sm:$0xf]
      %v6112 = vld [vmem:[%s434 + $0xdc] sm:$0xf]
      %v6113 = vld [vmem:[%s434 + $0xe0] sm:$0xf]
      %v6114 = vld [vmem:[%s434 + $0xe4] sm:$0xf]
      %v6115 = vld [vmem:[%s434 + $0xe8] sm:$0xf]
      %v6116 = vld [vmem:[%s434 + $0xec] sm:$0xf]
      %v6117 = vld [vmem:[%s434 + $0xf0] sm:$0xf]
      %v6118 = vld [vmem:[%s434 + $0xf4] sm:$0xf]
      %v6119 = vld [vmem:[%s434 + $0xf8] sm:$0xf]
      %v6120 = vld [vmem:[%s434 + $0xfc] sm:$0xf]
      %v6121 = vld [vmem:[%s8] sm:$0xf]
      %v6122 = vld [vmem:[%s8 + $0x4] sm:$0xf]
      %v6187 = vunpack.c.l.b16 %v6057
      %v6188 = vunpack.c.l.b16 %v6058
      %v6189 = vunpack.c.l.b16 %v6059
      %v6190 = vunpack.c.l.b16 %v6060
      %v6191 = vunpack.c.l.b16 %v6061
      %v6192 = vunpack.c.l.b16 %v6062
      %v6193 = vunpack.c.l.b16 %v6063
      %v6194 = vunpack.c.l.b16 %v6064
      %v6195 = vunpack.c.l.b16 %v6065
      %v6196 = vunpack.c.l.b16 %v6066
      %v6197 = vunpack.c.l.b16 %v6067
      %v6198 = vunpack.c.l.b16 %v6068
      %v6199 = vunpack.c.l.b16 %v6069
      %v6200 = vunpack.c.l.b16 %v6070
      %v6201 = vunpack.c.l.b16 %v6071
      %v6202 = vunpack.c.l.b16 %v6072
      %v6203 = vunpack.c.l.b16 %v6073
      %v6204 = vunpack.c.l.b16 %v6074
      %v6205 = vunpack.c.l.b16 %v6075
      %v6206 = vunpack.c.l.b16 %v6076
      %v6207 = vunpack.c.l.b16 %v6077
      %v6208 = vunpack.c.l.b16 %v6078
      %v6209 = vunpack.c.l.b16 %v6079
      %v6210 = vunpack.c.l.b16 %v6080
      %v6211 = vunpack.c.l.b16 %v6081
      %v6212 = vunpack.c.l.b16 %v6082
      %v6213 = vunpack.c.l.b16 %v6083
      %v6214 = vunpack.c.l.b16 %v6084
      %v6215 = vunpack.c.l.b16 %v6085
      %v6216 = vunpack.c.l.b16 %v6086
      %v6217 = vunpack.c.l.b16 %v6087
      %v6218 = vunpack.c.l.b16 %v6088
      %v6219 = vunpack.c.l.b16 %v6089
      %v6220 = vunpack.c.l.b16 %v6090
      %v6221 = vunpack.c.l.b16 %v6091
      %v6222 = vunpack.c.l.b16 %v6092
      %v6223 = vunpack.c.l.b16 %v6093
      %v6224 = vunpack.c.l.b16 %v6094
      %v6225 = vunpack.c.l.b16 %v6095
      %v6226 = vunpack.c.l.b16 %v6096
      %v6227 = vunpack.c.l.b16 %v6097
      %v6228 = vunpack.c.l.b16 %v6098
      %v6229 = vunpack.c.l.b16 %v6099
      %v6230 = vunpack.c.l.b16 %v6100
      %v6231 = vunpack.c.l.b16 %v6101
      %v6232 = vunpack.c.l.b16 %v6102
      %v6233 = vunpack.c.l.b16 %v6103
      %v6234 = vunpack.c.l.b16 %v6104
      %v6235 = vunpack.c.l.b16 %v6105
      %v6236 = vunpack.c.l.b16 %v6106
      %v6237 = vunpack.c.l.b16 %v6107
      %v6238 = vunpack.c.l.b16 %v6108
      %v6239 = vunpack.c.l.b16 %v6109
      %v6240 = vunpack.c.l.b16 %v6110
      %v6241 = vunpack.c.l.b16 %v6111
      %v6242 = vunpack.c.l.b16 %v6112
      %v6243 = vunpack.c.l.b16 %v6113
      %v6244 = vunpack.c.l.b16 %v6114
      %v6245 = vunpack.c.l.b16 %v6115
      %v6246 = vunpack.c.l.b16 %v6116
      %v6247 = vunpack.c.l.b16 %v6117
      %v6248 = vunpack.c.l.b16 %v6118
      %v6249 = vunpack.c.l.b16 %v6119
      %v6250 = vunpack.c.l.b16 %v6120
      %v6251 = vpack.c.b16 %v6188, %v6187
      %v6252 = vpack.c.b16 %v6190, %v6189
      %v6253 = vpack.c.b16 %v6192, %v6191
      %v6254 = vpack.c.b16 %v6194, %v6193
      %v6255 = vpack.c.b16 %v6196, %v6195
      %v6256 = vpack.c.b16 %v6198, %v6197
      %v6257 = vpack.c.b16 %v6200, %v6199
      %v6258 = vpack.c.b16 %v6202, %v6201
      %v6259 = vpack.c.b16 %v6204, %v6203
      %v6260 = vpack.c.b16 %v6206, %v6205
      %v6261 = vpack.c.b16 %v6208, %v6207
      %v6262 = vpack.c.b16 %v6210, %v6209
      %v6263 = vpack.c.b16 %v6212, %v6211
      %v6264 = vpack.c.b16 %v6214, %v6213
      %v6265 = vpack.c.b16 %v6216, %v6215
      %v6266 = vpack.c.b16 %v6218, %v6217
      %v6267 = vpack.c.b16 %v6220, %v6219
      %v6268 = vpack.c.b16 %v6222, %v6221
      %v6269 = vpack.c.b16 %v6224, %v6223
      %v6270 = vpack.c.b16 %v6226, %v6225
      %v6271 = vpack.c.b16 %v6228, %v6227
      %v6272 = vpack.c.b16 %v6230, %v6229
      %v6273 = vpack.c.b16 %v6232, %v6231
      %v6274 = vpack.c.b16 %v6234, %v6233
      %v6275 = vpack.c.b16 %v6236, %v6235
      %v6276 = vpack.c.b16 %v6238, %v6237
      %v6277 = vpack.c.b16 %v6240, %v6239
      %v6278 = vpack.c.b16 %v6242, %v6241
      %v6279 = vpack.c.b16 %v6244, %v6243
      %v6280 = vpack.c.b16 %v6246, %v6245
      %v6281 = vpack.c.b16 %v6248, %v6247
      %v6282 = vpack.c.b16 %v6250, %v6249
      %v6285 = vunpack.c.l.b16 %v6121
      %v6286 = vunpack.c.l.b16 %v6122
      %v6287 = vpack.c.b16 %v6286, %v6285
      %vm6289 = vcmask 130048
      %v6291 = vsel %vm6289, %v6251, 0
      %v6294 = vsel %vm6289, %v6252, 0
      %v6297 = vsel %vm6289, %v6253, 0
      %v6300 = vsel %vm6289, %v6254, 0
      %v6303 = vsel %vm6289, %v6255, 0
      %v6306 = vsel %vm6289, %v6256, 0
      %v6309 = vsel %vm6289, %v6257, 0
      %v6312 = vsel %vm6289, %v6258, 0
      %v6315 = vsel %vm6289, %v6259, 0
      %v6318 = vsel %vm6289, %v6260, 0
      %v6321 = vsel %vm6289, %v6261, 0
      %v6324 = vsel %vm6289, %v6262, 0
      %v6327 = vsel %vm6289, %v6263, 0
      %v6330 = vsel %vm6289, %v6264, 0
      %v6333 = vsel %vm6289, %v6265, 0
      %v6336 = vsel %vm6289, %v6266, 0
      %v6339 = vsel %vm6289, %v6267, 0
      %v6342 = vsel %vm6289, %v6268, 0
      %v6345 = vsel %vm6289, %v6269, 0
      %v6348 = vsel %vm6289, %v6270, 0
      %v6351 = vsel %vm6289, %v6271, 0
      %v6354 = vsel %vm6289, %v6272, 0
      %v6357 = vsel %vm6289, %v6273, 0
      %v6360 = vsel %vm6289, %v6274, 0
      %v6363 = vsel %vm6289, %v6275, 0
      %v6366 = vsel %vm6289, %v6276, 0
      %v6369 = vsel %vm6289, %v6277, 0
      %v6372 = vsel %vm6289, %v6278, 0
      %v6375 = vsel %vm6289, %v6279, 0
      %v6378 = vsel %vm6289, %v6280, 0
      %v6381 = vsel %vm6289, %v6281, 0
      %v6384 = vsel %vm6289, %v6282, 0
      %6386 = vmatprep.subr.bf16.mxu0 0
      %6387 = vmatpush1.bf16.msra.mxu0 0
      %6388 = vmatprep.subr.bf16.mxu0 0
      %6389 = vmatpush1.bf16.msra.mxu0 0
      %6390 = vmatprep.subr.bf16.mxu0 0
      %6391 = vmatpush1.bf16.msra.mxu0 0
      %6392 = vmatprep.subr.bf16.mxu0 0
      %6393 = vmatpush1.bf16.msra.mxu0 0
      %6394 = vmatprep.subr.bf16.mxu0 0
      %6395 = vmatpush1.bf16.msra.mxu0 0
      %6396 = vmatprep.subr.bf16.mxu0 0
      %6397 = vmatpush1.bf16.msra.mxu0 0
      %6398 = vmatprep.subr.bf16.mxu0 0
      %6399 = vmatpush1.bf16.msra.mxu0 0
      %6400 = vmatprep.subr.bf16.mxu0 0
      %6401 = vmatpush1.bf16.msra.mxu0 %v6287
      %6402 = vmatprep.subr.bf16.mxu0 0
      %6403 = vmatpush2.bf16.msra.mxu0 0
      %6404 = vmatprep.subr.bf16.mxu0 0
      %6405 = vmatpush2.bf16.msra.mxu0 0
      %6406 = vmatprep.subr.bf16.mxu0 0
      %6407 = vmatpush2.bf16.msra.mxu0 0
      %6408 = vmatprep.subr.bf16.mxu0 0
      %6409 = vmatpush2.bf16.msra.mxu0 0
      %6410 = vmatprep.subr.bf16.mxu0 0
      %6411 = vmatpush2.bf16.msra.mxu0 0
      %6412 = vmatprep.subr.bf16.mxu0 0
      %6413 = vmatpush2.bf16.msra.mxu0 0
      %6414 = vmatprep.subr.bf16.mxu0 0
      %6415 = vmatpush2.bf16.msra.mxu0 0
      %6416 = vmatprep.subr.bf16.mxu0 0
      %6417 = vmatpush2.bf16.msra.mxu0 0
      %6418 = vmatprep.mubr.bf16.mxu0 0
      %6419 = vmatmul.mubr.bf16.gmra.mxu0 %v6291
      %v6420 = vpop.f32.mrf.mxu0
      %v6421 = vadd.f32 0.0, %v6420
      %v6422 = vpop.f32.mrf.mxu0
      %v6423 = vpop.f32.mrf.mxu0
      %v6424 = vadd.f32 0.0, %v6423
      %v6425 = vpop.f32.mrf.mxu0
      %6426 = vmatprep.mubr.bf16.mxu0 0
      %6427 = vmatmul.mubr.bf16.gmra.mxu0 %v6294
      %v6428 = vpop.f32.mrf.mxu0
      %v6429 = vadd.f32 0.0, %v6428
      %v6430 = vpop.f32.mrf.mxu0
      %v6431 = vpop.f32.mrf.mxu0
      %v6432 = vadd.f32 0.0, %v6431
      %v6433 = vpop.f32.mrf.mxu0
      %6434 = vmatprep.mubr.bf16.mxu0 0
      %6435 = vmatmul.mubr.bf16.gmra.mxu0 %v6297
      %v6436 = vpop.f32.mrf.mxu0
      %v6437 = vadd.f32 0.0, %v6436
      %v6438 = vpop.f32.mrf.mxu0
      %v6439 = vpop.f32.mrf.mxu0
      %v6440 = vadd.f32 0.0, %v6439
      %v6441 = vpop.f32.mrf.mxu0
      %6442 = vmatprep.mubr.bf16.mxu0 0
      %6443 = vmatmul.mubr.bf16.gmra.mxu0 %v6300
      %v6444 = vpop.f32.mrf.mxu0
      %v6445 = vadd.f32 0.0, %v6444
      %v6446 = vpop.f32.mrf.mxu0
      %v6447 = vpop.f32.mrf.mxu0
      %v6448 = vadd.f32 0.0, %v6447
      %v6449 = vpop.f32.mrf.mxu0
      %6450 = vmatprep.mubr.bf16.mxu0 0
      %6451 = vmatmul.mubr.bf16.gmra.mxu0 %v6303
      %v6452 = vpop.f32.mrf.mxu0
      %v6453 = vadd.f32 0.0, %v6452
      %v6454 = vpop.f32.mrf.mxu0
      %v6455 = vpop.f32.mrf.mxu0
      %v6456 = vadd.f32 0.0, %v6455
      %v6457 = vpop.f32.mrf.mxu0
      %6458 = vmatprep.mubr.bf16.mxu0 0
      %6459 = vmatmul.mubr.bf16.gmra.mxu0 %v6306
      %v6460 = vpop.f32.mrf.mxu0
      %v6461 = vadd.f32 0.0, %v6460
      %v6462 = vpop.f32.mrf.mxu0
      %v6463 = vpop.f32.mrf.mxu0
      %v6464 = vadd.f32 0.0, %v6463
      %v6465 = vpop.f32.mrf.mxu0
      %6466 = vmatprep.mubr.bf16.mxu0 0
      %6467 = vmatmul.mubr.bf16.gmra.mxu0 %v6309
      %v6468 = vpop.f32.mrf.mxu0
      %v6469 = vadd.f32 0.0, %v6468
      %v6470 = vpop.f32.mrf.mxu0
      %v6471 = vpop.f32.mrf.mxu0
      %v6472 = vadd.f32 0.0, %v6471
      %v6473 = vpop.f32.mrf.mxu0
      %6474 = vmatprep.mubr.bf16.mxu0 0
      %6475 = vmatmul.mubr.bf16.gmra.mxu0 %v6312
      %v6476 = vpop.f32.mrf.mxu0
      %v6477 = vadd.f32 0.0, %v6476
      %v6478 = vpop.f32.mrf.mxu0
      %v6479 = vpop.f32.mrf.mxu0
      %v6480 = vadd.f32 0.0, %v6479
      %v6481 = vpop.f32.mrf.mxu0
      %6482 = vmatprep.mubr.bf16.mxu0 0
      %6483 = vmatmul.mubr.bf16.gmra.mxu0 %v6315
      %v6484 = vpop.f32.mrf.mxu0
      %v6485 = vadd.f32 0.0, %v6484
      %v6486 = vpop.f32.mrf.mxu0
      %v6487 = vpop.f32.mrf.mxu0
      %v6488 = vadd.f32 0.0, %v6487
      %v6489 = vpop.f32.mrf.mxu0
      %6490 = vmatprep.mubr.bf16.mxu0 0
      %6491 = vmatmul.mubr.bf16.gmra.mxu0 %v6318
      %v6492 = vpop.f32.mrf.mxu0
      %v6493 = vadd.f32 0.0, %v6492
      %v6494 = vpop.f32.mrf.mxu0
      %v6495 = vpop.f32.mrf.mxu0
      %v6496 = vadd.f32 0.0, %v6495
      %v6497 = vpop.f32.mrf.mxu0
      %6498 = vmatprep.mubr.bf16.mxu0 0
      %6499 = vmatmul.mubr.bf16.gmra.mxu0 %v6321
      %v6500 = vpop.f32.mrf.mxu0
      %v6501 = vadd.f32 0.0, %v6500
      %v6502 = vpop.f32.mrf.mxu0
      %v6503 = vpop.f32.mrf.mxu0
      %v6504 = vadd.f32 0.0, %v6503
      %v6505 = vpop.f32.mrf.mxu0
      %6506 = vmatprep.mubr.bf16.mxu0 0
      %6507 = vmatmul.mubr.bf16.gmra.mxu0 %v6324
      %v6508 = vpop.f32.mrf.mxu0
      %v6509 = vadd.f32 0.0, %v6508
      %v6510 = vpop.f32.mrf.mxu0
      %v6511 = vpop.f32.mrf.mxu0
      %v6512 = vadd.f32 0.0, %v6511
      %v6513 = vpop.f32.mrf.mxu0
      %6514 = vmatprep.mubr.bf16.mxu0 0
      %6515 = vmatmul.mubr.bf16.gmra.mxu0 %v6327
      %v6516 = vpop.f32.mrf.mxu0
      %v6517 = vadd.f32 0.0, %v6516
      %v6518 = vpop.f32.mrf.mxu0
      %v6519 = vpop.f32.mrf.mxu0
      %v6520 = vadd.f32 0.0, %v6519
      %v6521 = vpop.f32.mrf.mxu0
      %6522 = vmatprep.mubr.bf16.mxu0 0
      %6523 = vmatmul.mubr.bf16.gmra.mxu0 %v6330
      %v6524 = vpop.f32.mrf.mxu0
      %v6525 = vadd.f32 0.0, %v6524
      %v6526 = vpop.f32.mrf.mxu0
      %v6527 = vpop.f32.mrf.mxu0
      %v6528 = vadd.f32 0.0, %v6527
      %v6529 = vpop.f32.mrf.mxu0
      %6530 = vmatprep.mubr.bf16.mxu0 0
      %6531 = vmatmul.mubr.bf16.gmra.mxu0 %v6333
      %v6532 = vpop.f32.mrf.mxu0
      %v6533 = vadd.f32 0.0, %v6532
      %v6534 = vpop.f32.mrf.mxu0
      %v6535 = vpop.f32.mrf.mxu0
      %v6536 = vadd.f32 0.0, %v6535
      %v6537 = vpop.f32.mrf.mxu0
      %6538 = vmatprep.mubr.bf16.mxu0 0
      %6539 = vmatmul.mubr.bf16.gmra.mxu0 %v6336
      %v6540 = vpop.f32.mrf.mxu0
      %v6541 = vadd.f32 0.0, %v6540
      %v6542 = vpop.f32.mrf.mxu0
      %v6543 = vpop.f32.mrf.mxu0
      %v6544 = vadd.f32 0.0, %v6543
      %v6545 = vpop.f32.mrf.mxu0
      %6546 = vmatprep.mubr.bf16.mxu0 0
      %6547 = vmatmul.mubr.bf16.gmra.mxu0 %v6339
      %v6548 = vpop.f32.mrf.mxu0
      %v6549 = vadd.f32 0.0, %v6548
      %v6550 = vpop.f32.mrf.mxu0
      %v6551 = vpop.f32.mrf.mxu0
      %v6552 = vadd.f32 0.0, %v6551
      %v6553 = vpop.f32.mrf.mxu0
      %6554 = vmatprep.mubr.bf16.mxu0 0
      %6555 = vmatmul.mubr.bf16.gmra.mxu0 %v6342
      %v6556 = vpop.f32.mrf.mxu0
      %v6557 = vadd.f32 0.0, %v6556
      %v6558 = vpop.f32.mrf.mxu0
      %v6559 = vpop.f32.mrf.mxu0
      %v6560 = vadd.f32 0.0, %v6559
      %v6561 = vpop.f32.mrf.mxu0
      %6562 = vmatprep.mubr.bf16.mxu0 0
      %6563 = vmatmul.mubr.bf16.gmra.mxu0 %v6345
      %v6564 = vpop.f32.mrf.mxu0
      %v6565 = vadd.f32 0.0, %v6564
      %v6566 = vpop.f32.mrf.mxu0
      %v6567 = vpop.f32.mrf.mxu0
      %v6568 = vadd.f32 0.0, %v6567
      %v6569 = vpop.f32.mrf.mxu0
      %6570 = vmatprep.mubr.bf16.mxu0 0
      %6571 = vmatmul.mubr.bf16.gmra.mxu0 %v6348
      %v6572 = vpop.f32.mrf.mxu0
      %v6573 = vadd.f32 0.0, %v6572
      %v6574 = vpop.f32.mrf.mxu0
      %v6575 = vpop.f32.mrf.mxu0
      %v6576 = vadd.f32 0.0, %v6575
      %v6577 = vpop.f32.mrf.mxu0
      %6578 = vmatprep.mubr.bf16.mxu0 0
      %6579 = vmatmul.mubr.bf16.gmra.mxu0 %v6351
      %v6580 = vpop.f32.mrf.mxu0
      %v6581 = vadd.f32 0.0, %v6580
      %v6582 = vpop.f32.mrf.mxu0
      %v6583 = vpop.f32.mrf.mxu0
      %v6584 = vadd.f32 0.0, %v6583
      %v6585 = vpop.f32.mrf.mxu0
      %6586 = vmatprep.mubr.bf16.mxu0 0
      %6587 = vmatmul.mubr.bf16.gmra.mxu0 %v6354
      %v6588 = vpop.f32.mrf.mxu0
      %v6589 = vadd.f32 0.0, %v6588
      %v6590 = vpop.f32.mrf.mxu0
      %v6591 = vpop.f32.mrf.mxu0
      %v6592 = vadd.f32 0.0, %v6591
      %v6593 = vpop.f32.mrf.mxu0
      %6594 = vmatprep.mubr.bf16.mxu0 0
      %6595 = vmatmul.mubr.bf16.gmra.mxu0 %v6357
      %v6596 = vpop.f32.mrf.mxu0
      %v6597 = vadd.f32 0.0, %v6596
      %v6598 = vpop.f32.mrf.mxu0
      %v6599 = vpop.f32.mrf.mxu0
      %v6600 = vadd.f32 0.0, %v6599
      %v6601 = vpop.f32.mrf.mxu0
      %6602 = vmatprep.mubr.bf16.mxu0 0
      %6603 = vmatmul.mubr.bf16.gmra.mxu0 %v6360
      %v6604 = vpop.f32.mrf.mxu0
      %v6605 = vadd.f32 0.0, %v6604
      %v6606 = vpop.f32.mrf.mxu0
      %v6607 = vpop.f32.mrf.mxu0
      %v6608 = vadd.f32 0.0, %v6607
      %v6609 = vpop.f32.mrf.mxu0
      %6610 = vmatprep.mubr.bf16.mxu0 0
      %6611 = vmatmul.mubr.bf16.gmra.mxu0 %v6363
      %v6612 = vpop.f32.mrf.mxu0
      %v6613 = vadd.f32 0.0, %v6612
      %v6614 = vpop.f32.mrf.mxu0
      %v6615 = vpop.f32.mrf.mxu0
      %v6616 = vadd.f32 0.0, %v6615
      %v6617 = vpop.f32.mrf.mxu0
      %6618 = vmatprep.mubr.bf16.mxu0 0
      %6619 = vmatmul.mubr.bf16.gmra.mxu0 %v6366
      %v6620 = vpop.f32.mrf.mxu0
      %v6621 = vadd.f32 0.0, %v6620
      %v6622 = vpop.f32.mrf.mxu0
      %v6623 = vpop.f32.mrf.mxu0
      %v6624 = vadd.f32 0.0, %v6623
      %v6625 = vpop.f32.mrf.mxu0
      %6626 = vmatprep.mubr.bf16.mxu0 0
      %6627 = vmatmul.mubr.bf16.gmra.mxu0 %v6369
      %v6628 = vpop.f32.mrf.mxu0
      %v6629 = vadd.f32 0.0, %v6628
      %v6630 = vpop.f32.mrf.mxu0
      %v6631 = vpop.f32.mrf.mxu0
      %v6632 = vadd.f32 0.0, %v6631
      %v6633 = vpop.f32.mrf.mxu0
      %6634 = vmatprep.mubr.bf16.mxu0 0
      %6635 = vmatmul.mubr.bf16.gmra.mxu0 %v6372
      %v6636 = vpop.f32.mrf.mxu0
      %v6637 = vadd.f32 0.0, %v6636
      %v6638 = vpop.f32.mrf.mxu0
      %v6639 = vpop.f32.mrf.mxu0
      %v6640 = vadd.f32 0.0, %v6639
      %v6641 = vpop.f32.mrf.mxu0
      %6642 = vmatprep.mubr.bf16.mxu0 0
      %6643 = vmatmul.mubr.bf16.gmra.mxu0 %v6375
      %v6644 = vpop.f32.mrf.mxu0
      %v6645 = vadd.f32 0.0, %v6644
      %v6646 = vpop.f32.mrf.mxu0
      %v6647 = vpop.f32.mrf.mxu0
      %v6648 = vadd.f32 0.0, %v6647
      %v6649 = vpop.f32.mrf.mxu0
      %6650 = vmatprep.mubr.bf16.mxu0 0
      %6651 = vmatmul.mubr.bf16.gmra.mxu0 %v6378
      %v6652 = vpop.f32.mrf.mxu0
      %v6653 = vadd.f32 0.0, %v6652
      %v6654 = vpop.f32.mrf.mxu0
      %v6655 = vpop.f32.mrf.mxu0
      %v6656 = vadd.f32 0.0, %v6655
      %v6657 = vpop.f32.mrf.mxu0
      %6658 = vmatprep.mubr.bf16.mxu0 0
      %6659 = vmatmul.mubr.bf16.gmra.mxu0 %v6381
      %v6660 = vpop.f32.mrf.mxu0
      %v6661 = vadd.f32 0.0, %v6660
      %v6662 = vpop.f32.mrf.mxu0
      %v6663 = vpop.f32.mrf.mxu0
      %v6664 = vadd.f32 0.0, %v6663
      %v6665 = vpop.f32.mrf.mxu0
      %6666 = vmatprep.mubr.bf16.mxu0 0
      %6667 = vmatmul.mubr.bf16.gmra.mxu0 %v6384
      %v6668 = vpop.f32.mrf.mxu0
      %v6669 = vadd.f32 0.0, %v6668
      %v6670 = vpop.f32.mrf.mxu0
      %v6671 = vpop.f32.mrf.mxu0
      %v6672 = vadd.f32 0.0, %v6671
      %v6673 = vpop.f32.mrf.mxu0
      %6674 = vdwg.mxu0
      %v6675 = vld [vmem:[%s9] sm:$0x1]
      %v6677 = vlaneseq
      %v6678 = vshrl.u32 %v6677, 7
      %v6679 = vsub.s32 0, %v6678
      %v6680 = vrot.slane %v6675, %v6679
      %v6682 = vmul.f32 %v6421, %v6680
      %v6683 = vmul.f32 %v6424, %v6680
      %v6684 = vmul.f32 %v6429, %v6680
      %v6685 = vmul.f32 %v6432, %v6680
      %v6686 = vmul.f32 %v6437, %v6680
      %v6687 = vmul.f32 %v6440, %v6680
      %v6688 = vmul.f32 %v6445, %v6680
      %v6689 = vmul.f32 %v6448, %v6680
      %v6690 = vmul.f32 %v6453, %v6680
      %v6691 = vmul.f32 %v6456, %v6680
      %v6692 = vmul.f32 %v6461, %v6680
      %v6693 = vmul.f32 %v6464, %v6680
      %v6694 = vmul.f32 %v6469, %v6680
      %v6695 = vmul.f32 %v6472, %v6680
      %v6696 = vmul.f32 %v6477, %v6680
      %v6697 = vmul.f32 %v6480, %v6680
      %v6698 = vmul.f32 %v6485, %v6680
      %v6699 = vmul.f32 %v6488, %v6680
      %v6700 = vmul.f32 %v6493, %v6680
      %v6701 = vmul.f32 %v6496, %v6680
      %v6702 = vmul.f32 %v6501, %v6680
      %v6703 = vmul.f32 %v6504, %v6680
      %v6704 = vmul.f32 %v6509, %v6680
      %v6705 = vmul.f32 %v6512, %v6680
      %v6706 = vmul.f32 %v6517, %v6680
      %v6707 = vmul.f32 %v6520, %v6680
      %v6708 = vmul.f32 %v6525, %v6680
      %v6709 = vmul.f32 %v6528, %v6680
      %v6710 = vmul.f32 %v6533, %v6680
      %v6711 = vmul.f32 %v6536, %v6680
      %v6712 = vmul.f32 %v6541, %v6680
      %v6713 = vmul.f32 %v6544, %v6680
      %v6714 = vmul.f32 %v6549, %v6680
      %v6715 = vmul.f32 %v6552, %v6680
      %v6716 = vmul.f32 %v6557, %v6680
      %v6717 = vmul.f32 %v6560, %v6680
      %v6718 = vmul.f32 %v6565, %v6680
      %v6719 = vmul.f32 %v6568, %v6680
      %v6720 = vmul.f32 %v6573, %v6680
      %v6721 = vmul.f32 %v6576, %v6680
      %v6722 = vmul.f32 %v6581, %v6680
      %v6723 = vmul.f32 %v6584, %v6680
      %v6724 = vmul.f32 %v6589, %v6680
      %v6725 = vmul.f32 %v6592, %v6680
      %v6726 = vmul.f32 %v6597, %v6680
      %v6727 = vmul.f32 %v6600, %v6680
      %v6728 = vmul.f32 %v6605, %v6680
      %v6729 = vmul.f32 %v6608, %v6680
      %v6730 = vmul.f32 %v6613, %v6680
      %v6731 = vmul.f32 %v6616, %v6680
      %v6732 = vmul.f32 %v6621, %v6680
      %v6733 = vmul.f32 %v6624, %v6680
      %v6734 = vmul.f32 %v6629, %v6680
      %v6735 = vmul.f32 %v6632, %v6680
      %v6736 = vmul.f32 %v6637, %v6680
      %v6737 = vmul.f32 %v6640, %v6680
      %v6738 = vmul.f32 %v6645, %v6680
      %v6739 = vmul.f32 %v6648, %v6680
      %v6740 = vmul.f32 %v6653, %v6680
      %v6741 = vmul.f32 %v6656, %v6680
      %v6742 = vmul.f32 %v6661, %v6680
      %v6743 = vmul.f32 %v6664, %v6680
      %v6744 = vmul.f32 %v6669, %v6680
      %v6745 = vmul.f32 %v6672, %v6680
      %v6746 = vld [vmem:[%s10] sm:$0x1]
      %v6748 = vlaneseq
      %v6749 = vshrl.u32 %v6748, 7
      %v6750 = vsub.s32 0, %v6749
      %v6751 = vrot.slane %v6746, %v6750
      %v6753 = vadd.f32 %v6682, %v6751
      %v6754 = vadd.f32 %v6683, %v6751
      %v6755 = vadd.f32 %v6684, %v6751
      %v6756 = vadd.f32 %v6685, %v6751
      %v6757 = vadd.f32 %v6686, %v6751
      %v6758 = vadd.f32 %v6687, %v6751
      %v6759 = vadd.f32 %v6688, %v6751
      %v6760 = vadd.f32 %v6689, %v6751
      %v6761 = vadd.f32 %v6690, %v6751
      %v6762 = vadd.f32 %v6691, %v6751
      %v6763 = vadd.f32 %v6692, %v6751
      %v6764 = vadd.f32 %v6693, %v6751
      %v6765 = vadd.f32 %v6694, %v6751
      %v6766 = vadd.f32 %v6695, %v6751
      %v6767 = vadd.f32 %v6696, %v6751
      %v6768 = vadd.f32 %v6697, %v6751
      %v6769 = vadd.f32 %v6698, %v6751
      %v6770 = vadd.f32 %v6699, %v6751
      %v6771 = vadd.f32 %v6700, %v6751
      %v6772 = vadd.f32 %v6701, %v6751
      %v6773 = vadd.f32 %v6702, %v6751
      %v6774 = vadd.f32 %v6703, %v6751
      %v6775 = vadd.f32 %v6704, %v6751
      %v6776 = vadd.f32 %v6705, %v6751
      %v6777 = vadd.f32 %v6706, %v6751
      %v6778 = vadd.f32 %v6707, %v6751
      %v6779 = vadd.f32 %v6708, %v6751
      %v6780 = vadd.f32 %v6709, %v6751
      %v6781 = vadd.f32 %v6710, %v6751
      %v6782 = vadd.f32 %v6711, %v6751
      %v6783 = vadd.f32 %v6712, %v6751
      %v6784 = vadd.f32 %v6713, %v6751
      %v6785 = vadd.f32 %v6714, %v6751
      %v6786 = vadd.f32 %v6715, %v6751
      %v6787 = vadd.f32 %v6716, %v6751
      %v6788 = vadd.f32 %v6717, %v6751
      %v6789 = vadd.f32 %v6718, %v6751
      %v6790 = vadd.f32 %v6719, %v6751
      %v6791 = vadd.f32 %v6720, %v6751
      %v6792 = vadd.f32 %v6721, %v6751
      %v6793 = vadd.f32 %v6722, %v6751
      %v6794 = vadd.f32 %v6723, %v6751
      %v6795 = vadd.f32 %v6724, %v6751
      %v6796 = vadd.f32 %v6725, %v6751
      %v6797 = vadd.f32 %v6726, %v6751
      %v6798 = vadd.f32 %v6727, %v6751
      %v6799 = vadd.f32 %v6728, %v6751
      %v6800 = vadd.f32 %v6729, %v6751
      %v6801 = vadd.f32 %v6730, %v6751
      %v6802 = vadd.f32 %v6731, %v6751
      %v6803 = vadd.f32 %v6732, %v6751
      %v6804 = vadd.f32 %v6733, %v6751
      %v6805 = vadd.f32 %v6734, %v6751
      %v6806 = vadd.f32 %v6735, %v6751
      %v6807 = vadd.f32 %v6736, %v6751
      %v6808 = vadd.f32 %v6737, %v6751
      %v6809 = vadd.f32 %v6738, %v6751
      %v6810 = vadd.f32 %v6739, %v6751
      %v6811 = vadd.f32 %v6740, %v6751
      %v6812 = vadd.f32 %v6741, %v6751
      %v6813 = vadd.f32 %v6742, %v6751
      %v6814 = vadd.f32 %v6743, %v6751
      %v6815 = vadd.f32 %v6744, %v6751
      %v6816 = vadd.f32 %v6745, %v6751
      %v6817 = vadd.f32 %v5993, %v6753
      %v6818 = vadd.f32 %v5994, %v6754
      %v6819 = vadd.f32 %v5995, %v6755
      %v6820 = vadd.f32 %v5996, %v6756
      %v6821 = vadd.f32 %v5997, %v6757
      %v6822 = vadd.f32 %v5998, %v6758
      %v6823 = vadd.f32 %v5999, %v6759
      %v6824 = vadd.f32 %v6000, %v6760
      %v6825 = vadd.f32 %v6001, %v6761
      %v6826 = vadd.f32 %v6002, %v6762
      %v6827 = vadd.f32 %v6003, %v6763
      %v6828 = vadd.f32 %v6004, %v6764
      %v6829 = vadd.f32 %v6005, %v6765
      %v6830 = vadd.f32 %v6006, %v6766
      %v6831 = vadd.f32 %v6007, %v6767
      %v6832 = vadd.f32 %v6008, %v6768
      %v6833 = vadd.f32 %v6009, %v6769
      %v6834 = vadd.f32 %v6010, %v6770
      %v6835 = vadd.f32 %v6011, %v6771
      %v6836 = vadd.f32 %v6012, %v6772
      %v6837 = vadd.f32 %v6013, %v6773
      %v6838 = vadd.f32 %v6014, %v6774
      %v6839 = vadd.f32 %v6015, %v6775
      %v6840 = vadd.f32 %v6016, %v6776
      %v6841 = vadd.f32 %v6017, %v6777
      %v6842 = vadd.f32 %v6018, %v6778
      %v6843 = vadd.f32 %v6019, %v6779
      %v6844 = vadd.f32 %v6020, %v6780
      %v6845 = vadd.f32 %v6021, %v6781
      %v6846 = vadd.f32 %v6022, %v6782
      %v6847 = vadd.f32 %v6023, %v6783
      %v6848 = vadd.f32 %v6024, %v6784
      %v6849 = vadd.f32 %v6025, %v6785
      %v6850 = vadd.f32 %v6026, %v6786
      %v6851 = vadd.f32 %v6027, %v6787
      %v6852 = vadd.f32 %v6028, %v6788
      %v6853 = vadd.f32 %v6029, %v6789
      %v6854 = vadd.f32 %v6030, %v6790
      %v6855 = vadd.f32 %v6031, %v6791
      %v6856 = vadd.f32 %v6032, %v6792
      %v6857 = vadd.f32 %v6033, %v6793
      %v6858 = vadd.f32 %v6034, %v6794
      %v6859 = vadd.f32 %v6035, %v6795
      %v6860 = vadd.f32 %v6036, %v6796
      %v6861 = vadd.f32 %v6037, %v6797
      %v6862 = vadd.f32 %v6038, %v6798
      %v6863 = vadd.f32 %v6039, %v6799
      %v6864 = vadd.f32 %v6040, %v6800
      %v6865 = vadd.f32 %v6041, %v6801
      %v6866 = vadd.f32 %v6042, %v6802
      %v6867 = vadd.f32 %v6043, %v6803
      %v6868 = vadd.f32 %v6044, %v6804
      %v6869 = vadd.f32 %v6045, %v6805
      %v6870 = vadd.f32 %v6046, %v6806
      %v6871 = vadd.f32 %v6047, %v6807
      %v6872 = vadd.f32 %v6048, %v6808
      %v6873 = vadd.f32 %v6049, %v6809
      %v6874 = vadd.f32 %v6050, %v6810
      %v6875 = vadd.f32 %v6051, %v6811
      %v6876 = vadd.f32 %v6052, %v6812
      %v6877 = vadd.f32 %v6053, %v6813
      %v6878 = vadd.f32 %v6054, %v6814
      %v6879 = vadd.f32 %v6055, %v6815
      %v6880 = vadd.f32 %v6056, %v6816
      %v6881 = vmax.f32 %v6817, 0.0
      %v6882 = vmax.f32 %v6818, 0.0
      %v6883 = vmax.f32 %v6819, 0.0
      %v6884 = vmax.f32 %v6820, 0.0
      %v6885 = vmax.f32 %v6821, 0.0
      %v6886 = vmax.f32 %v6822, 0.0
      %v6887 = vmax.f32 %v6823, 0.0
      %v6888 = vmax.f32 %v6824, 0.0
      %v6889 = vmax.f32 %v6825, 0.0
      %v6890 = vmax.f32 %v6826, 0.0
      %v6891 = vmax.f32 %v6827, 0.0
      %v6892 = vmax.f32 %v6828, 0.0
      %v6893 = vmax.f32 %v6829, 0.0
      %v6894 = vmax.f32 %v6830, 0.0
      %v6895 = vmax.f32 %v6831, 0.0
      %v6896 = vmax.f32 %v6832, 0.0
      %v6897 = vmax.f32 %v6833, 0.0
      %v6898 = vmax.f32 %v6834, 0.0
      %v6899 = vmax.f32 %v6835, 0.0
      %v6900 = vmax.f32 %v6836, 0.0
      %v6901 = vmax.f32 %v6837, 0.0
      %v6902 = vmax.f32 %v6838, 0.0
      %v6903 = vmax.f32 %v6839, 0.0
      %v6904 = vmax.f32 %v6840, 0.0
      %v6905 = vmax.f32 %v6841, 0.0
      %v6906 = vmax.f32 %v6842, 0.0
      %v6907 = vmax.f32 %v6843, 0.0
      %v6908 = vmax.f32 %v6844, 0.0
      %v6909 = vmax.f32 %v6845, 0.0
      %v6910 = vmax.f32 %v6846, 0.0
      %v6911 = vmax.f32 %v6847, 0.0
      %v6912 = vmax.f32 %v6848, 0.0
      %v6913 = vmax.f32 %v6849, 0.0
      %v6914 = vmax.f32 %v6850, 0.0
      %v6915 = vmax.f32 %v6851, 0.0
      %v6916 = vmax.f32 %v6852, 0.0
      %v6917 = vmax.f32 %v6853, 0.0
      %v6918 = vmax.f32 %v6854, 0.0
      %v6919 = vmax.f32 %v6855, 0.0
      %v6920 = vmax.f32 %v6856, 0.0
      %v6921 = vmax.f32 %v6857, 0.0
      %v6922 = vmax.f32 %v6858, 0.0
      %v6923 = vmax.f32 %v6859, 0.0
      %v6924 = vmax.f32 %v6860, 0.0
      %v6925 = vmax.f32 %v6861, 0.0
      %v6926 = vmax.f32 %v6862, 0.0
      %v6927 = vmax.f32 %v6863, 0.0
      %v6928 = vmax.f32 %v6864, 0.0
      %v6929 = vmax.f32 %v6865, 0.0
      %v6930 = vmax.f32 %v6866, 0.0
      %v6931 = vmax.f32 %v6867, 0.0
      %v6932 = vmax.f32 %v6868, 0.0
      %v6933 = vmax.f32 %v6869, 0.0
      %v6934 = vmax.f32 %v6870, 0.0
      %v6935 = vmax.f32 %v6871, 0.0
      %v6936 = vmax.f32 %v6872, 0.0
      %v6937 = vmax.f32 %v6873, 0.0
      %v6938 = vmax.f32 %v6874, 0.0
      %v6939 = vmax.f32 %v6875, 0.0
      %v6940 = vmax.f32 %v6876, 0.0
      %v6941 = vmax.f32 %v6877, 0.0
      %v6942 = vmax.f32 %v6878, 0.0
      %v6943 = vmax.f32 %v6879, 0.0
      %v6944 = vmax.f32 %v6880, 0.0
      %vm6945 = vcmask 261120
      %6946 = vst.msk [vmem:[%s444] sm:$0xff] %vm6945, %v6881
      %6947 = vst.msk [vmem:[%s444 + $0x8] sm:$0xff] %vm6945, %v6882
      %6948 = vst.msk [vmem:[%s444 + $0x10] sm:$0xff] %vm6945, %v6883
      %6949 = vst.msk [vmem:[%s444 + $0x18] sm:$0xff] %vm6945, %v6884
      %6950 = vst.msk [vmem:[%s444 + $0x20] sm:$0xff] %vm6945, %v6885
      %6951 = vst.msk [vmem:[%s444 + $0x28] sm:$0xff] %vm6945, %v6886
      %6952 = vst.msk [vmem:[%s444 + $0x30] sm:$0xff] %vm6945, %v6887
      %6953 = vst.msk [vmem:[%s444 + $0x38] sm:$0xff] %vm6945, %v6888
      %6954 = vst.msk [vmem:[%s444 + $0x40] sm:$0xff] %vm6945, %v6889
      %6955 = vst.msk [vmem:[%s444 + $0x48] sm:$0xff] %vm6945, %v6890
      %6956 = vst.msk [vmem:[%s444 + $0x50] sm:$0xff] %vm6945, %v6891
      %6957 = vst.msk [vmem:[%s444 + $0x58] sm:$0xff] %vm6945, %v6892
      %6958 = vst.msk [vmem:[%s444 + $0x60] sm:$0xff] %vm6945, %v6893
      %6959 = vst.msk [vmem:[%s444 + $0x68] sm:$0xff] %vm6945, %v6894
      %6960 = vst.msk [vmem:[%s444 + $0x70] sm:$0xff] %vm6945, %v6895
      %6961 = vst.msk [vmem:[%s444 + $0x78] sm:$0xff] %vm6945, %v6896
      %6962 = vst.msk [vmem:[%s444 + $0x80] sm:$0xff] %vm6945, %v6897
      %6963 = vst.msk [vmem:[%s444 + $0x88] sm:$0xff] %vm6945, %v6898
      %6964 = vst.msk [vmem:[%s444 + $0x90] sm:$0xff] %vm6945, %v6899
      %6965 = vst.msk [vmem:[%s444 + $0x98] sm:$0xff] %vm6945, %v6900
      %6966 = vst.msk [vmem:[%s444 + $0xa0] sm:$0xff] %vm6945, %v6901
      %6967 = vst.msk [vmem:[%s444 + $0xa8] sm:$0xff] %vm6945, %v6902
      %6968 = vst.msk [vmem:[%s444 + $0xb0] sm:$0xff] %vm6945, %v6903
      %6969 = vst.msk [vmem:[%s444 + $0xb8] sm:$0xff] %vm6945, %v6904
      %6970 = vst.msk [vmem:[%s444 + $0xc0] sm:$0xff] %vm6945, %v6905
      %6971 = vst.msk [vmem:[%s444 + $0xc8] sm:$0xff] %vm6945, %v6906
      %6972 = vst.msk [vmem:[%s444 + $0xd0] sm:$0xff] %vm6945, %v6907
      %6973 = vst.msk [vmem:[%s444 + $0xd8] sm:$0xff] %vm6945, %v6908
      %6974 = vst.msk [vmem:[%s444 + $0xe0] sm:$0xff] %vm6945, %v6909
      %6975 = vst.msk [vmem:[%s444 + $0xe8] sm:$0xff] %vm6945, %v6910
      %6976 = vst.msk [vmem:[%s444 + $0xf0] sm:$0xff] %vm6945, %v6911
      %6977 = vst.msk [vmem:[%s444 + $0xf8] sm:$0xff] %vm6945, %v6912
      %6978 = vst.msk [vmem:[%s444 + $0x100] sm:$0xff] %vm6945, %v6913
      %6979 = vst.msk [vmem:[%s444 + $0x108] sm:$0xff] %vm6945, %v6914
      %6980 = vst.msk [vmem:[%s444 + $0x110] sm:$0xff] %vm6945, %v6915
      %6981 = vst.msk [vmem:[%s444 + $0x118] sm:$0xff] %vm6945, %v6916
      %6982 = vst.msk [vmem:[%s444 + $0x120] sm:$0xff] %vm6945, %v6917
      %6983 = vst.msk [vmem:[%s444 + $0x128] sm:$0xff] %vm6945, %v6918
      %6984 = vst.msk [vmem:[%s444 + $0x130] sm:$0xff] %vm6945, %v6919
      %6985 = vst.msk [vmem:[%s444 + $0x138] sm:$0xff] %vm6945, %v6920
      %6986 = vst.msk [vmem:[%s444 + $0x140] sm:$0xff] %vm6945, %v6921
      %6987 = vst.msk [vmem:[%s444 + $0x148] sm:$0xff] %vm6945, %v6922
      %6988 = vst.msk [vmem:[%s444 + $0x150] sm:$0xff] %vm6945, %v6923
      %6989 = vst.msk [vmem:[%s444 + $0x158] sm:$0xff] %vm6945, %v6924
      %6990 = vst.msk [vmem:[%s444 + $0x160] sm:$0xff] %vm6945, %v6925
      %6991 = vst.msk [vmem:[%s444 + $0x168] sm:$0xff] %vm6945, %v6926
      %6992 = vst.msk [vmem:[%s444 + $0x170] sm:$0xff] %vm6945, %v6927
      %6993 = vst.msk [vmem:[%s444 + $0x178] sm:$0xff] %vm6945, %v6928
      %6994 = vst.msk [vmem:[%s444 + $0x180] sm:$0xff] %vm6945, %v6929
      %6995 = vst.msk [vmem:[%s444 + $0x188] sm:$0xff] %vm6945, %v6930
      %6996 = vst.msk [vmem:[%s444 + $0x190] sm:$0xff] %vm6945, %v6931
      %6997 = vst.msk [vmem:[%s444 + $0x198] sm:$0xff] %vm6945, %v6932
      %6998 = vst.msk [vmem:[%s444 + $0x1a0] sm:$0xff] %vm6945, %v6933
      %6999 = vst.msk [vmem:[%s444 + $0x1a8] sm:$0xff] %vm6945, %v6934
      %7000 = vst.msk [vmem:[%s444 + $0x1b0] sm:$0xff] %vm6945, %v6935
      %7001 = vst.msk [vmem:[%s444 + $0x1b8] sm:$0xff] %vm6945, %v6936
      %7002 = vst.msk [vmem:[%s444 + $0x1c0] sm:$0xff] %vm6945, %v6937
      %7003 = vst.msk [vmem:[%s444 + $0x1c8] sm:$0xff] %vm6945, %v6938
      %7004 = vst.msk [vmem:[%s444 + $0x1d0] sm:$0xff] %vm6945, %v6939
      %7005 = vst.msk [vmem:[%s444 + $0x1d8] sm:$0xff] %vm6945, %v6940
      %7006 = vst.msk [vmem:[%s444 + $0x1e0] sm:$0xff] %vm6945, %v6941
      %7007 = vst.msk [vmem:[%s444 + $0x1e8] sm:$0xff] %vm6945, %v6942
      %7008 = vst.msk [vmem:[%s444 + $0x1f0] sm:$0xff] %vm6945, %v6943
      %7009 = vst.msk [vmem:[%s444 + $0x1f8] sm:$0xff] %vm6945, %v6944
      %s7010 = smul.u32 64, %s27
      %p7011 = scmp.lt.s32.totalorder %s26, 1
      %s7012 = scalar_select %p7011, %s26, 1
      %p7013 = scmp.lt.s32.totalorder %s7010, 63
      %s7014 = scalar_select %p7013, %s7010, 63
      %s7015 = smul.addr %s7012, 64
      %s7016 = sadd.s32 %s7014, %s7015
      %s7017 = smul.addr %s7016, 8
      %s7018 = scalar_lea.vmem %s11, %s7017
      // Predicated region
      $region65: #{bottleneck_forward.3} parent=63 // pred_check
        %p7019 = pneg %p297
      $region66: #{bottleneck_forward.3} parent=63 // pred_check_branch
        %7021 = sbr.rel (%p7019) target = $region68
      $region67: #{bottleneck_forward.3} parent=63 // pred_region
        %s7022 = smul.u32 64, %s27
      $region68: #{bottleneck_forward.3} parent=63 // pred_fallthru
        _
    $region64: #{bottleneck_forward.3} parent=5 // pred_fallthru
      _
    %p7023 = scmp.le.s32.totalorder 2, %s17
    // Predicated region
    $region69: #{bottleneck_forward.3} parent=5 // pred_check
      %p7024 = pneg %p7023
    $region70: #{bottleneck_forward.3} parent=5 // pred_check_branch
      %7026 = sbr.rel (%p7024) target = $region72
    $region71: #{bottleneck_forward.3} parent=5 // pred_region
      %s7027 = ssub.s32 %s17, 2
      // Predicated region
      $region73: #{bottleneck_forward.3} parent=71 // pred_check
        %p7028 = pneg %p303
      $region74: #{bottleneck_forward.3} parent=71 // pred_check_branch
        %7030 = sbr.rel (%p7028) target = $region76
      $region75: #{bottleneck_forward.3} parent=71 // pred_region
        %s7031 = smul.u32 64, %s29
        %p7032 = scmp.lt.s32.totalorder %s28, 1
        %s7033 = scalar_select %p7032, %s28, 1
        %p7034 = scmp.lt.s32.totalorder %s7031, 63
        %s7035 = scalar_select %p7034, %s7031, 63
        %s7036 = smul.addr %s7033, 64
        %s7037 = sadd.s32 %s7035, %s7036
        %s7038 = smul.addr %s7037, 8
        %s7039 = scalar_lea.vmem %s11, %s7038
      $region76: #{bottleneck_forward.3} parent=71 // pred_fallthru
        _
    $region72: #{bottleneck_forward.3} parent=5 // pred_fallthru
      _
  $region6: #{bottleneck_forward.3} parent=0 // loop_footer
    %s21 = sadd.s32 1, %s17
  $region7: #{bottleneck_forward.3} parent=0 // loop_footer_branch
    %16 = sbr.rel target = $region3
  $region8: #{bottleneck_forward.3} parent=0 // loop_exit
    _

</llo_original>
